<compile_context>
chip_gen: v6e
topology: v6e:2x2x1
jax: 0.10.0
libtpu: 0.0.40
codegen_flags: <defaults>
</compile_context>

<pallas_src>
import math
import functools
import numpy as np

import jax
import jax.numpy as jnp
from jax.experimental import pallas as pl
from jax.experimental.pallas import tpu as pltpu

LN_EPS = 1e-5  # torch.nn.LayerNorm default


def _layernorm(x, g, b):
    mean = jnp.mean(x, axis=-1, keepdims=True)
    var = jnp.mean((x - mean) ** 2, axis=-1, keepdims=True)
    return (x - mean) * jax.lax.rsqrt(var + LN_EPS) * g + b


# ---------------------------------------------------------------------------
# Fused Pallas kernel: all encoder layers + final LayerNorm + head, one batch
# element per grid step.
# ---------------------------------------------------------------------------
def transformer_kernel(x_ref,
                       ln1_g_ref, ln1_b_ref,
                       wq_ref, bq_ref, wk_ref, bk_ref, wv_ref, bv_ref,
                       wo_ref, bo_ref,
                       ln2_g_ref, ln2_b_ref,
                       ff1_w_ref, ff1_b_ref, ff2_w_ref, ff2_b_ref,
                       norm_g_ref, norm_b_ref, head_w_ref, head_b_ref,
                       o_ref, *, n_layers, n_heads):
    x = x_ref[0]                                   # (S, D) for this batch element

    for l in range(n_layers):                      # static unrolled layer loop
        # ---- multi-head self-attention (pre-norm) ----
        h = _layernorm(x, ln1_g_ref[l], ln1_b_ref[l])
        attn = None
        for hd in range(n_heads):                  # static unrolled head loop
            idx = l * n_heads + hd
            # per-head projections (scale 1/sqrt(Dh) already folded into wq/bq)
            qh = jnp.dot(h, wq_ref[idx], preferred_element_type=jnp.float32) + bq_ref[idx]
            kh = jnp.dot(h, wk_ref[idx], preferred_element_type=jnp.float32) + bk_ref[idx]
            vh = jnp.dot(h, wv_ref[idx], preferred_element_type=jnp.float32) + bv_ref[idx]
            # scores = qh @ kh^T  (NT dot, no explicit transpose materialized)
            s = jax.lax.dot_general(qh, kh, (((1,), (1,)), ((), ())),
                                    preferred_element_type=jnp.float32)
            s = s - jnp.max(s, axis=-1, keepdims=True)
            p = jnp.exp(s)
            p = p * pl.reciprocal(jnp.sum(p, axis=-1, keepdims=True), approx=True)
            ho = jnp.dot(p, vh, preferred_element_type=jnp.float32)        # (S, Dh)
            # accumulate this head's slice of the output projection directly
            contrib = jnp.dot(ho, wo_ref[idx], preferred_element_type=jnp.float32)
            attn = contrib if attn is None else attn + contrib
        x = x + attn + bo_ref[l]                   # dropout == identity

        # ---- feed-forward (pre-norm) ----
        h2 = _layernorm(x, ln2_g_ref[l], ln2_b_ref[l])
        f = jnp.dot(h2, ff1_w_ref[l], preferred_element_type=jnp.float32) + ff1_b_ref[l]
        f = jnp.maximum(f, 0.0)                    # ReLU
        x = x + jnp.dot(f, ff2_w_ref[l], preferred_element_type=jnp.float32) + ff2_b_ref[l]

    # ---- final LayerNorm + Flatten + Linear(embed_size*S -> 1) ----
    xn = _layernorm(x, norm_g_ref[...], norm_b_ref[...])
    per_tok = jnp.sum(xn * head_w_ref[...], axis=1, keepdims=True)         # (S, 1)
    total = jnp.sum(per_tok, axis=0, keepdims=True)                        # (1, 1)
    o_ref[0] = total + head_b_ref[...]


# ---------------------------------------------------------------------------
# pallas_call wrapper
# ---------------------------------------------------------------------------
def transformer_pallas(x, w, *, n_layers, n_heads):
    B, S, D = x.shape
    F = w["ff1_w"].shape[-1]
    Dh = D // n_heads

    weight_args = (w["ln1_g"], w["ln1_b"],
                   w["wq"], w["bq"], w["wk"], w["bk"], w["wv"], w["bv"],
                   w["wo"], w["bo"],
                   w["ln2_g"], w["ln2_b"],
                   w["ff1_w"], w["ff1_b"], w["ff2_w"], w["ff2_b"],
                   w["norm_g"], w["norm_b"], w["head_w"], w["head_b"])

    def rep_spec(a):
        nd = a.ndim
        return pl.BlockSpec(a.shape, lambda b, nd=nd: (0,) * nd)

    in_specs = [pl.BlockSpec((1, S, D), lambda b: (b, 0, 0))]
    in_specs += [rep_spec(a) for a in weight_args]

    # advisory cost estimate for XLA's scheduler
    macs_layer = 4 * S * D * D + 2 * S * S * D + 2 * S * D * F
    weight_bytes = int(sum(int(np.prod(a.shape)) * 4 for a in weight_args))
    cost = pl.CostEstimate(
        flops=2 * B * (n_layers * macs_layer + S * D),
        transcendentals=B * n_layers * (n_heads * S * S + 4 * S),
        bytes_accessed=B * S * D * 4 + weight_bytes + B * 4,
    )

    out = pl.pallas_call(
        functools.partial(transformer_kernel, n_layers=n_layers, n_heads=n_heads),
        out_shape=jax.ShapeDtypeStruct((B, 1, 1), jnp.float32),
        grid=(B,),
        in_specs=in_specs,
        out_specs=pl.BlockSpec((1, 1, 1), lambda b: (b, 0, 0)),
        compiler_params=pltpu.CompilerParams(dimension_semantics=("parallel",)),
        cost_estimate=cost,
    )(x, *weight_args)
    return out.reshape(B, 1)


# ---------------------------------------------------------------------------
# Parameters / positional embedding (glue, plain JAX / numpy)
# ---------------------------------------------------------------------------
def positional_embedding(d_model, max_seq_len):
    # Faithful to the (idiosyncratic) PyTorch reference formula.
    pe = np.zeros((max_seq_len, d_model), dtype=np.float32)
    for pos in range(max_seq_len):
        for i in range(0, d_model, 2):
            pe[pos, i] = math.sin(pos / 10000 ** (2 * i / d_model))
            pe[pos, i + 1] = math.cos(pos / 10000 ** (2 * (i + 1) / d_model))
    return jnp.asarray(pe)[None]              # (1, max_seq_len, d_model)


def init_params(key, *, n_code, n_heads, embed_size, inner_ff, n_embeddings, seq_len):
    def nrm(k, shape, scale=0.02):
        return jax.random.normal(k, shape, dtype=jnp.float32) * scale

    keys = jax.random.split(key, 2 + n_code)
    params = {
        "n_heads": n_heads,
        "embeddings": nrm(keys[0], (n_embeddings, embed_size)),
        "pe": positional_embedding(embed_size, seq_len),
    }
    layers = []
    for i in range(n_code):
        lk = jax.random.split(keys[2 + i], 6)
        layers.append({
            "qkv_w": nrm(lk[0], (embed_size, 3 * embed_size)),
            "qkv_b": nrm(lk[1], (3 * embed_size,)),
            "out_w": nrm(lk[2], (embed_size, embed_size)),
            "out_b": jnp.zeros((embed_size,), jnp.float32),
            "ln1_g": jnp.ones((embed_size,), jnp.float32),
            "ln1_b": jnp.zeros((embed_size,), jnp.float32),
            "ln2_g": jnp.ones((embed_size,), jnp.float32),
            "ln2_b": jnp.zeros((embed_size,), jnp.float32),
            "ff1_w": nrm(lk[3], (embed_size, inner_ff)),
            "ff1_b": nrm(lk[4], (inner_ff,)),
            "ff2_w": nrm(lk[5], (inner_ff, embed_size)),
            "ff2_b": jnp.zeros((embed_size,), jnp.float32),
        })
    params["layers"] = layers
    hk = jax.random.split(keys[1], 2)
    params["norm_g"] = jnp.ones((embed_size,), jnp.float32)
    params["norm_b"] = jnp.zeros((embed_size,), jnp.float32)
    params["lin_w"] = nrm(hk[0], (seq_len * embed_size,))     # Linear(embed*23 -> 1)
    params["lin_b"] = nrm(hk[1], (1,))
    return params


def pack_weights(params, seq_len):
    """Host-side re-layout: stack per-layer weights, split Q/K/V/out per head,
    fold the 1/sqrt(Dh) score scale into Wq/bq."""
    layers = params["layers"]
    L = len(layers)
    D = params["embeddings"].shape[1]
    H = params["n_heads"]
    Dh = D // H
    scale = 1.0 / math.sqrt(Dh)

    def stack(f):
        return jnp.stack([f(p) for p in layers], axis=0)

    def split_w(w):        # (D, D) -> (H, D, Dh): head h uses columns h*Dh:(h+1)*Dh
        return w.reshape(D, H, Dh).transpose(1, 0, 2)

    def split_b(b):        # (D,) -> (H, 1, Dh)
        return b.reshape(H, 1, Dh)

    w = {
        "ln1_g": stack(lambda p: p["ln1_g"].reshape(1, D)),
        "ln1_b": stack(lambda p: p["ln1_b"].reshape(1, D)),
        "wq": stack(lambda p: split_w(p["qkv_w"][:, :D]) * scale).reshape(L * H, D, Dh),
        "bq": stack(lambda p: split_b(p["qkv_b"][:D]) * scale).reshape(L * H, 1, Dh),
        "wk": stack(lambda p: split_w(p["qkv_w"][:, D:2 * D])).reshape(L * H, D, Dh),
        "bk": stack(lambda p: split_b(p["qkv_b"][D:2 * D])).reshape(L * H, 1, Dh),
        "wv": stack(lambda p: split_w(p["qkv_w"][:, 2 * D:])).reshape(L * H, D, Dh),
        "bv": stack(lambda p: split_b(p["qkv_b"][2 * D:])).reshape(L * H, 1, Dh),
        "wo": stack(lambda p: p["out_w"].reshape(H, Dh, D)).reshape(L * H, Dh, D),
        "bo": stack(lambda p: p["out_b"].reshape(1, D)),
        "ln2_g": stack(lambda p: p["ln2_g"].reshape(1, D)),
        "ln2_b": stack(lambda p: p["ln2_b"].reshape(1, D)),
        "ff1_w": stack(lambda p: p["ff1_w"]),
        "ff1_b": stack(lambda p: p["ff1_b"].reshape(1, -1)),
        "ff2_w": stack(lambda p: p["ff2_w"]),
        "ff2_b": stack(lambda p: p["ff2_b"].reshape(1, D)),
        "norm_g": params["norm_g"].reshape(1, D),
        "norm_b": params["norm_b"].reshape(1, D),
        "head_w": params["lin_w"].reshape(seq_len, D),   # matches row-major Flatten
        "head_b": params["lin_b"].reshape(1, 1),
    }
    return w


def transformer_forward(tokens, params):
    B, S = tokens.shape
    # TODO(synk): embedding gather + positional-embedding add stay in plain JAX
    # (a tiny gather; no benefit from a Pallas kernel at this size).
    x = params["embeddings"][tokens] + params["pe"][:, :S]
    w = pack_weights(params, S)
    return transformer_pallas(x, w,
                              n_layers=len(params["layers"]),
                              n_heads=params["n_heads"])


# ---------------------------------------------------------------------------
# Pure-JAX reference (mirrors the PyTorch module, eval mode)
# ---------------------------------------------------------------------------
def reference_forward(tokens, params):
    B, S = tokens.shape
    H = params["n_heads"]
    x = params["embeddings"][tokens] + params["pe"][:, :S]
    D = x.shape[-1]
    Dh = D // H
    for p in params["layers"]:
        h = _layernorm(x, p["ln1_g"], p["ln1_b"])
        qkv = h @ p["qkv_w"] + p["qkv_b"]
        q, k, v = qkv[..., :D], qkv[..., D:2 * D], qkv[..., 2 * D:]
        split = lambda t: t.reshape(B, S, H, Dh).transpose(0, 2, 1, 3)
        q, k, v = split(q), split(k), split(v)
        s = (q @ jnp.swapaxes(k, -1, -2)) / math.sqrt(Dh)
        s = jax.nn.softmax(s, axis=-1)
        a = (s @ v).transpose(0, 2, 1, 3).reshape(B, S, D)
        x = x + (a @ p["out_w"] + p["out_b"])
        h = _layernorm(x, p["ln2_g"], p["ln2_b"])
        h = jnp.maximum(h @ p["ff1_w"] + p["ff1_b"], 0.0) @ p["ff2_w"] + p["ff2_b"]
        x = x + h
    x = _layernorm(x, params["norm_g"], params["norm_b"])
    flat = x.reshape(B, -1)
    return flat @ params["lin_w"][:, None] + params["lin_b"]


# ---------------------------------------------------------------------------
if __name__ == "__main__":
    # Small config consistent with the module (seq_len forced to 23 by linear1).
    n_code, n_heads, embed_size, inner_ff = 2, 4, 32, 64
    n_embeddings, seq_len, batch = 100, 23, 2

    key = jax.random.PRNGKey(0)
    pkey, tkey = jax.random.split(key)
    params = init_params(pkey, n_code=n_code, n_heads=n_heads,
                         embed_size=embed_size, inner_ff=inner_ff,
                         n_embeddings=n_embeddings, seq_len=seq_len)
    tokens = jax.random.randint(tkey, (batch, seq_len), 0, n_embeddings, dtype=jnp.int32)

    out = transformer_forward(tokens, params)
    out = jax.block_until_ready(out)

    ref = jax.block_until_ready(reference_forward(tokens, params))
    np.testing.assert_allclose(np.asarray(out), np.asarray(ref), atol=1e-2, rtol=1e-2)

    assert out.shape == (batch, 1)
    print("KERNEL_OK")
</pallas_src>

<mosaic_0001>
module attributes {stable_mosaic.version = 11 : i64} {
  func.func @transformer_kernel(%arg0: i32, %arg1: memref<1x23x32xf32, #tpu.memory_space<vmem>>, %arg2: memref<2x1x32xf32, #tpu.memory_space<vmem>>, %arg3: memref<2x1x32xf32, #tpu.memory_space<vmem>>, %arg4: memref<8x32x8xf32, #tpu.memory_space<vmem>>, %arg5: memref<8x1x8xf32, #tpu.memory_space<vmem>>, %arg6: memref<8x32x8xf32, #tpu.memory_space<vmem>>, %arg7: memref<8x1x8xf32, #tpu.memory_space<vmem>>, %arg8: memref<8x32x8xf32, #tpu.memory_space<vmem>>, %arg9: memref<8x1x8xf32, #tpu.memory_space<vmem>>, %arg10: memref<8x8x32xf32, #tpu.memory_space<vmem>>, %arg11: memref<2x1x32xf32, #tpu.memory_space<vmem>>, %arg12: memref<2x1x32xf32, #tpu.memory_space<vmem>>, %arg13: memref<2x1x32xf32, #tpu.memory_space<vmem>>, %arg14: memref<2x32x64xf32, #tpu.memory_space<vmem>>, %arg15: memref<2x1x64xf32, #tpu.memory_space<vmem>>, %arg16: memref<2x64x32xf32, #tpu.memory_space<vmem>>, %arg17: memref<2x1x32xf32, #tpu.memory_space<vmem>>, %arg18: memref<1x32xf32, #tpu.memory_space<vmem>>, %arg19: memref<1x32xf32, #tpu.memory_space<vmem>>, %arg20: memref<23x32xf32, #tpu.memory_space<vmem>>, %arg21: memref<1x1xf32, #tpu.memory_space<vmem>>, %arg22: memref<1x1x1xf32, #tpu.memory_space<vmem>>) attributes {dimension_semantics = [#tpu.dimension_semantics<parallel>], iteration_bounds = array<i64: 2>, scalar_prefetch = 0 : i64, scratch_operands = 0 : i64, tpu.core_type = #tpu.core_type<tc>, window_params = [{transform_indices = @transform_0, window_bounds = array<i64: 1, 23, 32>}, {pipeline_mode = #tpu.pipeline_mode<synchronous>, transform_indices = @transform_1, window_bounds = array<i64: 2, 1, 32>}, {pipeline_mode = #tpu.pipeline_mode<synchronous>, transform_indices = @transform_2, window_bounds = array<i64: 2, 1, 32>}, {pipeline_mode = #tpu.pipeline_mode<synchronous>, transform_indices = @transform_3, window_bounds = array<i64: 8, 32, 8>}, {pipeline_mode = #tpu.pipeline_mode<synchronous>, transform_indices = @transform_4, window_bounds = array<i64: 8, 1, 8>}, {pipeline_mode = #tpu.pipeline_mode<synchronous>, transform_indices = @transform_5, window_bounds = array<i64: 8, 32, 8>}, {pipeline_mode = #tpu.pipeline_mode<synchronous>, transform_indices = @transform_6, window_bounds = array<i64: 8, 1, 8>}, {pipeline_mode = #tpu.pipeline_mode<synchronous>, transform_indices = @transform_7, window_bounds = array<i64: 8, 32, 8>}, {pipeline_mode = #tpu.pipeline_mode<synchronous>, transform_indices = @transform_8, window_bounds = array<i64: 8, 1, 8>}, {pipeline_mode = #tpu.pipeline_mode<synchronous>, transform_indices = @transform_9, window_bounds = array<i64: 8, 8, 32>}, {pipeline_mode = #tpu.pipeline_mode<synchronous>, transform_indices = @transform_10, window_bounds = array<i64: 2, 1, 32>}, {pipeline_mode = #tpu.pipeline_mode<synchronous>, transform_indices = @transform_11, window_bounds = array<i64: 2, 1, 32>}, {pipeline_mode = #tpu.pipeline_mode<synchronous>, transform_indices = @transform_12, window_bounds = array<i64: 2, 1, 32>}, {pipeline_mode = #tpu.pipeline_mode<synchronous>, transform_indices = @transform_13, window_bounds = array<i64: 2, 32, 64>}, {pipeline_mode = #tpu.pipeline_mode<synchronous>, transform_indices = @transform_14, window_bounds = array<i64: 2, 1, 64>}, {pipeline_mode = #tpu.pipeline_mode<synchronous>, transform_indices = @transform_15, window_bounds = array<i64: 2, 64, 32>}, {pipeline_mode = #tpu.pipeline_mode<synchronous>, transform_indices = @transform_16, window_bounds = array<i64: 2, 1, 32>}, {pipeline_mode = #tpu.pipeline_mode<synchronous>, transform_indices = @transform_17, window_bounds = array<i64: 1, 32>}, {pipeline_mode = #tpu.pipeline_mode<synchronous>, transform_indices = @transform_18, window_bounds = array<i64: 1, 32>}, {pipeline_mode = #tpu.pipeline_mode<synchronous>, transform_indices = @transform_19, window_bounds = array<i64: 23, 32>}, {pipeline_mode = #tpu.pipeline_mode<synchronous>, transform_indices = @transform_20, window_bounds = array<i64: 1, 1>}, {transform_indices = @transform_21, window_bounds = array<i64: 1, 1, 1>}]} {
    %c0 = arith.constant 0 : index
    %c0_0 = arith.constant 0 : index
    %c0_1 = arith.constant 0 : index
    %0 = vector.load %arg1[%c0, %c0_0, %c0_1] : memref<1x23x32xf32, #tpu.memory_space<vmem>>, vector<1x23x32xf32>
    %1 = vector.shape_cast %0 : vector<1x23x32xf32> to vector<23x32xf32>
    %c0_2 = arith.constant 0 : index
    %c0_3 = arith.constant 0 : index
    %c0_4 = arith.constant 0 : index
    %2 = vector.load %arg2[%c0_2, %c0_3, %c0_4] : memref<2x1x32xf32, #tpu.memory_space<vmem>>, vector<1x1x32xf32>
    %3 = vector.shape_cast %2 : vector<1x1x32xf32> to vector<1x32xf32>
    %c0_5 = arith.constant 0 : index
    %c0_6 = arith.constant 0 : index
    %c0_7 = arith.constant 0 : index
    %4 = vector.load %arg3[%c0_5, %c0_6, %c0_7] : memref<2x1x32xf32, #tpu.memory_space<vmem>>, vector<1x1x32xf32>
    %5 = vector.shape_cast %4 : vector<1x1x32xf32> to vector<1x32xf32>
    %cst = arith.constant dense<0.000000e+00> : vector<23xf32>
    %6 = vector.multi_reduction <add>, %1, %cst [1] : vector<23x32xf32> to vector<23xf32>
    %7 = vector.shape_cast %6 : vector<23xf32> to vector<23x1xf32>
    %cst_8 = arith.constant 3.200000e+01 : f32
    %8 = vector.broadcast %cst_8 : f32 to vector<23x1xf32>
    %9 = arith.divf %7, %8 : vector<23x1xf32>
    %10 = vector.broadcast %9 : vector<23x1xf32> to vector<23x32xf32>
    %11 = arith.subf %1, %10 : vector<23x32xf32>
    %12 = arith.mulf %11, %11 : vector<23x32xf32>
    %cst_9 = arith.constant dense<0.000000e+00> : vector<23xf32>
    %13 = vector.multi_reduction <add>, %12, %cst_9 [1] : vector<23x32xf32> to vector<23xf32>
    %14 = vector.shape_cast %13 : vector<23xf32> to vector<23x1xf32>
    %cst_10 = arith.constant 3.200000e+01 : f32
    %15 = vector.broadcast %cst_10 : f32 to vector<23x1xf32>
    %16 = arith.divf %14, %15 : vector<23x1xf32>
    %17 = vector.broadcast %9 : vector<23x1xf32> to vector<23x32xf32>
    %18 = arith.subf %1, %17 : vector<23x32xf32>
    %cst_11 = arith.constant 9.99999974E-6 : f32
    %19 = vector.broadcast %cst_11 : f32 to vector<23x1xf32>
    %20 = arith.addf %16, %19 : vector<23x1xf32>
    %21 = math.rsqrt %20 : vector<23x1xf32>
    %22 = vector.broadcast %21 : vector<23x1xf32> to vector<23x32xf32>
    %23 = arith.mulf %18, %22 : vector<23x32xf32>
    %24 = vector.broadcast %3 : vector<1x32xf32> to vector<23x32xf32>
    %25 = arith.mulf %23, %24 : vector<23x32xf32>
    %26 = vector.broadcast %5 : vector<1x32xf32> to vector<23x32xf32>
    %27 = arith.addf %25, %26 : vector<23x32xf32>
    %c0_12 = arith.constant 0 : index
    %c0_13 = arith.constant 0 : index
    %c0_14 = arith.constant 0 : index
    %28 = vector.load %arg4[%c0_12, %c0_13, %c0_14] : memref<8x32x8xf32, #tpu.memory_space<vmem>>, vector<1x32x8xf32>
    %29 = vector.shape_cast %28 : vector<1x32x8xf32> to vector<32x8xf32>
    %cst_15 = arith.constant dense<0.000000e+00> : vector<23x8xf32>
    %30 = tpu.matmul %27, %29, %cst_15 {dimension_numbers = #tpu.dot_dimension_numbers<[1], [0], [0], [1], [0, 0, 1, 1], [], []>} : vector<23x32xf32>, vector<32x8xf32>, vector<23x8xf32> -> vector<23x8xf32>
    %c0_16 = arith.constant 0 : index
    %c0_17 = arith.constant 0 : index
    %c0_18 = arith.constant 0 : index
    %31 = vector.load %arg5[%c0_16, %c0_17, %c0_18] : memref<8x1x8xf32, #tpu.memory_space<vmem>>, vector<1x1x8xf32>
    %32 = vector.shape_cast %31 : vector<1x1x8xf32> to vector<1x8xf32>
    %33 = vector.broadcast %32 : vector<1x8xf32> to vector<23x8xf32>
    %34 = arith.addf %30, %33 : vector<23x8xf32>
    %c0_19 = arith.constant 0 : index
    %c0_20 = arith.constant 0 : index
    %c0_21 = arith.constant 0 : index
    %35 = vector.load %arg6[%c0_19, %c0_20, %c0_21] : memref<8x32x8xf32, #tpu.memory_space<vmem>>, vector<1x32x8xf32>
    %36 = vector.shape_cast %35 : vector<1x32x8xf32> to vector<32x8xf32>
    %cst_22 = arith.constant dense<0.000000e+00> : vector<23x8xf32>
    %37 = tpu.matmul %27, %36, %cst_22 {dimension_numbers = #tpu.dot_dimension_numbers<[1], [0], [0], [1], [0, 0, 1, 1], [], []>} : vector<23x32xf32>, vector<32x8xf32>, vector<23x8xf32> -> vector<23x8xf32>
    %c0_23 = arith.constant 0 : index
    %c0_24 = arith.constant 0 : index
    %c0_25 = arith.constant 0 : index
    %38 = vector.load %arg7[%c0_23, %c0_24, %c0_25] : memref<8x1x8xf32, #tpu.memory_space<vmem>>, vector<1x1x8xf32>
    %39 = vector.shape_cast %38 : vector<1x1x8xf32> to vector<1x8xf32>
    %40 = vector.broadcast %39 : vector<1x8xf32> to vector<23x8xf32>
    %41 = arith.addf %37, %40 : vector<23x8xf32>
    %c0_26 = arith.constant 0 : index
    %c0_27 = arith.constant 0 : index
    %c0_28 = arith.constant 0 : index
    %42 = vector.load %arg8[%c0_26, %c0_27, %c0_28] : memref<8x32x8xf32, #tpu.memory_space<vmem>>, vector<1x32x8xf32>
    %43 = vector.shape_cast %42 : vector<1x32x8xf32> to vector<32x8xf32>
    %cst_29 = arith.constant dense<0.000000e+00> : vector<23x8xf32>
    %44 = tpu.matmul %27, %43, %cst_29 {dimension_numbers = #tpu.dot_dimension_numbers<[1], [0], [0], [1], [0, 0, 1, 1], [], []>} : vector<23x32xf32>, vector<32x8xf32>, vector<23x8xf32> -> vector<23x8xf32>
    %c0_30 = arith.constant 0 : index
    %c0_31 = arith.constant 0 : index
    %c0_32 = arith.constant 0 : index
    %45 = vector.load %arg9[%c0_30, %c0_31, %c0_32] : memref<8x1x8xf32, #tpu.memory_space<vmem>>, vector<1x1x8xf32>
    %46 = vector.shape_cast %45 : vector<1x1x8xf32> to vector<1x8xf32>
    %47 = vector.broadcast %46 : vector<1x8xf32> to vector<23x8xf32>
    %48 = arith.addf %44, %47 : vector<23x8xf32>
    %cst_33 = arith.constant dense<0.000000e+00> : vector<23x23xf32>
    %49 = tpu.matmul %34, %41, %cst_33 {dimension_numbers = #tpu.dot_dimension_numbers<[1], [1], [0], [0], [0, 0, 1, 0], [], []>} : vector<23x8xf32>, vector<23x8xf32>, vector<23x23xf32> -> vector<23x23xf32>
    %cst_34 = arith.constant dense<0xFF800000> : vector<23xf32>
    %50 = vector.multi_reduction <maximumf>, %49, %cst_34 [1] : vector<23x23xf32> to vector<23xf32>
    %51 = vector.shape_cast %50 : vector<23xf32> to vector<23x1xf32>
    %52 = vector.broadcast %51 : vector<23x1xf32> to vector<23x23xf32>
    %53 = arith.subf %49, %52 : vector<23x23xf32>
    %54 = math.exp %53 : vector<23x23xf32>
    %cst_35 = arith.constant dense<0.000000e+00> : vector<23xf32>
    %55 = vector.multi_reduction <add>, %54, %cst_35 [1] : vector<23x23xf32> to vector<23xf32>
    %56 = vector.shape_cast %55 : vector<23xf32> to vector<23x1xf32>
    %57 = tpu.reciprocal %56 {approx = true} : vector<23x1xf32> -> vector<23x1xf32>
    %58 = vector.broadcast %57 : vector<23x1xf32> to vector<23x23xf32>
    %59 = arith.mulf %54, %58 : vector<23x23xf32>
    %cst_36 = arith.constant dense<0.000000e+00> : vector<23x8xf32>
    %60 = tpu.matmul %59, %48, %cst_36 {dimension_numbers = #tpu.dot_dimension_numbers<[1], [0], [0], [1], [0, 0, 1, 1], [], []>} : vector<23x23xf32>, vector<23x8xf32>, vector<23x8xf32> -> vector<23x8xf32>
    %c0_37 = arith.constant 0 : index
    %c0_38 = arith.constant 0 : index
    %c0_39 = arith.constant 0 : index
    %61 = vector.load %arg10[%c0_37, %c0_38, %c0_39] : memref<8x8x32xf32, #tpu.memory_space<vmem>>, vector<1x8x32xf32>
    %62 = vector.shape_cast %61 : vector<1x8x32xf32> to vector<8x32xf32>
    %cst_40 = arith.constant dense<0.000000e+00> : vector<23x32xf32>
    %63 = tpu.matmul %60, %62, %cst_40 {dimension_numbers = #tpu.dot_dimension_numbers<[1], [0], [0], [1], [0, 0, 1, 1], [], []>} : vector<23x8xf32>, vector<8x32xf32>, vector<23x32xf32> -> vector<23x32xf32>
    %c1 = arith.constant 1 : index
    %c0_41 = arith.constant 0 : index
    %c0_42 = arith.constant 0 : index
    %64 = vector.load %arg4[%c1, %c0_41, %c0_42] : memref<8x32x8xf32, #tpu.memory_space<vmem>>, vector<1x32x8xf32>
    %65 = vector.shape_cast %64 : vector<1x32x8xf32> to vector<32x8xf32>
    %cst_43 = arith.constant dense<0.000000e+00> : vector<23x8xf32>
    %66 = tpu.matmul %27, %65, %cst_43 {dimension_numbers = #tpu.dot_dimension_numbers<[1], [0], [0], [1], [0, 0, 1, 1], [], []>} : vector<23x32xf32>, vector<32x8xf32>, vector<23x8xf32> -> vector<23x8xf32>
    %c1_44 = arith.constant 1 : index
    %c0_45 = arith.constant 0 : index
    %c0_46 = arith.constant 0 : index
    %67 = vector.load %arg5[%c1_44, %c0_45, %c0_46] : memref<8x1x8xf32, #tpu.memory_space<vmem>>, vector<1x1x8xf32>
    %68 = vector.shape_cast %67 : vector<1x1x8xf32> to vector<1x8xf32>
    %69 = vector.broadcast %68 : vector<1x8xf32> to vector<23x8xf32>
    %70 = arith.addf %66, %69 : vector<23x8xf32>
    %c1_47 = arith.constant 1 : index
    %c0_48 = arith.constant 0 : index
    %c0_49 = arith.constant 0 : index
    %71 = vector.load %arg6[%c1_47, %c0_48, %c0_49] : memref<8x32x8xf32, #tpu.memory_space<vmem>>, vector<1x32x8xf32>
    %72 = vector.shape_cast %71 : vector<1x32x8xf32> to vector<32x8xf32>
    %cst_50 = arith.constant dense<0.000000e+00> : vector<23x8xf32>
    %73 = tpu.matmul %27, %72, %cst_50 {dimension_numbers = #tpu.dot_dimension_numbers<[1], [0], [0], [1], [0, 0, 1, 1], [], []>} : vector<23x32xf32>, vector<32x8xf32>, vector<23x8xf32> -> vector<23x8xf32>
    %c1_51 = arith.constant 1 : index
    %c0_52 = arith.constant 0 : index
    %c0_53 = arith.constant 0 : index
    %74 = vector.load %arg7[%c1_51, %c0_52, %c0_53] : memref<8x1x8xf32, #tpu.memory_space<vmem>>, vector<1x1x8xf32>
    %75 = vector.shape_cast %74 : vector<1x1x8xf32> to vector<1x8xf32>
    %76 = vector.broadcast %75 : vector<1x8xf32> to vector<23x8xf32>
    %77 = arith.addf %73, %76 : vector<23x8xf32>
    %c1_54 = arith.constant 1 : index
    %c0_55 = arith.constant 0 : index
    %c0_56 = arith.constant 0 : index
    %78 = vector.load %arg8[%c1_54, %c0_55, %c0_56] : memref<8x32x8xf32, #tpu.memory_space<vmem>>, vector<1x32x8xf32>
    %79 = vector.shape_cast %78 : vector<1x32x8xf32> to vector<32x8xf32>
    %cst_57 = arith.constant dense<0.000000e+00> : vector<23x8xf32>
    %80 = tpu.matmul %27, %79, %cst_57 {dimension_numbers = #tpu.dot_dimension_numbers<[1], [0], [0], [1], [0, 0, 1, 1], [], []>} : vector<23x32xf32>, vector<32x8xf32>, vector<23x8xf32> -> vector<23x8xf32>
    %c1_58 = arith.constant 1 : index
    %c0_59 = arith.constant 0 : index
    %c0_60 = arith.constant 0 : index
    %81 = vector.load %arg9[%c1_58, %c0_59, %c0_60] : memref<8x1x8xf32, #tpu.memory_space<vmem>>, vector<1x1x8xf32>
    %82 = vector.shape_cast %81 : vector<1x1x8xf32> to vector<1x8xf32>
    %83 = vector.broadcast %82 : vector<1x8xf32> to vector<23x8xf32>
    %84 = arith.addf %80, %83 : vector<23x8xf32>
    %cst_61 = arith.constant dense<0.000000e+00> : vector<23x23xf32>
    %85 = tpu.matmul %70, %77, %cst_61 {dimension_numbers = #tpu.dot_dimension_numbers<[1], [1], [0], [0], [0, 0, 1, 0], [], []>} : vector<23x8xf32>, vector<23x8xf32>, vector<23x23xf32> -> vector<23x23xf32>
    %cst_62 = arith.constant dense<0xFF800000> : vector<23xf32>
    %86 = vector.multi_reduction <maximumf>, %85, %cst_62 [1] : vector<23x23xf32> to vector<23xf32>
    %87 = vector.shape_cast %86 : vector<23xf32> to vector<23x1xf32>
    %88 = vector.broadcast %87 : vector<23x1xf32> to vector<23x23xf32>
    %89 = arith.subf %85, %88 : vector<23x23xf32>
    %90 = math.exp %89 : vector<23x23xf32>
    %cst_63 = arith.constant dense<0.000000e+00> : vector<23xf32>
    %91 = vector.multi_reduction <add>, %90, %cst_63 [1] : vector<23x23xf32> to vector<23xf32>
    %92 = vector.shape_cast %91 : vector<23xf32> to vector<23x1xf32>
    %93 = tpu.reciprocal %92 {approx = true} : vector<23x1xf32> -> vector<23x1xf32>
    %94 = vector.broadcast %93 : vector<23x1xf32> to vector<23x23xf32>
    %95 = arith.mulf %90, %94 : vector<23x23xf32>
    %cst_64 = arith.constant dense<0.000000e+00> : vector<23x8xf32>
    %96 = tpu.matmul %95, %84, %cst_64 {dimension_numbers = #tpu.dot_dimension_numbers<[1], [0], [0], [1], [0, 0, 1, 1], [], []>} : vector<23x23xf32>, vector<23x8xf32>, vector<23x8xf32> -> vector<23x8xf32>
    %c1_65 = arith.constant 1 : index
    %c0_66 = arith.constant 0 : index
    %c0_67 = arith.constant 0 : index
    %97 = vector.load %arg10[%c1_65, %c0_66, %c0_67] : memref<8x8x32xf32, #tpu.memory_space<vmem>>, vector<1x8x32xf32>
    %98 = vector.shape_cast %97 : vector<1x8x32xf32> to vector<8x32xf32>
    %cst_68 = arith.constant dense<0.000000e+00> : vector<23x32xf32>
    %99 = tpu.matmul %96, %98, %cst_68 {dimension_numbers = #tpu.dot_dimension_numbers<[1], [0], [0], [1], [0, 0, 1, 1], [], []>} : vector<23x8xf32>, vector<8x32xf32>, vector<23x32xf32> -> vector<23x32xf32>
    %100 = arith.addf %63, %99 : vector<23x32xf32>
    %c2 = arith.constant 2 : index
    %c0_69 = arith.constant 0 : index
    %c0_70 = arith.constant 0 : index
    %101 = vector.load %arg4[%c2, %c0_69, %c0_70] : memref<8x32x8xf32, #tpu.memory_space<vmem>>, vector<1x32x8xf32>
    %102 = vector.shape_cast %101 : vector<1x32x8xf32> to vector<32x8xf32>
    %cst_71 = arith.constant dense<0.000000e+00> : vector<23x8xf32>
    %103 = tpu.matmul %27, %102, %cst_71 {dimension_numbers = #tpu.dot_dimension_numbers<[1], [0], [0], [1], [0, 0, 1, 1], [], []>} : vector<23x32xf32>, vector<32x8xf32>, vector<23x8xf32> -> vector<23x8xf32>
    %c2_72 = arith.constant 2 : index
    %c0_73 = arith.constant 0 : index
    %c0_74 = arith.constant 0 : index
    %104 = vector.load %arg5[%c2_72, %c0_73, %c0_74] : memref<8x1x8xf32, #tpu.memory_space<vmem>>, vector<1x1x8xf32>
    %105 = vector.shape_cast %104 : vector<1x1x8xf32> to vector<1x8xf32>
    %106 = vector.broadcast %105 : vector<1x8xf32> to vector<23x8xf32>
    %107 = arith.addf %103, %106 : vector<23x8xf32>
    %c2_75 = arith.constant 2 : index
    %c0_76 = arith.constant 0 : index
    %c0_77 = arith.constant 0 : index
    %108 = vector.load %arg6[%c2_75, %c0_76, %c0_77] : memref<8x32x8xf32, #tpu.memory_space<vmem>>, vector<1x32x8xf32>
    %109 = vector.shape_cast %108 : vector<1x32x8xf32> to vector<32x8xf32>
    %cst_78 = arith.constant dense<0.000000e+00> : vector<23x8xf32>
    %110 = tpu.matmul %27, %109, %cst_78 {dimension_numbers = #tpu.dot_dimension_numbers<[1], [0], [0], [1], [0, 0, 1, 1], [], []>} : vector<23x32xf32>, vector<32x8xf32>, vector<23x8xf32> -> vector<23x8xf32>
    %c2_79 = arith.constant 2 : index
    %c0_80 = arith.constant 0 : index
    %c0_81 = arith.constant 0 : index
    %111 = vector.load %arg7[%c2_79, %c0_80, %c0_81] : memref<8x1x8xf32, #tpu.memory_space<vmem>>, vector<1x1x8xf32>
    %112 = vector.shape_cast %111 : vector<1x1x8xf32> to vector<1x8xf32>
    %113 = vector.broadcast %112 : vector<1x8xf32> to vector<23x8xf32>
    %114 = arith.addf %110, %113 : vector<23x8xf32>
    %c2_82 = arith.constant 2 : index
    %c0_83 = arith.constant 0 : index
    %c0_84 = arith.constant 0 : index
    %115 = vector.load %arg8[%c2_82, %c0_83, %c0_84] : memref<8x32x8xf32, #tpu.memory_space<vmem>>, vector<1x32x8xf32>
    %116 = vector.shape_cast %115 : vector<1x32x8xf32> to vector<32x8xf32>
    %cst_85 = arith.constant dense<0.000000e+00> : vector<23x8xf32>
    %117 = tpu.matmul %27, %116, %cst_85 {dimension_numbers = #tpu.dot_dimension_numbers<[1], [0], [0], [1], [0, 0, 1, 1], [], []>} : vector<23x32xf32>, vector<32x8xf32>, vector<23x8xf32> -> vector<23x8xf32>
    %c2_86 = arith.constant 2 : index
    %c0_87 = arith.constant 0 : index
    %c0_88 = arith.constant 0 : index
    %118 = vector.load %arg9[%c2_86, %c0_87, %c0_88] : memref<8x1x8xf32, #tpu.memory_space<vmem>>, vector<1x1x8xf32>
    %119 = vector.shape_cast %118 : vector<1x1x8xf32> to vector<1x8xf32>
    %120 = vector.broadcast %119 : vector<1x8xf32> to vector<23x8xf32>
    %121 = arith.addf %117, %120 : vector<23x8xf32>
    %cst_89 = arith.constant dense<0.000000e+00> : vector<23x23xf32>
    %122 = tpu.matmul %107, %114, %cst_89 {dimension_numbers = #tpu.dot_dimension_numbers<[1], [1], [0], [0], [0, 0, 1, 0], [], []>} : vector<23x8xf32>, vector<23x8xf32>, vector<23x23xf32> -> vector<23x23xf32>
    %cst_90 = arith.constant dense<0xFF800000> : vector<23xf32>
    %123 = vector.multi_reduction <maximumf>, %122, %cst_90 [1] : vector<23x23xf32> to vector<23xf32>
    %124 = vector.shape_cast %123 : vector<23xf32> to vector<23x1xf32>
    %125 = vector.broadcast %124 : vector<23x1xf32> to vector<23x23xf32>
    %126 = arith.subf %122, %125 : vector<23x23xf32>
    %127 = math.exp %126 : vector<23x23xf32>
    %cst_91 = arith.constant dense<0.000000e+00> : vector<23xf32>
    %128 = vector.multi_reduction <add>, %127, %cst_91 [1] : vector<23x23xf32> to vector<23xf32>
    %129 = vector.shape_cast %128 : vector<23xf32> to vector<23x1xf32>
    %130 = tpu.reciprocal %129 {approx = true} : vector<23x1xf32> -> vector<23x1xf32>
    %131 = vector.broadcast %130 : vector<23x1xf32> to vector<23x23xf32>
    %132 = arith.mulf %127, %131 : vector<23x23xf32>
    %cst_92 = arith.constant dense<0.000000e+00> : vector<23x8xf32>
    %133 = tpu.matmul %132, %121, %cst_92 {dimension_numbers = #tpu.dot_dimension_numbers<[1], [0], [0], [1], [0, 0, 1, 1], [], []>} : vector<23x23xf32>, vector<23x8xf32>, vector<23x8xf32> -> vector<23x8xf32>
    %c2_93 = arith.constant 2 : index
    %c0_94 = arith.constant 0 : index
    %c0_95 = arith.constant 0 : index
    %134 = vector.load %arg10[%c2_93, %c0_94, %c0_95] : memref<8x8x32xf32, #tpu.memory_space<vmem>>, vector<1x8x32xf32>
    %135 = vector.shape_cast %134 : vector<1x8x32xf32> to vector<8x32xf32>
    %cst_96 = arith.constant dense<0.000000e+00> : vector<23x32xf32>
    %136 = tpu.matmul %133, %135, %cst_96 {dimension_numbers = #tpu.dot_dimension_numbers<[1], [0], [0], [1], [0, 0, 1, 1], [], []>} : vector<23x8xf32>, vector<8x32xf32>, vector<23x32xf32> -> vector<23x32xf32>
    %137 = arith.addf %100, %136 : vector<23x32xf32>
    %c3 = arith.constant 3 : index
    %c0_97 = arith.constant 0 : index
    %c0_98 = arith.constant 0 : index
    %138 = vector.load %arg4[%c3, %c0_97, %c0_98] : memref<8x32x8xf32, #tpu.memory_space<vmem>>, vector<1x32x8xf32>
    %139 = vector.shape_cast %138 : vector<1x32x8xf32> to vector<32x8xf32>
    %cst_99 = arith.constant dense<0.000000e+00> : vector<23x8xf32>
    %140 = tpu.matmul %27, %139, %cst_99 {dimension_numbers = #tpu.dot_dimension_numbers<[1], [0], [0], [1], [0, 0, 1, 1], [], []>} : vector<23x32xf32>, vector<32x8xf32>, vector<23x8xf32> -> vector<23x8xf32>
    %c3_100 = arith.constant 3 : index
    %c0_101 = arith.constant 0 : index
    %c0_102 = arith.constant 0 : index
    %141 = vector.load %arg5[%c3_100, %c0_101, %c0_102] : memref<8x1x8xf32, #tpu.memory_space<vmem>>, vector<1x1x8xf32>
    %142 = vector.shape_cast %141 : vector<1x1x8xf32> to vector<1x8xf32>
    %143 = vector.broadcast %142 : vector<1x8xf32> to vector<23x8xf32>
    %144 = arith.addf %140, %143 : vector<23x8xf32>
    %c3_103 = arith.constant 3 : index
    %c0_104 = arith.constant 0 : index
    %c0_105 = arith.constant 0 : index
    %145 = vector.load %arg6[%c3_103, %c0_104, %c0_105] : memref<8x32x8xf32, #tpu.memory_space<vmem>>, vector<1x32x8xf32>
    %146 = vector.shape_cast %145 : vector<1x32x8xf32> to vector<32x8xf32>
    %cst_106 = arith.constant dense<0.000000e+00> : vector<23x8xf32>
    %147 = tpu.matmul %27, %146, %cst_106 {dimension_numbers = #tpu.dot_dimension_numbers<[1], [0], [0], [1], [0, 0, 1, 1], [], []>} : vector<23x32xf32>, vector<32x8xf32>, vector<23x8xf32> -> vector<23x8xf32>
    %c3_107 = arith.constant 3 : index
    %c0_108 = arith.constant 0 : index
    %c0_109 = arith.constant 0 : index
    %148 = vector.load %arg7[%c3_107, %c0_108, %c0_109] : memref<8x1x8xf32, #tpu.memory_space<vmem>>, vector<1x1x8xf32>
    %149 = vector.shape_cast %148 : vector<1x1x8xf32> to vector<1x8xf32>
    %150 = vector.broadcast %149 : vector<1x8xf32> to vector<23x8xf32>
    %151 = arith.addf %147, %150 : vector<23x8xf32>
    %c3_110 = arith.constant 3 : index
    %c0_111 = arith.constant 0 : index
    %c0_112 = arith.constant 0 : index
    %152 = vector.load %arg8[%c3_110, %c0_111, %c0_112] : memref<8x32x8xf32, #tpu.memory_space<vmem>>, vector<1x32x8xf32>
    %153 = vector.shape_cast %152 : vector<1x32x8xf32> to vector<32x8xf32>
    %cst_113 = arith.constant dense<0.000000e+00> : vector<23x8xf32>
    %154 = tpu.matmul %27, %153, %cst_113 {dimension_numbers = #tpu.dot_dimension_numbers<[1], [0], [0], [1], [0, 0, 1, 1], [], []>} : vector<23x32xf32>, vector<32x8xf32>, vector<23x8xf32> -> vector<23x8xf32>
    %c3_114 = arith.constant 3 : index
    %c0_115 = arith.constant 0 : index
    %c0_116 = arith.constant 0 : index
    %155 = vector.load %arg9[%c3_114, %c0_115, %c0_116] : memref<8x1x8xf32, #tpu.memory_space<vmem>>, vector<1x1x8xf32>
    %156 = vector.shape_cast %155 : vector<1x1x8xf32> to vector<1x8xf32>
    %157 = vector.broadcast %156 : vector<1x8xf32> to vector<23x8xf32>
    %158 = arith.addf %154, %157 : vector<23x8xf32>
    %cst_117 = arith.constant dense<0.000000e+00> : vector<23x23xf32>
    %159 = tpu.matmul %144, %151, %cst_117 {dimension_numbers = #tpu.dot_dimension_numbers<[1], [1], [0], [0], [0, 0, 1, 0], [], []>} : vector<23x8xf32>, vector<23x8xf32>, vector<23x23xf32> -> vector<23x23xf32>
    %cst_118 = arith.constant dense<0xFF800000> : vector<23xf32>
    %160 = vector.multi_reduction <maximumf>, %159, %cst_118 [1] : vector<23x23xf32> to vector<23xf32>
    %161 = vector.shape_cast %160 : vector<23xf32> to vector<23x1xf32>
    %162 = vector.broadcast %161 : vector<23x1xf32> to vector<23x23xf32>
    %163 = arith.subf %159, %162 : vector<23x23xf32>
    %164 = math.exp %163 : vector<23x23xf32>
    %cst_119 = arith.constant dense<0.000000e+00> : vector<23xf32>
    %165 = vector.multi_reduction <add>, %164, %cst_119 [1] : vector<23x23xf32> to vector<23xf32>
    %166 = vector.shape_cast %165 : vector<23xf32> to vector<23x1xf32>
    %167 = tpu.reciprocal %166 {approx = true} : vector<23x1xf32> -> vector<23x1xf32>
    %168 = vector.broadcast %167 : vector<23x1xf32> to vector<23x23xf32>
    %169 = arith.mulf %164, %168 : vector<23x23xf32>
    %cst_120 = arith.constant dense<0.000000e+00> : vector<23x8xf32>
    %170 = tpu.matmul %169, %158, %cst_120 {dimension_numbers = #tpu.dot_dimension_numbers<[1], [0], [0], [1], [0, 0, 1, 1], [], []>} : vector<23x23xf32>, vector<23x8xf32>, vector<23x8xf32> -> vector<23x8xf32>
    %c3_121 = arith.constant 3 : index
    %c0_122 = arith.constant 0 : index
    %c0_123 = arith.constant 0 : index
    %171 = vector.load %arg10[%c3_121, %c0_122, %c0_123] : memref<8x8x32xf32, #tpu.memory_space<vmem>>, vector<1x8x32xf32>
    %172 = vector.shape_cast %171 : vector<1x8x32xf32> to vector<8x32xf32>
    %cst_124 = arith.constant dense<0.000000e+00> : vector<23x32xf32>
    %173 = tpu.matmul %170, %172, %cst_124 {dimension_numbers = #tpu.dot_dimension_numbers<[1], [0], [0], [1], [0, 0, 1, 1], [], []>} : vector<23x8xf32>, vector<8x32xf32>, vector<23x32xf32> -> vector<23x32xf32>
    %174 = arith.addf %137, %173 : vector<23x32xf32>
    %175 = arith.addf %1, %174 : vector<23x32xf32>
    %c0_125 = arith.constant 0 : index
    %c0_126 = arith.constant 0 : index
    %c0_127 = arith.constant 0 : index
    %176 = vector.load %arg11[%c0_125, %c0_126, %c0_127] : memref<2x1x32xf32, #tpu.memory_space<vmem>>, vector<1x1x32xf32>
    %177 = vector.shape_cast %176 : vector<1x1x32xf32> to vector<1x32xf32>
    %178 = vector.broadcast %177 : vector<1x32xf32> to vector<23x32xf32>
    %179 = arith.addf %175, %178 : vector<23x32xf32>
    %c0_128 = arith.constant 0 : index
    %c0_129 = arith.constant 0 : index
    %c0_130 = arith.constant 0 : index
    %180 = vector.load %arg12[%c0_128, %c0_129, %c0_130] : memref<2x1x32xf32, #tpu.memory_space<vmem>>, vector<1x1x32xf32>
    %181 = vector.shape_cast %180 : vector<1x1x32xf32> to vector<1x32xf32>
    %c0_131 = arith.constant 0 : index
    %c0_132 = arith.constant 0 : index
    %c0_133 = arith.constant 0 : index
    %182 = vector.load %arg13[%c0_131, %c0_132, %c0_133] : memref<2x1x32xf32, #tpu.memory_space<vmem>>, vector<1x1x32xf32>
    %183 = vector.shape_cast %182 : vector<1x1x32xf32> to vector<1x32xf32>
    %cst_134 = arith.constant dense<0.000000e+00> : vector<23xf32>
    %184 = vector.multi_reduction <add>, %179, %cst_134 [1] : vector<23x32xf32> to vector<23xf32>
    %185 = vector.shape_cast %184 : vector<23xf32> to vector<23x1xf32>
    %cst_135 = arith.constant 3.200000e+01 : f32
    %186 = vector.broadcast %cst_135 : f32 to vector<23x1xf32>
    %187 = arith.divf %185, %186 : vector<23x1xf32>
    %188 = vector.broadcast %187 : vector<23x1xf32> to vector<23x32xf32>
    %189 = arith.subf %179, %188 : vector<23x32xf32>
    %190 = arith.mulf %189, %189 : vector<23x32xf32>
    %cst_136 = arith.constant dense<0.000000e+00> : vector<23xf32>
    %191 = vector.multi_reduction <add>, %190, %cst_136 [1] : vector<23x32xf32> to vector<23xf32>
    %192 = vector.shape_cast %191 : vector<23xf32> to vector<23x1xf32>
    %cst_137 = arith.constant 3.200000e+01 : f32
    %193 = vector.broadcast %cst_137 : f32 to vector<23x1xf32>
    %194 = arith.divf %192, %193 : vector<23x1xf32>
    %195 = vector.broadcast %187 : vector<23x1xf32> to vector<23x32xf32>
    %196 = arith.subf %179, %195 : vector<23x32xf32>
    %cst_138 = arith.constant 9.99999974E-6 : f32
    %197 = vector.broadcast %cst_138 : f32 to vector<23x1xf32>
    %198 = arith.addf %194, %197 : vector<23x1xf32>
    %199 = math.rsqrt %198 : vector<23x1xf32>
    %200 = vector.broadcast %199 : vector<23x1xf32> to vector<23x32xf32>
    %201 = arith.mulf %196, %200 : vector<23x32xf32>
    %202 = vector.broadcast %181 : vector<1x32xf32> to vector<23x32xf32>
    %203 = arith.mulf %201, %202 : vector<23x32xf32>
    %204 = vector.broadcast %183 : vector<1x32xf32> to vector<23x32xf32>
    %205 = arith.addf %203, %204 : vector<23x32xf32>
    %c0_139 = arith.constant 0 : index
    %c0_140 = arith.constant 0 : index
    %c0_141 = arith.constant 0 : index
    %206 = vector.load %arg14[%c0_139, %c0_140, %c0_141] : memref<2x32x64xf32, #tpu.memory_space<vmem>>, vector<1x32x64xf32>
    %207 = vector.shape_cast %206 : vector<1x32x64xf32> to vector<32x64xf32>
    %cst_142 = arith.constant dense<0.000000e+00> : vector<23x64xf32>
    %208 = tpu.matmul %205, %207, %cst_142 {dimension_numbers = #tpu.dot_dimension_numbers<[1], [0], [0], [1], [0, 0, 1, 1], [], []>} : vector<23x32xf32>, vector<32x64xf32>, vector<23x64xf32> -> vector<23x64xf32>
    %c0_143 = arith.constant 0 : index
    %c0_144 = arith.constant 0 : index
    %c0_145 = arith.constant 0 : index
    %209 = vector.load %arg15[%c0_143, %c0_144, %c0_145] : memref<2x1x64xf32, #tpu.memory_space<vmem>>, vector<1x1x64xf32>
    %210 = vector.shape_cast %209 : vector<1x1x64xf32> to vector<1x64xf32>
    %211 = vector.broadcast %210 : vector<1x64xf32> to vector<23x64xf32>
    %212 = arith.addf %208, %211 : vector<23x64xf32>
    %cst_146 = arith.constant 0.000000e+00 : f32
    %213 = vector.broadcast %cst_146 : f32 to vector<23x64xf32>
    %214 = arith.maximumf %212, %213 : vector<23x64xf32>
    %c0_147 = arith.constant 0 : index
    %c0_148 = arith.constant 0 : index
    %c0_149 = arith.constant 0 : index
    %215 = vector.load %arg16[%c0_147, %c0_148, %c0_149] : memref<2x64x32xf32, #tpu.memory_space<vmem>>, vector<1x64x32xf32>
    %216 = vector.shape_cast %215 : vector<1x64x32xf32> to vector<64x32xf32>
    %cst_150 = arith.constant dense<0.000000e+00> : vector<23x32xf32>
    %217 = tpu.matmul %214, %216, %cst_150 {dimension_numbers = #tpu.dot_dimension_numbers<[1], [0], [0], [1], [0, 0, 1, 1], [], []>} : vector<23x64xf32>, vector<64x32xf32>, vector<23x32xf32> -> vector<23x32xf32>
    %218 = arith.addf %179, %217 : vector<23x32xf32>
    %c0_151 = arith.constant 0 : index
    %c0_152 = arith.constant 0 : index
    %c0_153 = arith.constant 0 : index
    %219 = vector.load %arg17[%c0_151, %c0_152, %c0_153] : memref<2x1x32xf32, #tpu.memory_space<vmem>>, vector<1x1x32xf32>
    %220 = vector.shape_cast %219 : vector<1x1x32xf32> to vector<1x32xf32>
    %221 = vector.broadcast %220 : vector<1x32xf32> to vector<23x32xf32>
    %222 = arith.addf %218, %221 : vector<23x32xf32>
    %c1_154 = arith.constant 1 : index
    %c0_155 = arith.constant 0 : index
    %c0_156 = arith.constant 0 : index
    %223 = vector.load %arg2[%c1_154, %c0_155, %c0_156] : memref<2x1x32xf32, #tpu.memory_space<vmem>>, vector<1x1x32xf32>
    %224 = vector.shape_cast %223 : vector<1x1x32xf32> to vector<1x32xf32>
    %c1_157 = arith.constant 1 : index
    %c0_158 = arith.constant 0 : index
    %c0_159 = arith.constant 0 : index
    %225 = vector.load %arg3[%c1_157, %c0_158, %c0_159] : memref<2x1x32xf32, #tpu.memory_space<vmem>>, vector<1x1x32xf32>
    %226 = vector.shape_cast %225 : vector<1x1x32xf32> to vector<1x32xf32>
    %cst_160 = arith.constant dense<0.000000e+00> : vector<23xf32>
    %227 = vector.multi_reduction <add>, %222, %cst_160 [1] : vector<23x32xf32> to vector<23xf32>
    %228 = vector.shape_cast %227 : vector<23xf32> to vector<23x1xf32>
    %cst_161 = arith.constant 3.200000e+01 : f32
    %229 = vector.broadcast %cst_161 : f32 to vector<23x1xf32>
    %230 = arith.divf %228, %229 : vector<23x1xf32>
    %231 = vector.broadcast %230 : vector<23x1xf32> to vector<23x32xf32>
    %232 = arith.subf %222, %231 : vector<23x32xf32>
    %233 = arith.mulf %232, %232 : vector<23x32xf32>
    %cst_162 = arith.constant dense<0.000000e+00> : vector<23xf32>
    %234 = vector.multi_reduction <add>, %233, %cst_162 [1] : vector<23x32xf32> to vector<23xf32>
    %235 = vector.shape_cast %234 : vector<23xf32> to vector<23x1xf32>
    %cst_163 = arith.constant 3.200000e+01 : f32
    %236 = vector.broadcast %cst_163 : f32 to vector<23x1xf32>
    %237 = arith.divf %235, %236 : vector<23x1xf32>
    %238 = vector.broadcast %230 : vector<23x1xf32> to vector<23x32xf32>
    %239 = arith.subf %222, %238 : vector<23x32xf32>
    %cst_164 = arith.constant 9.99999974E-6 : f32
    %240 = vector.broadcast %cst_164 : f32 to vector<23x1xf32>
    %241 = arith.addf %237, %240 : vector<23x1xf32>
    %242 = math.rsqrt %241 : vector<23x1xf32>
    %243 = vector.broadcast %242 : vector<23x1xf32> to vector<23x32xf32>
    %244 = arith.mulf %239, %243 : vector<23x32xf32>
    %245 = vector.broadcast %224 : vector<1x32xf32> to vector<23x32xf32>
    %246 = arith.mulf %244, %245 : vector<23x32xf32>
    %247 = vector.broadcast %226 : vector<1x32xf32> to vector<23x32xf32>
    %248 = arith.addf %246, %247 : vector<23x32xf32>
    %c4 = arith.constant 4 : index
    %c0_165 = arith.constant 0 : index
    %c0_166 = arith.constant 0 : index
    %249 = vector.load %arg4[%c4, %c0_165, %c0_166] : memref<8x32x8xf32, #tpu.memory_space<vmem>>, vector<1x32x8xf32>
    %250 = vector.shape_cast %249 : vector<1x32x8xf32> to vector<32x8xf32>
    %cst_167 = arith.constant dense<0.000000e+00> : vector<23x8xf32>
    %251 = tpu.matmul %248, %250, %cst_167 {dimension_numbers = #tpu.dot_dimension_numbers<[1], [0], [0], [1], [0, 0, 1, 1], [], []>} : vector<23x32xf32>, vector<32x8xf32>, vector<23x8xf32> -> vector<23x8xf32>
    %c4_168 = arith.constant 4 : index
    %c0_169 = arith.constant 0 : index
    %c0_170 = arith.constant 0 : index
    %252 = vector.load %arg5[%c4_168, %c0_169, %c0_170] : memref<8x1x8xf32, #tpu.memory_space<vmem>>, vector<1x1x8xf32>
    %253 = vector.shape_cast %252 : vector<1x1x8xf32> to vector<1x8xf32>
    %254 = vector.broadcast %253 : vector<1x8xf32> to vector<23x8xf32>
    %255 = arith.addf %251, %254 : vector<23x8xf32>
    %c4_171 = arith.constant 4 : index
    %c0_172 = arith.constant 0 : index
    %c0_173 = arith.constant 0 : index
    %256 = vector.load %arg6[%c4_171, %c0_172, %c0_173] : memref<8x32x8xf32, #tpu.memory_space<vmem>>, vector<1x32x8xf32>
    %257 = vector.shape_cast %256 : vector<1x32x8xf32> to vector<32x8xf32>
    %cst_174 = arith.constant dense<0.000000e+00> : vector<23x8xf32>
    %258 = tpu.matmul %248, %257, %cst_174 {dimension_numbers = #tpu.dot_dimension_numbers<[1], [0], [0], [1], [0, 0, 1, 1], [], []>} : vector<23x32xf32>, vector<32x8xf32>, vector<23x8xf32> -> vector<23x8xf32>
    %c4_175 = arith.constant 4 : index
    %c0_176 = arith.constant 0 : index
    %c0_177 = arith.constant 0 : index
    %259 = vector.load %arg7[%c4_175, %c0_176, %c0_177] : memref<8x1x8xf32, #tpu.memory_space<vmem>>, vector<1x1x8xf32>
    %260 = vector.shape_cast %259 : vector<1x1x8xf32> to vector<1x8xf32>
    %261 = vector.broadcast %260 : vector<1x8xf32> to vector<23x8xf32>
    %262 = arith.addf %258, %261 : vector<23x8xf32>
    %c4_178 = arith.constant 4 : index
    %c0_179 = arith.constant 0 : index
    %c0_180 = arith.constant 0 : index
    %263 = vector.load %arg8[%c4_178, %c0_179, %c0_180] : memref<8x32x8xf32, #tpu.memory_space<vmem>>, vector<1x32x8xf32>
    %264 = vector.shape_cast %263 : vector<1x32x8xf32> to vector<32x8xf32>
    %cst_181 = arith.constant dense<0.000000e+00> : vector<23x8xf32>
    %265 = tpu.matmul %248, %264, %cst_181 {dimension_numbers = #tpu.dot_dimension_numbers<[1], [0], [0], [1], [0, 0, 1, 1], [], []>} : vector<23x32xf32>, vector<32x8xf32>, vector<23x8xf32> -> vector<23x8xf32>
    %c4_182 = arith.constant 4 : index
    %c0_183 = arith.constant 0 : index
    %c0_184 = arith.constant 0 : index
    %266 = vector.load %arg9[%c4_182, %c0_183, %c0_184] : memref<8x1x8xf32, #tpu.memory_space<vmem>>, vector<1x1x8xf32>
    %267 = vector.shape_cast %266 : vector<1x1x8xf32> to vector<1x8xf32>
    %268 = vector.broadcast %267 : vector<1x8xf32> to vector<23x8xf32>
    %269 = arith.addf %265, %268 : vector<23x8xf32>
    %cst_185 = arith.constant dense<0.000000e+00> : vector<23x23xf32>
    %270 = tpu.matmul %255, %262, %cst_185 {dimension_numbers = #tpu.dot_dimension_numbers<[1], [1], [0], [0], [0, 0, 1, 0], [], []>} : vector<23x8xf32>, vector<23x8xf32>, vector<23x23xf32> -> vector<23x23xf32>
    %cst_186 = arith.constant dense<0xFF800000> : vector<23xf32>
    %271 = vector.multi_reduction <maximumf>, %270, %cst_186 [1] : vector<23x23xf32> to vector<23xf32>
    %272 = vector.shape_cast %271 : vector<23xf32> to vector<23x1xf32>
    %273 = vector.broadcast %272 : vector<23x1xf32> to vector<23x23xf32>
    %274 = arith.subf %270, %273 : vector<23x23xf32>
    %275 = math.exp %274 : vector<23x23xf32>
    %cst_187 = arith.constant dense<0.000000e+00> : vector<23xf32>
    %276 = vector.multi_reduction <add>, %275, %cst_187 [1] : vector<23x23xf32> to vector<23xf32>
    %277 = vector.shape_cast %276 : vector<23xf32> to vector<23x1xf32>
    %278 = tpu.reciprocal %277 {approx = true} : vector<23x1xf32> -> vector<23x1xf32>
    %279 = vector.broadcast %278 : vector<23x1xf32> to vector<23x23xf32>
    %280 = arith.mulf %275, %279 : vector<23x23xf32>
    %cst_188 = arith.constant dense<0.000000e+00> : vector<23x8xf32>
    %281 = tpu.matmul %280, %269, %cst_188 {dimension_numbers = #tpu.dot_dimension_numbers<[1], [0], [0], [1], [0, 0, 1, 1], [], []>} : vector<23x23xf32>, vector<23x8xf32>, vector<23x8xf32> -> vector<23x8xf32>
    %c4_189 = arith.constant 4 : index
    %c0_190 = arith.constant 0 : index
    %c0_191 = arith.constant 0 : index
    %282 = vector.load %arg10[%c4_189, %c0_190, %c0_191] : memref<8x8x32xf32, #tpu.memory_space<vmem>>, vector<1x8x32xf32>
    %283 = vector.shape_cast %282 : vector<1x8x32xf32> to vector<8x32xf32>
    %cst_192 = arith.constant dense<0.000000e+00> : vector<23x32xf32>
    %284 = tpu.matmul %281, %283, %cst_192 {dimension_numbers = #tpu.dot_dimension_numbers<[1], [0], [0], [1], [0, 0, 1, 1], [], []>} : vector<23x8xf32>, vector<8x32xf32>, vector<23x32xf32> -> vector<23x32xf32>
    %c5 = arith.constant 5 : index
    %c0_193 = arith.constant 0 : index
    %c0_194 = arith.constant 0 : index
    %285 = vector.load %arg4[%c5, %c0_193, %c0_194] : memref<8x32x8xf32, #tpu.memory_space<vmem>>, vector<1x32x8xf32>
    %286 = vector.shape_cast %285 : vector<1x32x8xf32> to vector<32x8xf32>
    %cst_195 = arith.constant dense<0.000000e+00> : vector<23x8xf32>
    %287 = tpu.matmul %248, %286, %cst_195 {dimension_numbers = #tpu.dot_dimension_numbers<[1], [0], [0], [1], [0, 0, 1, 1], [], []>} : vector<23x32xf32>, vector<32x8xf32>, vector<23x8xf32> -> vector<23x8xf32>
    %c5_196 = arith.constant 5 : index
    %c0_197 = arith.constant 0 : index
    %c0_198 = arith.constant 0 : index
    %288 = vector.load %arg5[%c5_196, %c0_197, %c0_198] : memref<8x1x8xf32, #tpu.memory_space<vmem>>, vector<1x1x8xf32>
    %289 = vector.shape_cast %288 : vector<1x1x8xf32> to vector<1x8xf32>
    %290 = vector.broadcast %289 : vector<1x8xf32> to vector<23x8xf32>
    %291 = arith.addf %287, %290 : vector<23x8xf32>
    %c5_199 = arith.constant 5 : index
    %c0_200 = arith.constant 0 : index
    %c0_201 = arith.constant 0 : index
    %292 = vector.load %arg6[%c5_199, %c0_200, %c0_201] : memref<8x32x8xf32, #tpu.memory_space<vmem>>, vector<1x32x8xf32>
    %293 = vector.shape_cast %292 : vector<1x32x8xf32> to vector<32x8xf32>
    %cst_202 = arith.constant dense<0.000000e+00> : vector<23x8xf32>
    %294 = tpu.matmul %248, %293, %cst_202 {dimension_numbers = #tpu.dot_dimension_numbers<[1], [0], [0], [1], [0, 0, 1, 1], [], []>} : vector<23x32xf32>, vector<32x8xf32>, vector<23x8xf32> -> vector<23x8xf32>
    %c5_203 = arith.constant 5 : index
    %c0_204 = arith.constant 0 : index
    %c0_205 = arith.constant 0 : index
    %295 = vector.load %arg7[%c5_203, %c0_204, %c0_205] : memref<8x1x8xf32, #tpu.memory_space<vmem>>, vector<1x1x8xf32>
    %296 = vector.shape_cast %295 : vector<1x1x8xf32> to vector<1x8xf32>
    %297 = vector.broadcast %296 : vector<1x8xf32> to vector<23x8xf32>
    %298 = arith.addf %294, %297 : vector<23x8xf32>
    %c5_206 = arith.constant 5 : index
    %c0_207 = arith.constant 0 : index
    %c0_208 = arith.constant 0 : index
    %299 = vector.load %arg8[%c5_206, %c0_207, %c0_208] : memref<8x32x8xf32, #tpu.memory_space<vmem>>, vector<1x32x8xf32>
    %300 = vector.shape_cast %299 : vector<1x32x8xf32> to vector<32x8xf32>
    %cst_209 = arith.constant dense<0.000000e+00> : vector<23x8xf32>
    %301 = tpu.matmul %248, %300, %cst_209 {dimension_numbers = #tpu.dot_dimension_numbers<[1], [0], [0], [1], [0, 0, 1, 1], [], []>} : vector<23x32xf32>, vector<32x8xf32>, vector<23x8xf32> -> vector<23x8xf32>
    %c5_210 = arith.constant 5 : index
    %c0_211 = arith.constant 0 : index
    %c0_212 = arith.constant 0 : index
    %302 = vector.load %arg9[%c5_210, %c0_211, %c0_212] : memref<8x1x8xf32, #tpu.memory_space<vmem>>, vector<1x1x8xf32>
    %303 = vector.shape_cast %302 : vector<1x1x8xf32> to vector<1x8xf32>
    %304 = vector.broadcast %303 : vector<1x8xf32> to vector<23x8xf32>
    %305 = arith.addf %301, %304 : vector<23x8xf32>
    %cst_213 = arith.constant dense<0.000000e+00> : vector<23x23xf32>
    %306 = tpu.matmul %291, %298, %cst_213 {dimension_numbers = #tpu.dot_dimension_numbers<[1], [1], [0], [0], [0, 0, 1, 0], [], []>} : vector<23x8xf32>, vector<23x8xf32>, vector<23x23xf32> -> vector<23x23xf32>
    %cst_214 = arith.constant dense<0xFF800000> : vector<23xf32>
    %307 = vector.multi_reduction <maximumf>, %306, %cst_214 [1] : vector<23x23xf32> to vector<23xf32>
    %308 = vector.shape_cast %307 : vector<23xf32> to vector<23x1xf32>
    %309 = vector.broadcast %308 : vector<23x1xf32> to vector<23x23xf32>
    %310 = arith.subf %306, %309 : vector<23x23xf32>
    %311 = math.exp %310 : vector<23x23xf32>
    %cst_215 = arith.constant dense<0.000000e+00> : vector<23xf32>
    %312 = vector.multi_reduction <add>, %311, %cst_215 [1] : vector<23x23xf32> to vector<23xf32>
    %313 = vector.shape_cast %312 : vector<23xf32> to vector<23x1xf32>
    %314 = tpu.reciprocal %313 {approx = true} : vector<23x1xf32> -> vector<23x1xf32>
    %315 = vector.broadcast %314 : vector<23x1xf32> to vector<23x23xf32>
    %316 = arith.mulf %311, %315 : vector<23x23xf32>
    %cst_216 = arith.constant dense<0.000000e+00> : vector<23x8xf32>
    %317 = tpu.matmul %316, %305, %cst_216 {dimension_numbers = #tpu.dot_dimension_numbers<[1], [0], [0], [1], [0, 0, 1, 1], [], []>} : vector<23x23xf32>, vector<23x8xf32>, vector<23x8xf32> -> vector<23x8xf32>
    %c5_217 = arith.constant 5 : index
    %c0_218 = arith.constant 0 : index
    %c0_219 = arith.constant 0 : index
    %318 = vector.load %arg10[%c5_217, %c0_218, %c0_219] : memref<8x8x32xf32, #tpu.memory_space<vmem>>, vector<1x8x32xf32>
    %319 = vector.shape_cast %318 : vector<1x8x32xf32> to vector<8x32xf32>
    %cst_220 = arith.constant dense<0.000000e+00> : vector<23x32xf32>
    %320 = tpu.matmul %317, %319, %cst_220 {dimension_numbers = #tpu.dot_dimension_numbers<[1], [0], [0], [1], [0, 0, 1, 1], [], []>} : vector<23x8xf32>, vector<8x32xf32>, vector<23x32xf32> -> vector<23x32xf32>
    %321 = arith.addf %284, %320 : vector<23x32xf32>
    %c6 = arith.constant 6 : index
    %c0_221 = arith.constant 0 : index
    %c0_222 = arith.constant 0 : index
    %322 = vector.load %arg4[%c6, %c0_221, %c0_222] : memref<8x32x8xf32, #tpu.memory_space<vmem>>, vector<1x32x8xf32>
    %323 = vector.shape_cast %322 : vector<1x32x8xf32> to vector<32x8xf32>
    %cst_223 = arith.constant dense<0.000000e+00> : vector<23x8xf32>
    %324 = tpu.matmul %248, %323, %cst_223 {dimension_numbers = #tpu.dot_dimension_numbers<[1], [0], [0], [1], [0, 0, 1, 1], [], []>} : vector<23x32xf32>, vector<32x8xf32>, vector<23x8xf32> -> vector<23x8xf32>
    %c6_224 = arith.constant 6 : index
    %c0_225 = arith.constant 0 : index
    %c0_226 = arith.constant 0 : index
    %325 = vector.load %arg5[%c6_224, %c0_225, %c0_226] : memref<8x1x8xf32, #tpu.memory_space<vmem>>, vector<1x1x8xf32>
    %326 = vector.shape_cast %325 : vector<1x1x8xf32> to vector<1x8xf32>
    %327 = vector.broadcast %326 : vector<1x8xf32> to vector<23x8xf32>
    %328 = arith.addf %324, %327 : vector<23x8xf32>
    %c6_227 = arith.constant 6 : index
    %c0_228 = arith.constant 0 : index
    %c0_229 = arith.constant 0 : index
    %329 = vector.load %arg6[%c6_227, %c0_228, %c0_229] : memref<8x32x8xf32, #tpu.memory_space<vmem>>, vector<1x32x8xf32>
    %330 = vector.shape_cast %329 : vector<1x32x8xf32> to vector<32x8xf32>
    %cst_230 = arith.constant dense<0.000000e+00> : vector<23x8xf32>
    %331 = tpu.matmul %248, %330, %cst_230 {dimension_numbers = #tpu.dot_dimension_numbers<[1], [0], [0], [1], [0, 0, 1, 1], [], []>} : vector<23x32xf32>, vector<32x8xf32>, vector<23x8xf32> -> vector<23x8xf32>
    %c6_231 = arith.constant 6 : index
    %c0_232 = arith.constant 0 : index
    %c0_233 = arith.constant 0 : index
    %332 = vector.load %arg7[%c6_231, %c0_232, %c0_233] : memref<8x1x8xf32, #tpu.memory_space<vmem>>, vector<1x1x8xf32>
    %333 = vector.shape_cast %332 : vector<1x1x8xf32> to vector<1x8xf32>
    %334 = vector.broadcast %333 : vector<1x8xf32> to vector<23x8xf32>
    %335 = arith.addf %331, %334 : vector<23x8xf32>
    %c6_234 = arith.constant 6 : index
    %c0_235 = arith.constant 0 : index
    %c0_236 = arith.constant 0 : index
    %336 = vector.load %arg8[%c6_234, %c0_235, %c0_236] : memref<8x32x8xf32, #tpu.memory_space<vmem>>, vector<1x32x8xf32>
    %337 = vector.shape_cast %336 : vector<1x32x8xf32> to vector<32x8xf32>
    %cst_237 = arith.constant dense<0.000000e+00> : vector<23x8xf32>
    %338 = tpu.matmul %248, %337, %cst_237 {dimension_numbers = #tpu.dot_dimension_numbers<[1], [0], [0], [1], [0, 0, 1, 1], [], []>} : vector<23x32xf32>, vector<32x8xf32>, vector<23x8xf32> -> vector<23x8xf32>
    %c6_238 = arith.constant 6 : index
    %c0_239 = arith.constant 0 : index
    %c0_240 = arith.constant 0 : index
    %339 = vector.load %arg9[%c6_238, %c0_239, %c0_240] : memref<8x1x8xf32, #tpu.memory_space<vmem>>, vector<1x1x8xf32>
    %340 = vector.shape_cast %339 : vector<1x1x8xf32> to vector<1x8xf32>
    %341 = vector.broadcast %340 : vector<1x8xf32> to vector<23x8xf32>
    %342 = arith.addf %338, %341 : vector<23x8xf32>
    %cst_241 = arith.constant dense<0.000000e+00> : vector<23x23xf32>
    %343 = tpu.matmul %328, %335, %cst_241 {dimension_numbers = #tpu.dot_dimension_numbers<[1], [1], [0], [0], [0, 0, 1, 0], [], []>} : vector<23x8xf32>, vector<23x8xf32>, vector<23x23xf32> -> vector<23x23xf32>
    %cst_242 = arith.constant dense<0xFF800000> : vector<23xf32>
    %344 = vector.multi_reduction <maximumf>, %343, %cst_242 [1] : vector<23x23xf32> to vector<23xf32>
    %345 = vector.shape_cast %344 : vector<23xf32> to vector<23x1xf32>
    %346 = vector.broadcast %345 : vector<23x1xf32> to vector<23x23xf32>
    %347 = arith.subf %343, %346 : vector<23x23xf32>
    %348 = math.exp %347 : vector<23x23xf32>
    %cst_243 = arith.constant dense<0.000000e+00> : vector<23xf32>
    %349 = vector.multi_reduction <add>, %348, %cst_243 [1] : vector<23x23xf32> to vector<23xf32>
    %350 = vector.shape_cast %349 : vector<23xf32> to vector<23x1xf32>
    %351 = tpu.reciprocal %350 {approx = true} : vector<23x1xf32> -> vector<23x1xf32>
    %352 = vector.broadcast %351 : vector<23x1xf32> to vector<23x23xf32>
    %353 = arith.mulf %348, %352 : vector<23x23xf32>
    %cst_244 = arith.constant dense<0.000000e+00> : vector<23x8xf32>
    %354 = tpu.matmul %353, %342, %cst_244 {dimension_numbers = #tpu.dot_dimension_numbers<[1], [0], [0], [1], [0, 0, 1, 1], [], []>} : vector<23x23xf32>, vector<23x8xf32>, vector<23x8xf32> -> vector<23x8xf32>
    %c6_245 = arith.constant 6 : index
    %c0_246 = arith.constant 0 : index
    %c0_247 = arith.constant 0 : index
    %355 = vector.load %arg10[%c6_245, %c0_246, %c0_247] : memref<8x8x32xf32, #tpu.memory_space<vmem>>, vector<1x8x32xf32>
    %356 = vector.shape_cast %355 : vector<1x8x32xf32> to vector<8x32xf32>
    %cst_248 = arith.constant dense<0.000000e+00> : vector<23x32xf32>
    %357 = tpu.matmul %354, %356, %cst_248 {dimension_numbers = #tpu.dot_dimension_numbers<[1], [0], [0], [1], [0, 0, 1, 1], [], []>} : vector<23x8xf32>, vector<8x32xf32>, vector<23x32xf32> -> vector<23x32xf32>
    %358 = arith.addf %321, %357 : vector<23x32xf32>
    %c7 = arith.constant 7 : index
    %c0_249 = arith.constant 0 : index
    %c0_250 = arith.constant 0 : index
    %359 = vector.load %arg4[%c7, %c0_249, %c0_250] : memref<8x32x8xf32, #tpu.memory_space<vmem>>, vector<1x32x8xf32>
    %360 = vector.shape_cast %359 : vector<1x32x8xf32> to vector<32x8xf32>
    %cst_251 = arith.constant dense<0.000000e+00> : vector<23x8xf32>
    %361 = tpu.matmul %248, %360, %cst_251 {dimension_numbers = #tpu.dot_dimension_numbers<[1], [0], [0], [1], [0, 0, 1, 1], [], []>} : vector<23x32xf32>, vector<32x8xf32>, vector<23x8xf32> -> vector<23x8xf32>
    %c7_252 = arith.constant 7 : index
    %c0_253 = arith.constant 0 : index
    %c0_254 = arith.constant 0 : index
    %362 = vector.load %arg5[%c7_252, %c0_253, %c0_254] : memref<8x1x8xf32, #tpu.memory_space<vmem>>, vector<1x1x8xf32>
    %363 = vector.shape_cast %362 : vector<1x1x8xf32> to vector<1x8xf32>
    %364 = vector.broadcast %363 : vector<1x8xf32> to vector<23x8xf32>
    %365 = arith.addf %361, %364 : vector<23x8xf32>
    %c7_255 = arith.constant 7 : index
    %c0_256 = arith.constant 0 : index
    %c0_257 = arith.constant 0 : index
    %366 = vector.load %arg6[%c7_255, %c0_256, %c0_257] : memref<8x32x8xf32, #tpu.memory_space<vmem>>, vector<1x32x8xf32>
    %367 = vector.shape_cast %366 : vector<1x32x8xf32> to vector<32x8xf32>
    %cst_258 = arith.constant dense<0.000000e+00> : vector<23x8xf32>
    %368 = tpu.matmul %248, %367, %cst_258 {dimension_numbers = #tpu.dot_dimension_numbers<[1], [0], [0], [1], [0, 0, 1, 1], [], []>} : vector<23x32xf32>, vector<32x8xf32>, vector<23x8xf32> -> vector<23x8xf32>
    %c7_259 = arith.constant 7 : index
    %c0_260 = arith.constant 0 : index
    %c0_261 = arith.constant 0 : index
    %369 = vector.load %arg7[%c7_259, %c0_260, %c0_261] : memref<8x1x8xf32, #tpu.memory_space<vmem>>, vector<1x1x8xf32>
    %370 = vector.shape_cast %369 : vector<1x1x8xf32> to vector<1x8xf32>
    %371 = vector.broadcast %370 : vector<1x8xf32> to vector<23x8xf32>
    %372 = arith.addf %368, %371 : vector<23x8xf32>
    %c7_262 = arith.constant 7 : index
    %c0_263 = arith.constant 0 : index
    %c0_264 = arith.constant 0 : index
    %373 = vector.load %arg8[%c7_262, %c0_263, %c0_264] : memref<8x32x8xf32, #tpu.memory_space<vmem>>, vector<1x32x8xf32>
    %374 = vector.shape_cast %373 : vector<1x32x8xf32> to vector<32x8xf32>
    %cst_265 = arith.constant dense<0.000000e+00> : vector<23x8xf32>
    %375 = tpu.matmul %248, %374, %cst_265 {dimension_numbers = #tpu.dot_dimension_numbers<[1], [0], [0], [1], [0, 0, 1, 1], [], []>} : vector<23x32xf32>, vector<32x8xf32>, vector<23x8xf32> -> vector<23x8xf32>
    %c7_266 = arith.constant 7 : index
    %c0_267 = arith.constant 0 : index
    %c0_268 = arith.constant 0 : index
    %376 = vector.load %arg9[%c7_266, %c0_267, %c0_268] : memref<8x1x8xf32, #tpu.memory_space<vmem>>, vector<1x1x8xf32>
    %377 = vector.shape_cast %376 : vector<1x1x8xf32> to vector<1x8xf32>
    %378 = vector.broadcast %377 : vector<1x8xf32> to vector<23x8xf32>
    %379 = arith.addf %375, %378 : vector<23x8xf32>
    %cst_269 = arith.constant dense<0.000000e+00> : vector<23x23xf32>
    %380 = tpu.matmul %365, %372, %cst_269 {dimension_numbers = #tpu.dot_dimension_numbers<[1], [1], [0], [0], [0, 0, 1, 0], [], []>} : vector<23x8xf32>, vector<23x8xf32>, vector<23x23xf32> -> vector<23x23xf32>
    %cst_270 = arith.constant dense<0xFF800000> : vector<23xf32>
    %381 = vector.multi_reduction <maximumf>, %380, %cst_270 [1] : vector<23x23xf32> to vector<23xf32>
    %382 = vector.shape_cast %381 : vector<23xf32> to vector<23x1xf32>
    %383 = vector.broadcast %382 : vector<23x1xf32> to vector<23x23xf32>
    %384 = arith.subf %380, %383 : vector<23x23xf32>
    %385 = math.exp %384 : vector<23x23xf32>
    %cst_271 = arith.constant dense<0.000000e+00> : vector<23xf32>
    %386 = vector.multi_reduction <add>, %385, %cst_271 [1] : vector<23x23xf32> to vector<23xf32>
    %387 = vector.shape_cast %386 : vector<23xf32> to vector<23x1xf32>
    %388 = tpu.reciprocal %387 {approx = true} : vector<23x1xf32> -> vector<23x1xf32>
    %389 = vector.broadcast %388 : vector<23x1xf32> to vector<23x23xf32>
    %390 = arith.mulf %385, %389 : vector<23x23xf32>
    %cst_272 = arith.constant dense<0.000000e+00> : vector<23x8xf32>
    %391 = tpu.matmul %390, %379, %cst_272 {dimension_numbers = #tpu.dot_dimension_numbers<[1], [0], [0], [1], [0, 0, 1, 1], [], []>} : vector<23x23xf32>, vector<23x8xf32>, vector<23x8xf32> -> vector<23x8xf32>
    %c7_273 = arith.constant 7 : index
    %c0_274 = arith.constant 0 : index
    %c0_275 = arith.constant 0 : index
    %392 = vector.load %arg10[%c7_273, %c0_274, %c0_275] : memref<8x8x32xf32, #tpu.memory_space<vmem>>, vector<1x8x32xf32>
    %393 = vector.shape_cast %392 : vector<1x8x32xf32> to vector<8x32xf32>
    %cst_276 = arith.constant dense<0.000000e+00> : vector<23x32xf32>
    %394 = tpu.matmul %391, %393, %cst_276 {dimension_numbers = #tpu.dot_dimension_numbers<[1], [0], [0], [1], [0, 0, 1, 1], [], []>} : vector<23x8xf32>, vector<8x32xf32>, vector<23x32xf32> -> vector<23x32xf32>
    %395 = arith.addf %358, %394 : vector<23x32xf32>
    %396 = arith.addf %222, %395 : vector<23x32xf32>
    %c1_277 = arith.constant 1 : index
    %c0_278 = arith.constant 0 : index
    %c0_279 = arith.constant 0 : index
    %397 = vector.load %arg11[%c1_277, %c0_278, %c0_279] : memref<2x1x32xf32, #tpu.memory_space<vmem>>, vector<1x1x32xf32>
    %398 = vector.shape_cast %397 : vector<1x1x32xf32> to vector<1x32xf32>
    %399 = vector.broadcast %398 : vector<1x32xf32> to vector<23x32xf32>
    %400 = arith.addf %396, %399 : vector<23x32xf32>
    %c1_280 = arith.constant 1 : index
    %c0_281 = arith.constant 0 : index
    %c0_282 = arith.constant 0 : index
    %401 = vector.load %arg12[%c1_280, %c0_281, %c0_282] : memref<2x1x32xf32, #tpu.memory_space<vmem>>, vector<1x1x32xf32>
    %402 = vector.shape_cast %401 : vector<1x1x32xf32> to vector<1x32xf32>
    %c1_283 = arith.constant 1 : index
    %c0_284 = arith.constant 0 : index
    %c0_285 = arith.constant 0 : index
    %403 = vector.load %arg13[%c1_283, %c0_284, %c0_285] : memref<2x1x32xf32, #tpu.memory_space<vmem>>, vector<1x1x32xf32>
    %404 = vector.shape_cast %403 : vector<1x1x32xf32> to vector<1x32xf32>
    %cst_286 = arith.constant dense<0.000000e+00> : vector<23xf32>
    %405 = vector.multi_reduction <add>, %400, %cst_286 [1] : vector<23x32xf32> to vector<23xf32>
    %406 = vector.shape_cast %405 : vector<23xf32> to vector<23x1xf32>
    %cst_287 = arith.constant 3.200000e+01 : f32
    %407 = vector.broadcast %cst_287 : f32 to vector<23x1xf32>
    %408 = arith.divf %406, %407 : vector<23x1xf32>
    %409 = vector.broadcast %408 : vector<23x1xf32> to vector<23x32xf32>
    %410 = arith.subf %400, %409 : vector<23x32xf32>
    %411 = arith.mulf %410, %410 : vector<23x32xf32>
    %cst_288 = arith.constant dense<0.000000e+00> : vector<23xf32>
    %412 = vector.multi_reduction <add>, %411, %cst_288 [1] : vector<23x32xf32> to vector<23xf32>
    %413 = vector.shape_cast %412 : vector<23xf32> to vector<23x1xf32>
    %cst_289 = arith.constant 3.200000e+01 : f32
    %414 = vector.broadcast %cst_289 : f32 to vector<23x1xf32>
    %415 = arith.divf %413, %414 : vector<23x1xf32>
    %416 = vector.broadcast %408 : vector<23x1xf32> to vector<23x32xf32>
    %417 = arith.subf %400, %416 : vector<23x32xf32>
    %cst_290 = arith.constant 9.99999974E-6 : f32
    %418 = vector.broadcast %cst_290 : f32 to vector<23x1xf32>
    %419 = arith.addf %415, %418 : vector<23x1xf32>
    %420 = math.rsqrt %419 : vector<23x1xf32>
    %421 = vector.broadcast %420 : vector<23x1xf32> to vector<23x32xf32>
    %422 = arith.mulf %417, %421 : vector<23x32xf32>
    %423 = vector.broadcast %402 : vector<1x32xf32> to vector<23x32xf32>
    %424 = arith.mulf %422, %423 : vector<23x32xf32>
    %425 = vector.broadcast %404 : vector<1x32xf32> to vector<23x32xf32>
    %426 = arith.addf %424, %425 : vector<23x32xf32>
    %c1_291 = arith.constant 1 : index
    %c0_292 = arith.constant 0 : index
    %c0_293 = arith.constant 0 : index
    %427 = vector.load %arg14[%c1_291, %c0_292, %c0_293] : memref<2x32x64xf32, #tpu.memory_space<vmem>>, vector<1x32x64xf32>
    %428 = vector.shape_cast %427 : vector<1x32x64xf32> to vector<32x64xf32>
    %cst_294 = arith.constant dense<0.000000e+00> : vector<23x64xf32>
    %429 = tpu.matmul %426, %428, %cst_294 {dimension_numbers = #tpu.dot_dimension_numbers<[1], [0], [0], [1], [0, 0, 1, 1], [], []>} : vector<23x32xf32>, vector<32x64xf32>, vector<23x64xf32> -> vector<23x64xf32>
    %c1_295 = arith.constant 1 : index
    %c0_296 = arith.constant 0 : index
    %c0_297 = arith.constant 0 : index
    %430 = vector.load %arg15[%c1_295, %c0_296, %c0_297] : memref<2x1x64xf32, #tpu.memory_space<vmem>>, vector<1x1x64xf32>
    %431 = vector.shape_cast %430 : vector<1x1x64xf32> to vector<1x64xf32>
    %432 = vector.broadcast %431 : vector<1x64xf32> to vector<23x64xf32>
    %433 = arith.addf %429, %432 : vector<23x64xf32>
    %cst_298 = arith.constant 0.000000e+00 : f32
    %434 = vector.broadcast %cst_298 : f32 to vector<23x64xf32>
    %435 = arith.maximumf %433, %434 : vector<23x64xf32>
    %c1_299 = arith.constant 1 : index
    %c0_300 = arith.constant 0 : index
    %c0_301 = arith.constant 0 : index
    %436 = vector.load %arg16[%c1_299, %c0_300, %c0_301] : memref<2x64x32xf32, #tpu.memory_space<vmem>>, vector<1x64x32xf32>
    %437 = vector.shape_cast %436 : vector<1x64x32xf32> to vector<64x32xf32>
    %cst_302 = arith.constant dense<0.000000e+00> : vector<23x32xf32>
    %438 = tpu.matmul %435, %437, %cst_302 {dimension_numbers = #tpu.dot_dimension_numbers<[1], [0], [0], [1], [0, 0, 1, 1], [], []>} : vector<23x64xf32>, vector<64x32xf32>, vector<23x32xf32> -> vector<23x32xf32>
    %439 = arith.addf %400, %438 : vector<23x32xf32>
    %c1_303 = arith.constant 1 : index
    %c0_304 = arith.constant 0 : index
    %c0_305 = arith.constant 0 : index
    %440 = vector.load %arg17[%c1_303, %c0_304, %c0_305] : memref<2x1x32xf32, #tpu.memory_space<vmem>>, vector<1x1x32xf32>
    %441 = vector.shape_cast %440 : vector<1x1x32xf32> to vector<1x32xf32>
    %442 = vector.broadcast %441 : vector<1x32xf32> to vector<23x32xf32>
    %443 = arith.addf %439, %442 : vector<23x32xf32>
    %c0_306 = arith.constant 0 : index
    %c0_307 = arith.constant 0 : index
    %444 = vector.load %arg18[%c0_306, %c0_307] : memref<1x32xf32, #tpu.memory_space<vmem>>, vector<1x32xf32>
    %c0_308 = arith.constant 0 : index
    %c0_309 = arith.constant 0 : index
    %445 = vector.load %arg19[%c0_308, %c0_309] : memref<1x32xf32, #tpu.memory_space<vmem>>, vector<1x32xf32>
    %cst_310 = arith.constant dense<0.000000e+00> : vector<23xf32>
    %446 = vector.multi_reduction <add>, %443, %cst_310 [1] : vector<23x32xf32> to vector<23xf32>
    %447 = vector.shape_cast %446 : vector<23xf32> to vector<23x1xf32>
    %cst_311 = arith.constant 3.200000e+01 : f32
    %448 = vector.broadcast %cst_311 : f32 to vector<23x1xf32>
    %449 = arith.divf %447, %448 : vector<23x1xf32>
    %450 = vector.broadcast %449 : vector<23x1xf32> to vector<23x32xf32>
    %451 = arith.subf %443, %450 : vector<23x32xf32>
    %452 = arith.mulf %451, %451 : vector<23x32xf32>
    %cst_312 = arith.constant dense<0.000000e+00> : vector<23xf32>
    %453 = vector.multi_reduction <add>, %452, %cst_312 [1] : vector<23x32xf32> to vector<23xf32>
    %454 = vector.shape_cast %453 : vector<23xf32> to vector<23x1xf32>
    %cst_313 = arith.constant 3.200000e+01 : f32
    %455 = vector.broadcast %cst_313 : f32 to vector<23x1xf32>
    %456 = arith.divf %454, %455 : vector<23x1xf32>
    %457 = vector.broadcast %449 : vector<23x1xf32> to vector<23x32xf32>
    %458 = arith.subf %443, %457 : vector<23x32xf32>
    %cst_314 = arith.constant 9.99999974E-6 : f32
    %459 = vector.broadcast %cst_314 : f32 to vector<23x1xf32>
    %460 = arith.addf %456, %459 : vector<23x1xf32>
    %461 = math.rsqrt %460 : vector<23x1xf32>
    %462 = vector.broadcast %461 : vector<23x1xf32> to vector<23x32xf32>
    %463 = arith.mulf %458, %462 : vector<23x32xf32>
    %464 = vector.broadcast %444 : vector<1x32xf32> to vector<23x32xf32>
    %465 = arith.mulf %463, %464 : vector<23x32xf32>
    %466 = vector.broadcast %445 : vector<1x32xf32> to vector<23x32xf32>
    %467 = arith.addf %465, %466 : vector<23x32xf32>
    %c0_315 = arith.constant 0 : index
    %c0_316 = arith.constant 0 : index
    %468 = vector.load %arg20[%c0_315, %c0_316] : memref<23x32xf32, #tpu.memory_space<vmem>>, vector<23x32xf32>
    %469 = arith.mulf %467, %468 : vector<23x32xf32>
    %cst_317 = arith.constant dense<0.000000e+00> : vector<23xf32>
    %470 = vector.multi_reduction <add>, %469, %cst_317 [1] : vector<23x32xf32> to vector<23xf32>
    %471 = vector.shape_cast %470 : vector<23xf32> to vector<23x1xf32>
    %cst_318 = arith.constant dense<0.000000e+00> : vector<1xf32>
    %472 = vector.multi_reduction <add>, %471, %cst_318 [0] : vector<23x1xf32> to vector<1xf32>
    %473 = vector.shape_cast %472 : vector<1xf32> to vector<1x1xf32>
    %c0_319 = arith.constant 0 : index
    %c0_320 = arith.constant 0 : index
    %474 = vector.load %arg21[%c0_319, %c0_320] : memref<1x1xf32, #tpu.memory_space<vmem>>, vector<1x1xf32>
    %475 = arith.addf %473, %474 : vector<1x1xf32>
    %c0_321 = arith.constant 0 : index
    %c0_322 = arith.constant 0 : index
    %c0_323 = arith.constant 0 : index
    %476 = vector.load %arg22[%c0_321, %c0_322, %c0_323] : memref<1x1x1xf32, #tpu.memory_space<vmem>>, vector<1x1x1xf32>
    %477 = vector.shape_cast %476 : vector<1x1x1xf32> to vector<1x1xf32>
    %478 = vector.shape_cast %475 : vector<1x1xf32> to vector<1x1x1xf32>
    tpu.vector_store %arg22[%c0_321, %c0_322, %c0_323], %478 {strides = array<i32>} : memref<1x1x1xf32, #tpu.memory_space<vmem>>, vector<1x1x1xf32>,
    return
  }
  func.func @transform_0(%arg0: i32) -> (i32, i32, i32) {
    %c0_i32 = arith.constant 0 : i32
    %c0_i32_0 = arith.constant 0 : i32
    %c0_i32_1 = arith.constant 0 : i32
    return %arg0, %c0_i32, %c0_i32_0 : i32, i32, i32
  }
  func.func @transform_1(%arg0: i32) -> (i32, i32, i32) {
    %c0_i32 = arith.constant 0 : i32
    %c0_i32_0 = arith.constant 0 : i32
    %c0_i32_1 = arith.constant 0 : i32
    %c0_i32_2 = arith.constant 0 : i32
    return %c0_i32, %c0_i32_0, %c0_i32_1 : i32, i32, i32
  }
  func.func @transform_2(%arg0: i32) -> (i32, i32, i32) {
    %c0_i32 = arith.constant 0 : i32
    %c0_i32_0 = arith.constant 0 : i32
    %c0_i32_1 = arith.constant 0 : i32
    %c0_i32_2 = arith.constant 0 : i32
    return %c0_i32, %c0_i32_0, %c0_i32_1 : i32, i32, i32
  }
  func.func @transform_3(%arg0: i32) -> (i32, i32, i32) {
    %c0_i32 = arith.constant 0 : i32
    %c0_i32_0 = arith.constant 0 : i32
    %c0_i32_1 = arith.constant 0 : i32
    %c0_i32_2 = arith.constant 0 : i32
    return %c0_i32, %c0_i32_0, %c0_i32_1 : i32, i32, i32
  }
  func.func @transform_4(%arg0: i32) -> (i32, i32, i32) {
    %c0_i32 = arith.constant 0 : i32
    %c0_i32_0 = arith.constant 0 : i32
    %c0_i32_1 = arith.constant 0 : i32
    %c0_i32_2 = arith.constant 0 : i32
    return %c0_i32, %c0_i32_0, %c0_i32_1 : i32, i32, i32
  }
  func.func @transform_5(%arg0: i32) -> (i32, i32, i32) {
    %c0_i32 = arith.constant 0 : i32
    %c0_i32_0 = arith.constant 0 : i32
    %c0_i32_1 = arith.constant 0 : i32
    %c0_i32_2 = arith.constant 0 : i32
    return %c0_i32, %c0_i32_0, %c0_i32_1 : i32, i32, i32
  }
  func.func @transform_6(%arg0: i32) -> (i32, i32, i32) {
    %c0_i32 = arith.constant 0 : i32
    %c0_i32_0 = arith.constant 0 : i32
    %c0_i32_1 = arith.constant 0 : i32
    %c0_i32_2 = arith.constant 0 : i32
    return %c0_i32, %c0_i32_0, %c0_i32_1 : i32, i32, i32
  }
  func.func @transform_7(%arg0: i32) -> (i32, i32, i32) {
    %c0_i32 = arith.constant 0 : i32
    %c0_i32_0 = arith.constant 0 : i32
    %c0_i32_1 = arith.constant 0 : i32
    %c0_i32_2 = arith.constant 0 : i32
    return %c0_i32, %c0_i32_0, %c0_i32_1 : i32, i32, i32
  }
  func.func @transform_8(%arg0: i32) -> (i32, i32, i32) {
    %c0_i32 = arith.constant 0 : i32
    %c0_i32_0 = arith.constant 0 : i32
    %c0_i32_1 = arith.constant 0 : i32
    %c0_i32_2 = arith.constant 0 : i32
    return %c0_i32, %c0_i32_0, %c0_i32_1 : i32, i32, i32
  }
  func.func @transform_9(%arg0: i32) -> (i32, i32, i32) {
    %c0_i32 = arith.constant 0 : i32
    %c0_i32_0 = arith.constant 0 : i32
    %c0_i32_1 = arith.constant 0 : i32
    %c0_i32_2 = arith.constant 0 : i32
    return %c0_i32, %c0_i32_0, %c0_i32_1 : i32, i32, i32
  }
  func.func @transform_10(%arg0: i32) -> (i32, i32, i32) {
    %c0_i32 = arith.constant 0 : i32
    %c0_i32_0 = arith.constant 0 : i32
    %c0_i32_1 = arith.constant 0 : i32
    %c0_i32_2 = arith.constant 0 : i32
    return %c0_i32, %c0_i32_0, %c0_i32_1 : i32, i32, i32
  }
  func.func @transform_11(%arg0: i32) -> (i32, i32, i32) {
    %c0_i32 = arith.constant 0 : i32
    %c0_i32_0 = arith.constant 0 : i32
    %c0_i32_1 = arith.constant 0 : i32
    %c0_i32_2 = arith.constant 0 : i32
    return %c0_i32, %c0_i32_0, %c0_i32_1 : i32, i32, i32
  }
  func.func @transform_12(%arg0: i32) -> (i32, i32, i32) {
    %c0_i32 = arith.constant 0 : i32
    %c0_i32_0 = arith.constant 0 : i32
    %c0_i32_1 = arith.constant 0 : i32
    %c0_i32_2 = arith.constant 0 : i32
    return %c0_i32, %c0_i32_0, %c0_i32_1 : i32, i32, i32
  }
  func.func @transform_13(%arg0: i32) -> (i32, i32, i32) {
    %c0_i32 = arith.constant 0 : i32
    %c0_i32_0 = arith.constant 0 : i32
    %c0_i32_1 = arith.constant 0 : i32
    %c0_i32_2 = arith.constant 0 : i32
    return %c0_i32, %c0_i32_0, %c0_i32_1 : i32, i32, i32
  }
  func.func @transform_14(%arg0: i32) -> (i32, i32, i32) {
    %c0_i32 = arith.constant 0 : i32
    %c0_i32_0 = arith.constant 0 : i32
    %c0_i32_1 = arith.constant 0 : i32
    %c0_i32_2 = arith.constant 0 : i32
    return %c0_i32, %c0_i32_0, %c0_i32_1 : i32, i32, i32
  }
  func.func @transform_15(%arg0: i32) -> (i32, i32, i32) {
    %c0_i32 = arith.constant 0 : i32
    %c0_i32_0 = arith.constant 0 : i32
    %c0_i32_1 = arith.constant 0 : i32
    %c0_i32_2 = arith.constant 0 : i32
    return %c0_i32, %c0_i32_0, %c0_i32_1 : i32, i32, i32
  }
  func.func @transform_16(%arg0: i32) -> (i32, i32, i32) {
    %c0_i32 = arith.constant 0 : i32
    %c0_i32_0 = arith.constant 0 : i32
    %c0_i32_1 = arith.constant 0 : i32
    %c0_i32_2 = arith.constant 0 : i32
    return %c0_i32, %c0_i32_0, %c0_i32_1 : i32, i32, i32
  }
  func.func @transform_17(%arg0: i32) -> (i32, i32) {
    %c0_i32 = arith.constant 0 : i32
    %c0_i32_0 = arith.constant 0 : i32
    %c0_i32_1 = arith.constant 0 : i32
    return %c0_i32, %c0_i32_0 : i32, i32
  }
  func.func @transform_18(%arg0: i32) -> (i32, i32) {
    %c0_i32 = arith.constant 0 : i32
    %c0_i32_0 = arith.constant 0 : i32
    %c0_i32_1 = arith.constant 0 : i32
    return %c0_i32, %c0_i32_0 : i32, i32
  }
  func.func @transform_19(%arg0: i32) -> (i32, i32) {
    %c0_i32 = arith.constant 0 : i32
    %c0_i32_0 = arith.constant 0 : i32
    %c0_i32_1 = arith.constant 0 : i32
    return %c0_i32, %c0_i32_0 : i32, i32
  }
  func.func @transform_20(%arg0: i32) -> (i32, i32) {
    %c0_i32 = arith.constant 0 : i32
    %c0_i32_0 = arith.constant 0 : i32
    %c0_i32_1 = arith.constant 0 : i32
    return %c0_i32, %c0_i32_0 : i32, i32
  }
  func.func @transform_21(%arg0: i32) -> (i32, i32, i32) {
    %c0_i32 = arith.constant 0 : i32
    %c0_i32_0 = arith.constant 0 : i32
    %c0_i32_1 = arith.constant 0 : i32
    return %arg0, %c0_i32, %c0_i32_0 : i32, i32, i32
  }
}

</mosaic_0001>

<llo_original>
// kernel: tpu_custom_call.1
$region0: #{tpu_custom_call.1}
  #allocation0 [shape = 'u32[]', space=smem, size = 0x4, offset = 0x4, fixed_abs, tag = 'smem constant byte address 0x4 - core index']
  #allocation1 [shape = 'u32[144,128]{1,0:T(1,128)}', space=vmem, size = 0x12000, scoped, tag = 'internal scratch']
  #allocation2 [shape = 'f32[1,1]{1,0:T(1,128)S(1)}', space=vmem, size = 0x200, scoped, tag = 'scoped memory for tpu_custom_call.1']
  %s0 = inlined_call_operand.vmem [shape: f32[2,23,32], index: 0, kind: input, shape index: {}]
  %s1 = inlined_call_operand.vmem [shape: f32[2,1,32], index: 1, kind: input, shape index: {}]
  %s2 = inlined_call_operand.vmem [shape: f32[2,1,32], index: 2, kind: input, shape index: {}]
  %s3 = inlined_call_operand.vmem [shape: f32[8,32,8], index: 3, kind: input, shape index: {}]
  %s4 = inlined_call_operand.vmem [shape: f32[8,1,8], index: 4, kind: input, shape index: {}]
  %s5 = inlined_call_operand.vmem [shape: f32[8,32,8], index: 5, kind: input, shape index: {}]
  %s6 = inlined_call_operand.vmem [shape: f32[8,1,8], index: 6, kind: input, shape index: {}]
  %s7 = inlined_call_operand.vmem [shape: f32[8,32,8], index: 7, kind: input, shape index: {}]
  %s8 = inlined_call_operand.vmem [shape: f32[8,1,8], index: 8, kind: input, shape index: {}]
  %s9 = inlined_call_operand.vmem [shape: f32[8,8,32], index: 9, kind: input, shape index: {}]
  %s10 = inlined_call_operand.vmem [shape: f32[2,1,32], index: 10, kind: input, shape index: {}]
  %s11 = inlined_call_operand.vmem [shape: f32[2,1,32], index: 11, kind: input, shape index: {}]
  %s12 = inlined_call_operand.vmem [shape: f32[2,1,32], index: 12, kind: input, shape index: {}]
  %s13 = inlined_call_operand.vmem [shape: f32[2,32,64], index: 13, kind: input, shape index: {}]
  %s14 = inlined_call_operand.vmem [shape: f32[2,1,64], index: 14, kind: input, shape index: {}]
  %s15 = inlined_call_operand.vmem [shape: f32[2,64,32], index: 15, kind: input, shape index: {}]
  %s16 = inlined_call_operand.vmem [shape: f32[2,1,32], index: 16, kind: input, shape index: {}]
  %s17 = inlined_call_operand.vmem [shape: f32[1,32], index: 17, kind: input, shape index: {}]
  %s18 = inlined_call_operand.vmem [shape: f32[1,32], index: 18, kind: input, shape index: {}]
  %s19 = inlined_call_operand.vmem [shape: f32[23,32], index: 19, kind: input, shape index: {}]
  %s20 = inlined_call_operand.<no memory space> [shape: f32[1,1], index: 20, kind: input, shape index: {}]
  %s21 = inlined_call_operand.vmem [shape: f32[2,1,1], index: 21, kind: output, shape index: {}]
  %s22 = sld [smem:[#allocation0]]
  $region117: #{tpu_custom_call.1} parent=0
    _
  %s24 = ssub.s32 1, %s22
  %s25 = scalar_select 0, %s24, %s22
  %v26 = vstv %s20
  %27 = vst [vmem:[#allocation2] sm:$0x1] %v26
  loop: start=0, step=1, limit=4
  $region2: #{tpu_custom_call.1} parent=0 // loop_pre_header
    _
  $region3: #{tpu_custom_call.1} parent=0 // loop_header
    %s29 = sphi 0, %s33
    %p30 = scmp.ge.s32.totalorder %s29, 4
    %s39 = sphi 0, %s41
    %s42 = sphi 0, %s39
    %s43 = sphi 0, %s42
    %s59 = sphi 0, %s43
    %s63 = sphi 0, %s63
    %s65 = sphi 0, %s63
    %s66 = sphi 0, %s65
    %s80 = sphi 0, %s66
    %s84 = sphi 0, %s84
    %s86 = sphi 0, %s84
    %s87 = sphi 0, %s86
    %s101 = sphi 0, %s87
    %s105 = sphi 0, %s105
    %s107 = sphi 0, %s105
    %s108 = sphi 0, %s107
    %s122 = sphi 0, %s108
    %s126 = sphi 0, %s126
    %s128 = sphi 0, %s126
    %s129 = sphi 0, %s128
    %s143 = sphi 0, %s129
    %s147 = sphi 0, %s147
    %s149 = sphi 0, %s147
    %s150 = sphi 0, %s149
    %s164 = sphi 0, %s150
    %s168 = sphi 0, %s168
    %s170 = sphi 0, %s168
    %s171 = sphi 0, %s170
    %s185 = sphi 0, %s171
    %s189 = sphi 0, %s189
    %s191 = sphi 0, %s189
    %s192 = sphi 0, %s191
    %s206 = sphi 0, %s192
    %s210 = sphi 0, %s210
    %s212 = sphi 0, %s210
    %s213 = sphi 0, %s212
    %s227 = sphi 0, %s213
    %s231 = sphi 0, %s231
    %s233 = sphi 0, %s231
    %s234 = sphi 0, %s233
    %s248 = sphi 0, %s234
    %s252 = sphi 0, %s252
    %s254 = sphi 0, %s252
    %s255 = sphi 0, %s254
    %s269 = sphi 0, %s255
    %s273 = sphi 0, %s273
    %s275 = sphi 0, %s273
    %s276 = sphi 0, %s275
    %s290 = sphi 0, %s276
    %s294 = sphi 0, %s294
    %s296 = sphi 0, %s294
    %s297 = sphi 0, %s296
    %s311 = sphi 0, %s297
    %s315 = sphi 0, %s315
    %s317 = sphi 0, %s315
    %s318 = sphi 0, %s317
    %s332 = sphi 0, %s318
    %s336 = sphi 0, %s336
    %s338 = sphi 0, %s336
    %s339 = sphi 0, %s338
    %s353 = sphi 0, %s339
    %s357 = sphi 0, %s357
    %s359 = sphi 0, %s357
    %s360 = sphi 0, %s359
    %s374 = sphi 0, %s360
    %s378 = sphi 0, %s378
    %s380 = sphi 0, %s378
    %s381 = sphi 0, %s380
    %s395 = sphi 0, %s381
    %s399 = sphi 0, %s399
    %s401 = sphi 0, %s399
    %s402 = sphi 0, %s401
    %s416 = sphi 0, %s402
    %s420 = sphi 0, %s420
    %s422 = sphi 0, %s420
    %s423 = sphi 0, %s422
    %s437 = sphi 0, %s423
    %s441 = sphi 0, %s441
    %s443 = sphi 0, %s441
    %s444 = sphi 0, %s443
    %s458 = sphi 0, %s444
    %s462 = sphi 0, %s462
    %s464 = sphi 0, %s462
    %s465 = sphi 0, %s464
    %s479 = sphi 0, %s465
    %s485 = sphi 0, %s487
    %s488 = sphi 0, %s485
    %s489 = sphi 0, %s488
    %s505 = sphi 0, %s489
  $region4: #{tpu_custom_call.1} parent=0 // loop_header_branch
    %32 = sbr.rel (%p30) target = $region8
  $region5: #{tpu_custom_call.1} parent=0 // loop_body
    %s34 = ssub.s32 %s29, 1
    %s35 = ssub.s32 %s29, 2
    %s36 = sadd.s32 %s29, 1
    %s37 = ssub.s32 %s29, %s36
    %p38 = scmp.eq.s32.totalorder %s37, 0
    %s40 = sadd.s32 %s39, 1
    %s41 = scalar_select %p38, %s39, %s40
    %p44 = pneg %p38
    %p45 = scmp.eq.s32.totalorder %s29, 1
    %p46 = por %p44, %p45
    %p47 = scmp.ne.s32.totalorder %s39, %s42
    %p48 = scmp.eq.s32.totalorder %s29, 0
    %p49 = por %p47, %p48
    %p50 = scmp.ne.s32.totalorder %s39, %s42
    %p51 = scmp.eq.s32.totalorder %s34, 1
    %p52 = por %p50, %p51
    %p53 = scmp.ne.s32.totalorder %s42, %s43
    %p54 = scmp.eq.s32.totalorder %s34, 0
    %p55 = por %p53, %p54
    %p56 = scmp.ne.s32.totalorder %s42, %s43
    %p57 = scmp.eq.s32.totalorder %s35, 1
    %p58 = por %p56, %p57
    %p60 = scmp.ne.s32.totalorder %s43, %s59
    %p61 = scmp.eq.s32.totalorder %s35, 0
    %p62 = por %p60, %p61
    %s64 = sadd.s32 %s63, 1
    %p67 = scmp.eq.s32.totalorder %s29, 1
    %p68 = scmp.ne.s32.totalorder %s63, %s65
    %p69 = scmp.eq.s32.totalorder %s29, 0
    %p70 = por %p68, %p69
    %p71 = scmp.ne.s32.totalorder %s63, %s65
    %p72 = scmp.eq.s32.totalorder %s34, 1
    %p73 = por %p71, %p72
    %p74 = scmp.ne.s32.totalorder %s65, %s66
    %p75 = scmp.eq.s32.totalorder %s34, 0
    %p76 = por %p74, %p75
    %p77 = scmp.ne.s32.totalorder %s65, %s66
    %p78 = scmp.eq.s32.totalorder %s35, 1
    %p79 = por %p77, %p78
    %p81 = scmp.ne.s32.totalorder %s66, %s80
    %p82 = scmp.eq.s32.totalorder %s35, 0
    %p83 = por %p81, %p82
    %s85 = sadd.s32 %s84, 1
    %p88 = scmp.eq.s32.totalorder %s29, 1
    %p89 = scmp.ne.s32.totalorder %s84, %s86
    %p90 = scmp.eq.s32.totalorder %s29, 0
    %p91 = por %p89, %p90
    %p92 = scmp.ne.s32.totalorder %s84, %s86
    %p93 = scmp.eq.s32.totalorder %s34, 1
    %p94 = por %p92, %p93
    %p95 = scmp.ne.s32.totalorder %s86, %s87
    %p96 = scmp.eq.s32.totalorder %s34, 0
    %p97 = por %p95, %p96
    %p98 = scmp.ne.s32.totalorder %s86, %s87
    %p99 = scmp.eq.s32.totalorder %s35, 1
    %p100 = por %p98, %p99
    %p102 = scmp.ne.s32.totalorder %s87, %s101
    %p103 = scmp.eq.s32.totalorder %s35, 0
    %p104 = por %p102, %p103
    %s106 = sadd.s32 %s105, 1
    %p109 = scmp.eq.s32.totalorder %s29, 1
    %p110 = scmp.ne.s32.totalorder %s105, %s107
    %p111 = scmp.eq.s32.totalorder %s29, 0
    %p112 = por %p110, %p111
    %p113 = scmp.ne.s32.totalorder %s105, %s107
    %p114 = scmp.eq.s32.totalorder %s34, 1
    %p115 = por %p113, %p114
    %p116 = scmp.ne.s32.totalorder %s107, %s108
    %p117 = scmp.eq.s32.totalorder %s34, 0
    %p118 = por %p116, %p117
    %p119 = scmp.ne.s32.totalorder %s107, %s108
    %p120 = scmp.eq.s32.totalorder %s35, 1
    %p121 = por %p119, %p120
    %p123 = scmp.ne.s32.totalorder %s108, %s122
    %p124 = scmp.eq.s32.totalorder %s35, 0
    %p125 = por %p123, %p124
    %s127 = sadd.s32 %s126, 1
    %p130 = scmp.eq.s32.totalorder %s29, 1
    %p131 = scmp.ne.s32.totalorder %s126, %s128
    %p132 = scmp.eq.s32.totalorder %s29, 0
    %p133 = por %p131, %p132
    %p134 = scmp.ne.s32.totalorder %s126, %s128
    %p135 = scmp.eq.s32.totalorder %s34, 1
    %p136 = por %p134, %p135
    %p137 = scmp.ne.s32.totalorder %s128, %s129
    %p138 = scmp.eq.s32.totalorder %s34, 0
    %p139 = por %p137, %p138
    %p140 = scmp.ne.s32.totalorder %s128, %s129
    %p141 = scmp.eq.s32.totalorder %s35, 1
    %p142 = por %p140, %p141
    %p144 = scmp.ne.s32.totalorder %s129, %s143
    %p145 = scmp.eq.s32.totalorder %s35, 0
    %p146 = por %p144, %p145
    %s148 = sadd.s32 %s147, 1
    %p151 = scmp.eq.s32.totalorder %s29, 1
    %p152 = scmp.ne.s32.totalorder %s147, %s149
    %p153 = scmp.eq.s32.totalorder %s29, 0
    %p154 = por %p152, %p153
    %p155 = scmp.ne.s32.totalorder %s147, %s149
    %p156 = scmp.eq.s32.totalorder %s34, 1
    %p157 = por %p155, %p156
    %p158 = scmp.ne.s32.totalorder %s149, %s150
    %p159 = scmp.eq.s32.totalorder %s34, 0
    %p160 = por %p158, %p159
    %p161 = scmp.ne.s32.totalorder %s149, %s150
    %p162 = scmp.eq.s32.totalorder %s35, 1
    %p163 = por %p161, %p162
    %p165 = scmp.ne.s32.totalorder %s150, %s164
    %p166 = scmp.eq.s32.totalorder %s35, 0
    %p167 = por %p165, %p166
    %s169 = sadd.s32 %s168, 1
    %p172 = scmp.eq.s32.totalorder %s29, 1
    %p173 = scmp.ne.s32.totalorder %s168, %s170
    %p174 = scmp.eq.s32.totalorder %s29, 0
    %p175 = por %p173, %p174
    %p176 = scmp.ne.s32.totalorder %s168, %s170
    %p177 = scmp.eq.s32.totalorder %s34, 1
    %p178 = por %p176, %p177
    %p179 = scmp.ne.s32.totalorder %s170, %s171
    %p180 = scmp.eq.s32.totalorder %s34, 0
    %p181 = por %p179, %p180
    %p182 = scmp.ne.s32.totalorder %s170, %s171
    %p183 = scmp.eq.s32.totalorder %s35, 1
    %p184 = por %p182, %p183
    %p186 = scmp.ne.s32.totalorder %s171, %s185
    %p187 = scmp.eq.s32.totalorder %s35, 0
    %p188 = por %p186, %p187
    %s190 = sadd.s32 %s189, 1
    %p193 = scmp.eq.s32.totalorder %s29, 1
    %p194 = scmp.ne.s32.totalorder %s189, %s191
    %p195 = scmp.eq.s32.totalorder %s29, 0
    %p196 = por %p194, %p195
    %p197 = scmp.ne.s32.totalorder %s189, %s191
    %p198 = scmp.eq.s32.totalorder %s34, 1
    %p199 = por %p197, %p198
    %p200 = scmp.ne.s32.totalorder %s191, %s192
    %p201 = scmp.eq.s32.totalorder %s34, 0
    %p202 = por %p200, %p201
    %p203 = scmp.ne.s32.totalorder %s191, %s192
    %p204 = scmp.eq.s32.totalorder %s35, 1
    %p205 = por %p203, %p204
    %p207 = scmp.ne.s32.totalorder %s192, %s206
    %p208 = scmp.eq.s32.totalorder %s35, 0
    %p209 = por %p207, %p208
    %s211 = sadd.s32 %s210, 1
    %p214 = scmp.eq.s32.totalorder %s29, 1
    %p215 = scmp.ne.s32.totalorder %s210, %s212
    %p216 = scmp.eq.s32.totalorder %s29, 0
    %p217 = por %p215, %p216
    %p218 = scmp.ne.s32.totalorder %s210, %s212
    %p219 = scmp.eq.s32.totalorder %s34, 1
    %p220 = por %p218, %p219
    %p221 = scmp.ne.s32.totalorder %s212, %s213
    %p222 = scmp.eq.s32.totalorder %s34, 0
    %p223 = por %p221, %p222
    %p224 = scmp.ne.s32.totalorder %s212, %s213
    %p225 = scmp.eq.s32.totalorder %s35, 1
    %p226 = por %p224, %p225
    %p228 = scmp.ne.s32.totalorder %s213, %s227
    %p229 = scmp.eq.s32.totalorder %s35, 0
    %p230 = por %p228, %p229
    %s232 = sadd.s32 %s231, 1
    %p235 = scmp.eq.s32.totalorder %s29, 1
    %p236 = scmp.ne.s32.totalorder %s231, %s233
    %p237 = scmp.eq.s32.totalorder %s29, 0
    %p238 = por %p236, %p237
    %p239 = scmp.ne.s32.totalorder %s231, %s233
    %p240 = scmp.eq.s32.totalorder %s34, 1
    %p241 = por %p239, %p240
    %p242 = scmp.ne.s32.totalorder %s233, %s234
    %p243 = scmp.eq.s32.totalorder %s34, 0
    %p244 = por %p242, %p243
    %p245 = scmp.ne.s32.totalorder %s233, %s234
    %p246 = scmp.eq.s32.totalorder %s35, 1
    %p247 = por %p245, %p246
    %p249 = scmp.ne.s32.totalorder %s234, %s248
    %p250 = scmp.eq.s32.totalorder %s35, 0
    %p251 = por %p249, %p250
    %s253 = sadd.s32 %s252, 1
    %p256 = scmp.eq.s32.totalorder %s29, 1
    %p257 = scmp.ne.s32.totalorder %s252, %s254
    %p258 = scmp.eq.s32.totalorder %s29, 0
    %p259 = por %p257, %p258
    %p260 = scmp.ne.s32.totalorder %s252, %s254
    %p261 = scmp.eq.s32.totalorder %s34, 1
    %p262 = por %p260, %p261
    %p263 = scmp.ne.s32.totalorder %s254, %s255
    %p264 = scmp.eq.s32.totalorder %s34, 0
    %p265 = por %p263, %p264
    %p266 = scmp.ne.s32.totalorder %s254, %s255
    %p267 = scmp.eq.s32.totalorder %s35, 1
    %p268 = por %p266, %p267
    %p270 = scmp.ne.s32.totalorder %s255, %s269
    %p271 = scmp.eq.s32.totalorder %s35, 0
    %p272 = por %p270, %p271
    %s274 = sadd.s32 %s273, 1
    %p277 = scmp.eq.s32.totalorder %s29, 1
    %p278 = scmp.ne.s32.totalorder %s273, %s275
    %p279 = scmp.eq.s32.totalorder %s29, 0
    %p280 = por %p278, %p279
    %p281 = scmp.ne.s32.totalorder %s273, %s275
    %p282 = scmp.eq.s32.totalorder %s34, 1
    %p283 = por %p281, %p282
    %p284 = scmp.ne.s32.totalorder %s275, %s276
    %p285 = scmp.eq.s32.totalorder %s34, 0
    %p286 = por %p284, %p285
    %p287 = scmp.ne.s32.totalorder %s275, %s276
    %p288 = scmp.eq.s32.totalorder %s35, 1
    %p289 = por %p287, %p288
    %p291 = scmp.ne.s32.totalorder %s276, %s290
    %p292 = scmp.eq.s32.totalorder %s35, 0
    %p293 = por %p291, %p292
    %s295 = sadd.s32 %s294, 1
    %p298 = scmp.eq.s32.totalorder %s29, 1
    %p299 = scmp.ne.s32.totalorder %s294, %s296
    %p300 = scmp.eq.s32.totalorder %s29, 0
    %p301 = por %p299, %p300
    %p302 = scmp.ne.s32.totalorder %s294, %s296
    %p303 = scmp.eq.s32.totalorder %s34, 1
    %p304 = por %p302, %p303
    %p305 = scmp.ne.s32.totalorder %s296, %s297
    %p306 = scmp.eq.s32.totalorder %s34, 0
    %p307 = por %p305, %p306
    %p308 = scmp.ne.s32.totalorder %s296, %s297
    %p309 = scmp.eq.s32.totalorder %s35, 1
    %p310 = por %p308, %p309
    %p312 = scmp.ne.s32.totalorder %s297, %s311
    %p313 = scmp.eq.s32.totalorder %s35, 0
    %p314 = por %p312, %p313
    %s316 = sadd.s32 %s315, 1
    %p319 = scmp.eq.s32.totalorder %s29, 1
    %p320 = scmp.ne.s32.totalorder %s315, %s317
    %p321 = scmp.eq.s32.totalorder %s29, 0
    %p322 = por %p320, %p321
    %p323 = scmp.ne.s32.totalorder %s315, %s317
    %p324 = scmp.eq.s32.totalorder %s34, 1
    %p325 = por %p323, %p324
    %p326 = scmp.ne.s32.totalorder %s317, %s318
    %p327 = scmp.eq.s32.totalorder %s34, 0
    %p328 = por %p326, %p327
    %p329 = scmp.ne.s32.totalorder %s317, %s318
    %p330 = scmp.eq.s32.totalorder %s35, 1
    %p331 = por %p329, %p330
    %p333 = scmp.ne.s32.totalorder %s318, %s332
    %p334 = scmp.eq.s32.totalorder %s35, 0
    %p335 = por %p333, %p334
    %s337 = sadd.s32 %s336, 1
    %p340 = scmp.eq.s32.totalorder %s29, 1
    %p341 = scmp.ne.s32.totalorder %s336, %s338
    %p342 = scmp.eq.s32.totalorder %s29, 0
    %p343 = por %p341, %p342
    %p344 = scmp.ne.s32.totalorder %s336, %s338
    %p345 = scmp.eq.s32.totalorder %s34, 1
    %p346 = por %p344, %p345
    %p347 = scmp.ne.s32.totalorder %s338, %s339
    %p348 = scmp.eq.s32.totalorder %s34, 0
    %p349 = por %p347, %p348
    %p350 = scmp.ne.s32.totalorder %s338, %s339
    %p351 = scmp.eq.s32.totalorder %s35, 1
    %p352 = por %p350, %p351
    %p354 = scmp.ne.s32.totalorder %s339, %s353
    %p355 = scmp.eq.s32.totalorder %s35, 0
    %p356 = por %p354, %p355
    %s358 = sadd.s32 %s357, 1
    %p361 = scmp.eq.s32.totalorder %s29, 1
    %p362 = scmp.ne.s32.totalorder %s357, %s359
    %p363 = scmp.eq.s32.totalorder %s29, 0
    %p364 = por %p362, %p363
    %p365 = scmp.ne.s32.totalorder %s357, %s359
    %p366 = scmp.eq.s32.totalorder %s34, 1
    %p367 = por %p365, %p366
    %p368 = scmp.ne.s32.totalorder %s359, %s360
    %p369 = scmp.eq.s32.totalorder %s34, 0
    %p370 = por %p368, %p369
    %p371 = scmp.ne.s32.totalorder %s359, %s360
    %p372 = scmp.eq.s32.totalorder %s35, 1
    %p373 = por %p371, %p372
    %p375 = scmp.ne.s32.totalorder %s360, %s374
    %p376 = scmp.eq.s32.totalorder %s35, 0
    %p377 = por %p375, %p376
    %s379 = sadd.s32 %s378, 1
    %p382 = scmp.eq.s32.totalorder %s29, 1
    %p383 = scmp.ne.s32.totalorder %s378, %s380
    %p384 = scmp.eq.s32.totalorder %s29, 0
    %p385 = por %p383, %p384
    %p386 = scmp.ne.s32.totalorder %s378, %s380
    %p387 = scmp.eq.s32.totalorder %s34, 1
    %p388 = por %p386, %p387
    %p389 = scmp.ne.s32.totalorder %s380, %s381
    %p390 = scmp.eq.s32.totalorder %s34, 0
    %p391 = por %p389, %p390
    %p392 = scmp.ne.s32.totalorder %s380, %s381
    %p393 = scmp.eq.s32.totalorder %s35, 1
    %p394 = por %p392, %p393
    %p396 = scmp.ne.s32.totalorder %s381, %s395
    %p397 = scmp.eq.s32.totalorder %s35, 0
    %p398 = por %p396, %p397
    %s400 = sadd.s32 %s399, 1
    %p403 = scmp.eq.s32.totalorder %s29, 1
    %p404 = scmp.ne.s32.totalorder %s399, %s401
    %p405 = scmp.eq.s32.totalorder %s29, 0
    %p406 = por %p404, %p405
    %p407 = scmp.ne.s32.totalorder %s399, %s401
    %p408 = scmp.eq.s32.totalorder %s34, 1
    %p409 = por %p407, %p408
    %p410 = scmp.ne.s32.totalorder %s401, %s402
    %p411 = scmp.eq.s32.totalorder %s34, 0
    %p412 = por %p410, %p411
    %p413 = scmp.ne.s32.totalorder %s401, %s402
    %p414 = scmp.eq.s32.totalorder %s35, 1
    %p415 = por %p413, %p414
    %p417 = scmp.ne.s32.totalorder %s402, %s416
    %p418 = scmp.eq.s32.totalorder %s35, 0
    %p419 = por %p417, %p418
    %s421 = sadd.s32 %s420, 1
    %p424 = scmp.eq.s32.totalorder %s29, 1
    %p425 = scmp.ne.s32.totalorder %s420, %s422
    %p426 = scmp.eq.s32.totalorder %s29, 0
    %p427 = por %p425, %p426
    %p428 = scmp.ne.s32.totalorder %s420, %s422
    %p429 = scmp.eq.s32.totalorder %s34, 1
    %p430 = por %p428, %p429
    %p431 = scmp.ne.s32.totalorder %s422, %s423
    %p432 = scmp.eq.s32.totalorder %s34, 0
    %p433 = por %p431, %p432
    %p434 = scmp.ne.s32.totalorder %s422, %s423
    %p435 = scmp.eq.s32.totalorder %s35, 1
    %p436 = por %p434, %p435
    %p438 = scmp.ne.s32.totalorder %s423, %s437
    %p439 = scmp.eq.s32.totalorder %s35, 0
    %p440 = por %p438, %p439
    %s442 = sadd.s32 %s441, 1
    %p445 = scmp.eq.s32.totalorder %s29, 1
    %p446 = scmp.ne.s32.totalorder %s441, %s443
    %p447 = scmp.eq.s32.totalorder %s29, 0
    %p448 = por %p446, %p447
    %p449 = scmp.ne.s32.totalorder %s441, %s443
    %p450 = scmp.eq.s32.totalorder %s34, 1
    %p451 = por %p449, %p450
    %p452 = scmp.ne.s32.totalorder %s443, %s444
    %p453 = scmp.eq.s32.totalorder %s34, 0
    %p454 = por %p452, %p453
    %p455 = scmp.ne.s32.totalorder %s443, %s444
    %p456 = scmp.eq.s32.totalorder %s35, 1
    %p457 = por %p455, %p456
    %p459 = scmp.ne.s32.totalorder %s444, %s458
    %p460 = scmp.eq.s32.totalorder %s35, 0
    %p461 = por %p459, %p460
    %s463 = sadd.s32 %s462, 1
    %p466 = scmp.eq.s32.totalorder %s29, 1
    %p467 = scmp.ne.s32.totalorder %s462, %s464
    %p468 = scmp.eq.s32.totalorder %s29, 0
    %p469 = por %p467, %p468
    %p470 = scmp.ne.s32.totalorder %s462, %s464
    %p471 = scmp.eq.s32.totalorder %s34, 1
    %p472 = por %p470, %p471
    %p473 = scmp.ne.s32.totalorder %s464, %s465
    %p474 = scmp.eq.s32.totalorder %s34, 0
    %p475 = por %p473, %p474
    %p476 = scmp.ne.s32.totalorder %s464, %s465
    %p477 = scmp.eq.s32.totalorder %s35, 1
    %p478 = por %p476, %p477
    %p480 = scmp.ne.s32.totalorder %s465, %s479
    %p481 = scmp.eq.s32.totalorder %s35, 0
    %p482 = por %p480, %p481
    %s483 = ssub.s32 %s29, %s36
    %p484 = scmp.eq.s32.totalorder %s483, 0
    %s486 = sadd.s32 %s485, 1
    %s487 = scalar_select %p484, %s485, %s486
    %p490 = pneg %p484
    %p491 = scmp.eq.s32.totalorder %s29, 1
    %p492 = por %p490, %p491
    %p493 = scmp.ne.s32.totalorder %s485, %s488
    %p494 = scmp.eq.s32.totalorder %s29, 0
    %p495 = por %p493, %p494
    %p496 = scmp.ne.s32.totalorder %s485, %s488
    %p497 = scmp.eq.s32.totalorder %s34, 1
    %p498 = por %p496, %p497
    %p499 = scmp.ne.s32.totalorder %s488, %s489
    %p500 = scmp.eq.s32.totalorder %s34, 0
    %p501 = por %p499, %p500
    %p502 = scmp.ne.s32.totalorder %s488, %s489
    %p503 = scmp.eq.s32.totalorder %s35, 1
    %p504 = por %p502, %p503
    %p506 = scmp.ne.s32.totalorder %s489, %s505
    %p507 = scmp.eq.s32.totalorder %s35, 0
    %p508 = por %p506, %p507
    %p509 = scmp.le.s32.totalorder 1, %s29
    %p510 = scmp.lt.s32.totalorder %s29, 3
    %p511 = pnand %p509, %p510
    %p512 = pneg %p511
    // Predicated region
    $region9: #{tpu_custom_call.1} parent=5 // pred_check
      _
    $region10: #{tpu_custom_call.1} parent=5 // pred_check_branch
      %514 = sbr.rel (%p511) target = $region12
    $region11: #{tpu_custom_call.1} parent=5 // pred_region
      %s515 = ssub.s32 %s29, 1
      // Predicated region
      $region13: #{tpu_custom_call.1} parent=11 // pred_check
        %p516 = pneg %p76
      $region14: #{tpu_custom_call.1} parent=11 // pred_check_branch
        %518 = sbr.rel (%p516) target = $region16
      $region15: #{tpu_custom_call.1} parent=11 // pred_region
        _
      $region16: #{tpu_custom_call.1} parent=11 // pred_fallthru
        _
      // Predicated region
      $region17: #{tpu_custom_call.1} parent=11 // pred_check
        %p519 = pneg %p97
      $region18: #{tpu_custom_call.1} parent=11 // pred_check_branch
        %521 = sbr.rel (%p519) target = $region20
      $region19: #{tpu_custom_call.1} parent=11 // pred_region
        _
      $region20: #{tpu_custom_call.1} parent=11 // pred_fallthru
        _
      // Predicated region
      $region21: #{tpu_custom_call.1} parent=11 // pred_check
        %p522 = pneg %p118
      $region22: #{tpu_custom_call.1} parent=11 // pred_check_branch
        %524 = sbr.rel (%p522) target = $region24
      $region23: #{tpu_custom_call.1} parent=11 // pred_region
        _
      $region24: #{tpu_custom_call.1} parent=11 // pred_fallthru
        _
      // Predicated region
      $region25: #{tpu_custom_call.1} parent=11 // pred_check
        %p525 = pneg %p139
      $region26: #{tpu_custom_call.1} parent=11 // pred_check_branch
        %527 = sbr.rel (%p525) target = $region28
      $region27: #{tpu_custom_call.1} parent=11 // pred_region
        _
      $region28: #{tpu_custom_call.1} parent=11 // pred_fallthru
        _
      // Predicated region
      $region29: #{tpu_custom_call.1} parent=11 // pred_check
        %p528 = pneg %p160
      $region30: #{tpu_custom_call.1} parent=11 // pred_check_branch
        %530 = sbr.rel (%p528) target = $region32
      $region31: #{tpu_custom_call.1} parent=11 // pred_region
        _
      $region32: #{tpu_custom_call.1} parent=11 // pred_fallthru
        _
      // Predicated region
      $region33: #{tpu_custom_call.1} parent=11 // pred_check
        %p531 = pneg %p181
      $region34: #{tpu_custom_call.1} parent=11 // pred_check_branch
        %533 = sbr.rel (%p531) target = $region36
      $region35: #{tpu_custom_call.1} parent=11 // pred_region
        _
      $region36: #{tpu_custom_call.1} parent=11 // pred_fallthru
        _
      // Predicated region
      $region37: #{tpu_custom_call.1} parent=11 // pred_check
        %p534 = pneg %p202
      $region38: #{tpu_custom_call.1} parent=11 // pred_check_branch
        %536 = sbr.rel (%p534) target = $region40
      $region39: #{tpu_custom_call.1} parent=11 // pred_region
        _
      $region40: #{tpu_custom_call.1} parent=11 // pred_fallthru
        _
      // Predicated region
      $region41: #{tpu_custom_call.1} parent=11 // pred_check
        %p537 = pneg %p223
      $region42: #{tpu_custom_call.1} parent=11 // pred_check_branch
        %539 = sbr.rel (%p537) target = $region44
      $region43: #{tpu_custom_call.1} parent=11 // pred_region
        _
      $region44: #{tpu_custom_call.1} parent=11 // pred_fallthru
        _
      // Predicated region
      $region45: #{tpu_custom_call.1} parent=11 // pred_check
        %p540 = pneg %p244
      $region46: #{tpu_custom_call.1} parent=11 // pred_check_branch
        %542 = sbr.rel (%p540) target = $region48
      $region47: #{tpu_custom_call.1} parent=11 // pred_region
        _
      $region48: #{tpu_custom_call.1} parent=11 // pred_fallthru
        _
      // Predicated region
      $region49: #{tpu_custom_call.1} parent=11 // pred_check
        %p543 = pneg %p265
      $region50: #{tpu_custom_call.1} parent=11 // pred_check_branch
        %545 = sbr.rel (%p543) target = $region52
      $region51: #{tpu_custom_call.1} parent=11 // pred_region
        _
      $region52: #{tpu_custom_call.1} parent=11 // pred_fallthru
        _
      // Predicated region
      $region53: #{tpu_custom_call.1} parent=11 // pred_check
        %p546 = pneg %p286
      $region54: #{tpu_custom_call.1} parent=11 // pred_check_branch
        %548 = sbr.rel (%p546) target = $region56
      $region55: #{tpu_custom_call.1} parent=11 // pred_region
        _
      $region56: #{tpu_custom_call.1} parent=11 // pred_fallthru
        _
      // Predicated region
      $region57: #{tpu_custom_call.1} parent=11 // pred_check
        %p549 = pneg %p307
      $region58: #{tpu_custom_call.1} parent=11 // pred_check_branch
        %551 = sbr.rel (%p549) target = $region60
      $region59: #{tpu_custom_call.1} parent=11 // pred_region
        _
      $region60: #{tpu_custom_call.1} parent=11 // pred_fallthru
        _
      // Predicated region
      $region61: #{tpu_custom_call.1} parent=11 // pred_check
        %p552 = pneg %p328
      $region62: #{tpu_custom_call.1} parent=11 // pred_check_branch
        %554 = sbr.rel (%p552) target = $region64
      $region63: #{tpu_custom_call.1} parent=11 // pred_region
        _
      $region64: #{tpu_custom_call.1} parent=11 // pred_fallthru
        _
      // Predicated region
      $region65: #{tpu_custom_call.1} parent=11 // pred_check
        %p555 = pneg %p349
      $region66: #{tpu_custom_call.1} parent=11 // pred_check_branch
        %557 = sbr.rel (%p555) target = $region68
      $region67: #{tpu_custom_call.1} parent=11 // pred_region
        _
      $region68: #{tpu_custom_call.1} parent=11 // pred_fallthru
        _
      // Predicated region
      $region69: #{tpu_custom_call.1} parent=11 // pred_check
        %p558 = pneg %p370
      $region70: #{tpu_custom_call.1} parent=11 // pred_check_branch
        %560 = sbr.rel (%p558) target = $region72
      $region71: #{tpu_custom_call.1} parent=11 // pred_region
        _
      $region72: #{tpu_custom_call.1} parent=11 // pred_fallthru
        _
      // Predicated region
      $region73: #{tpu_custom_call.1} parent=11 // pred_check
        %p561 = pneg %p391
      $region74: #{tpu_custom_call.1} parent=11 // pred_check_branch
        %563 = sbr.rel (%p561) target = $region76
      $region75: #{tpu_custom_call.1} parent=11 // pred_region
        _
      $region76: #{tpu_custom_call.1} parent=11 // pred_fallthru
        _
      // Predicated region
      $region77: #{tpu_custom_call.1} parent=11 // pred_check
        %p564 = pneg %p412
      $region78: #{tpu_custom_call.1} parent=11 // pred_check_branch
        %566 = sbr.rel (%p564) target = $region80
      $region79: #{tpu_custom_call.1} parent=11 // pred_region
        _
      $region80: #{tpu_custom_call.1} parent=11 // pred_fallthru
        _
      // Predicated region
      $region81: #{tpu_custom_call.1} parent=11 // pred_check
        %p567 = pneg %p433
      $region82: #{tpu_custom_call.1} parent=11 // pred_check_branch
        %569 = sbr.rel (%p567) target = $region84
      $region83: #{tpu_custom_call.1} parent=11 // pred_region
        _
      $region84: #{tpu_custom_call.1} parent=11 // pred_fallthru
        _
      // Predicated region
      $region85: #{tpu_custom_call.1} parent=11 // pred_check
        %p570 = pneg %p454
      $region86: #{tpu_custom_call.1} parent=11 // pred_check_branch
        %572 = sbr.rel (%p570) target = $region88
      $region87: #{tpu_custom_call.1} parent=11 // pred_region
        _
      $region88: #{tpu_custom_call.1} parent=11 // pred_fallthru
        _
      // Predicated region
      $region89: #{tpu_custom_call.1} parent=11 // pred_check
        %p573 = pneg %p475
      $region90: #{tpu_custom_call.1} parent=11 // pred_check_branch
        %575 = sbr.rel (%p573) target = $region92
      $region91: #{tpu_custom_call.1} parent=11 // pred_region
        _
      $region92: #{tpu_custom_call.1} parent=11 // pred_fallthru
        _
    $region12: #{tpu_custom_call.1} parent=5 // pred_fallthru
      _
    %p576 = scmp.lt.s32.totalorder %s29, 2
    // Predicated region
    $region93: #{tpu_custom_call.1} parent=5 // pred_check
      %p577 = pneg %p576
    $region94: #{tpu_custom_call.1} parent=5 // pred_check_branch
      %579 = sbr.rel (%p577) target = $region96
    $region95: #{tpu_custom_call.1} parent=5 // pred_region
      // Predicated region
      $region97: #{tpu_custom_call.1} parent=95 // pred_check
        %p580 = pneg %p49
      $region98: #{tpu_custom_call.1} parent=95 // pred_check_branch
        %582 = sbr.rel (%p580) target = $region100
      $region99: #{tpu_custom_call.1} parent=95 // pred_region
        %p583 = scmp.lt.s32.totalorder %s29, 1
        %s584 = scalar_select %p583, %s29, 1
        %s585 = smul.addr %s584, 3
        %s586 = smul.addr %s585, 8
        %s587 = scalar_lea.vmem %s0, %s586
      $region100: #{tpu_custom_call.1} parent=95 // pred_fallthru
        _
    $region96: #{tpu_custom_call.1} parent=5 // pred_fallthru
      _
    %p588 = scmp.le.s32.totalorder 1, %s29
    %p589 = scmp.lt.s32.totalorder %s29, 3
    %p590 = pnand %p588, %p589
    %p591 = pneg %p590
    // Predicated region
    $region101: #{tpu_custom_call.1} parent=5 // pred_check
      _
    $region102: #{tpu_custom_call.1} parent=5 // pred_check_branch
      %593 = sbr.rel (%p590) target = $region104
    $region103: #{tpu_custom_call.1} parent=5 // pred_region
      %s594 = ssub.s32 %s29, 1
      %p595 = scmp.lt.s32.totalorder %s34, 1
      %s596 = scalar_select %p595, %s34, 1
      %s597 = smul.addr %s596, 3
      %s598 = smul.addr %s597, 8
      %s599 = scalar_lea.vmem %s0, %s598
      %p600 = pneg %p55
      %p601 = pneg %p52
      %p602 = pneg %p76
      %p603 = pneg %p73
      %p604 = pneg %p97
      %p605 = pneg %p94
      %p606 = pneg %p118
      %p607 = pneg %p115
      %p608 = pneg %p139
      %p609 = pneg %p136
      %p610 = pneg %p160
      %p611 = pneg %p157
      %p612 = pneg %p181
      %p613 = pneg %p178
      %p614 = pneg %p202
      %p615 = pneg %p199
      %p616 = pneg %p223
      %p617 = pneg %p220
      %p618 = pneg %p244
      %p619 = pneg %p241
      %p620 = pneg %p265
      %p621 = pneg %p262
      %p622 = pneg %p286
      %p623 = pneg %p283
      %p624 = pneg %p307
      %p625 = pneg %p304
      %p626 = pneg %p328
      %p627 = pneg %p325
      %p628 = pneg %p349
      %p629 = pneg %p346
      %p630 = pneg %p370
      %p631 = pneg %p367
      %p632 = pneg %p391
      %p633 = pneg %p388
      %p634 = pneg %p412
      %p635 = pneg %p409
      %p636 = pneg %p433
      %p637 = pneg %p430
      %p638 = pneg %p454
      %p639 = pneg %p451
      %p640 = pneg %p475
      %p641 = pneg %p472
      %p642 = pneg %p501
      %p643 = pneg %p498
      %p644 = scmp.lt.s32.totalorder %s34, 1
      %s645 = scalar_select %p644, %s34, 1
      %s646 = scalar_lea.vmem %s21, %s645
      %p647 = scmp.lt.s32.totalorder %s34, 1
      %s648 = scalar_select %p647, %s34, 1
      %s649 = smul.addr %s648, 3
      %s650 = smul.addr %s649, 8
      %s651 = scalar_lea.vmem %s0, %s650
      %p652 = scmp.lt.s32.totalorder %s34, 1
      %s653 = scalar_select %p652, %s34, 1
      %s654 = scalar_lea.vmem %s21, %s653
      %v655 = vld [vmem:[%s651] sm:$0xff]
      %v656 = vld [vmem:[%s651 + $0x8] sm:$0xff]
      %v657 = vld [vmem:[%s651 + $0x10] sm:$0x7f]
      %v658 = vld [vmem:[%s1] sm:$0x1]
      %v659 = vld [vmem:[%s2] sm:$0x1]
      %vm660 = vcmask 261120
      %v661 = vsel %vm660, %v655, 0.0
      %662 = vadd.xlane.f32.xlu0 %v661
      %v663 = vpop.xlane.xlu0 %662
      %v664 = vsel %vm660, %v656, 0.0
      %665 = vadd.xlane.f32.xlu0 %v664
      %v666 = vpop.xlane.xlu0 %665
      %vm667 = vcmask 260096
      %v668 = vsel %vm667, %v657, 0.0
      %669 = vadd.xlane.f32.xlu0 %v668
      %v670 = vpop.xlane.xlu0 %669
      %v671 = vrcp.pop 32.0
      %v672 = vmul.f32 %v663, %v671
      %v673 = vmul.f32 %v666, %v671
      %v674 = vmul.f32 %v670, %v671
      %v675 = vsub.f32 %v655, %v672
      %v676 = vsub.f32 %v656, %v673
      %v677 = vsub.f32 %v657, %v674
      %v678 = vmul.f32 %v675, %v675
      %v679 = vmul.f32 %v676, %v676
      %v680 = vmul.f32 %v677, %v677
      %v681 = vsel %vm660, %v678, 0.0
      %682 = vadd.xlane.f32.xlu0 %v681
      %v683 = vpop.xlane.xlu0 %682
      %v684 = vsel %vm660, %v679, 0.0
      %685 = vadd.xlane.f32.xlu0 %v684
      %v686 = vpop.xlane.xlu0 %685
      %v687 = vsel %vm667, %v680, 0.0
      %688 = vadd.xlane.f32.xlu0 %v687
      %v689 = vpop.xlane.xlu0 %688
      %v690 = vmul.f32 %v683, %v671
      %v691 = vmul.f32 %v686, %v671
      %v692 = vmul.f32 %v689, %v671
      %v693 = vadd.f32 %v690, 1e-05
      %v694 = vadd.f32 %v691, 1e-05
      %v695 = vadd.f32 %v692, 1e-05
      %v696 = vrsqrt.pop %v693
      %v697 = vrsqrt.pop %v694
      %v698 = vrsqrt.pop %v695
      %v699 = vmul.f32 %v675, %v696
      %v700 = vmul.f32 %v676, %v697
      %v701 = vmul.f32 %v677, %v698
      %v703 = vlaneseq
      %v704 = vshrl.u32 %v703, 7
      %v705 = vsub.s32 0, %v704
      %v706 = vrot.slane %v658, %v705
      %v708 = vmul.f32 %v699, %v706
      %v709 = vmul.f32 %v700, %v706
      %v710 = vmul.f32 %v701, %v706
      %v712 = vlaneseq
      %v713 = vshrl.u32 %v712, 7
      %v714 = vsub.s32 0, %v713
      %v715 = vrot.slane %v659, %v714
      %v717 = vadd.f32 %v708, %v715
      %v718 = vadd.f32 %v709, %v715
      %v719 = vadd.f32 %v710, %v715
      %v720 = vld [vmem:[%s3] sm:$0xff]
      %v721 = vld [vmem:[%s3 + $0x8] sm:$0xff]
      %v722 = vld [vmem:[%s3 + $0x10] sm:$0xff]
      %v723 = vld [vmem:[%s3 + $0x18] sm:$0xff]
      %v724 = vld [vmem:[%s4] sm:$0x1]
      %v726 = vlaneseq
      %v727 = vshrl.u32 %v726, 7
      %v728 = vsub.s32 0, %v727
      %v729 = vrot.slane %v724, %v728
      %v732 = vsel %vm660, %v717, 0
      %v735 = vsel %vm660, %v718, 0
      %v738 = vsel %vm660, %v719, 0
      %740 = vmatprep.subr.mxu0 0.0
      %741 = vmatpush1.msra.mxu0 0.0
      %742 = vmatprep.subr.mxu0 0.0
      %743 = vmatpush1.msra.mxu0 0.0
      %744 = vmatprep.subr.mxu0 0.0
      %745 = vmatpush1.msra.mxu0 0.0
      %746 = vmatprep.subr.mxu0 0.0
      %747 = vmatpush1.msra.mxu0 0.0
      %748 = vmatprep.subr.mxu0 0.0
      %749 = vmatpush1.msra.mxu0 0.0
      %750 = vmatprep.subr.mxu0 0.0
      %751 = vmatpush1.msra.mxu0 0.0
      %752 = vmatprep.subr.mxu0 0.0
      %753 = vmatpush1.msra.mxu0 0.0
      %754 = vmatprep.subr.mxu0 0.0
      %755 = vmatpush1.msra.mxu0 0.0
      %756 = vmatprep.subr.mxu0 0.0
      %757 = vmatpush1.msra.mxu0 0.0
      %758 = vmatprep.subr.mxu0 0.0
      %759 = vmatpush1.msra.mxu0 0.0
      %760 = vmatprep.subr.mxu0 0.0
      %761 = vmatpush1.msra.mxu0 0.0
      %762 = vmatprep.subr.mxu0 0.0
      %763 = vmatpush1.msra.mxu0 0.0
      %764 = vmatprep.subr.mxu0 0.0
      %765 = vmatpush1.msra.mxu0 %v723
      %766 = vmatprep.subr.mxu0 0.0
      %767 = vmatpush1.msra.mxu0 %v722
      %768 = vmatprep.subr.mxu0 0.0
      %769 = vmatpush1.msra.mxu0 %v721
      %770 = vmatprep.subr.mxu0 0.0
      %771 = vmatpush1.msra.mxu0 %v720
      %772 = vmatprep.subr.mxu0 0.0
      %773 = vmatpush2.msra.mxu0 0.0
      %774 = vmatprep.subr.mxu0 0.0
      %775 = vmatpush2.msra.mxu0 0.0
      %776 = vmatprep.subr.mxu0 0.0
      %777 = vmatpush2.msra.mxu0 0.0
      %778 = vmatprep.subr.mxu0 0.0
      %779 = vmatpush2.msra.mxu0 0.0
      %780 = vmatprep.subr.mxu0 0.0
      %781 = vmatpush2.msra.mxu0 0.0
      %782 = vmatprep.subr.mxu0 0.0
      %783 = vmatpush2.msra.mxu0 0.0
      %784 = vmatprep.subr.mxu0 0.0
      %785 = vmatpush2.msra.mxu0 0.0
      %786 = vmatprep.subr.mxu0 0.0
      %787 = vmatpush2.msra.mxu0 0.0
      %788 = vmatprep.subr.mxu0 0.0
      %789 = vmatpush2.msra.mxu0 0.0
      %790 = vmatprep.subr.mxu0 0.0
      %791 = vmatpush2.msra.mxu0 0.0
      %792 = vmatprep.subr.mxu0 0.0
      %793 = vmatpush2.msra.mxu0 0.0
      %794 = vmatprep.subr.mxu0 0.0
      %795 = vmatpush2.msra.mxu0 0.0
      %796 = vmatprep.subr.mxu0 0.0
      %797 = vmatpush2.msra.mxu0 0.0
      %798 = vmatprep.subr.mxu0 0.0
      %799 = vmatpush2.msra.mxu0 0.0
      %800 = vmatprep.subr.mxu0 0.0
      %801 = vmatpush2.msra.mxu0 0.0
      %802 = vmatprep.subr.mxu0 0.0
      %803 = vmatpush2.msra.mxu0 0.0
      %804 = vmatprep.mubr.f32.mxu0 0.0
      %805 = vmatmul.mubr.f32.gmra.mxu0 %v732
      %v806 = vpop.f32.mrf.mxu0
      %v807 = vadd.f32 %v729, %v806
      %v808 = vpop.f32.mrf.mxu0
      %809 = vmatprep.mubr.f32.mxu0 0.0
      %810 = vmatmul.mubr.f32.gmra.mxu0 %v735
      %v811 = vpop.f32.mrf.mxu0
      %v812 = vadd.f32 %v729, %v811
      %v813 = vpop.f32.mrf.mxu0
      %814 = vmatprep.mubr.f32.mxu0 0.0
      %815 = vmatmul.mubr.f32.gmra.mxu0 %v738
      %v816 = vpop.f32.mrf.mxu0
      %v817 = vadd.f32 %v729, %v816
      %v818 = vpop.f32.mrf.mxu0
      %819 = vdwg.mxu0
      %v820 = vld [vmem:[%s5] sm:$0xff]
      %v821 = vld [vmem:[%s5 + $0x8] sm:$0xff]
      %v822 = vld [vmem:[%s5 + $0x10] sm:$0xff]
      %v823 = vld [vmem:[%s5 + $0x18] sm:$0xff]
      %v824 = vld [vmem:[%s6] sm:$0x1]
      %v826 = vlaneseq
      %v827 = vshrl.u32 %v826, 7
      %v828 = vsub.s32 0, %v827
      %v829 = vrot.slane %v824, %v828
      %831 = vmatprep.subr.mxu0 0.0
      %832 = vmatpush1.msra.mxu0 0.0
      %833 = vmatprep.subr.mxu0 0.0
      %834 = vmatpush1.msra.mxu0 0.0
      %835 = vmatprep.subr.mxu0 0.0
      %836 = vmatpush1.msra.mxu0 0.0
      %837 = vmatprep.subr.mxu0 0.0
      %838 = vmatpush1.msra.mxu0 0.0
      %839 = vmatprep.subr.mxu0 0.0
      %840 = vmatpush1.msra.mxu0 0.0
      %841 = vmatprep.subr.mxu0 0.0
      %842 = vmatpush1.msra.mxu0 0.0
      %843 = vmatprep.subr.mxu0 0.0
      %844 = vmatpush1.msra.mxu0 0.0
      %845 = vmatprep.subr.mxu0 0.0
      %846 = vmatpush1.msra.mxu0 0.0
      %847 = vmatprep.subr.mxu0 0.0
      %848 = vmatpush1.msra.mxu0 0.0
      %849 = vmatprep.subr.mxu0 0.0
      %850 = vmatpush1.msra.mxu0 0.0
      %851 = vmatprep.subr.mxu0 0.0
      %852 = vmatpush1.msra.mxu0 0.0
      %853 = vmatprep.subr.mxu0 0.0
      %854 = vmatpush1.msra.mxu0 0.0
      %855 = vmatprep.subr.mxu0 0.0
      %856 = vmatpush1.msra.mxu0 %v823
      %857 = vmatprep.subr.mxu0 0.0
      %858 = vmatpush1.msra.mxu0 %v822
      %859 = vmatprep.subr.mxu0 0.0
      %860 = vmatpush1.msra.mxu0 %v821
      %861 = vmatprep.subr.mxu0 0.0
      %862 = vmatpush1.msra.mxu0 %v820
      %863 = vmatprep.subr.mxu0 0.0
      %864 = vmatpush2.msra.mxu0 0.0
      %865 = vmatprep.subr.mxu0 0.0
      %866 = vmatpush2.msra.mxu0 0.0
      %867 = vmatprep.subr.mxu0 0.0
      %868 = vmatpush2.msra.mxu0 0.0
      %869 = vmatprep.subr.mxu0 0.0
      %870 = vmatpush2.msra.mxu0 0.0
      %871 = vmatprep.subr.mxu0 0.0
      %872 = vmatpush2.msra.mxu0 0.0
      %873 = vmatprep.subr.mxu0 0.0
      %874 = vmatpush2.msra.mxu0 0.0
      %875 = vmatprep.subr.mxu0 0.0
      %876 = vmatpush2.msra.mxu0 0.0
      %877 = vmatprep.subr.mxu0 0.0
      %878 = vmatpush2.msra.mxu0 0.0
      %879 = vmatprep.subr.mxu0 0.0
      %880 = vmatpush2.msra.mxu0 0.0
      %881 = vmatprep.subr.mxu0 0.0
      %882 = vmatpush2.msra.mxu0 0.0
      %883 = vmatprep.subr.mxu0 0.0
      %884 = vmatpush2.msra.mxu0 0.0
      %885 = vmatprep.subr.mxu0 0.0
      %886 = vmatpush2.msra.mxu0 0.0
      %887 = vmatprep.subr.mxu0 0.0
      %888 = vmatpush2.msra.mxu0 0.0
      %889 = vmatprep.subr.mxu0 0.0
      %890 = vmatpush2.msra.mxu0 0.0
      %891 = vmatprep.subr.mxu0 0.0
      %892 = vmatpush2.msra.mxu0 0.0
      %893 = vmatprep.subr.mxu0 0.0
      %894 = vmatpush2.msra.mxu0 0.0
      %895 = vmatprep.mubr.f32.mxu0 0.0
      %896 = vmatmul.mubr.f32.gmra.mxu0 %v732
      %v897 = vpop.f32.mrf.mxu0
      %v898 = vadd.f32 %v829, %v897
      %v899 = vpop.f32.mrf.mxu0
      %900 = vmatprep.mubr.f32.mxu0 0.0
      %901 = vmatmul.mubr.f32.gmra.mxu0 %v735
      %v902 = vpop.f32.mrf.mxu0
      %v903 = vadd.f32 %v829, %v902
      %v904 = vpop.f32.mrf.mxu0
      %905 = vmatprep.mubr.f32.mxu0 0.0
      %906 = vmatmul.mubr.f32.gmra.mxu0 %v738
      %v907 = vpop.f32.mrf.mxu0
      %v908 = vadd.f32 %v829, %v907
      %v909 = vpop.f32.mrf.mxu0
      %910 = vdwg.mxu0
      %v911 = vld [vmem:[%s7] sm:$0xff]
      %v912 = vld [vmem:[%s7 + $0x8] sm:$0xff]
      %v913 = vld [vmem:[%s7 + $0x10] sm:$0xff]
      %v914 = vld [vmem:[%s7 + $0x18] sm:$0xff]
      %v915 = vld [vmem:[%s8] sm:$0x1]
      %v917 = vlaneseq
      %v918 = vshrl.u32 %v917, 7
      %v919 = vsub.s32 0, %v918
      %v920 = vrot.slane %v915, %v919
      %922 = vmatprep.subr.mxu0 0.0
      %923 = vmatpush1.msra.mxu0 0.0
      %924 = vmatprep.subr.mxu0 0.0
      %925 = vmatpush1.msra.mxu0 0.0
      %926 = vmatprep.subr.mxu0 0.0
      %927 = vmatpush1.msra.mxu0 0.0
      %928 = vmatprep.subr.mxu0 0.0
      %929 = vmatpush1.msra.mxu0 0.0
      %930 = vmatprep.subr.mxu0 0.0
      %931 = vmatpush1.msra.mxu0 0.0
      %932 = vmatprep.subr.mxu0 0.0
      %933 = vmatpush1.msra.mxu0 0.0
      %934 = vmatprep.subr.mxu0 0.0
      %935 = vmatpush1.msra.mxu0 0.0
      %936 = vmatprep.subr.mxu0 0.0
      %937 = vmatpush1.msra.mxu0 0.0
      %938 = vmatprep.subr.mxu0 0.0
      %939 = vmatpush1.msra.mxu0 0.0
      %940 = vmatprep.subr.mxu0 0.0
      %941 = vmatpush1.msra.mxu0 0.0
      %942 = vmatprep.subr.mxu0 0.0
      %943 = vmatpush1.msra.mxu0 0.0
      %944 = vmatprep.subr.mxu0 0.0
      %945 = vmatpush1.msra.mxu0 0.0
      %946 = vmatprep.subr.mxu0 0.0
      %947 = vmatpush1.msra.mxu0 %v914
      %948 = vmatprep.subr.mxu0 0.0
      %949 = vmatpush1.msra.mxu0 %v913
      %950 = vmatprep.subr.mxu0 0.0
      %951 = vmatpush1.msra.mxu0 %v912
      %952 = vmatprep.subr.mxu0 0.0
      %953 = vmatpush1.msra.mxu0 %v911
      %954 = vmatprep.subr.mxu0 0.0
      %955 = vmatpush2.msra.mxu0 0.0
      %956 = vmatprep.subr.mxu0 0.0
      %957 = vmatpush2.msra.mxu0 0.0
      %958 = vmatprep.subr.mxu0 0.0
      %959 = vmatpush2.msra.mxu0 0.0
      %960 = vmatprep.subr.mxu0 0.0
      %961 = vmatpush2.msra.mxu0 0.0
      %962 = vmatprep.subr.mxu0 0.0
      %963 = vmatpush2.msra.mxu0 0.0
      %964 = vmatprep.subr.mxu0 0.0
      %965 = vmatpush2.msra.mxu0 0.0
      %966 = vmatprep.subr.mxu0 0.0
      %967 = vmatpush2.msra.mxu0 0.0
      %968 = vmatprep.subr.mxu0 0.0
      %969 = vmatpush2.msra.mxu0 0.0
      %970 = vmatprep.subr.mxu0 0.0
      %971 = vmatpush2.msra.mxu0 0.0
      %972 = vmatprep.subr.mxu0 0.0
      %973 = vmatpush2.msra.mxu0 0.0
      %974 = vmatprep.subr.mxu0 0.0
      %975 = vmatpush2.msra.mxu0 0.0
      %976 = vmatprep.subr.mxu0 0.0
      %977 = vmatpush2.msra.mxu0 0.0
      %978 = vmatprep.subr.mxu0 0.0
      %979 = vmatpush2.msra.mxu0 0.0
      %980 = vmatprep.subr.mxu0 0.0
      %981 = vmatpush2.msra.mxu0 0.0
      %982 = vmatprep.subr.mxu0 0.0
      %983 = vmatpush2.msra.mxu0 0.0
      %984 = vmatprep.subr.mxu0 0.0
      %985 = vmatpush2.msra.mxu0 0.0
      %986 = vmatprep.mubr.f32.mxu0 0.0
      %987 = vmatmul.mubr.f32.gmra.mxu0 %v732
      %v988 = vpop.f32.mrf.mxu0
      %v989 = vadd.f32 %v920, %v988
      %v990 = vpop.f32.mrf.mxu0
      %991 = vmatprep.mubr.f32.mxu0 0.0
      %992 = vmatmul.mubr.f32.gmra.mxu0 %v735
      %v993 = vpop.f32.mrf.mxu0
      %v994 = vadd.f32 %v920, %v993
      %v995 = vpop.f32.mrf.mxu0
      %996 = vmatprep.mubr.f32.mxu0 0.0
      %997 = vmatmul.mubr.f32.gmra.mxu0 %v738
      %v998 = vpop.f32.mrf.mxu0
      %v999 = vadd.f32 %v920, %v998
      %v1000 = vpop.f32.mrf.mxu0
      %1001 = vdwg.mxu0
      %vm1002 = vcmask 64512
      %v1004 = vsel %vm1002, %v807, 0
      %v1007 = vsel %vm1002, %v812, 0
      %v1010 = vsel %vm1002, %v817, 0
      %v1013 = vsel %vm1002, %v898, 0
      %v1016 = vsel %vm1002, %v903, 0
      %v1019 = vsel %vm1002, %v908, 0
      %1021 = vmatprep.subr.mxu0 0.0
      %1022 = vmatpush1.xpose.msra.mxu0 0.0
      %1023 = vmatprep.subr.mxu0 0.0
      %1024 = vmatpush1.xpose.msra.mxu0 0.0
      %1025 = vmatprep.subr.mxu0 0.0
      %1026 = vmatpush1.xpose.msra.mxu0 0.0
      %1027 = vmatprep.subr.mxu0 0.0
      %1028 = vmatpush1.xpose.msra.mxu0 0.0
      %1029 = vmatprep.subr.mxu0 0.0
      %1030 = vmatpush1.xpose.msra.mxu0 0.0
      %1031 = vmatprep.subr.mxu0 0.0
      %1032 = vmatpush1.xpose.msra.mxu0 0.0
      %1033 = vmatprep.subr.mxu0 0.0
      %1034 = vmatpush1.xpose.msra.mxu0 0.0
      %1035 = vmatprep.subr.mxu0 0.0
      %1036 = vmatpush1.xpose.msra.mxu0 0.0
      %1037 = vmatprep.subr.mxu0 0.0
      %1038 = vmatpush1.xpose.msra.mxu0 0.0
      %1039 = vmatprep.subr.mxu0 0.0
      %1040 = vmatpush1.xpose.msra.mxu0 0.0
      %1041 = vmatprep.subr.mxu0 0.0
      %1042 = vmatpush1.xpose.msra.mxu0 0.0
      %1043 = vmatprep.subr.mxu0 0.0
      %1044 = vmatpush1.xpose.msra.mxu0 0.0
      %1045 = vmatprep.subr.mxu0 0.0
      %1046 = vmatpush1.xpose.msra.mxu0 0.0
      %1047 = vmatprep.subr.mxu0 0.0
      %1048 = vmatpush1.xpose.msra.mxu0 %v1019
      %1049 = vmatprep.subr.mxu0 0.0
      %1050 = vmatpush1.xpose.msra.mxu0 %v1016
      %1051 = vmatprep.subr.mxu0 0.0
      %1052 = vmatpush1.xpose.msra.mxu0 %v1013
      %1053 = vmatprep.subr.mxu0 0.0
      %1054 = vmatpush2.xpose.msra.mxu0 0.0
      %1055 = vmatprep.subr.mxu0 0.0
      %1056 = vmatpush2.xpose.msra.mxu0 0.0
      %1057 = vmatprep.subr.mxu0 0.0
      %1058 = vmatpush2.xpose.msra.mxu0 0.0
      %1059 = vmatprep.subr.mxu0 0.0
      %1060 = vmatpush2.xpose.msra.mxu0 0.0
      %1061 = vmatprep.subr.mxu0 0.0
      %1062 = vmatpush2.xpose.msra.mxu0 0.0
      %1063 = vmatprep.subr.mxu0 0.0
      %1064 = vmatpush2.xpose.msra.mxu0 0.0
      %1065 = vmatprep.subr.mxu0 0.0
      %1066 = vmatpush2.xpose.msra.mxu0 0.0
      %1067 = vmatprep.subr.mxu0 0.0
      %1068 = vmatpush2.xpose.msra.mxu0 0.0
      %1069 = vmatprep.subr.mxu0 0.0
      %1070 = vmatpush2.xpose.msra.mxu0 0.0
      %1071 = vmatprep.subr.mxu0 0.0
      %1072 = vmatpush2.xpose.msra.mxu0 0.0
      %1073 = vmatprep.subr.mxu0 0.0
      %1074 = vmatpush2.xpose.msra.mxu0 0.0
      %1075 = vmatprep.subr.mxu0 0.0
      %1076 = vmatpush2.xpose.msra.mxu0 0.0
      %1077 = vmatprep.subr.mxu0 0.0
      %1078 = vmatpush2.xpose.msra.mxu0 0.0
      %1079 = vmatprep.subr.mxu0 0.0
      %1080 = vmatpush2.xpose.msra.mxu0 0.0
      %1081 = vmatprep.subr.mxu0 0.0
      %1082 = vmatpush2.xpose.msra.mxu0 0.0
      %1083 = vmatprep.subr.mxu0 0.0
      %1084 = vmatpush2.xpose.msra.mxu0 0.0
      %1085 = vmatprep.mubr.f32.mxu0 0.0
      %1086 = vmatmul.mubr.f32.gmra.mxu0 %v1004
      %v1087 = vpop.f32.mrf.mxu0
      %v1088 = vadd.f32 0.0, %v1087
      %v1089 = vpop.f32.mrf.mxu0
      %1090 = vmatprep.mubr.f32.mxu0 0.0
      %1091 = vmatmul.mubr.f32.gmra.mxu0 %v1007
      %v1092 = vpop.f32.mrf.mxu0
      %v1093 = vadd.f32 0.0, %v1092
      %v1094 = vpop.f32.mrf.mxu0
      %1095 = vmatprep.mubr.f32.mxu0 0.0
      %1096 = vmatmul.mubr.f32.gmra.mxu0 %v1010
      %v1097 = vpop.f32.mrf.mxu0
      %v1098 = vadd.f32 0.0, %v1097
      %v1099 = vpop.f32.mrf.mxu0
      %1100 = vdwg.mxu0
      %vm1101 = vcmask 187392
      %v1102 = vsel %vm1101, %v1088, -inf
      %1103 = vmax.xlane.f32.xlu0 %v1102
      %v1104 = vpop.xlane.xlu0 %1103
      %v1105 = vsel %vm1101, %v1093, -inf
      %1106 = vmax.xlane.f32.xlu0 %v1105
      %v1107 = vpop.xlane.xlu0 %1106
      %vm1108 = vcmask 186368
      %v1109 = vsel %vm1108, %v1098, -inf
      %1110 = vmax.xlane.f32.xlu0 %v1109
      %v1111 = vpop.xlane.xlu0 %1110
      %v1112 = vsub.f32 %v1088, %v1104
      %v1113 = vsub.f32 %v1093, %v1107
      %v1114 = vsub.f32 %v1098, %v1111
      %v1115 = vmul.f32 %v1112, 1.442695
      %v1116 = vpow.pop %v1115
      %v1117 = vmul.f32 %v1113, 1.442695
      %v1118 = vpow.pop %v1117
      %v1119 = vmul.f32 %v1114, 1.442695
      %v1120 = vpow.pop %v1119
      %v1121 = vsel %vm1101, %v1116, 0.0
      %1122 = vadd.xlane.f32.xlu0 %v1121
      %v1123 = vpop.xlane.xlu0 %1122
      %v1124 = vsel %vm1101, %v1118, 0.0
      %1125 = vadd.xlane.f32.xlu0 %v1124
      %v1126 = vpop.xlane.xlu0 %1125
      %v1127 = vsel %vm1108, %v1120, 0.0
      %1128 = vadd.xlane.f32.xlu0 %v1127
      %v1129 = vpop.xlane.xlu0 %1128
      %v1130 = vrcp.pop %v1123
      %v1131 = vrcp.pop %v1126
      %v1132 = vrcp.pop %v1129
      %v1133 = vmul.f32 %v1116, %v1130
      %v1134 = vmul.f32 %v1118, %v1131
      %v1135 = vmul.f32 %v1120, %v1132
      %v1137 = vsel %vm1101, %v1133, 0
      %v1140 = vsel %vm1101, %v1134, 0
      %v1143 = vsel %vm1101, %v1135, 0
      %vm1145 = vcmask 1046528
      %v1147 = vsel %vm1145, %v999, 0
      %1149 = vmatprep.subr.mxu0 0.0
      %1150 = vmatpush1.msra.mxu0 0.0
      %1151 = vmatprep.subr.mxu0 0.0
      %1152 = vmatpush1.msra.mxu0 0.0
      %1153 = vmatprep.subr.mxu0 0.0
      %1154 = vmatpush1.msra.mxu0 0.0
      %1155 = vmatprep.subr.mxu0 0.0
      %1156 = vmatpush1.msra.mxu0 0.0
      %1157 = vmatprep.subr.mxu0 0.0
      %1158 = vmatpush1.msra.mxu0 0.0
      %1159 = vmatprep.subr.mxu0 0.0
      %1160 = vmatpush1.msra.mxu0 0.0
      %1161 = vmatprep.subr.mxu0 0.0
      %1162 = vmatpush1.msra.mxu0 0.0
      %1163 = vmatprep.subr.mxu0 0.0
      %1164 = vmatpush1.msra.mxu0 0.0
      %1165 = vmatprep.subr.mxu0 0.0
      %1166 = vmatpush1.msra.mxu0 0.0
      %1167 = vmatprep.subr.mxu0 0.0
      %1168 = vmatpush1.msra.mxu0 0.0
      %1169 = vmatprep.subr.mxu0 0.0
      %1170 = vmatpush1.msra.mxu0 0.0
      %1171 = vmatprep.subr.mxu0 0.0
      %1172 = vmatpush1.msra.mxu0 0.0
      %1173 = vmatprep.subr.mxu0 0.0
      %1174 = vmatpush1.msra.mxu0 0.0
      %1175 = vmatprep.subr.mxu0 0.0
      %1176 = vmatpush1.msra.mxu0 %v1147
      %1177 = vmatprep.subr.mxu0 0.0
      %1178 = vmatpush1.msra.mxu0 %v994
      %1179 = vmatprep.subr.mxu0 0.0
      %1180 = vmatpush1.msra.mxu0 %v989
      %1181 = vmatprep.subr.mxu0 0.0
      %1182 = vmatpush2.msra.mxu0 0.0
      %1183 = vmatprep.subr.mxu0 0.0
      %1184 = vmatpush2.msra.mxu0 0.0
      %1185 = vmatprep.subr.mxu0 0.0
      %1186 = vmatpush2.msra.mxu0 0.0
      %1187 = vmatprep.subr.mxu0 0.0
      %1188 = vmatpush2.msra.mxu0 0.0
      %1189 = vmatprep.subr.mxu0 0.0
      %1190 = vmatpush2.msra.mxu0 0.0
      %1191 = vmatprep.subr.mxu0 0.0
      %1192 = vmatpush2.msra.mxu0 0.0
      %1193 = vmatprep.subr.mxu0 0.0
      %1194 = vmatpush2.msra.mxu0 0.0
      %1195 = vmatprep.subr.mxu0 0.0
      %1196 = vmatpush2.msra.mxu0 0.0
      %1197 = vmatprep.subr.mxu0 0.0
      %1198 = vmatpush2.msra.mxu0 0.0
      %1199 = vmatprep.subr.mxu0 0.0
      %1200 = vmatpush2.msra.mxu0 0.0
      %1201 = vmatprep.subr.mxu0 0.0
      %1202 = vmatpush2.msra.mxu0 0.0
      %1203 = vmatprep.subr.mxu0 0.0
      %1204 = vmatpush2.msra.mxu0 0.0
      %1205 = vmatprep.subr.mxu0 0.0
      %1206 = vmatpush2.msra.mxu0 0.0
      %1207 = vmatprep.subr.mxu0 0.0
      %1208 = vmatpush2.msra.mxu0 0.0
      %1209 = vmatprep.subr.mxu0 0.0
      %1210 = vmatpush2.msra.mxu0 0.0
      %1211 = vmatprep.subr.mxu0 0.0
      %1212 = vmatpush2.msra.mxu0 0.0
      %1213 = vmatprep.mubr.f32.mxu0 0.0
      %1214 = vmatmul.mubr.f32.gmra.mxu0 %v1137
      %v1215 = vpop.f32.mrf.mxu0
      %v1216 = vadd.f32 0.0, %v1215
      %v1217 = vpop.f32.mrf.mxu0
      %1218 = vmatprep.mubr.f32.mxu0 0.0
      %1219 = vmatmul.mubr.f32.gmra.mxu0 %v1140
      %v1220 = vpop.f32.mrf.mxu0
      %v1221 = vadd.f32 0.0, %v1220
      %v1222 = vpop.f32.mrf.mxu0
      %1223 = vmatprep.mubr.f32.mxu0 0.0
      %1224 = vmatmul.mubr.f32.gmra.mxu0 %v1143
      %v1225 = vpop.f32.mrf.mxu0
      %v1226 = vadd.f32 0.0, %v1225
      %v1227 = vpop.f32.mrf.mxu0
      %1228 = vdwg.mxu0
      %v1229 = vld [vmem:[%s9] sm:$0xff]
      %s1230 = scalar_lea.vmem %s3, 32
      %v1231 = vld [vmem:[%s1230] sm:$0xff]
      %v1232 = vld [vmem:[%s1230 + $0x8] sm:$0xff]
      %v1233 = vld [vmem:[%s1230 + $0x10] sm:$0xff]
      %v1234 = vld [vmem:[%s1230 + $0x18] sm:$0xff]
      %s1235 = scalar_lea.vmem %s4, 1
      %v1236 = vld [vmem:[%s1235] sm:$0x1]
      %v1238 = vlaneseq
      %v1239 = vshrl.u32 %v1238, 7
      %v1240 = vsub.s32 0, %v1239
      %v1241 = vrot.slane %v1236, %v1240
      %1243 = vmatprep.subr.mxu0 0.0
      %1244 = vmatpush1.msra.mxu0 0.0
      %1245 = vmatprep.subr.mxu0 0.0
      %1246 = vmatpush1.msra.mxu0 0.0
      %1247 = vmatprep.subr.mxu0 0.0
      %1248 = vmatpush1.msra.mxu0 0.0
      %1249 = vmatprep.subr.mxu0 0.0
      %1250 = vmatpush1.msra.mxu0 0.0
      %1251 = vmatprep.subr.mxu0 0.0
      %1252 = vmatpush1.msra.mxu0 0.0
      %1253 = vmatprep.subr.mxu0 0.0
      %1254 = vmatpush1.msra.mxu0 0.0
      %1255 = vmatprep.subr.mxu0 0.0
      %1256 = vmatpush1.msra.mxu0 0.0
      %1257 = vmatprep.subr.mxu0 0.0
      %1258 = vmatpush1.msra.mxu0 0.0
      %1259 = vmatprep.subr.mxu0 0.0
      %1260 = vmatpush1.msra.mxu0 0.0
      %1261 = vmatprep.subr.mxu0 0.0
      %1262 = vmatpush1.msra.mxu0 0.0
      %1263 = vmatprep.subr.mxu0 0.0
      %1264 = vmatpush1.msra.mxu0 0.0
      %1265 = vmatprep.subr.mxu0 0.0
      %1266 = vmatpush1.msra.mxu0 0.0
      %1267 = vmatprep.subr.mxu0 0.0
      %1268 = vmatpush1.msra.mxu0 %v1234
      %1269 = vmatprep.subr.mxu0 0.0
      %1270 = vmatpush1.msra.mxu0 %v1233
      %1271 = vmatprep.subr.mxu0 0.0
      %1272 = vmatpush1.msra.mxu0 %v1232
      %1273 = vmatprep.subr.mxu0 0.0
      %1274 = vmatpush1.msra.mxu0 %v1231
      %1275 = vmatprep.subr.mxu0 0.0
      %1276 = vmatpush2.msra.mxu0 0.0
      %1277 = vmatprep.subr.mxu0 0.0
      %1278 = vmatpush2.msra.mxu0 0.0
      %1279 = vmatprep.subr.mxu0 0.0
      %1280 = vmatpush2.msra.mxu0 0.0
      %1281 = vmatprep.subr.mxu0 0.0
      %1282 = vmatpush2.msra.mxu0 0.0
      %1283 = vmatprep.subr.mxu0 0.0
      %1284 = vmatpush2.msra.mxu0 0.0
      %1285 = vmatprep.subr.mxu0 0.0
      %1286 = vmatpush2.msra.mxu0 0.0
      %1287 = vmatprep.subr.mxu0 0.0
      %1288 = vmatpush2.msra.mxu0 0.0
      %1289 = vmatprep.subr.mxu0 0.0
      %1290 = vmatpush2.msra.mxu0 0.0
      %1291 = vmatprep.subr.mxu0 0.0
      %1292 = vmatpush2.msra.mxu0 0.0
      %1293 = vmatprep.subr.mxu0 0.0
      %1294 = vmatpush2.msra.mxu0 0.0
      %1295 = vmatprep.subr.mxu0 0.0
      %1296 = vmatpush2.msra.mxu0 0.0
      %1297 = vmatprep.subr.mxu0 0.0
      %1298 = vmatpush2.msra.mxu0 0.0
      %1299 = vmatprep.subr.mxu0 0.0
      %1300 = vmatpush2.msra.mxu0 0.0
      %1301 = vmatprep.subr.mxu0 0.0
      %1302 = vmatpush2.msra.mxu0 0.0
      %1303 = vmatprep.subr.mxu0 0.0
      %1304 = vmatpush2.msra.mxu0 0.0
      %1305 = vmatprep.subr.mxu0 0.0
      %1306 = vmatpush2.msra.mxu0 0.0
      %1307 = vmatprep.mubr.f32.mxu0 0.0
      %1308 = vmatmul.mubr.f32.gmra.mxu0 %v732
      %v1309 = vpop.f32.mrf.mxu0
      %v1310 = vadd.f32 %v1241, %v1309
      %v1311 = vpop.f32.mrf.mxu0
      %1312 = vmatprep.mubr.f32.mxu0 0.0
      %1313 = vmatmul.mubr.f32.gmra.mxu0 %v735
      %v1314 = vpop.f32.mrf.mxu0
      %v1315 = vadd.f32 %v1241, %v1314
      %v1316 = vpop.f32.mrf.mxu0
      %1317 = vmatprep.mubr.f32.mxu0 0.0
      %1318 = vmatmul.mubr.f32.gmra.mxu0 %v738
      %v1319 = vpop.f32.mrf.mxu0
      %v1320 = vadd.f32 %v1241, %v1319
      %v1321 = vpop.f32.mrf.mxu0
      %1322 = vdwg.mxu0
      %s1323 = scalar_lea.vmem %s5, 32
      %v1324 = vld [vmem:[%s1323] sm:$0xff]
      %v1325 = vld [vmem:[%s1323 + $0x8] sm:$0xff]
      %v1326 = vld [vmem:[%s1323 + $0x10] sm:$0xff]
      %v1327 = vld [vmem:[%s1323 + $0x18] sm:$0xff]
      %s1328 = scalar_lea.vmem %s6, 1
      %v1329 = vld [vmem:[%s1328] sm:$0x1]
      %v1331 = vlaneseq
      %v1332 = vshrl.u32 %v1331, 7
      %v1333 = vsub.s32 0, %v1332
      %v1334 = vrot.slane %v1329, %v1333
      %1336 = vmatprep.subr.mxu0 0.0
      %1337 = vmatpush1.msra.mxu0 0.0
      %1338 = vmatprep.subr.mxu0 0.0
      %1339 = vmatpush1.msra.mxu0 0.0
      %1340 = vmatprep.subr.mxu0 0.0
      %1341 = vmatpush1.msra.mxu0 0.0
      %1342 = vmatprep.subr.mxu0 0.0
      %1343 = vmatpush1.msra.mxu0 0.0
      %1344 = vmatprep.subr.mxu0 0.0
      %1345 = vmatpush1.msra.mxu0 0.0
      %1346 = vmatprep.subr.mxu0 0.0
      %1347 = vmatpush1.msra.mxu0 0.0
      %1348 = vmatprep.subr.mxu0 0.0
      %1349 = vmatpush1.msra.mxu0 0.0
      %1350 = vmatprep.subr.mxu0 0.0
      %1351 = vmatpush1.msra.mxu0 0.0
      %1352 = vmatprep.subr.mxu0 0.0
      %1353 = vmatpush1.msra.mxu0 0.0
      %1354 = vmatprep.subr.mxu0 0.0
      %1355 = vmatpush1.msra.mxu0 0.0
      %1356 = vmatprep.subr.mxu0 0.0
      %1357 = vmatpush1.msra.mxu0 0.0
      %1358 = vmatprep.subr.mxu0 0.0
      %1359 = vmatpush1.msra.mxu0 0.0
      %1360 = vmatprep.subr.mxu0 0.0
      %1361 = vmatpush1.msra.mxu0 %v1327
      %1362 = vmatprep.subr.mxu0 0.0
      %1363 = vmatpush1.msra.mxu0 %v1326
      %1364 = vmatprep.subr.mxu0 0.0
      %1365 = vmatpush1.msra.mxu0 %v1325
      %1366 = vmatprep.subr.mxu0 0.0
      %1367 = vmatpush1.msra.mxu0 %v1324
      %1368 = vmatprep.subr.mxu0 0.0
      %1369 = vmatpush2.msra.mxu0 0.0
      %1370 = vmatprep.subr.mxu0 0.0
      %1371 = vmatpush2.msra.mxu0 0.0
      %1372 = vmatprep.subr.mxu0 0.0
      %1373 = vmatpush2.msra.mxu0 0.0
      %1374 = vmatprep.subr.mxu0 0.0
      %1375 = vmatpush2.msra.mxu0 0.0
      %1376 = vmatprep.subr.mxu0 0.0
      %1377 = vmatpush2.msra.mxu0 0.0
      %1378 = vmatprep.subr.mxu0 0.0
      %1379 = vmatpush2.msra.mxu0 0.0
      %1380 = vmatprep.subr.mxu0 0.0
      %1381 = vmatpush2.msra.mxu0 0.0
      %1382 = vmatprep.subr.mxu0 0.0
      %1383 = vmatpush2.msra.mxu0 0.0
      %1384 = vmatprep.subr.mxu0 0.0
      %1385 = vmatpush2.msra.mxu0 0.0
      %1386 = vmatprep.subr.mxu0 0.0
      %1387 = vmatpush2.msra.mxu0 0.0
      %1388 = vmatprep.subr.mxu0 0.0
      %1389 = vmatpush2.msra.mxu0 0.0
      %1390 = vmatprep.subr.mxu0 0.0
      %1391 = vmatpush2.msra.mxu0 0.0
      %1392 = vmatprep.subr.mxu0 0.0
      %1393 = vmatpush2.msra.mxu0 0.0
      %1394 = vmatprep.subr.mxu0 0.0
      %1395 = vmatpush2.msra.mxu0 0.0
      %1396 = vmatprep.subr.mxu0 0.0
      %1397 = vmatpush2.msra.mxu0 0.0
      %1398 = vmatprep.subr.mxu0 0.0
      %1399 = vmatpush2.msra.mxu0 0.0
      %1400 = vmatprep.mubr.f32.mxu0 0.0
      %1401 = vmatmul.mubr.f32.gmra.mxu0 %v732
      %v1402 = vpop.f32.mrf.mxu0
      %v1403 = vadd.f32 %v1334, %v1402
      %v1404 = vpop.f32.mrf.mxu0
      %1405 = vmatprep.mubr.f32.mxu0 0.0
      %1406 = vmatmul.mubr.f32.gmra.mxu0 %v735
      %v1407 = vpop.f32.mrf.mxu0
      %v1408 = vadd.f32 %v1334, %v1407
      %v1409 = vpop.f32.mrf.mxu0
      %1410 = vmatprep.mubr.f32.mxu0 0.0
      %1411 = vmatmul.mubr.f32.gmra.mxu0 %v738
      %v1412 = vpop.f32.mrf.mxu0
      %v1413 = vadd.f32 %v1334, %v1412
      %v1414 = vpop.f32.mrf.mxu0
      %1415 = vdwg.mxu0
      %s1416 = scalar_lea.vmem %s7, 32
      %v1417 = vld [vmem:[%s1416] sm:$0xff]
      %v1418 = vld [vmem:[%s1416 + $0x8] sm:$0xff]
      %v1419 = vld [vmem:[%s1416 + $0x10] sm:$0xff]
      %v1420 = vld [vmem:[%s1416 + $0x18] sm:$0xff]
      %s1421 = scalar_lea.vmem %s8, 1
      %v1422 = vld [vmem:[%s1421] sm:$0x1]
      %v1424 = vlaneseq
      %v1425 = vshrl.u32 %v1424, 7
      %v1426 = vsub.s32 0, %v1425
      %v1427 = vrot.slane %v1422, %v1426
      %1429 = vmatprep.subr.mxu0 0.0
      %1430 = vmatpush1.msra.mxu0 0.0
      %1431 = vmatprep.subr.mxu0 0.0
      %1432 = vmatpush1.msra.mxu0 0.0
      %1433 = vmatprep.subr.mxu0 0.0
      %1434 = vmatpush1.msra.mxu0 0.0
      %1435 = vmatprep.subr.mxu0 0.0
      %1436 = vmatpush1.msra.mxu0 0.0
      %1437 = vmatprep.subr.mxu0 0.0
      %1438 = vmatpush1.msra.mxu0 0.0
      %1439 = vmatprep.subr.mxu0 0.0
      %1440 = vmatpush1.msra.mxu0 0.0
      %1441 = vmatprep.subr.mxu0 0.0
      %1442 = vmatpush1.msra.mxu0 0.0
      %1443 = vmatprep.subr.mxu0 0.0
      %1444 = vmatpush1.msra.mxu0 0.0
      %1445 = vmatprep.subr.mxu0 0.0
      %1446 = vmatpush1.msra.mxu0 0.0
      %1447 = vmatprep.subr.mxu0 0.0
      %1448 = vmatpush1.msra.mxu0 0.0
      %1449 = vmatprep.subr.mxu0 0.0
      %1450 = vmatpush1.msra.mxu0 0.0
      %1451 = vmatprep.subr.mxu0 0.0
      %1452 = vmatpush1.msra.mxu0 0.0
      %1453 = vmatprep.subr.mxu0 0.0
      %1454 = vmatpush1.msra.mxu0 %v1420
      %1455 = vmatprep.subr.mxu0 0.0
      %1456 = vmatpush1.msra.mxu0 %v1419
      %1457 = vmatprep.subr.mxu0 0.0
      %1458 = vmatpush1.msra.mxu0 %v1418
      %1459 = vmatprep.subr.mxu0 0.0
      %1460 = vmatpush1.msra.mxu0 %v1417
      %1461 = vmatprep.subr.mxu0 0.0
      %1462 = vmatpush2.msra.mxu0 0.0
      %1463 = vmatprep.subr.mxu0 0.0
      %1464 = vmatpush2.msra.mxu0 0.0
      %1465 = vmatprep.subr.mxu0 0.0
      %1466 = vmatpush2.msra.mxu0 0.0
      %1467 = vmatprep.subr.mxu0 0.0
      %1468 = vmatpush2.msra.mxu0 0.0
      %1469 = vmatprep.subr.mxu0 0.0
      %1470 = vmatpush2.msra.mxu0 0.0
      %1471 = vmatprep.subr.mxu0 0.0
      %1472 = vmatpush2.msra.mxu0 0.0
      %1473 = vmatprep.subr.mxu0 0.0
      %1474 = vmatpush2.msra.mxu0 0.0
      %1475 = vmatprep.subr.mxu0 0.0
      %1476 = vmatpush2.msra.mxu0 0.0
      %1477 = vmatprep.subr.mxu0 0.0
      %1478 = vmatpush2.msra.mxu0 0.0
      %1479 = vmatprep.subr.mxu0 0.0
      %1480 = vmatpush2.msra.mxu0 0.0
      %1481 = vmatprep.subr.mxu0 0.0
      %1482 = vmatpush2.msra.mxu0 0.0
      %1483 = vmatprep.subr.mxu0 0.0
      %1484 = vmatpush2.msra.mxu0 0.0
      %1485 = vmatprep.subr.mxu0 0.0
      %1486 = vmatpush2.msra.mxu0 0.0
      %1487 = vmatprep.subr.mxu0 0.0
      %1488 = vmatpush2.msra.mxu0 0.0
      %1489 = vmatprep.subr.mxu0 0.0
      %1490 = vmatpush2.msra.mxu0 0.0
      %1491 = vmatprep.subr.mxu0 0.0
      %1492 = vmatpush2.msra.mxu0 0.0
      %1493 = vmatprep.mubr.f32.mxu0 0.0
      %1494 = vmatmul.mubr.f32.gmra.mxu0 %v732
      %v1495 = vpop.f32.mrf.mxu0
      %v1496 = vadd.f32 %v1427, %v1495
      %v1497 = vpop.f32.mrf.mxu0
      %1498 = vmatprep.mubr.f32.mxu0 0.0
      %1499 = vmatmul.mubr.f32.gmra.mxu0 %v735
      %v1500 = vpop.f32.mrf.mxu0
      %v1501 = vadd.f32 %v1427, %v1500
      %v1502 = vpop.f32.mrf.mxu0
      %1503 = vmatprep.mubr.f32.mxu0 0.0
      %1504 = vmatmul.mubr.f32.gmra.mxu0 %v738
      %v1505 = vpop.f32.mrf.mxu0
      %v1506 = vadd.f32 %v1427, %v1505
      %v1507 = vpop.f32.mrf.mxu0
      %1508 = vdwg.mxu0
      %v1510 = vsel %vm1002, %v1310, 0
      %v1513 = vsel %vm1002, %v1315, 0
      %v1516 = vsel %vm1002, %v1320, 0
      %v1519 = vsel %vm1002, %v1403, 0
      %v1522 = vsel %vm1002, %v1408, 0
      %v1525 = vsel %vm1002, %v1413, 0
      %1527 = vmatprep.subr.mxu0 0.0
      %1528 = vmatpush1.xpose.msra.mxu0 0.0
      %1529 = vmatprep.subr.mxu0 0.0
      %1530 = vmatpush1.xpose.msra.mxu0 0.0
      %1531 = vmatprep.subr.mxu0 0.0
      %1532 = vmatpush1.xpose.msra.mxu0 0.0
      %1533 = vmatprep.subr.mxu0 0.0
      %1534 = vmatpush1.xpose.msra.mxu0 0.0
      %1535 = vmatprep.subr.mxu0 0.0
      %1536 = vmatpush1.xpose.msra.mxu0 0.0
      %1537 = vmatprep.subr.mxu0 0.0
      %1538 = vmatpush1.xpose.msra.mxu0 0.0
      %1539 = vmatprep.subr.mxu0 0.0
      %1540 = vmatpush1.xpose.msra.mxu0 0.0
      %1541 = vmatprep.subr.mxu0 0.0
      %1542 = vmatpush1.xpose.msra.mxu0 0.0
      %1543 = vmatprep.subr.mxu0 0.0
      %1544 = vmatpush1.xpose.msra.mxu0 0.0
      %1545 = vmatprep.subr.mxu0 0.0
      %1546 = vmatpush1.xpose.msra.mxu0 0.0
      %1547 = vmatprep.subr.mxu0 0.0
      %1548 = vmatpush1.xpose.msra.mxu0 0.0
      %1549 = vmatprep.subr.mxu0 0.0
      %1550 = vmatpush1.xpose.msra.mxu0 0.0
      %1551 = vmatprep.subr.mxu0 0.0
      %1552 = vmatpush1.xpose.msra.mxu0 0.0
      %1553 = vmatprep.subr.mxu0 0.0
      %1554 = vmatpush1.xpose.msra.mxu0 %v1525
      %1555 = vmatprep.subr.mxu0 0.0
      %1556 = vmatpush1.xpose.msra.mxu0 %v1522
      %1557 = vmatprep.subr.mxu0 0.0
      %1558 = vmatpush1.xpose.msra.mxu0 %v1519
      %1559 = vmatprep.subr.mxu0 0.0
      %1560 = vmatpush2.xpose.msra.mxu0 0.0
      %1561 = vmatprep.subr.mxu0 0.0
      %1562 = vmatpush2.xpose.msra.mxu0 0.0
      %1563 = vmatprep.subr.mxu0 0.0
      %1564 = vmatpush2.xpose.msra.mxu0 0.0
      %1565 = vmatprep.subr.mxu0 0.0
      %1566 = vmatpush2.xpose.msra.mxu0 0.0
      %1567 = vmatprep.subr.mxu0 0.0
      %1568 = vmatpush2.xpose.msra.mxu0 0.0
      %1569 = vmatprep.subr.mxu0 0.0
      %1570 = vmatpush2.xpose.msra.mxu0 0.0
      %1571 = vmatprep.subr.mxu0 0.0
      %1572 = vmatpush2.xpose.msra.mxu0 0.0
      %1573 = vmatprep.subr.mxu0 0.0
      %1574 = vmatpush2.xpose.msra.mxu0 0.0
      %1575 = vmatprep.subr.mxu0 0.0
      %1576 = vmatpush2.xpose.msra.mxu0 0.0
      %1577 = vmatprep.subr.mxu0 0.0
      %1578 = vmatpush2.xpose.msra.mxu0 0.0
      %1579 = vmatprep.subr.mxu0 0.0
      %1580 = vmatpush2.xpose.msra.mxu0 0.0
      %1581 = vmatprep.subr.mxu0 0.0
      %1582 = vmatpush2.xpose.msra.mxu0 0.0
      %1583 = vmatprep.subr.mxu0 0.0
      %1584 = vmatpush2.xpose.msra.mxu0 0.0
      %1585 = vmatprep.subr.mxu0 0.0
      %1586 = vmatpush2.xpose.msra.mxu0 0.0
      %1587 = vmatprep.subr.mxu0 0.0
      %1588 = vmatpush2.xpose.msra.mxu0 0.0
      %1589 = vmatprep.subr.mxu0 0.0
      %1590 = vmatpush2.xpose.msra.mxu0 0.0
      %1591 = vmatprep.mubr.f32.mxu0 0.0
      %1592 = vmatmul.mubr.f32.gmra.mxu0 %v1510
      %v1593 = vpop.f32.mrf.mxu0
      %v1594 = vadd.f32 0.0, %v1593
      %v1595 = vpop.f32.mrf.mxu0
      %1596 = vmatprep.mubr.f32.mxu0 0.0
      %1597 = vmatmul.mubr.f32.gmra.mxu0 %v1513
      %v1598 = vpop.f32.mrf.mxu0
      %v1599 = vadd.f32 0.0, %v1598
      %v1600 = vpop.f32.mrf.mxu0
      %1601 = vmatprep.mubr.f32.mxu0 0.0
      %1602 = vmatmul.mubr.f32.gmra.mxu0 %v1516
      %v1603 = vpop.f32.mrf.mxu0
      %v1604 = vadd.f32 0.0, %v1603
      %v1605 = vpop.f32.mrf.mxu0
      %1606 = vdwg.mxu0
      %v1607 = vsel %vm1101, %v1594, -inf
      %1608 = vmax.xlane.f32.xlu0 %v1607
      %v1609 = vpop.xlane.xlu0 %1608
      %v1610 = vsel %vm1101, %v1599, -inf
      %1611 = vmax.xlane.f32.xlu0 %v1610
      %v1612 = vpop.xlane.xlu0 %1611
      %v1613 = vsel %vm1108, %v1604, -inf
      %1614 = vmax.xlane.f32.xlu0 %v1613
      %v1615 = vpop.xlane.xlu0 %1614
      %v1616 = vsub.f32 %v1594, %v1609
      %v1617 = vsub.f32 %v1599, %v1612
      %v1618 = vsub.f32 %v1604, %v1615
      %v1619 = vmul.f32 %v1616, 1.442695
      %v1620 = vpow.pop %v1619
      %v1621 = vmul.f32 %v1617, 1.442695
      %v1622 = vpow.pop %v1621
      %v1623 = vmul.f32 %v1618, 1.442695
      %v1624 = vpow.pop %v1623
      %v1625 = vsel %vm1101, %v1620, 0.0
      %1626 = vadd.xlane.f32.xlu0 %v1625
      %v1627 = vpop.xlane.xlu0 %1626
      %v1628 = vsel %vm1101, %v1622, 0.0
      %1629 = vadd.xlane.f32.xlu0 %v1628
      %v1630 = vpop.xlane.xlu0 %1629
      %v1631 = vsel %vm1108, %v1624, 0.0
      %1632 = vadd.xlane.f32.xlu0 %v1631
      %v1633 = vpop.xlane.xlu0 %1632
      %v1634 = vrcp.pop %v1627
      %v1635 = vrcp.pop %v1630
      %v1636 = vrcp.pop %v1633
      %v1637 = vmul.f32 %v1620, %v1634
      %v1638 = vmul.f32 %v1622, %v1635
      %v1639 = vmul.f32 %v1624, %v1636
      %v1641 = vsel %vm1101, %v1637, 0
      %v1644 = vsel %vm1101, %v1638, 0
      %v1647 = vsel %vm1101, %v1639, 0
      %v1650 = vsel %vm1145, %v1506, 0
      %1652 = vmatprep.subr.mxu0 0.0
      %1653 = vmatpush1.msra.mxu0 0.0
      %1654 = vmatprep.subr.mxu0 0.0
      %1655 = vmatpush1.msra.mxu0 0.0
      %1656 = vmatprep.subr.mxu0 0.0
      %1657 = vmatpush1.msra.mxu0 0.0
      %1658 = vmatprep.subr.mxu0 0.0
      %1659 = vmatpush1.msra.mxu0 0.0
      %1660 = vmatprep.subr.mxu0 0.0
      %1661 = vmatpush1.msra.mxu0 0.0
      %1662 = vmatprep.subr.mxu0 0.0
      %1663 = vmatpush1.msra.mxu0 0.0
      %1664 = vmatprep.subr.mxu0 0.0
      %1665 = vmatpush1.msra.mxu0 0.0
      %1666 = vmatprep.subr.mxu0 0.0
      %1667 = vmatpush1.msra.mxu0 0.0
      %1668 = vmatprep.subr.mxu0 0.0
      %1669 = vmatpush1.msra.mxu0 0.0
      %1670 = vmatprep.subr.mxu0 0.0
      %1671 = vmatpush1.msra.mxu0 0.0
      %1672 = vmatprep.subr.mxu0 0.0
      %1673 = vmatpush1.msra.mxu0 0.0
      %1674 = vmatprep.subr.mxu0 0.0
      %1675 = vmatpush1.msra.mxu0 0.0
      %1676 = vmatprep.subr.mxu0 0.0
      %1677 = vmatpush1.msra.mxu0 0.0
      %1678 = vmatprep.subr.mxu0 0.0
      %1679 = vmatpush1.msra.mxu0 %v1650
      %1680 = vmatprep.subr.mxu0 0.0
      %1681 = vmatpush1.msra.mxu0 %v1501
      %1682 = vmatprep.subr.mxu0 0.0
      %1683 = vmatpush1.msra.mxu0 %v1496
      %1684 = vmatprep.subr.mxu0 0.0
      %1685 = vmatpush2.msra.mxu0 0.0
      %1686 = vmatprep.subr.mxu0 0.0
      %1687 = vmatpush2.msra.mxu0 0.0
      %1688 = vmatprep.subr.mxu0 0.0
      %1689 = vmatpush2.msra.mxu0 0.0
      %1690 = vmatprep.subr.mxu0 0.0
      %1691 = vmatpush2.msra.mxu0 0.0
      %1692 = vmatprep.subr.mxu0 0.0
      %1693 = vmatpush2.msra.mxu0 0.0
      %1694 = vmatprep.subr.mxu0 0.0
      %1695 = vmatpush2.msra.mxu0 0.0
      %1696 = vmatprep.subr.mxu0 0.0
      %1697 = vmatpush2.msra.mxu0 0.0
      %1698 = vmatprep.subr.mxu0 0.0
      %1699 = vmatpush2.msra.mxu0 0.0
      %1700 = vmatprep.subr.mxu0 0.0
      %1701 = vmatpush2.msra.mxu0 0.0
      %1702 = vmatprep.subr.mxu0 0.0
      %1703 = vmatpush2.msra.mxu0 0.0
      %1704 = vmatprep.subr.mxu0 0.0
      %1705 = vmatpush2.msra.mxu0 0.0
      %1706 = vmatprep.subr.mxu0 0.0
      %1707 = vmatpush2.msra.mxu0 0.0
      %1708 = vmatprep.subr.mxu0 0.0
      %1709 = vmatpush2.msra.mxu0 0.0
      %1710 = vmatprep.subr.mxu0 0.0
      %1711 = vmatpush2.msra.mxu0 0.0
      %1712 = vmatprep.subr.mxu0 0.0
      %1713 = vmatpush2.msra.mxu0 0.0
      %1714 = vmatprep.subr.mxu0 0.0
      %1715 = vmatpush2.msra.mxu0 0.0
      %1716 = vmatprep.mubr.f32.mxu0 0.0
      %1717 = vmatmul.mubr.f32.gmra.mxu0 %v1641
      %v1718 = vpop.f32.mrf.mxu0
      %v1719 = vadd.f32 0.0, %v1718
      %v1720 = vpop.f32.mrf.mxu0
      %1721 = vmatprep.mubr.f32.mxu0 0.0
      %1722 = vmatmul.mubr.f32.gmra.mxu0 %v1644
      %v1723 = vpop.f32.mrf.mxu0
      %v1724 = vadd.f32 0.0, %v1723
      %v1725 = vpop.f32.mrf.mxu0
      %1726 = vmatprep.mubr.f32.mxu0 0.0
      %1727 = vmatmul.mubr.f32.gmra.mxu0 %v1647
      %v1728 = vpop.f32.mrf.mxu0
      %v1729 = vadd.f32 0.0, %v1728
      %v1730 = vpop.f32.mrf.mxu0
      %1731 = vdwg.mxu0
      %s1732 = scalar_lea.vmem %s9, 8
      %v1733 = vld [vmem:[%s1732] sm:$0xff]
      %v1735 = vsel %vm1002, %v1719, 0
      %v1738 = vsel %vm1002, %v1724, 0
      %v1741 = vsel %vm1002, %v1729, 0
      %1743 = vmatprep.subr.mxu0 0.0
      %1744 = vmatpush1.msra.mxu0 0.0
      %1745 = vmatprep.subr.mxu0 0.0
      %1746 = vmatpush1.msra.mxu0 0.0
      %1747 = vmatprep.subr.mxu0 0.0
      %1748 = vmatpush1.msra.mxu0 0.0
      %1749 = vmatprep.subr.mxu0 0.0
      %1750 = vmatpush1.msra.mxu0 0.0
      %1751 = vmatprep.subr.mxu0 0.0
      %1752 = vmatpush1.msra.mxu0 0.0
      %1753 = vmatprep.subr.mxu0 0.0
      %1754 = vmatpush1.msra.mxu0 0.0
      %1755 = vmatprep.subr.mxu0 0.0
      %1756 = vmatpush1.msra.mxu0 0.0
      %1757 = vmatprep.subr.mxu0 0.0
      %1758 = vmatpush1.msra.mxu0 0.0
      %1759 = vmatprep.subr.mxu0 0.0
      %1760 = vmatpush1.msra.mxu0 0.0
      %1761 = vmatprep.subr.mxu0 0.0
      %1762 = vmatpush1.msra.mxu0 0.0
      %1763 = vmatprep.subr.mxu0 0.0
      %1764 = vmatpush1.msra.mxu0 0.0
      %1765 = vmatprep.subr.mxu0 0.0
      %1766 = vmatpush1.msra.mxu0 0.0
      %1767 = vmatprep.subr.mxu0 0.0
      %1768 = vmatpush1.msra.mxu0 0.0
      %1769 = vmatprep.subr.mxu0 0.0
      %1770 = vmatpush1.msra.mxu0 0.0
      %1771 = vmatprep.subr.mxu0 0.0
      %1772 = vmatpush1.msra.mxu0 0.0
      %1773 = vmatprep.subr.mxu0 0.0
      %1774 = vmatpush1.msra.mxu0 %v1733
      %1775 = vmatprep.subr.mxu0 0.0
      %1776 = vmatpush2.msra.mxu0 0.0
      %1777 = vmatprep.subr.mxu0 0.0
      %1778 = vmatpush2.msra.mxu0 0.0
      %1779 = vmatprep.subr.mxu0 0.0
      %1780 = vmatpush2.msra.mxu0 0.0
      %1781 = vmatprep.subr.mxu0 0.0
      %1782 = vmatpush2.msra.mxu0 0.0
      %1783 = vmatprep.subr.mxu0 0.0
      %1784 = vmatpush2.msra.mxu0 0.0
      %1785 = vmatprep.subr.mxu0 0.0
      %1786 = vmatpush2.msra.mxu0 0.0
      %1787 = vmatprep.subr.mxu0 0.0
      %1788 = vmatpush2.msra.mxu0 0.0
      %1789 = vmatprep.subr.mxu0 0.0
      %1790 = vmatpush2.msra.mxu0 0.0
      %1791 = vmatprep.subr.mxu0 0.0
      %1792 = vmatpush2.msra.mxu0 0.0
      %1793 = vmatprep.subr.mxu0 0.0
      %1794 = vmatpush2.msra.mxu0 0.0
      %1795 = vmatprep.subr.mxu0 0.0
      %1796 = vmatpush2.msra.mxu0 0.0
      %1797 = vmatprep.subr.mxu0 0.0
      %1798 = vmatpush2.msra.mxu0 0.0
      %1799 = vmatprep.subr.mxu0 0.0
      %1800 = vmatpush2.msra.mxu0 0.0
      %1801 = vmatprep.subr.mxu0 0.0
      %1802 = vmatpush2.msra.mxu0 0.0
      %1803 = vmatprep.subr.mxu0 0.0
      %1804 = vmatpush2.msra.mxu0 0.0
      %1805 = vmatprep.subr.mxu0 0.0
      %1806 = vmatpush2.msra.mxu0 0.0
      %1807 = vmatprep.mubr.f32.mxu0 0.0
      %1808 = vmatmul.mubr.f32.gmra.mxu0 %v1735
      %v1809 = vpop.f32.mrf.mxu0
      %v1810 = vadd.f32 0.0, %v1809
      %v1811 = vpop.f32.mrf.mxu0
      %1812 = vmatprep.mubr.f32.mxu0 0.0
      %1813 = vmatmul.mubr.f32.gmra.mxu0 %v1738
      %v1814 = vpop.f32.mrf.mxu0
      %v1815 = vadd.f32 0.0, %v1814
      %v1816 = vpop.f32.mrf.mxu0
      %1817 = vmatprep.mubr.f32.mxu0 0.0
      %1818 = vmatmul.mubr.f32.gmra.mxu0 %v1741
      %v1819 = vpop.f32.mrf.mxu0
      %v1820 = vadd.f32 0.0, %v1819
      %v1821 = vpop.f32.mrf.mxu0
      %1822 = vdwg.mxu0
      %v1824 = vsel %vm1002, %v1216, 0
      %v1827 = vsel %vm1002, %v1221, 0
      %v1830 = vsel %vm1002, %v1226, 0
      %1832 = vmatprep.subr.mxu0 0.0
      %1833 = vmatpush1.msra.mxu0 0.0
      %1834 = vmatprep.subr.mxu0 0.0
      %1835 = vmatpush1.msra.mxu0 0.0
      %1836 = vmatprep.subr.mxu0 0.0
      %1837 = vmatpush1.msra.mxu0 0.0
      %1838 = vmatprep.subr.mxu0 0.0
      %1839 = vmatpush1.msra.mxu0 0.0
      %1840 = vmatprep.subr.mxu0 0.0
      %1841 = vmatpush1.msra.mxu0 0.0
      %1842 = vmatprep.subr.mxu0 0.0
      %1843 = vmatpush1.msra.mxu0 0.0
      %1844 = vmatprep.subr.mxu0 0.0
      %1845 = vmatpush1.msra.mxu0 0.0
      %1846 = vmatprep.subr.mxu0 0.0
      %1847 = vmatpush1.msra.mxu0 0.0
      %1848 = vmatprep.subr.mxu0 0.0
      %1849 = vmatpush1.msra.mxu0 0.0
      %1850 = vmatprep.subr.mxu0 0.0
      %1851 = vmatpush1.msra.mxu0 0.0
      %1852 = vmatprep.subr.mxu0 0.0
      %1853 = vmatpush1.msra.mxu0 0.0
      %1854 = vmatprep.subr.mxu0 0.0
      %1855 = vmatpush1.msra.mxu0 0.0
      %1856 = vmatprep.subr.mxu0 0.0
      %1857 = vmatpush1.msra.mxu0 0.0
      %1858 = vmatprep.subr.mxu0 0.0
      %1859 = vmatpush1.msra.mxu0 0.0
      %1860 = vmatprep.subr.mxu0 0.0
      %1861 = vmatpush1.msra.mxu0 0.0
      %1862 = vmatprep.subr.mxu0 0.0
      %1863 = vmatpush1.msra.mxu0 %v1229
      %1864 = vmatprep.subr.mxu0 0.0
      %1865 = vmatpush2.msra.mxu0 0.0
      %1866 = vmatprep.subr.mxu0 0.0
      %1867 = vmatpush2.msra.mxu0 0.0
      %1868 = vmatprep.subr.mxu0 0.0
      %1869 = vmatpush2.msra.mxu0 0.0
      %1870 = vmatprep.subr.mxu0 0.0
      %1871 = vmatpush2.msra.mxu0 0.0
      %1872 = vmatprep.subr.mxu0 0.0
      %1873 = vmatpush2.msra.mxu0 0.0
      %1874 = vmatprep.subr.mxu0 0.0
      %1875 = vmatpush2.msra.mxu0 0.0
      %1876 = vmatprep.subr.mxu0 0.0
      %1877 = vmatpush2.msra.mxu0 0.0
      %1878 = vmatprep.subr.mxu0 0.0
      %1879 = vmatpush2.msra.mxu0 0.0
      %1880 = vmatprep.subr.mxu0 0.0
      %1881 = vmatpush2.msra.mxu0 0.0
      %1882 = vmatprep.subr.mxu0 0.0
      %1883 = vmatpush2.msra.mxu0 0.0
      %1884 = vmatprep.subr.mxu0 0.0
      %1885 = vmatpush2.msra.mxu0 0.0
      %1886 = vmatprep.subr.mxu0 0.0
      %1887 = vmatpush2.msra.mxu0 0.0
      %1888 = vmatprep.subr.mxu0 0.0
      %1889 = vmatpush2.msra.mxu0 0.0
      %1890 = vmatprep.subr.mxu0 0.0
      %1891 = vmatpush2.msra.mxu0 0.0
      %1892 = vmatprep.subr.mxu0 0.0
      %1893 = vmatpush2.msra.mxu0 0.0
      %1894 = vmatprep.subr.mxu0 0.0
      %1895 = vmatpush2.msra.mxu0 0.0
      %1896 = vmatprep.mubr.f32.mxu0 0.0
      %1897 = vmatmul.mubr.f32.gmra.mxu0 %v1824
      %v1898 = vpop.f32.mrf.mxu0
      %v1899 = vadd.f32 %v1810, %v1898
      %v1900 = vpop.f32.mrf.mxu0
      %1901 = vmatprep.mubr.f32.mxu0 0.0
      %1902 = vmatmul.mubr.f32.gmra.mxu0 %v1827
      %v1903 = vpop.f32.mrf.mxu0
      %v1904 = vadd.f32 %v1815, %v1903
      %v1905 = vpop.f32.mrf.mxu0
      %1906 = vmatprep.mubr.f32.mxu0 0.0
      %1907 = vmatmul.mubr.f32.gmra.mxu0 %v1830
      %v1908 = vpop.f32.mrf.mxu0
      %v1909 = vadd.f32 %v1820, %v1908
      %v1910 = vpop.f32.mrf.mxu0
      %1911 = vdwg.mxu0
      %s1912 = scalar_lea.vmem %s3, 64
      %v1913 = vld [vmem:[%s1912] sm:$0xff]
      %v1914 = vld [vmem:[%s1912 + $0x8] sm:$0xff]
      %v1915 = vld [vmem:[%s1912 + $0x10] sm:$0xff]
      %v1916 = vld [vmem:[%s1912 + $0x18] sm:$0xff]
      %s1917 = scalar_lea.vmem %s4, 2
      %v1918 = vld [vmem:[%s1917] sm:$0x1]
      %v1920 = vlaneseq
      %v1921 = vshrl.u32 %v1920, 7
      %v1922 = vsub.s32 0, %v1921
      %v1923 = vrot.slane %v1918, %v1922
      %1925 = vmatprep.subr.mxu0 0.0
      %1926 = vmatpush1.msra.mxu0 0.0
      %1927 = vmatprep.subr.mxu0 0.0
      %1928 = vmatpush1.msra.mxu0 0.0
      %1929 = vmatprep.subr.mxu0 0.0
      %1930 = vmatpush1.msra.mxu0 0.0
      %1931 = vmatprep.subr.mxu0 0.0
      %1932 = vmatpush1.msra.mxu0 0.0
      %1933 = vmatprep.subr.mxu0 0.0
      %1934 = vmatpush1.msra.mxu0 0.0
      %1935 = vmatprep.subr.mxu0 0.0
      %1936 = vmatpush1.msra.mxu0 0.0
      %1937 = vmatprep.subr.mxu0 0.0
      %1938 = vmatpush1.msra.mxu0 0.0
      %1939 = vmatprep.subr.mxu0 0.0
      %1940 = vmatpush1.msra.mxu0 0.0
      %1941 = vmatprep.subr.mxu0 0.0
      %1942 = vmatpush1.msra.mxu0 0.0
      %1943 = vmatprep.subr.mxu0 0.0
      %1944 = vmatpush1.msra.mxu0 0.0
      %1945 = vmatprep.subr.mxu0 0.0
      %1946 = vmatpush1.msra.mxu0 0.0
      %1947 = vmatprep.subr.mxu0 0.0
      %1948 = vmatpush1.msra.mxu0 0.0
      %1949 = vmatprep.subr.mxu0 0.0
      %1950 = vmatpush1.msra.mxu0 %v1916
      %1951 = vmatprep.subr.mxu0 0.0
      %1952 = vmatpush1.msra.mxu0 %v1915
      %1953 = vmatprep.subr.mxu0 0.0
      %1954 = vmatpush1.msra.mxu0 %v1914
      %1955 = vmatprep.subr.mxu0 0.0
      %1956 = vmatpush1.msra.mxu0 %v1913
      %1957 = vmatprep.subr.mxu0 0.0
      %1958 = vmatpush2.msra.mxu0 0.0
      %1959 = vmatprep.subr.mxu0 0.0
      %1960 = vmatpush2.msra.mxu0 0.0
      %1961 = vmatprep.subr.mxu0 0.0
      %1962 = vmatpush2.msra.mxu0 0.0
      %1963 = vmatprep.subr.mxu0 0.0
      %1964 = vmatpush2.msra.mxu0 0.0
      %1965 = vmatprep.subr.mxu0 0.0
      %1966 = vmatpush2.msra.mxu0 0.0
      %1967 = vmatprep.subr.mxu0 0.0
      %1968 = vmatpush2.msra.mxu0 0.0
      %1969 = vmatprep.subr.mxu0 0.0
      %1970 = vmatpush2.msra.mxu0 0.0
      %1971 = vmatprep.subr.mxu0 0.0
      %1972 = vmatpush2.msra.mxu0 0.0
      %1973 = vmatprep.subr.mxu0 0.0
      %1974 = vmatpush2.msra.mxu0 0.0
      %1975 = vmatprep.subr.mxu0 0.0
      %1976 = vmatpush2.msra.mxu0 0.0
      %1977 = vmatprep.subr.mxu0 0.0
      %1978 = vmatpush2.msra.mxu0 0.0
      %1979 = vmatprep.subr.mxu0 0.0
      %1980 = vmatpush2.msra.mxu0 0.0
      %1981 = vmatprep.subr.mxu0 0.0
      %1982 = vmatpush2.msra.mxu0 0.0
      %1983 = vmatprep.subr.mxu0 0.0
      %1984 = vmatpush2.msra.mxu0 0.0
      %1985 = vmatprep.subr.mxu0 0.0
      %1986 = vmatpush2.msra.mxu0 0.0
      %1987 = vmatprep.subr.mxu0 0.0
      %1988 = vmatpush2.msra.mxu0 0.0
      %1989 = vmatprep.mubr.f32.mxu0 0.0
      %1990 = vmatmul.mubr.f32.gmra.mxu0 %v732
      %v1991 = vpop.f32.mrf.mxu0
      %v1992 = vadd.f32 %v1923, %v1991
      %v1993 = vpop.f32.mrf.mxu0
      %1994 = vmatprep.mubr.f32.mxu0 0.0
      %1995 = vmatmul.mubr.f32.gmra.mxu0 %v735
      %v1996 = vpop.f32.mrf.mxu0
      %v1997 = vadd.f32 %v1923, %v1996
      %v1998 = vpop.f32.mrf.mxu0
      %1999 = vmatprep.mubr.f32.mxu0 0.0
      %2000 = vmatmul.mubr.f32.gmra.mxu0 %v738
      %v2001 = vpop.f32.mrf.mxu0
      %v2002 = vadd.f32 %v1923, %v2001
      %v2003 = vpop.f32.mrf.mxu0
      %2004 = vdwg.mxu0
      %s2005 = scalar_lea.vmem %s5, 64
      %v2006 = vld [vmem:[%s2005] sm:$0xff]
      %v2007 = vld [vmem:[%s2005 + $0x8] sm:$0xff]
      %v2008 = vld [vmem:[%s2005 + $0x10] sm:$0xff]
      %v2009 = vld [vmem:[%s2005 + $0x18] sm:$0xff]
      %s2010 = scalar_lea.vmem %s6, 2
      %v2011 = vld [vmem:[%s2010] sm:$0x1]
      %v2013 = vlaneseq
      %v2014 = vshrl.u32 %v2013, 7
      %v2015 = vsub.s32 0, %v2014
      %v2016 = vrot.slane %v2011, %v2015
      %2018 = vmatprep.subr.mxu0 0.0
      %2019 = vmatpush1.msra.mxu0 0.0
      %2020 = vmatprep.subr.mxu0 0.0
      %2021 = vmatpush1.msra.mxu0 0.0
      %2022 = vmatprep.subr.mxu0 0.0
      %2023 = vmatpush1.msra.mxu0 0.0
      %2024 = vmatprep.subr.mxu0 0.0
      %2025 = vmatpush1.msra.mxu0 0.0
      %2026 = vmatprep.subr.mxu0 0.0
      %2027 = vmatpush1.msra.mxu0 0.0
      %2028 = vmatprep.subr.mxu0 0.0
      %2029 = vmatpush1.msra.mxu0 0.0
      %2030 = vmatprep.subr.mxu0 0.0
      %2031 = vmatpush1.msra.mxu0 0.0
      %2032 = vmatprep.subr.mxu0 0.0
      %2033 = vmatpush1.msra.mxu0 0.0
      %2034 = vmatprep.subr.mxu0 0.0
      %2035 = vmatpush1.msra.mxu0 0.0
      %2036 = vmatprep.subr.mxu0 0.0
      %2037 = vmatpush1.msra.mxu0 0.0
      %2038 = vmatprep.subr.mxu0 0.0
      %2039 = vmatpush1.msra.mxu0 0.0
      %2040 = vmatprep.subr.mxu0 0.0
      %2041 = vmatpush1.msra.mxu0 0.0
      %2042 = vmatprep.subr.mxu0 0.0
      %2043 = vmatpush1.msra.mxu0 %v2009
      %2044 = vmatprep.subr.mxu0 0.0
      %2045 = vmatpush1.msra.mxu0 %v2008
      %2046 = vmatprep.subr.mxu0 0.0
      %2047 = vmatpush1.msra.mxu0 %v2007
      %2048 = vmatprep.subr.mxu0 0.0
      %2049 = vmatpush1.msra.mxu0 %v2006
      %2050 = vmatprep.subr.mxu0 0.0
      %2051 = vmatpush2.msra.mxu0 0.0
      %2052 = vmatprep.subr.mxu0 0.0
      %2053 = vmatpush2.msra.mxu0 0.0
      %2054 = vmatprep.subr.mxu0 0.0
      %2055 = vmatpush2.msra.mxu0 0.0
      %2056 = vmatprep.subr.mxu0 0.0
      %2057 = vmatpush2.msra.mxu0 0.0
      %2058 = vmatprep.subr.mxu0 0.0
      %2059 = vmatpush2.msra.mxu0 0.0
      %2060 = vmatprep.subr.mxu0 0.0
      %2061 = vmatpush2.msra.mxu0 0.0
      %2062 = vmatprep.subr.mxu0 0.0
      %2063 = vmatpush2.msra.mxu0 0.0
      %2064 = vmatprep.subr.mxu0 0.0
      %2065 = vmatpush2.msra.mxu0 0.0
      %2066 = vmatprep.subr.mxu0 0.0
      %2067 = vmatpush2.msra.mxu0 0.0
      %2068 = vmatprep.subr.mxu0 0.0
      %2069 = vmatpush2.msra.mxu0 0.0
      %2070 = vmatprep.subr.mxu0 0.0
      %2071 = vmatpush2.msra.mxu0 0.0
      %2072 = vmatprep.subr.mxu0 0.0
      %2073 = vmatpush2.msra.mxu0 0.0
      %2074 = vmatprep.subr.mxu0 0.0
      %2075 = vmatpush2.msra.mxu0 0.0
      %2076 = vmatprep.subr.mxu0 0.0
      %2077 = vmatpush2.msra.mxu0 0.0
      %2078 = vmatprep.subr.mxu0 0.0
      %2079 = vmatpush2.msra.mxu0 0.0
      %2080 = vmatprep.subr.mxu0 0.0
      %2081 = vmatpush2.msra.mxu0 0.0
      %2082 = vmatprep.mubr.f32.mxu0 0.0
      %2083 = vmatmul.mubr.f32.gmra.mxu0 %v732
      %v2084 = vpop.f32.mrf.mxu0
      %v2085 = vadd.f32 %v2016, %v2084
      %v2086 = vpop.f32.mrf.mxu0
      %2087 = vmatprep.mubr.f32.mxu0 0.0
      %2088 = vmatmul.mubr.f32.gmra.mxu0 %v735
      %v2089 = vpop.f32.mrf.mxu0
      %v2090 = vadd.f32 %v2016, %v2089
      %v2091 = vpop.f32.mrf.mxu0
      %2092 = vmatprep.mubr.f32.mxu0 0.0
      %2093 = vmatmul.mubr.f32.gmra.mxu0 %v738
      %v2094 = vpop.f32.mrf.mxu0
      %v2095 = vadd.f32 %v2016, %v2094
      %v2096 = vpop.f32.mrf.mxu0
      %2097 = vdwg.mxu0
      %s2098 = scalar_lea.vmem %s7, 64
      %v2099 = vld [vmem:[%s2098] sm:$0xff]
      %v2100 = vld [vmem:[%s2098 + $0x8] sm:$0xff]
      %v2101 = vld [vmem:[%s2098 + $0x10] sm:$0xff]
      %v2102 = vld [vmem:[%s2098 + $0x18] sm:$0xff]
      %s2103 = scalar_lea.vmem %s8, 2
      %v2104 = vld [vmem:[%s2103] sm:$0x1]
      %v2106 = vlaneseq
      %v2107 = vshrl.u32 %v2106, 7
      %v2108 = vsub.s32 0, %v2107
      %v2109 = vrot.slane %v2104, %v2108
      %2111 = vmatprep.subr.mxu0 0.0
      %2112 = vmatpush1.msra.mxu0 0.0
      %2113 = vmatprep.subr.mxu0 0.0
      %2114 = vmatpush1.msra.mxu0 0.0
      %2115 = vmatprep.subr.mxu0 0.0
      %2116 = vmatpush1.msra.mxu0 0.0
      %2117 = vmatprep.subr.mxu0 0.0
      %2118 = vmatpush1.msra.mxu0 0.0
      %2119 = vmatprep.subr.mxu0 0.0
      %2120 = vmatpush1.msra.mxu0 0.0
      %2121 = vmatprep.subr.mxu0 0.0
      %2122 = vmatpush1.msra.mxu0 0.0
      %2123 = vmatprep.subr.mxu0 0.0
      %2124 = vmatpush1.msra.mxu0 0.0
      %2125 = vmatprep.subr.mxu0 0.0
      %2126 = vmatpush1.msra.mxu0 0.0
      %2127 = vmatprep.subr.mxu0 0.0
      %2128 = vmatpush1.msra.mxu0 0.0
      %2129 = vmatprep.subr.mxu0 0.0
      %2130 = vmatpush1.msra.mxu0 0.0
      %2131 = vmatprep.subr.mxu0 0.0
      %2132 = vmatpush1.msra.mxu0 0.0
      %2133 = vmatprep.subr.mxu0 0.0
      %2134 = vmatpush1.msra.mxu0 0.0
      %2135 = vmatprep.subr.mxu0 0.0
      %2136 = vmatpush1.msra.mxu0 %v2102
      %2137 = vmatprep.subr.mxu0 0.0
      %2138 = vmatpush1.msra.mxu0 %v2101
      %2139 = vmatprep.subr.mxu0 0.0
      %2140 = vmatpush1.msra.mxu0 %v2100
      %2141 = vmatprep.subr.mxu0 0.0
      %2142 = vmatpush1.msra.mxu0 %v2099
      %2143 = vmatprep.subr.mxu0 0.0
      %2144 = vmatpush2.msra.mxu0 0.0
      %2145 = vmatprep.subr.mxu0 0.0
      %2146 = vmatpush2.msra.mxu0 0.0
      %2147 = vmatprep.subr.mxu0 0.0
      %2148 = vmatpush2.msra.mxu0 0.0
      %2149 = vmatprep.subr.mxu0 0.0
      %2150 = vmatpush2.msra.mxu0 0.0
      %2151 = vmatprep.subr.mxu0 0.0
      %2152 = vmatpush2.msra.mxu0 0.0
      %2153 = vmatprep.subr.mxu0 0.0
      %2154 = vmatpush2.msra.mxu0 0.0
      %2155 = vmatprep.subr.mxu0 0.0
      %2156 = vmatpush2.msra.mxu0 0.0
      %2157 = vmatprep.subr.mxu0 0.0
      %2158 = vmatpush2.msra.mxu0 0.0
      %2159 = vmatprep.subr.mxu0 0.0
      %2160 = vmatpush2.msra.mxu0 0.0
      %2161 = vmatprep.subr.mxu0 0.0
      %2162 = vmatpush2.msra.mxu0 0.0
      %2163 = vmatprep.subr.mxu0 0.0
      %2164 = vmatpush2.msra.mxu0 0.0
      %2165 = vmatprep.subr.mxu0 0.0
      %2166 = vmatpush2.msra.mxu0 0.0
      %2167 = vmatprep.subr.mxu0 0.0
      %2168 = vmatpush2.msra.mxu0 0.0
      %2169 = vmatprep.subr.mxu0 0.0
      %2170 = vmatpush2.msra.mxu0 0.0
      %2171 = vmatprep.subr.mxu0 0.0
      %2172 = vmatpush2.msra.mxu0 0.0
      %2173 = vmatprep.subr.mxu0 0.0
      %2174 = vmatpush2.msra.mxu0 0.0
      %2175 = vmatprep.mubr.f32.mxu0 0.0
      %2176 = vmatmul.mubr.f32.gmra.mxu0 %v732
      %v2177 = vpop.f32.mrf.mxu0
      %v2178 = vadd.f32 %v2109, %v2177
      %v2179 = vpop.f32.mrf.mxu0
      %2180 = vmatprep.mubr.f32.mxu0 0.0
      %2181 = vmatmul.mubr.f32.gmra.mxu0 %v735
      %v2182 = vpop.f32.mrf.mxu0
      %v2183 = vadd.f32 %v2109, %v2182
      %v2184 = vpop.f32.mrf.mxu0
      %2185 = vmatprep.mubr.f32.mxu0 0.0
      %2186 = vmatmul.mubr.f32.gmra.mxu0 %v738
      %v2187 = vpop.f32.mrf.mxu0
      %v2188 = vadd.f32 %v2109, %v2187
      %v2189 = vpop.f32.mrf.mxu0
      %2190 = vdwg.mxu0
      %v2192 = vsel %vm1002, %v1992, 0
      %v2195 = vsel %vm1002, %v1997, 0
      %v2198 = vsel %vm1002, %v2002, 0
      %v2201 = vsel %vm1002, %v2085, 0
      %v2204 = vsel %vm1002, %v2090, 0
      %v2207 = vsel %vm1002, %v2095, 0
      %2209 = vmatprep.subr.mxu0 0.0
      %2210 = vmatpush1.xpose.msra.mxu0 0.0
      %2211 = vmatprep.subr.mxu0 0.0
      %2212 = vmatpush1.xpose.msra.mxu0 0.0
      %2213 = vmatprep.subr.mxu0 0.0
      %2214 = vmatpush1.xpose.msra.mxu0 0.0
      %2215 = vmatprep.subr.mxu0 0.0
      %2216 = vmatpush1.xpose.msra.mxu0 0.0
      %2217 = vmatprep.subr.mxu0 0.0
      %2218 = vmatpush1.xpose.msra.mxu0 0.0
      %2219 = vmatprep.subr.mxu0 0.0
      %2220 = vmatpush1.xpose.msra.mxu0 0.0
      %2221 = vmatprep.subr.mxu0 0.0
      %2222 = vmatpush1.xpose.msra.mxu0 0.0
      %2223 = vmatprep.subr.mxu0 0.0
      %2224 = vmatpush1.xpose.msra.mxu0 0.0
      %2225 = vmatprep.subr.mxu0 0.0
      %2226 = vmatpush1.xpose.msra.mxu0 0.0
      %2227 = vmatprep.subr.mxu0 0.0
      %2228 = vmatpush1.xpose.msra.mxu0 0.0
      %2229 = vmatprep.subr.mxu0 0.0
      %2230 = vmatpush1.xpose.msra.mxu0 0.0
      %2231 = vmatprep.subr.mxu0 0.0
      %2232 = vmatpush1.xpose.msra.mxu0 0.0
      %2233 = vmatprep.subr.mxu0 0.0
      %2234 = vmatpush1.xpose.msra.mxu0 0.0
      %2235 = vmatprep.subr.mxu0 0.0
      %2236 = vmatpush1.xpose.msra.mxu0 %v2207
      %2237 = vmatprep.subr.mxu0 0.0
      %2238 = vmatpush1.xpose.msra.mxu0 %v2204
      %2239 = vmatprep.subr.mxu0 0.0
      %2240 = vmatpush1.xpose.msra.mxu0 %v2201
      %2241 = vmatprep.subr.mxu0 0.0
      %2242 = vmatpush2.xpose.msra.mxu0 0.0
      %2243 = vmatprep.subr.mxu0 0.0
      %2244 = vmatpush2.xpose.msra.mxu0 0.0
      %2245 = vmatprep.subr.mxu0 0.0
      %2246 = vmatpush2.xpose.msra.mxu0 0.0
      %2247 = vmatprep.subr.mxu0 0.0
      %2248 = vmatpush2.xpose.msra.mxu0 0.0
      %2249 = vmatprep.subr.mxu0 0.0
      %2250 = vmatpush2.xpose.msra.mxu0 0.0
      %2251 = vmatprep.subr.mxu0 0.0
      %2252 = vmatpush2.xpose.msra.mxu0 0.0
      %2253 = vmatprep.subr.mxu0 0.0
      %2254 = vmatpush2.xpose.msra.mxu0 0.0
      %2255 = vmatprep.subr.mxu0 0.0
      %2256 = vmatpush2.xpose.msra.mxu0 0.0
      %2257 = vmatprep.subr.mxu0 0.0
      %2258 = vmatpush2.xpose.msra.mxu0 0.0
      %2259 = vmatprep.subr.mxu0 0.0
      %2260 = vmatpush2.xpose.msra.mxu0 0.0
      %2261 = vmatprep.subr.mxu0 0.0
      %2262 = vmatpush2.xpose.msra.mxu0 0.0
      %2263 = vmatprep.subr.mxu0 0.0
      %2264 = vmatpush2.xpose.msra.mxu0 0.0
      %2265 = vmatprep.subr.mxu0 0.0
      %2266 = vmatpush2.xpose.msra.mxu0 0.0
      %2267 = vmatprep.subr.mxu0 0.0
      %2268 = vmatpush2.xpose.msra.mxu0 0.0
      %2269 = vmatprep.subr.mxu0 0.0
      %2270 = vmatpush2.xpose.msra.mxu0 0.0
      %2271 = vmatprep.subr.mxu0 0.0
      %2272 = vmatpush2.xpose.msra.mxu0 0.0
      %2273 = vmatprep.mubr.f32.mxu0 0.0
      %2274 = vmatmul.mubr.f32.gmra.mxu0 %v2192
      %v2275 = vpop.f32.mrf.mxu0
      %v2276 = vadd.f32 0.0, %v2275
      %v2277 = vpop.f32.mrf.mxu0
      %2278 = vmatprep.mubr.f32.mxu0 0.0
      %2279 = vmatmul.mubr.f32.gmra.mxu0 %v2195
      %v2280 = vpop.f32.mrf.mxu0
      %v2281 = vadd.f32 0.0, %v2280
      %v2282 = vpop.f32.mrf.mxu0
      %2283 = vmatprep.mubr.f32.mxu0 0.0
      %2284 = vmatmul.mubr.f32.gmra.mxu0 %v2198
      %v2285 = vpop.f32.mrf.mxu0
      %v2286 = vadd.f32 0.0, %v2285
      %v2287 = vpop.f32.mrf.mxu0
      %2288 = vdwg.mxu0
      %v2289 = vsel %vm1101, %v2276, -inf
      %2290 = vmax.xlane.f32.xlu0 %v2289
      %v2291 = vpop.xlane.xlu0 %2290
      %v2292 = vsel %vm1101, %v2281, -inf
      %2293 = vmax.xlane.f32.xlu0 %v2292
      %v2294 = vpop.xlane.xlu0 %2293
      %v2295 = vsel %vm1108, %v2286, -inf
      %2296 = vmax.xlane.f32.xlu0 %v2295
      %v2297 = vpop.xlane.xlu0 %2296
      %v2298 = vsub.f32 %v2276, %v2291
      %v2299 = vsub.f32 %v2281, %v2294
      %v2300 = vsub.f32 %v2286, %v2297
      %v2301 = vmul.f32 %v2298, 1.442695
      %v2302 = vpow.pop %v2301
      %v2303 = vmul.f32 %v2299, 1.442695
      %v2304 = vpow.pop %v2303
      %v2305 = vmul.f32 %v2300, 1.442695
      %v2306 = vpow.pop %v2305
      %v2307 = vsel %vm1101, %v2302, 0.0
      %2308 = vadd.xlane.f32.xlu0 %v2307
      %v2309 = vpop.xlane.xlu0 %2308
      %v2310 = vsel %vm1101, %v2304, 0.0
      %2311 = vadd.xlane.f32.xlu0 %v2310
      %v2312 = vpop.xlane.xlu0 %2311
      %v2313 = vsel %vm1108, %v2306, 0.0
      %2314 = vadd.xlane.f32.xlu0 %v2313
      %v2315 = vpop.xlane.xlu0 %2314
      %v2316 = vrcp.pop %v2309
      %v2317 = vrcp.pop %v2312
      %v2318 = vrcp.pop %v2315
      %v2319 = vmul.f32 %v2302, %v2316
      %v2320 = vmul.f32 %v2304, %v2317
      %v2321 = vmul.f32 %v2306, %v2318
      %v2323 = vsel %vm1101, %v2319, 0
      %v2326 = vsel %vm1101, %v2320, 0
      %v2329 = vsel %vm1101, %v2321, 0
      %v2332 = vsel %vm1145, %v2188, 0
      %2334 = vmatprep.subr.mxu0 0.0
      %2335 = vmatpush1.msra.mxu0 0.0
      %2336 = vmatprep.subr.mxu0 0.0
      %2337 = vmatpush1.msra.mxu0 0.0
      %2338 = vmatprep.subr.mxu0 0.0
      %2339 = vmatpush1.msra.mxu0 0.0
      %2340 = vmatprep.subr.mxu0 0.0
      %2341 = vmatpush1.msra.mxu0 0.0
      %2342 = vmatprep.subr.mxu0 0.0
      %2343 = vmatpush1.msra.mxu0 0.0
      %2344 = vmatprep.subr.mxu0 0.0
      %2345 = vmatpush1.msra.mxu0 0.0
      %2346 = vmatprep.subr.mxu0 0.0
      %2347 = vmatpush1.msra.mxu0 0.0
      %2348 = vmatprep.subr.mxu0 0.0
      %2349 = vmatpush1.msra.mxu0 0.0
      %2350 = vmatprep.subr.mxu0 0.0
      %2351 = vmatpush1.msra.mxu0 0.0
      %2352 = vmatprep.subr.mxu0 0.0
      %2353 = vmatpush1.msra.mxu0 0.0
      %2354 = vmatprep.subr.mxu0 0.0
      %2355 = vmatpush1.msra.mxu0 0.0
      %2356 = vmatprep.subr.mxu0 0.0
      %2357 = vmatpush1.msra.mxu0 0.0
      %2358 = vmatprep.subr.mxu0 0.0
      %2359 = vmatpush1.msra.mxu0 0.0
      %2360 = vmatprep.subr.mxu0 0.0
      %2361 = vmatpush1.msra.mxu0 %v2332
      %2362 = vmatprep.subr.mxu0 0.0
      %2363 = vmatpush1.msra.mxu0 %v2183
      %2364 = vmatprep.subr.mxu0 0.0
      %2365 = vmatpush1.msra.mxu0 %v2178
      %2366 = vmatprep.subr.mxu0 0.0
      %2367 = vmatpush2.msra.mxu0 0.0
      %2368 = vmatprep.subr.mxu0 0.0
      %2369 = vmatpush2.msra.mxu0 0.0
      %2370 = vmatprep.subr.mxu0 0.0
      %2371 = vmatpush2.msra.mxu0 0.0
      %2372 = vmatprep.subr.mxu0 0.0
      %2373 = vmatpush2.msra.mxu0 0.0
      %2374 = vmatprep.subr.mxu0 0.0
      %2375 = vmatpush2.msra.mxu0 0.0
      %2376 = vmatprep.subr.mxu0 0.0
      %2377 = vmatpush2.msra.mxu0 0.0
      %2378 = vmatprep.subr.mxu0 0.0
      %2379 = vmatpush2.msra.mxu0 0.0
      %2380 = vmatprep.subr.mxu0 0.0
      %2381 = vmatpush2.msra.mxu0 0.0
      %2382 = vmatprep.subr.mxu0 0.0
      %2383 = vmatpush2.msra.mxu0 0.0
      %2384 = vmatprep.subr.mxu0 0.0
      %2385 = vmatpush2.msra.mxu0 0.0
      %2386 = vmatprep.subr.mxu0 0.0
      %2387 = vmatpush2.msra.mxu0 0.0
      %2388 = vmatprep.subr.mxu0 0.0
      %2389 = vmatpush2.msra.mxu0 0.0
      %2390 = vmatprep.subr.mxu0 0.0
      %2391 = vmatpush2.msra.mxu0 0.0
      %2392 = vmatprep.subr.mxu0 0.0
      %2393 = vmatpush2.msra.mxu0 0.0
      %2394 = vmatprep.subr.mxu0 0.0
      %2395 = vmatpush2.msra.mxu0 0.0
      %2396 = vmatprep.subr.mxu0 0.0
      %2397 = vmatpush2.msra.mxu0 0.0
      %2398 = vmatprep.mubr.f32.mxu0 0.0
      %2399 = vmatmul.mubr.f32.gmra.mxu0 %v2323
      %v2400 = vpop.f32.mrf.mxu0
      %v2401 = vadd.f32 0.0, %v2400
      %v2402 = vpop.f32.mrf.mxu0
      %2403 = vmatprep.mubr.f32.mxu0 0.0
      %2404 = vmatmul.mubr.f32.gmra.mxu0 %v2326
      %v2405 = vpop.f32.mrf.mxu0
      %v2406 = vadd.f32 0.0, %v2405
      %v2407 = vpop.f32.mrf.mxu0
      %2408 = vmatprep.mubr.f32.mxu0 0.0
      %2409 = vmatmul.mubr.f32.gmra.mxu0 %v2329
      %v2410 = vpop.f32.mrf.mxu0
      %v2411 = vadd.f32 0.0, %v2410
      %v2412 = vpop.f32.mrf.mxu0
      %2413 = vdwg.mxu0
      %s2414 = scalar_lea.vmem %s9, 16
      %v2415 = vld [vmem:[%s2414] sm:$0xff]
      %v2417 = vsel %vm1002, %v2401, 0
      %v2420 = vsel %vm1002, %v2406, 0
      %v2423 = vsel %vm1002, %v2411, 0
      %2425 = vmatprep.subr.mxu0 0.0
      %2426 = vmatpush1.msra.mxu0 0.0
      %2427 = vmatprep.subr.mxu0 0.0
      %2428 = vmatpush1.msra.mxu0 0.0
      %2429 = vmatprep.subr.mxu0 0.0
      %2430 = vmatpush1.msra.mxu0 0.0
      %2431 = vmatprep.subr.mxu0 0.0
      %2432 = vmatpush1.msra.mxu0 0.0
      %2433 = vmatprep.subr.mxu0 0.0
      %2434 = vmatpush1.msra.mxu0 0.0
      %2435 = vmatprep.subr.mxu0 0.0
      %2436 = vmatpush1.msra.mxu0 0.0
      %2437 = vmatprep.subr.mxu0 0.0
      %2438 = vmatpush1.msra.mxu0 0.0
      %2439 = vmatprep.subr.mxu0 0.0
      %2440 = vmatpush1.msra.mxu0 0.0
      %2441 = vmatprep.subr.mxu0 0.0
      %2442 = vmatpush1.msra.mxu0 0.0
      %2443 = vmatprep.subr.mxu0 0.0
      %2444 = vmatpush1.msra.mxu0 0.0
      %2445 = vmatprep.subr.mxu0 0.0
      %2446 = vmatpush1.msra.mxu0 0.0
      %2447 = vmatprep.subr.mxu0 0.0
      %2448 = vmatpush1.msra.mxu0 0.0
      %2449 = vmatprep.subr.mxu0 0.0
      %2450 = vmatpush1.msra.mxu0 0.0
      %2451 = vmatprep.subr.mxu0 0.0
      %2452 = vmatpush1.msra.mxu0 0.0
      %2453 = vmatprep.subr.mxu0 0.0
      %2454 = vmatpush1.msra.mxu0 0.0
      %2455 = vmatprep.subr.mxu0 0.0
      %2456 = vmatpush1.msra.mxu0 %v2415
      %2457 = vmatprep.subr.mxu0 0.0
      %2458 = vmatpush2.msra.mxu0 0.0
      %2459 = vmatprep.subr.mxu0 0.0
      %2460 = vmatpush2.msra.mxu0 0.0
      %2461 = vmatprep.subr.mxu0 0.0
      %2462 = vmatpush2.msra.mxu0 0.0
      %2463 = vmatprep.subr.mxu0 0.0
      %2464 = vmatpush2.msra.mxu0 0.0
      %2465 = vmatprep.subr.mxu0 0.0
      %2466 = vmatpush2.msra.mxu0 0.0
      %2467 = vmatprep.subr.mxu0 0.0
      %2468 = vmatpush2.msra.mxu0 0.0
      %2469 = vmatprep.subr.mxu0 0.0
      %2470 = vmatpush2.msra.mxu0 0.0
      %2471 = vmatprep.subr.mxu0 0.0
      %2472 = vmatpush2.msra.mxu0 0.0
      %2473 = vmatprep.subr.mxu0 0.0
      %2474 = vmatpush2.msra.mxu0 0.0
      %2475 = vmatprep.subr.mxu0 0.0
      %2476 = vmatpush2.msra.mxu0 0.0
      %2477 = vmatprep.subr.mxu0 0.0
      %2478 = vmatpush2.msra.mxu0 0.0
      %2479 = vmatprep.subr.mxu0 0.0
      %2480 = vmatpush2.msra.mxu0 0.0
      %2481 = vmatprep.subr.mxu0 0.0
      %2482 = vmatpush2.msra.mxu0 0.0
      %2483 = vmatprep.subr.mxu0 0.0
      %2484 = vmatpush2.msra.mxu0 0.0
      %2485 = vmatprep.subr.mxu0 0.0
      %2486 = vmatpush2.msra.mxu0 0.0
      %2487 = vmatprep.subr.mxu0 0.0
      %2488 = vmatpush2.msra.mxu0 0.0
      %2489 = vmatprep.mubr.f32.mxu0 0.0
      %2490 = vmatmul.mubr.f32.gmra.mxu0 %v2417
      %v2491 = vpop.f32.mrf.mxu0
      %v2492 = vadd.f32 0.0, %v2491
      %v2493 = vpop.f32.mrf.mxu0
      %2494 = vmatprep.mubr.f32.mxu0 0.0
      %2495 = vmatmul.mubr.f32.gmra.mxu0 %v2420
      %v2496 = vpop.f32.mrf.mxu0
      %v2497 = vadd.f32 0.0, %v2496
      %v2498 = vpop.f32.mrf.mxu0
      %2499 = vmatprep.mubr.f32.mxu0 0.0
      %2500 = vmatmul.mubr.f32.gmra.mxu0 %v2423
      %v2501 = vpop.f32.mrf.mxu0
      %v2502 = vadd.f32 0.0, %v2501
      %v2503 = vpop.f32.mrf.mxu0
      %2504 = vdwg.mxu0
      %v2505 = vadd.f32 %v1899, %v2492
      %v2506 = vadd.f32 %v1904, %v2497
      %v2507 = vadd.f32 %v1909, %v2502
      %s2508 = scalar_lea.vmem %s3, 96
      %v2509 = vld [vmem:[%s2508] sm:$0xff]
      %v2510 = vld [vmem:[%s2508 + $0x8] sm:$0xff]
      %v2511 = vld [vmem:[%s2508 + $0x10] sm:$0xff]
      %v2512 = vld [vmem:[%s2508 + $0x18] sm:$0xff]
      %s2513 = scalar_lea.vmem %s4, 3
      %v2514 = vld [vmem:[%s2513] sm:$0x1]
      %v2516 = vlaneseq
      %v2517 = vshrl.u32 %v2516, 7
      %v2518 = vsub.s32 0, %v2517
      %v2519 = vrot.slane %v2514, %v2518
      %2521 = vmatprep.subr.mxu0 0.0
      %2522 = vmatpush1.msra.mxu0 0.0
      %2523 = vmatprep.subr.mxu0 0.0
      %2524 = vmatpush1.msra.mxu0 0.0
      %2525 = vmatprep.subr.mxu0 0.0
      %2526 = vmatpush1.msra.mxu0 0.0
      %2527 = vmatprep.subr.mxu0 0.0
      %2528 = vmatpush1.msra.mxu0 0.0
      %2529 = vmatprep.subr.mxu0 0.0
      %2530 = vmatpush1.msra.mxu0 0.0
      %2531 = vmatprep.subr.mxu0 0.0
      %2532 = vmatpush1.msra.mxu0 0.0
      %2533 = vmatprep.subr.mxu0 0.0
      %2534 = vmatpush1.msra.mxu0 0.0
      %2535 = vmatprep.subr.mxu0 0.0
      %2536 = vmatpush1.msra.mxu0 0.0
      %2537 = vmatprep.subr.mxu0 0.0
      %2538 = vmatpush1.msra.mxu0 0.0
      %2539 = vmatprep.subr.mxu0 0.0
      %2540 = vmatpush1.msra.mxu0 0.0
      %2541 = vmatprep.subr.mxu0 0.0
      %2542 = vmatpush1.msra.mxu0 0.0
      %2543 = vmatprep.subr.mxu0 0.0
      %2544 = vmatpush1.msra.mxu0 0.0
      %2545 = vmatprep.subr.mxu0 0.0
      %2546 = vmatpush1.msra.mxu0 %v2512
      %2547 = vmatprep.subr.mxu0 0.0
      %2548 = vmatpush1.msra.mxu0 %v2511
      %2549 = vmatprep.subr.mxu0 0.0
      %2550 = vmatpush1.msra.mxu0 %v2510
      %2551 = vmatprep.subr.mxu0 0.0
      %2552 = vmatpush1.msra.mxu0 %v2509
      %2553 = vmatprep.subr.mxu0 0.0
      %2554 = vmatpush2.msra.mxu0 0.0
      %2555 = vmatprep.subr.mxu0 0.0
      %2556 = vmatpush2.msra.mxu0 0.0
      %2557 = vmatprep.subr.mxu0 0.0
      %2558 = vmatpush2.msra.mxu0 0.0
      %2559 = vmatprep.subr.mxu0 0.0
      %2560 = vmatpush2.msra.mxu0 0.0
      %2561 = vmatprep.subr.mxu0 0.0
      %2562 = vmatpush2.msra.mxu0 0.0
      %2563 = vmatprep.subr.mxu0 0.0
      %2564 = vmatpush2.msra.mxu0 0.0
      %2565 = vmatprep.subr.mxu0 0.0
      %2566 = vmatpush2.msra.mxu0 0.0
      %2567 = vmatprep.subr.mxu0 0.0
      %2568 = vmatpush2.msra.mxu0 0.0
      %2569 = vmatprep.subr.mxu0 0.0
      %2570 = vmatpush2.msra.mxu0 0.0
      %2571 = vmatprep.subr.mxu0 0.0
      %2572 = vmatpush2.msra.mxu0 0.0
      %2573 = vmatprep.subr.mxu0 0.0
      %2574 = vmatpush2.msra.mxu0 0.0
      %2575 = vmatprep.subr.mxu0 0.0
      %2576 = vmatpush2.msra.mxu0 0.0
      %2577 = vmatprep.subr.mxu0 0.0
      %2578 = vmatpush2.msra.mxu0 0.0
      %2579 = vmatprep.subr.mxu0 0.0
      %2580 = vmatpush2.msra.mxu0 0.0
      %2581 = vmatprep.subr.mxu0 0.0
      %2582 = vmatpush2.msra.mxu0 0.0
      %2583 = vmatprep.subr.mxu0 0.0
      %2584 = vmatpush2.msra.mxu0 0.0
      %2585 = vmatprep.mubr.f32.mxu0 0.0
      %2586 = vmatmul.mubr.f32.gmra.mxu0 %v732
      %v2587 = vpop.f32.mrf.mxu0
      %v2588 = vadd.f32 %v2519, %v2587
      %v2589 = vpop.f32.mrf.mxu0
      %2590 = vmatprep.mubr.f32.mxu0 0.0
      %2591 = vmatmul.mubr.f32.gmra.mxu0 %v735
      %v2592 = vpop.f32.mrf.mxu0
      %v2593 = vadd.f32 %v2519, %v2592
      %v2594 = vpop.f32.mrf.mxu0
      %2595 = vmatprep.mubr.f32.mxu0 0.0
      %2596 = vmatmul.mubr.f32.gmra.mxu0 %v738
      %v2597 = vpop.f32.mrf.mxu0
      %v2598 = vadd.f32 %v2519, %v2597
      %v2599 = vpop.f32.mrf.mxu0
      %2600 = vdwg.mxu0
      %s2601 = scalar_lea.vmem %s5, 96
      %v2602 = vld [vmem:[%s2601] sm:$0xff]
      %v2603 = vld [vmem:[%s2601 + $0x8] sm:$0xff]
      %v2604 = vld [vmem:[%s2601 + $0x10] sm:$0xff]
      %v2605 = vld [vmem:[%s2601 + $0x18] sm:$0xff]
      %s2606 = scalar_lea.vmem %s6, 3
      %v2607 = vld [vmem:[%s2606] sm:$0x1]
      %v2609 = vlaneseq
      %v2610 = vshrl.u32 %v2609, 7
      %v2611 = vsub.s32 0, %v2610
      %v2612 = vrot.slane %v2607, %v2611
      %2614 = vmatprep.subr.mxu0 0.0
      %2615 = vmatpush1.msra.mxu0 0.0
      %2616 = vmatprep.subr.mxu0 0.0
      %2617 = vmatpush1.msra.mxu0 0.0
      %2618 = vmatprep.subr.mxu0 0.0
      %2619 = vmatpush1.msra.mxu0 0.0
      %2620 = vmatprep.subr.mxu0 0.0
      %2621 = vmatpush1.msra.mxu0 0.0
      %2622 = vmatprep.subr.mxu0 0.0
      %2623 = vmatpush1.msra.mxu0 0.0
      %2624 = vmatprep.subr.mxu0 0.0
      %2625 = vmatpush1.msra.mxu0 0.0
      %2626 = vmatprep.subr.mxu0 0.0
      %2627 = vmatpush1.msra.mxu0 0.0
      %2628 = vmatprep.subr.mxu0 0.0
      %2629 = vmatpush1.msra.mxu0 0.0
      %2630 = vmatprep.subr.mxu0 0.0
      %2631 = vmatpush1.msra.mxu0 0.0
      %2632 = vmatprep.subr.mxu0 0.0
      %2633 = vmatpush1.msra.mxu0 0.0
      %2634 = vmatprep.subr.mxu0 0.0
      %2635 = vmatpush1.msra.mxu0 0.0
      %2636 = vmatprep.subr.mxu0 0.0
      %2637 = vmatpush1.msra.mxu0 0.0
      %2638 = vmatprep.subr.mxu0 0.0
      %2639 = vmatpush1.msra.mxu0 %v2605
      %2640 = vmatprep.subr.mxu0 0.0
      %2641 = vmatpush1.msra.mxu0 %v2604
      %2642 = vmatprep.subr.mxu0 0.0
      %2643 = vmatpush1.msra.mxu0 %v2603
      %2644 = vmatprep.subr.mxu0 0.0
      %2645 = vmatpush1.msra.mxu0 %v2602
      %2646 = vmatprep.subr.mxu0 0.0
      %2647 = vmatpush2.msra.mxu0 0.0
      %2648 = vmatprep.subr.mxu0 0.0
      %2649 = vmatpush2.msra.mxu0 0.0
      %2650 = vmatprep.subr.mxu0 0.0
      %2651 = vmatpush2.msra.mxu0 0.0
      %2652 = vmatprep.subr.mxu0 0.0
      %2653 = vmatpush2.msra.mxu0 0.0
      %2654 = vmatprep.subr.mxu0 0.0
      %2655 = vmatpush2.msra.mxu0 0.0
      %2656 = vmatprep.subr.mxu0 0.0
      %2657 = vmatpush2.msra.mxu0 0.0
      %2658 = vmatprep.subr.mxu0 0.0
      %2659 = vmatpush2.msra.mxu0 0.0
      %2660 = vmatprep.subr.mxu0 0.0
      %2661 = vmatpush2.msra.mxu0 0.0
      %2662 = vmatprep.subr.mxu0 0.0
      %2663 = vmatpush2.msra.mxu0 0.0
      %2664 = vmatprep.subr.mxu0 0.0
      %2665 = vmatpush2.msra.mxu0 0.0
      %2666 = vmatprep.subr.mxu0 0.0
      %2667 = vmatpush2.msra.mxu0 0.0
      %2668 = vmatprep.subr.mxu0 0.0
      %2669 = vmatpush2.msra.mxu0 0.0
      %2670 = vmatprep.subr.mxu0 0.0
      %2671 = vmatpush2.msra.mxu0 0.0
      %2672 = vmatprep.subr.mxu0 0.0
      %2673 = vmatpush2.msra.mxu0 0.0
      %2674 = vmatprep.subr.mxu0 0.0
      %2675 = vmatpush2.msra.mxu0 0.0
      %2676 = vmatprep.subr.mxu0 0.0
      %2677 = vmatpush2.msra.mxu0 0.0
      %2678 = vmatprep.mubr.f32.mxu0 0.0
      %2679 = vmatmul.mubr.f32.gmra.mxu0 %v732
      %v2680 = vpop.f32.mrf.mxu0
      %v2681 = vadd.f32 %v2612, %v2680
      %v2682 = vpop.f32.mrf.mxu0
      %2683 = vmatprep.mubr.f32.mxu0 0.0
      %2684 = vmatmul.mubr.f32.gmra.mxu0 %v735
      %v2685 = vpop.f32.mrf.mxu0
      %v2686 = vadd.f32 %v2612, %v2685
      %v2687 = vpop.f32.mrf.mxu0
      %2688 = vmatprep.mubr.f32.mxu0 0.0
      %2689 = vmatmul.mubr.f32.gmra.mxu0 %v738
      %v2690 = vpop.f32.mrf.mxu0
      %v2691 = vadd.f32 %v2612, %v2690
      %v2692 = vpop.f32.mrf.mxu0
      %2693 = vdwg.mxu0
      %s2694 = scalar_lea.vmem %s7, 96
      %v2695 = vld [vmem:[%s2694] sm:$0xff]
      %v2696 = vld [vmem:[%s2694 + $0x8] sm:$0xff]
      %v2697 = vld [vmem:[%s2694 + $0x10] sm:$0xff]
      %v2698 = vld [vmem:[%s2694 + $0x18] sm:$0xff]
      %s2699 = scalar_lea.vmem %s8, 3
      %v2700 = vld [vmem:[%s2699] sm:$0x1]
      %v2702 = vlaneseq
      %v2703 = vshrl.u32 %v2702, 7
      %v2704 = vsub.s32 0, %v2703
      %v2705 = vrot.slane %v2700, %v2704
      %2707 = vmatprep.subr.mxu0 0.0
      %2708 = vmatpush1.msra.mxu0 0.0
      %2709 = vmatprep.subr.mxu0 0.0
      %2710 = vmatpush1.msra.mxu0 0.0
      %2711 = vmatprep.subr.mxu0 0.0
      %2712 = vmatpush1.msra.mxu0 0.0
      %2713 = vmatprep.subr.mxu0 0.0
      %2714 = vmatpush1.msra.mxu0 0.0
      %2715 = vmatprep.subr.mxu0 0.0
      %2716 = vmatpush1.msra.mxu0 0.0
      %2717 = vmatprep.subr.mxu0 0.0
      %2718 = vmatpush1.msra.mxu0 0.0
      %2719 = vmatprep.subr.mxu0 0.0
      %2720 = vmatpush1.msra.mxu0 0.0
      %2721 = vmatprep.subr.mxu0 0.0
      %2722 = vmatpush1.msra.mxu0 0.0
      %2723 = vmatprep.subr.mxu0 0.0
      %2724 = vmatpush1.msra.mxu0 0.0
      %2725 = vmatprep.subr.mxu0 0.0
      %2726 = vmatpush1.msra.mxu0 0.0
      %2727 = vmatprep.subr.mxu0 0.0
      %2728 = vmatpush1.msra.mxu0 0.0
      %2729 = vmatprep.subr.mxu0 0.0
      %2730 = vmatpush1.msra.mxu0 0.0
      %2731 = vmatprep.subr.mxu0 0.0
      %2732 = vmatpush1.msra.mxu0 %v2698
      %2733 = vmatprep.subr.mxu0 0.0
      %2734 = vmatpush1.msra.mxu0 %v2697
      %2735 = vmatprep.subr.mxu0 0.0
      %2736 = vmatpush1.msra.mxu0 %v2696
      %2737 = vmatprep.subr.mxu0 0.0
      %2738 = vmatpush1.msra.mxu0 %v2695
      %2739 = vmatprep.subr.mxu0 0.0
      %2740 = vmatpush2.msra.mxu0 0.0
      %2741 = vmatprep.subr.mxu0 0.0
      %2742 = vmatpush2.msra.mxu0 0.0
      %2743 = vmatprep.subr.mxu0 0.0
      %2744 = vmatpush2.msra.mxu0 0.0
      %2745 = vmatprep.subr.mxu0 0.0
      %2746 = vmatpush2.msra.mxu0 0.0
      %2747 = vmatprep.subr.mxu0 0.0
      %2748 = vmatpush2.msra.mxu0 0.0
      %2749 = vmatprep.subr.mxu0 0.0
      %2750 = vmatpush2.msra.mxu0 0.0
      %2751 = vmatprep.subr.mxu0 0.0
      %2752 = vmatpush2.msra.mxu0 0.0
      %2753 = vmatprep.subr.mxu0 0.0
      %2754 = vmatpush2.msra.mxu0 0.0
      %2755 = vmatprep.subr.mxu0 0.0
      %2756 = vmatpush2.msra.mxu0 0.0
      %2757 = vmatprep.subr.mxu0 0.0
      %2758 = vmatpush2.msra.mxu0 0.0
      %2759 = vmatprep.subr.mxu0 0.0
      %2760 = vmatpush2.msra.mxu0 0.0
      %2761 = vmatprep.subr.mxu0 0.0
      %2762 = vmatpush2.msra.mxu0 0.0
      %2763 = vmatprep.subr.mxu0 0.0
      %2764 = vmatpush2.msra.mxu0 0.0
      %2765 = vmatprep.subr.mxu0 0.0
      %2766 = vmatpush2.msra.mxu0 0.0
      %2767 = vmatprep.subr.mxu0 0.0
      %2768 = vmatpush2.msra.mxu0 0.0
      %2769 = vmatprep.subr.mxu0 0.0
      %2770 = vmatpush2.msra.mxu0 0.0
      %2771 = vmatprep.mubr.f32.mxu0 0.0
      %2772 = vmatmul.mubr.f32.gmra.mxu0 %v732
      %v2773 = vpop.f32.mrf.mxu0
      %v2774 = vadd.f32 %v2705, %v2773
      %v2775 = vpop.f32.mrf.mxu0
      %2776 = vmatprep.mubr.f32.mxu0 0.0
      %2777 = vmatmul.mubr.f32.gmra.mxu0 %v735
      %v2778 = vpop.f32.mrf.mxu0
      %v2779 = vadd.f32 %v2705, %v2778
      %v2780 = vpop.f32.mrf.mxu0
      %2781 = vmatprep.mubr.f32.mxu0 0.0
      %2782 = vmatmul.mubr.f32.gmra.mxu0 %v738
      %v2783 = vpop.f32.mrf.mxu0
      %v2784 = vadd.f32 %v2705, %v2783
      %v2785 = vpop.f32.mrf.mxu0
      %2786 = vdwg.mxu0
      %v2788 = vsel %vm1002, %v2588, 0
      %v2791 = vsel %vm1002, %v2593, 0
      %v2794 = vsel %vm1002, %v2598, 0
      %v2797 = vsel %vm1002, %v2681, 0
      %v2800 = vsel %vm1002, %v2686, 0
      %v2803 = vsel %vm1002, %v2691, 0
      %2805 = vmatprep.subr.mxu0 0.0
      %2806 = vmatpush1.xpose.msra.mxu0 0.0
      %2807 = vmatprep.subr.mxu0 0.0
      %2808 = vmatpush1.xpose.msra.mxu0 0.0
      %2809 = vmatprep.subr.mxu0 0.0
      %2810 = vmatpush1.xpose.msra.mxu0 0.0
      %2811 = vmatprep.subr.mxu0 0.0
      %2812 = vmatpush1.xpose.msra.mxu0 0.0
      %2813 = vmatprep.subr.mxu0 0.0
      %2814 = vmatpush1.xpose.msra.mxu0 0.0
      %2815 = vmatprep.subr.mxu0 0.0
      %2816 = vmatpush1.xpose.msra.mxu0 0.0
      %2817 = vmatprep.subr.mxu0 0.0
      %2818 = vmatpush1.xpose.msra.mxu0 0.0
      %2819 = vmatprep.subr.mxu0 0.0
      %2820 = vmatpush1.xpose.msra.mxu0 0.0
      %2821 = vmatprep.subr.mxu0 0.0
      %2822 = vmatpush1.xpose.msra.mxu0 0.0
      %2823 = vmatprep.subr.mxu0 0.0
      %2824 = vmatpush1.xpose.msra.mxu0 0.0
      %2825 = vmatprep.subr.mxu0 0.0
      %2826 = vmatpush1.xpose.msra.mxu0 0.0
      %2827 = vmatprep.subr.mxu0 0.0
      %2828 = vmatpush1.xpose.msra.mxu0 0.0
      %2829 = vmatprep.subr.mxu0 0.0
      %2830 = vmatpush1.xpose.msra.mxu0 0.0
      %2831 = vmatprep.subr.mxu0 0.0
      %2832 = vmatpush1.xpose.msra.mxu0 %v2803
      %2833 = vmatprep.subr.mxu0 0.0
      %2834 = vmatpush1.xpose.msra.mxu0 %v2800
      %2835 = vmatprep.subr.mxu0 0.0
      %2836 = vmatpush1.xpose.msra.mxu0 %v2797
      %2837 = vmatprep.subr.mxu0 0.0
      %2838 = vmatpush2.xpose.msra.mxu0 0.0
      %2839 = vmatprep.subr.mxu0 0.0
      %2840 = vmatpush2.xpose.msra.mxu0 0.0
      %2841 = vmatprep.subr.mxu0 0.0
      %2842 = vmatpush2.xpose.msra.mxu0 0.0
      %2843 = vmatprep.subr.mxu0 0.0
      %2844 = vmatpush2.xpose.msra.mxu0 0.0
      %2845 = vmatprep.subr.mxu0 0.0
      %2846 = vmatpush2.xpose.msra.mxu0 0.0
      %2847 = vmatprep.subr.mxu0 0.0
      %2848 = vmatpush2.xpose.msra.mxu0 0.0
      %2849 = vmatprep.subr.mxu0 0.0
      %2850 = vmatpush2.xpose.msra.mxu0 0.0
      %2851 = vmatprep.subr.mxu0 0.0
      %2852 = vmatpush2.xpose.msra.mxu0 0.0
      %2853 = vmatprep.subr.mxu0 0.0
      %2854 = vmatpush2.xpose.msra.mxu0 0.0
      %2855 = vmatprep.subr.mxu0 0.0
      %2856 = vmatpush2.xpose.msra.mxu0 0.0
      %2857 = vmatprep.subr.mxu0 0.0
      %2858 = vmatpush2.xpose.msra.mxu0 0.0
      %2859 = vmatprep.subr.mxu0 0.0
      %2860 = vmatpush2.xpose.msra.mxu0 0.0
      %2861 = vmatprep.subr.mxu0 0.0
      %2862 = vmatpush2.xpose.msra.mxu0 0.0
      %2863 = vmatprep.subr.mxu0 0.0
      %2864 = vmatpush2.xpose.msra.mxu0 0.0
      %2865 = vmatprep.subr.mxu0 0.0
      %2866 = vmatpush2.xpose.msra.mxu0 0.0
      %2867 = vmatprep.subr.mxu0 0.0
      %2868 = vmatpush2.xpose.msra.mxu0 0.0
      %2869 = vmatprep.mubr.f32.mxu0 0.0
      %2870 = vmatmul.mubr.f32.gmra.mxu0 %v2788
      %v2871 = vpop.f32.mrf.mxu0
      %v2872 = vadd.f32 0.0, %v2871
      %v2873 = vpop.f32.mrf.mxu0
      %2874 = vmatprep.mubr.f32.mxu0 0.0
      %2875 = vmatmul.mubr.f32.gmra.mxu0 %v2791
      %v2876 = vpop.f32.mrf.mxu0
      %v2877 = vadd.f32 0.0, %v2876
      %v2878 = vpop.f32.mrf.mxu0
      %2879 = vmatprep.mubr.f32.mxu0 0.0
      %2880 = vmatmul.mubr.f32.gmra.mxu0 %v2794
      %v2881 = vpop.f32.mrf.mxu0
      %v2882 = vadd.f32 0.0, %v2881
      %v2883 = vpop.f32.mrf.mxu0
      %2884 = vdwg.mxu0
      %v2885 = vsel %vm1101, %v2872, -inf
      %2886 = vmax.xlane.f32.xlu0 %v2885
      %v2887 = vpop.xlane.xlu0 %2886
      %v2888 = vsel %vm1101, %v2877, -inf
      %2889 = vmax.xlane.f32.xlu0 %v2888
      %v2890 = vpop.xlane.xlu0 %2889
      %v2891 = vsel %vm1108, %v2882, -inf
      %2892 = vmax.xlane.f32.xlu0 %v2891
      %v2893 = vpop.xlane.xlu0 %2892
      %v2894 = vsub.f32 %v2872, %v2887
      %v2895 = vsub.f32 %v2877, %v2890
      %v2896 = vsub.f32 %v2882, %v2893
      %v2897 = vmul.f32 %v2894, 1.442695
      %v2898 = vpow.pop %v2897
      %v2899 = vmul.f32 %v2895, 1.442695
      %v2900 = vpow.pop %v2899
      %v2901 = vmul.f32 %v2896, 1.442695
      %v2902 = vpow.pop %v2901
      %v2903 = vsel %vm1101, %v2898, 0.0
      %2904 = vadd.xlane.f32.xlu0 %v2903
      %v2905 = vpop.xlane.xlu0 %2904
      %v2906 = vsel %vm1101, %v2900, 0.0
      %2907 = vadd.xlane.f32.xlu0 %v2906
      %v2908 = vpop.xlane.xlu0 %2907
      %v2909 = vsel %vm1108, %v2902, 0.0
      %2910 = vadd.xlane.f32.xlu0 %v2909
      %v2911 = vpop.xlane.xlu0 %2910
      %v2912 = vrcp.pop %v2905
      %v2913 = vrcp.pop %v2908
      %v2914 = vrcp.pop %v2911
      %v2915 = vmul.f32 %v2898, %v2912
      %v2916 = vmul.f32 %v2900, %v2913
      %v2917 = vmul.f32 %v2902, %v2914
      %v2919 = vsel %vm1101, %v2915, 0
      %v2922 = vsel %vm1101, %v2916, 0
      %v2925 = vsel %vm1101, %v2917, 0
      %v2928 = vsel %vm1145, %v2784, 0
      %2930 = vmatprep.subr.mxu0 0.0
      %2931 = vmatpush1.msra.mxu0 0.0
      %2932 = vmatprep.subr.mxu0 0.0
      %2933 = vmatpush1.msra.mxu0 0.0
      %2934 = vmatprep.subr.mxu0 0.0
      %2935 = vmatpush1.msra.mxu0 0.0
      %2936 = vmatprep.subr.mxu0 0.0
      %2937 = vmatpush1.msra.mxu0 0.0
      %2938 = vmatprep.subr.mxu0 0.0
      %2939 = vmatpush1.msra.mxu0 0.0
      %2940 = vmatprep.subr.mxu0 0.0
      %2941 = vmatpush1.msra.mxu0 0.0
      %2942 = vmatprep.subr.mxu0 0.0
      %2943 = vmatpush1.msra.mxu0 0.0
      %2944 = vmatprep.subr.mxu0 0.0
      %2945 = vmatpush1.msra.mxu0 0.0
      %2946 = vmatprep.subr.mxu0 0.0
      %2947 = vmatpush1.msra.mxu0 0.0
      %2948 = vmatprep.subr.mxu0 0.0
      %2949 = vmatpush1.msra.mxu0 0.0
      %2950 = vmatprep.subr.mxu0 0.0
      %2951 = vmatpush1.msra.mxu0 0.0
      %2952 = vmatprep.subr.mxu0 0.0
      %2953 = vmatpush1.msra.mxu0 0.0
      %2954 = vmatprep.subr.mxu0 0.0
      %2955 = vmatpush1.msra.mxu0 0.0
      %2956 = vmatprep.subr.mxu0 0.0
      %2957 = vmatpush1.msra.mxu0 %v2928
      %2958 = vmatprep.subr.mxu0 0.0
      %2959 = vmatpush1.msra.mxu0 %v2779
      %2960 = vmatprep.subr.mxu0 0.0
      %2961 = vmatpush1.msra.mxu0 %v2774
      %2962 = vmatprep.subr.mxu0 0.0
      %2963 = vmatpush2.msra.mxu0 0.0
      %2964 = vmatprep.subr.mxu0 0.0
      %2965 = vmatpush2.msra.mxu0 0.0
      %2966 = vmatprep.subr.mxu0 0.0
      %2967 = vmatpush2.msra.mxu0 0.0
      %2968 = vmatprep.subr.mxu0 0.0
      %2969 = vmatpush2.msra.mxu0 0.0
      %2970 = vmatprep.subr.mxu0 0.0
      %2971 = vmatpush2.msra.mxu0 0.0
      %2972 = vmatprep.subr.mxu0 0.0
      %2973 = vmatpush2.msra.mxu0 0.0
      %2974 = vmatprep.subr.mxu0 0.0
      %2975 = vmatpush2.msra.mxu0 0.0
      %2976 = vmatprep.subr.mxu0 0.0
      %2977 = vmatpush2.msra.mxu0 0.0
      %2978 = vmatprep.subr.mxu0 0.0
      %2979 = vmatpush2.msra.mxu0 0.0
      %2980 = vmatprep.subr.mxu0 0.0
      %2981 = vmatpush2.msra.mxu0 0.0
      %2982 = vmatprep.subr.mxu0 0.0
      %2983 = vmatpush2.msra.mxu0 0.0
      %2984 = vmatprep.subr.mxu0 0.0
      %2985 = vmatpush2.msra.mxu0 0.0
      %2986 = vmatprep.subr.mxu0 0.0
      %2987 = vmatpush2.msra.mxu0 0.0
      %2988 = vmatprep.subr.mxu0 0.0
      %2989 = vmatpush2.msra.mxu0 0.0
      %2990 = vmatprep.subr.mxu0 0.0
      %2991 = vmatpush2.msra.mxu0 0.0
      %2992 = vmatprep.subr.mxu0 0.0
      %2993 = vmatpush2.msra.mxu0 0.0
      %2994 = vmatprep.mubr.f32.mxu0 0.0
      %2995 = vmatmul.mubr.f32.gmra.mxu0 %v2919
      %v2996 = vpop.f32.mrf.mxu0
      %v2997 = vadd.f32 0.0, %v2996
      %v2998 = vpop.f32.mrf.mxu0
      %2999 = vmatprep.mubr.f32.mxu0 0.0
      %3000 = vmatmul.mubr.f32.gmra.mxu0 %v2922
      %v3001 = vpop.f32.mrf.mxu0
      %v3002 = vadd.f32 0.0, %v3001
      %v3003 = vpop.f32.mrf.mxu0
      %3004 = vmatprep.mubr.f32.mxu0 0.0
      %3005 = vmatmul.mubr.f32.gmra.mxu0 %v2925
      %v3006 = vpop.f32.mrf.mxu0
      %v3007 = vadd.f32 0.0, %v3006
      %v3008 = vpop.f32.mrf.mxu0
      %3009 = vdwg.mxu0
      %s3010 = scalar_lea.vmem %s9, 24
      %v3011 = vld [vmem:[%s3010] sm:$0xff]
      %v3013 = vsel %vm1002, %v2997, 0
      %v3016 = vsel %vm1002, %v3002, 0
      %v3019 = vsel %vm1002, %v3007, 0
      %3021 = vmatprep.subr.mxu0 0.0
      %3022 = vmatpush1.msra.mxu0 0.0
      %3023 = vmatprep.subr.mxu0 0.0
      %3024 = vmatpush1.msra.mxu0 0.0
      %3025 = vmatprep.subr.mxu0 0.0
      %3026 = vmatpush1.msra.mxu0 0.0
      %3027 = vmatprep.subr.mxu0 0.0
      %3028 = vmatpush1.msra.mxu0 0.0
      %3029 = vmatprep.subr.mxu0 0.0
      %3030 = vmatpush1.msra.mxu0 0.0
      %3031 = vmatprep.subr.mxu0 0.0
      %3032 = vmatpush1.msra.mxu0 0.0
      %3033 = vmatprep.subr.mxu0 0.0
      %3034 = vmatpush1.msra.mxu0 0.0
      %3035 = vmatprep.subr.mxu0 0.0
      %3036 = vmatpush1.msra.mxu0 0.0
      %3037 = vmatprep.subr.mxu0 0.0
      %3038 = vmatpush1.msra.mxu0 0.0
      %3039 = vmatprep.subr.mxu0 0.0
      %3040 = vmatpush1.msra.mxu0 0.0
      %3041 = vmatprep.subr.mxu0 0.0
      %3042 = vmatpush1.msra.mxu0 0.0
      %3043 = vmatprep.subr.mxu0 0.0
      %3044 = vmatpush1.msra.mxu0 0.0
      %3045 = vmatprep.subr.mxu0 0.0
      %3046 = vmatpush1.msra.mxu0 0.0
      %3047 = vmatprep.subr.mxu0 0.0
      %3048 = vmatpush1.msra.mxu0 0.0
      %3049 = vmatprep.subr.mxu0 0.0
      %3050 = vmatpush1.msra.mxu0 0.0
      %3051 = vmatprep.subr.mxu0 0.0
      %3052 = vmatpush1.msra.mxu0 %v3011
      %3053 = vmatprep.subr.mxu0 0.0
      %3054 = vmatpush2.msra.mxu0 0.0
      %3055 = vmatprep.subr.mxu0 0.0
      %3056 = vmatpush2.msra.mxu0 0.0
      %3057 = vmatprep.subr.mxu0 0.0
      %3058 = vmatpush2.msra.mxu0 0.0
      %3059 = vmatprep.subr.mxu0 0.0
      %3060 = vmatpush2.msra.mxu0 0.0
      %3061 = vmatprep.subr.mxu0 0.0
      %3062 = vmatpush2.msra.mxu0 0.0
      %3063 = vmatprep.subr.mxu0 0.0
      %3064 = vmatpush2.msra.mxu0 0.0
      %3065 = vmatprep.subr.mxu0 0.0
      %3066 = vmatpush2.msra.mxu0 0.0
      %3067 = vmatprep.subr.mxu0 0.0
      %3068 = vmatpush2.msra.mxu0 0.0
      %3069 = vmatprep.subr.mxu0 0.0
      %3070 = vmatpush2.msra.mxu0 0.0
      %3071 = vmatprep.subr.mxu0 0.0
      %3072 = vmatpush2.msra.mxu0 0.0
      %3073 = vmatprep.subr.mxu0 0.0
      %3074 = vmatpush2.msra.mxu0 0.0
      %3075 = vmatprep.subr.mxu0 0.0
      %3076 = vmatpush2.msra.mxu0 0.0
      %3077 = vmatprep.subr.mxu0 0.0
      %3078 = vmatpush2.msra.mxu0 0.0
      %3079 = vmatprep.subr.mxu0 0.0
      %3080 = vmatpush2.msra.mxu0 0.0
      %3081 = vmatprep.subr.mxu0 0.0
      %3082 = vmatpush2.msra.mxu0 0.0
      %3083 = vmatprep.subr.mxu0 0.0
      %3084 = vmatpush2.msra.mxu0 0.0
      %3085 = vmatprep.mubr.f32.mxu0 0.0
      %3086 = vmatmul.mubr.f32.gmra.mxu0 %v3013
      %v3087 = vpop.f32.mrf.mxu0
      %v3088 = vadd.f32 0.0, %v3087
      %v3089 = vpop.f32.mrf.mxu0
      %3090 = vmatprep.mubr.f32.mxu0 0.0
      %3091 = vmatmul.mubr.f32.gmra.mxu0 %v3016
      %v3092 = vpop.f32.mrf.mxu0
      %v3093 = vadd.f32 0.0, %v3092
      %v3094 = vpop.f32.mrf.mxu0
      %3095 = vmatprep.mubr.f32.mxu0 0.0
      %3096 = vmatmul.mubr.f32.gmra.mxu0 %v3019
      %v3097 = vpop.f32.mrf.mxu0
      %v3098 = vadd.f32 0.0, %v3097
      %v3099 = vpop.f32.mrf.mxu0
      %3100 = vdwg.mxu0
      %v3101 = vadd.f32 %v2505, %v3088
      %v3102 = vadd.f32 %v2506, %v3093
      %v3103 = vadd.f32 %v2507, %v3098
      %v3104 = vadd.f32 %v655, %v3101
      %v3105 = vadd.f32 %v656, %v3102
      %v3106 = vadd.f32 %v657, %v3103
      %v3107 = vld [vmem:[%s10] sm:$0x1]
      %v3109 = vlaneseq
      %v3110 = vshrl.u32 %v3109, 7
      %v3111 = vsub.s32 0, %v3110
      %v3112 = vrot.slane %v3107, %v3111
      %v3114 = vadd.f32 %v3104, %v3112
      %v3115 = vadd.f32 %v3105, %v3112
      %v3116 = vadd.f32 %v3106, %v3112
      %v3117 = vld [vmem:[%s11] sm:$0x1]
      %v3118 = vld [vmem:[%s12] sm:$0x1]
      %v3119 = vsel %vm660, %v3114, 0.0
      %3120 = vadd.xlane.f32.xlu0 %v3119
      %v3121 = vpop.xlane.xlu0 %3120
      %v3122 = vsel %vm660, %v3115, 0.0
      %3123 = vadd.xlane.f32.xlu0 %v3122
      %v3124 = vpop.xlane.xlu0 %3123
      %v3125 = vsel %vm667, %v3116, 0.0
      %3126 = vadd.xlane.f32.xlu0 %v3125
      %v3127 = vpop.xlane.xlu0 %3126
      %v3128 = vmul.f32 %v3121, %v671
      %v3129 = vmul.f32 %v3124, %v671
      %v3130 = vmul.f32 %v3127, %v671
      %v3131 = vsub.f32 %v3114, %v3128
      %v3132 = vsub.f32 %v3115, %v3129
      %v3133 = vsub.f32 %v3116, %v3130
      %v3134 = vmul.f32 %v3131, %v3131
      %v3135 = vmul.f32 %v3132, %v3132
      %v3136 = vmul.f32 %v3133, %v3133
      %v3137 = vsel %vm660, %v3134, 0.0
      %3138 = vadd.xlane.f32.xlu0 %v3137
      %v3139 = vpop.xlane.xlu0 %3138
      %v3140 = vsel %vm660, %v3135, 0.0
      %3141 = vadd.xlane.f32.xlu0 %v3140
      %v3142 = vpop.xlane.xlu0 %3141
      %v3143 = vsel %vm667, %v3136, 0.0
      %3144 = vadd.xlane.f32.xlu0 %v3143
      %v3145 = vpop.xlane.xlu0 %3144
      %v3146 = vmul.f32 %v3139, %v671
      %v3147 = vmul.f32 %v3142, %v671
      %v3148 = vmul.f32 %v3145, %v671
      %v3149 = vadd.f32 %v3146, 1e-05
      %v3150 = vadd.f32 %v3147, 1e-05
      %v3151 = vadd.f32 %v3148, 1e-05
      %v3152 = vrsqrt.pop %v3149
      %v3153 = vrsqrt.pop %v3150
      %v3154 = vrsqrt.pop %v3151
      %v3155 = vmul.f32 %v3131, %v3152
      %v3156 = vmul.f32 %v3132, %v3153
      %v3157 = vmul.f32 %v3133, %v3154
      %v3159 = vlaneseq
      %v3160 = vshrl.u32 %v3159, 7
      %v3161 = vsub.s32 0, %v3160
      %v3162 = vrot.slane %v3117, %v3161
      %v3164 = vmul.f32 %v3155, %v3162
      %v3165 = vmul.f32 %v3156, %v3162
      %v3166 = vmul.f32 %v3157, %v3162
      %v3168 = vlaneseq
      %v3169 = vshrl.u32 %v3168, 7
      %v3170 = vsub.s32 0, %v3169
      %v3171 = vrot.slane %v3118, %v3170
      %v3173 = vadd.f32 %v3164, %v3171
      %v3174 = vadd.f32 %v3165, %v3171
      %v3175 = vadd.f32 %v3166, %v3171
      %v3176 = vld [vmem:[%s13] sm:$0xff]
      %v3177 = vld [vmem:[%s13 + $0x8] sm:$0xff]
      %v3178 = vld [vmem:[%s13 + $0x10] sm:$0xff]
      %v3179 = vld [vmem:[%s13 + $0x18] sm:$0xff]
      %v3180 = vld [vmem:[%s14] sm:$0x1]
      %v3182 = vlaneseq
      %v3183 = vshrl.u32 %v3182, 7
      %v3184 = vsub.s32 0, %v3183
      %v3185 = vrot.slane %v3180, %v3184
      %v3188 = vsel %vm660, %v3173, 0
      %v3191 = vsel %vm660, %v3174, 0
      %v3194 = vsel %vm660, %v3175, 0
      %3196 = vmatprep.subr.mxu0 0.0
      %3197 = vmatpush1.msra.mxu0 0.0
      %3198 = vmatprep.subr.mxu0 0.0
      %3199 = vmatpush1.msra.mxu0 0.0
      %3200 = vmatprep.subr.mxu0 0.0
      %3201 = vmatpush1.msra.mxu0 0.0
      %3202 = vmatprep.subr.mxu0 0.0
      %3203 = vmatpush1.msra.mxu0 0.0
      %3204 = vmatprep.subr.mxu0 0.0
      %3205 = vmatpush1.msra.mxu0 0.0
      %3206 = vmatprep.subr.mxu0 0.0
      %3207 = vmatpush1.msra.mxu0 0.0
      %3208 = vmatprep.subr.mxu0 0.0
      %3209 = vmatpush1.msra.mxu0 0.0
      %3210 = vmatprep.subr.mxu0 0.0
      %3211 = vmatpush1.msra.mxu0 0.0
      %3212 = vmatprep.subr.mxu0 0.0
      %3213 = vmatpush1.msra.mxu0 0.0
      %3214 = vmatprep.subr.mxu0 0.0
      %3215 = vmatpush1.msra.mxu0 0.0
      %3216 = vmatprep.subr.mxu0 0.0
      %3217 = vmatpush1.msra.mxu0 0.0
      %3218 = vmatprep.subr.mxu0 0.0
      %3219 = vmatpush1.msra.mxu0 0.0
      %3220 = vmatprep.subr.mxu0 0.0
      %3221 = vmatpush1.msra.mxu0 %v3179
      %3222 = vmatprep.subr.mxu0 0.0
      %3223 = vmatpush1.msra.mxu0 %v3178
      %3224 = vmatprep.subr.mxu0 0.0
      %3225 = vmatpush1.msra.mxu0 %v3177
      %3226 = vmatprep.subr.mxu0 0.0
      %3227 = vmatpush1.msra.mxu0 %v3176
      %3228 = vmatprep.subr.mxu0 0.0
      %3229 = vmatpush2.msra.mxu0 0.0
      %3230 = vmatprep.subr.mxu0 0.0
      %3231 = vmatpush2.msra.mxu0 0.0
      %3232 = vmatprep.subr.mxu0 0.0
      %3233 = vmatpush2.msra.mxu0 0.0
      %3234 = vmatprep.subr.mxu0 0.0
      %3235 = vmatpush2.msra.mxu0 0.0
      %3236 = vmatprep.subr.mxu0 0.0
      %3237 = vmatpush2.msra.mxu0 0.0
      %3238 = vmatprep.subr.mxu0 0.0
      %3239 = vmatpush2.msra.mxu0 0.0
      %3240 = vmatprep.subr.mxu0 0.0
      %3241 = vmatpush2.msra.mxu0 0.0
      %3242 = vmatprep.subr.mxu0 0.0
      %3243 = vmatpush2.msra.mxu0 0.0
      %3244 = vmatprep.subr.mxu0 0.0
      %3245 = vmatpush2.msra.mxu0 0.0
      %3246 = vmatprep.subr.mxu0 0.0
      %3247 = vmatpush2.msra.mxu0 0.0
      %3248 = vmatprep.subr.mxu0 0.0
      %3249 = vmatpush2.msra.mxu0 0.0
      %3250 = vmatprep.subr.mxu0 0.0
      %3251 = vmatpush2.msra.mxu0 0.0
      %3252 = vmatprep.subr.mxu0 0.0
      %3253 = vmatpush2.msra.mxu0 0.0
      %3254 = vmatprep.subr.mxu0 0.0
      %3255 = vmatpush2.msra.mxu0 0.0
      %3256 = vmatprep.subr.mxu0 0.0
      %3257 = vmatpush2.msra.mxu0 0.0
      %3258 = vmatprep.subr.mxu0 0.0
      %3259 = vmatpush2.msra.mxu0 0.0
      %3260 = vmatprep.mubr.f32.mxu0 0.0
      %3261 = vmatmul.mubr.f32.gmra.mxu0 %v3188
      %v3262 = vpop.f32.mrf.mxu0
      %v3263 = vadd.f32 %v3185, %v3262
      %v3264 = vpop.f32.mrf.mxu0
      %3265 = vmatprep.mubr.f32.mxu0 0.0
      %3266 = vmatmul.mubr.f32.gmra.mxu0 %v3191
      %v3267 = vpop.f32.mrf.mxu0
      %v3268 = vadd.f32 %v3185, %v3267
      %v3269 = vpop.f32.mrf.mxu0
      %3270 = vmatprep.mubr.f32.mxu0 0.0
      %3271 = vmatmul.mubr.f32.gmra.mxu0 %v3194
      %v3272 = vpop.f32.mrf.mxu0
      %v3273 = vadd.f32 %v3185, %v3272
      %v3274 = vpop.f32.mrf.mxu0
      %3275 = vdwg.mxu0
      %v3276 = vmax.f32 %v3263, 0.0
      %v3277 = vmax.f32 %v3268, 0.0
      %v3278 = vmax.f32 %v3273, 0.0
      %v3279 = vld [vmem:[%s15] sm:$0xff]
      %v3280 = vld [vmem:[%s15 + $0x8] sm:$0xff]
      %v3281 = vld [vmem:[%s15 + $0x10] sm:$0xff]
      %v3282 = vld [vmem:[%s15 + $0x18] sm:$0xff]
      %v3283 = vld [vmem:[%s15 + $0x20] sm:$0xff]
      %v3284 = vld [vmem:[%s15 + $0x28] sm:$0xff]
      %v3285 = vld [vmem:[%s15 + $0x30] sm:$0xff]
      %v3286 = vld [vmem:[%s15 + $0x38] sm:$0xff]
      %vm3287 = vcmask 523264
      %v3289 = vsel %vm3287, %v3276, 0
      %v3292 = vsel %vm3287, %v3277, 0
      %v3295 = vsel %vm3287, %v3278, 0
      %3297 = vmatprep.subr.mxu0 0.0
      %3298 = vmatpush1.msra.mxu0 0.0
      %3299 = vmatprep.subr.mxu0 0.0
      %3300 = vmatpush1.msra.mxu0 0.0
      %3301 = vmatprep.subr.mxu0 0.0
      %3302 = vmatpush1.msra.mxu0 0.0
      %3303 = vmatprep.subr.mxu0 0.0
      %3304 = vmatpush1.msra.mxu0 0.0
      %3305 = vmatprep.subr.mxu0 0.0
      %3306 = vmatpush1.msra.mxu0 0.0
      %3307 = vmatprep.subr.mxu0 0.0
      %3308 = vmatpush1.msra.mxu0 0.0
      %3309 = vmatprep.subr.mxu0 0.0
      %3310 = vmatpush1.msra.mxu0 0.0
      %3311 = vmatprep.subr.mxu0 0.0
      %3312 = vmatpush1.msra.mxu0 0.0
      %3313 = vmatprep.subr.mxu0 0.0
      %3314 = vmatpush1.msra.mxu0 %v3286
      %3315 = vmatprep.subr.mxu0 0.0
      %3316 = vmatpush1.msra.mxu0 %v3285
      %3317 = vmatprep.subr.mxu0 0.0
      %3318 = vmatpush1.msra.mxu0 %v3284
      %3319 = vmatprep.subr.mxu0 0.0
      %3320 = vmatpush1.msra.mxu0 %v3283
      %3321 = vmatprep.subr.mxu0 0.0
      %3322 = vmatpush1.msra.mxu0 %v3282
      %3323 = vmatprep.subr.mxu0 0.0
      %3324 = vmatpush1.msra.mxu0 %v3281
      %3325 = vmatprep.subr.mxu0 0.0
      %3326 = vmatpush1.msra.mxu0 %v3280
      %3327 = vmatprep.subr.mxu0 0.0
      %3328 = vmatpush1.msra.mxu0 %v3279
      %3329 = vmatprep.subr.mxu0 0.0
      %3330 = vmatpush2.msra.mxu0 0.0
      %3331 = vmatprep.subr.mxu0 0.0
      %3332 = vmatpush2.msra.mxu0 0.0
      %3333 = vmatprep.subr.mxu0 0.0
      %3334 = vmatpush2.msra.mxu0 0.0
      %3335 = vmatprep.subr.mxu0 0.0
      %3336 = vmatpush2.msra.mxu0 0.0
      %3337 = vmatprep.subr.mxu0 0.0
      %3338 = vmatpush2.msra.mxu0 0.0
      %3339 = vmatprep.subr.mxu0 0.0
      %3340 = vmatpush2.msra.mxu0 0.0
      %3341 = vmatprep.subr.mxu0 0.0
      %3342 = vmatpush2.msra.mxu0 0.0
      %3343 = vmatprep.subr.mxu0 0.0
      %3344 = vmatpush2.msra.mxu0 0.0
      %3345 = vmatprep.subr.mxu0 0.0
      %3346 = vmatpush2.msra.mxu0 0.0
      %3347 = vmatprep.subr.mxu0 0.0
      %3348 = vmatpush2.msra.mxu0 0.0
      %3349 = vmatprep.subr.mxu0 0.0
      %3350 = vmatpush2.msra.mxu0 0.0
      %3351 = vmatprep.subr.mxu0 0.0
      %3352 = vmatpush2.msra.mxu0 0.0
      %3353 = vmatprep.subr.mxu0 0.0
      %3354 = vmatpush2.msra.mxu0 0.0
      %3355 = vmatprep.subr.mxu0 0.0
      %3356 = vmatpush2.msra.mxu0 0.0
      %3357 = vmatprep.subr.mxu0 0.0
      %3358 = vmatpush2.msra.mxu0 0.0
      %3359 = vmatprep.subr.mxu0 0.0
      %3360 = vmatpush2.msra.mxu0 0.0
      %3361 = vmatprep.mubr.f32.mxu0 0.0
      %3362 = vmatmul.mubr.f32.gmra.mxu0 %v3289
      %v3363 = vpop.f32.mrf.mxu0
      %v3364 = vadd.f32 0.0, %v3363
      %v3365 = vpop.f32.mrf.mxu0
      %3366 = vmatprep.mubr.f32.mxu0 0.0
      %3367 = vmatmul.mubr.f32.gmra.mxu0 %v3292
      %v3368 = vpop.f32.mrf.mxu0
      %v3369 = vadd.f32 0.0, %v3368
      %v3370 = vpop.f32.mrf.mxu0
      %3371 = vmatprep.mubr.f32.mxu0 0.0
      %3372 = vmatmul.mubr.f32.gmra.mxu0 %v3295
      %v3373 = vpop.f32.mrf.mxu0
      %v3374 = vadd.f32 0.0, %v3373
      %v3375 = vpop.f32.mrf.mxu0
      %3376 = vdwg.mxu0
      %v3377 = vadd.f32 %v3114, %v3364
      %v3378 = vadd.f32 %v3115, %v3369
      %v3379 = vadd.f32 %v3116, %v3374
      %v3380 = vld [vmem:[%s16] sm:$0x1]
      %v3382 = vlaneseq
      %v3383 = vshrl.u32 %v3382, 7
      %v3384 = vsub.s32 0, %v3383
      %v3385 = vrot.slane %v3380, %v3384
      %v3387 = vadd.f32 %v3377, %v3385
      %v3388 = vadd.f32 %v3378, %v3385
      %v3389 = vadd.f32 %v3379, %v3385
      %s3390 = scalar_lea.vmem %s1, 1
      %v3391 = vld [vmem:[%s3390] sm:$0x1]
      %s3392 = scalar_lea.vmem %s2, 1
      %v3393 = vld [vmem:[%s3392] sm:$0x1]
      %v3394 = vsel %vm660, %v3387, 0.0
      %3395 = vadd.xlane.f32.xlu0 %v3394
      %v3396 = vpop.xlane.xlu0 %3395
      %v3397 = vsel %vm660, %v3388, 0.0
      %3398 = vadd.xlane.f32.xlu0 %v3397
      %v3399 = vpop.xlane.xlu0 %3398
      %v3400 = vsel %vm667, %v3389, 0.0
      %3401 = vadd.xlane.f32.xlu0 %v3400
      %v3402 = vpop.xlane.xlu0 %3401
      %v3403 = vmul.f32 %v3396, %v671
      %v3404 = vmul.f32 %v3399, %v671
      %v3405 = vmul.f32 %v3402, %v671
      %v3406 = vsub.f32 %v3387, %v3403
      %v3407 = vsub.f32 %v3388, %v3404
      %v3408 = vsub.f32 %v3389, %v3405
      %v3409 = vmul.f32 %v3406, %v3406
      %v3410 = vmul.f32 %v3407, %v3407
      %v3411 = vmul.f32 %v3408, %v3408
      %v3412 = vsel %vm660, %v3409, 0.0
      %3413 = vadd.xlane.f32.xlu0 %v3412
      %v3414 = vpop.xlane.xlu0 %3413
      %v3415 = vsel %vm660, %v3410, 0.0
      %3416 = vadd.xlane.f32.xlu0 %v3415
      %v3417 = vpop.xlane.xlu0 %3416
      %v3418 = vsel %vm667, %v3411, 0.0
      %3419 = vadd.xlane.f32.xlu0 %v3418
      %v3420 = vpop.xlane.xlu0 %3419
      %v3421 = vmul.f32 %v3414, %v671
      %v3422 = vmul.f32 %v3417, %v671
      %v3423 = vmul.f32 %v3420, %v671
      %v3424 = vadd.f32 %v3421, 1e-05
      %v3425 = vadd.f32 %v3422, 1e-05
      %v3426 = vadd.f32 %v3423, 1e-05
      %v3427 = vrsqrt.pop %v3424
      %v3428 = vrsqrt.pop %v3425
      %v3429 = vrsqrt.pop %v3426
      %v3430 = vmul.f32 %v3406, %v3427
      %v3431 = vmul.f32 %v3407, %v3428
      %v3432 = vmul.f32 %v3408, %v3429
      %v3434 = vlaneseq
      %v3435 = vshrl.u32 %v3434, 7
      %v3436 = vsub.s32 0, %v3435
      %v3437 = vrot.slane %v3391, %v3436
      %v3439 = vmul.f32 %v3430, %v3437
      %v3440 = vmul.f32 %v3431, %v3437
      %v3441 = vmul.f32 %v3432, %v3437
      %v3443 = vlaneseq
      %v3444 = vshrl.u32 %v3443, 7
      %v3445 = vsub.s32 0, %v3444
      %v3446 = vrot.slane %v3393, %v3445
      %v3448 = vadd.f32 %v3439, %v3446
      %v3449 = vadd.f32 %v3440, %v3446
      %v3450 = vadd.f32 %v3441, %v3446
      %s3451 = scalar_lea.vmem %s3, 128
      %v3452 = vld [vmem:[%s3451] sm:$0xff]
      %v3453 = vld [vmem:[%s3451 + $0x8] sm:$0xff]
      %v3454 = vld [vmem:[%s3451 + $0x10] sm:$0xff]
      %v3455 = vld [vmem:[%s3451 + $0x18] sm:$0xff]
      %s3456 = scalar_lea.vmem %s4, 4
      %v3457 = vld [vmem:[%s3456] sm:$0x1]
      %v3459 = vlaneseq
      %v3460 = vshrl.u32 %v3459, 7
      %v3461 = vsub.s32 0, %v3460
      %v3462 = vrot.slane %v3457, %v3461
      %v3465 = vsel %vm660, %v3448, 0
      %v3468 = vsel %vm660, %v3449, 0
      %v3471 = vsel %vm660, %v3450, 0
      %3473 = vmatprep.subr.mxu0 0.0
      %3474 = vmatpush1.msra.mxu0 0.0
      %3475 = vmatprep.subr.mxu0 0.0
      %3476 = vmatpush1.msra.mxu0 0.0
      %3477 = vmatprep.subr.mxu0 0.0
      %3478 = vmatpush1.msra.mxu0 0.0
      %3479 = vmatprep.subr.mxu0 0.0
      %3480 = vmatpush1.msra.mxu0 0.0
      %3481 = vmatprep.subr.mxu0 0.0
      %3482 = vmatpush1.msra.mxu0 0.0
      %3483 = vmatprep.subr.mxu0 0.0
      %3484 = vmatpush1.msra.mxu0 0.0
      %3485 = vmatprep.subr.mxu0 0.0
      %3486 = vmatpush1.msra.mxu0 0.0
      %3487 = vmatprep.subr.mxu0 0.0
      %3488 = vmatpush1.msra.mxu0 0.0
      %3489 = vmatprep.subr.mxu0 0.0
      %3490 = vmatpush1.msra.mxu0 0.0
      %3491 = vmatprep.subr.mxu0 0.0
      %3492 = vmatpush1.msra.mxu0 0.0
      %3493 = vmatprep.subr.mxu0 0.0
      %3494 = vmatpush1.msra.mxu0 0.0
      %3495 = vmatprep.subr.mxu0 0.0
      %3496 = vmatpush1.msra.mxu0 0.0
      %3497 = vmatprep.subr.mxu0 0.0
      %3498 = vmatpush1.msra.mxu0 %v3455
      %3499 = vmatprep.subr.mxu0 0.0
      %3500 = vmatpush1.msra.mxu0 %v3454
      %3501 = vmatprep.subr.mxu0 0.0
      %3502 = vmatpush1.msra.mxu0 %v3453
      %3503 = vmatprep.subr.mxu0 0.0
      %3504 = vmatpush1.msra.mxu0 %v3452
      %3505 = vmatprep.subr.mxu0 0.0
      %3506 = vmatpush2.msra.mxu0 0.0
      %3507 = vmatprep.subr.mxu0 0.0
      %3508 = vmatpush2.msra.mxu0 0.0
      %3509 = vmatprep.subr.mxu0 0.0
      %3510 = vmatpush2.msra.mxu0 0.0
      %3511 = vmatprep.subr.mxu0 0.0
      %3512 = vmatpush2.msra.mxu0 0.0
      %3513 = vmatprep.subr.mxu0 0.0
      %3514 = vmatpush2.msra.mxu0 0.0
      %3515 = vmatprep.subr.mxu0 0.0
      %3516 = vmatpush2.msra.mxu0 0.0
      %3517 = vmatprep.subr.mxu0 0.0
      %3518 = vmatpush2.msra.mxu0 0.0
      %3519 = vmatprep.subr.mxu0 0.0
      %3520 = vmatpush2.msra.mxu0 0.0
      %3521 = vmatprep.subr.mxu0 0.0
      %3522 = vmatpush2.msra.mxu0 0.0
      %3523 = vmatprep.subr.mxu0 0.0
      %3524 = vmatpush2.msra.mxu0 0.0
      %3525 = vmatprep.subr.mxu0 0.0
      %3526 = vmatpush2.msra.mxu0 0.0
      %3527 = vmatprep.subr.mxu0 0.0
      %3528 = vmatpush2.msra.mxu0 0.0
      %3529 = vmatprep.subr.mxu0 0.0
      %3530 = vmatpush2.msra.mxu0 0.0
      %3531 = vmatprep.subr.mxu0 0.0
      %3532 = vmatpush2.msra.mxu0 0.0
      %3533 = vmatprep.subr.mxu0 0.0
      %3534 = vmatpush2.msra.mxu0 0.0
      %3535 = vmatprep.subr.mxu0 0.0
      %3536 = vmatpush2.msra.mxu0 0.0
      %3537 = vmatprep.mubr.f32.mxu0 0.0
      %3538 = vmatmul.mubr.f32.gmra.mxu0 %v3465
      %v3539 = vpop.f32.mrf.mxu0
      %v3540 = vadd.f32 %v3462, %v3539
      %v3541 = vpop.f32.mrf.mxu0
      %3542 = vmatprep.mubr.f32.mxu0 0.0
      %3543 = vmatmul.mubr.f32.gmra.mxu0 %v3468
      %v3544 = vpop.f32.mrf.mxu0
      %v3545 = vadd.f32 %v3462, %v3544
      %v3546 = vpop.f32.mrf.mxu0
      %3547 = vmatprep.mubr.f32.mxu0 0.0
      %3548 = vmatmul.mubr.f32.gmra.mxu0 %v3471
      %v3549 = vpop.f32.mrf.mxu0
      %v3550 = vadd.f32 %v3462, %v3549
      %v3551 = vpop.f32.mrf.mxu0
      %3552 = vdwg.mxu0
      %s3553 = scalar_lea.vmem %s5, 128
      %v3554 = vld [vmem:[%s3553] sm:$0xff]
      %v3555 = vld [vmem:[%s3553 + $0x8] sm:$0xff]
      %v3556 = vld [vmem:[%s3553 + $0x10] sm:$0xff]
      %v3557 = vld [vmem:[%s3553 + $0x18] sm:$0xff]
      %s3558 = scalar_lea.vmem %s6, 4
      %v3559 = vld [vmem:[%s3558] sm:$0x1]
      %v3561 = vlaneseq
      %v3562 = vshrl.u32 %v3561, 7
      %v3563 = vsub.s32 0, %v3562
      %v3564 = vrot.slane %v3559, %v3563
      %3566 = vmatprep.subr.mxu0 0.0
      %3567 = vmatpush1.msra.mxu0 0.0
      %3568 = vmatprep.subr.mxu0 0.0
      %3569 = vmatpush1.msra.mxu0 0.0
      %3570 = vmatprep.subr.mxu0 0.0
      %3571 = vmatpush1.msra.mxu0 0.0
      %3572 = vmatprep.subr.mxu0 0.0
      %3573 = vmatpush1.msra.mxu0 0.0
      %3574 = vmatprep.subr.mxu0 0.0
      %3575 = vmatpush1.msra.mxu0 0.0
      %3576 = vmatprep.subr.mxu0 0.0
      %3577 = vmatpush1.msra.mxu0 0.0
      %3578 = vmatprep.subr.mxu0 0.0
      %3579 = vmatpush1.msra.mxu0 0.0
      %3580 = vmatprep.subr.mxu0 0.0
      %3581 = vmatpush1.msra.mxu0 0.0
      %3582 = vmatprep.subr.mxu0 0.0
      %3583 = vmatpush1.msra.mxu0 0.0
      %3584 = vmatprep.subr.mxu0 0.0
      %3585 = vmatpush1.msra.mxu0 0.0
      %3586 = vmatprep.subr.mxu0 0.0
      %3587 = vmatpush1.msra.mxu0 0.0
      %3588 = vmatprep.subr.mxu0 0.0
      %3589 = vmatpush1.msra.mxu0 0.0
      %3590 = vmatprep.subr.mxu0 0.0
      %3591 = vmatpush1.msra.mxu0 %v3557
      %3592 = vmatprep.subr.mxu0 0.0
      %3593 = vmatpush1.msra.mxu0 %v3556
      %3594 = vmatprep.subr.mxu0 0.0
      %3595 = vmatpush1.msra.mxu0 %v3555
      %3596 = vmatprep.subr.mxu0 0.0
      %3597 = vmatpush1.msra.mxu0 %v3554
      %3598 = vmatprep.subr.mxu0 0.0
      %3599 = vmatpush2.msra.mxu0 0.0
      %3600 = vmatprep.subr.mxu0 0.0
      %3601 = vmatpush2.msra.mxu0 0.0
      %3602 = vmatprep.subr.mxu0 0.0
      %3603 = vmatpush2.msra.mxu0 0.0
      %3604 = vmatprep.subr.mxu0 0.0
      %3605 = vmatpush2.msra.mxu0 0.0
      %3606 = vmatprep.subr.mxu0 0.0
      %3607 = vmatpush2.msra.mxu0 0.0
      %3608 = vmatprep.subr.mxu0 0.0
      %3609 = vmatpush2.msra.mxu0 0.0
      %3610 = vmatprep.subr.mxu0 0.0
      %3611 = vmatpush2.msra.mxu0 0.0
      %3612 = vmatprep.subr.mxu0 0.0
      %3613 = vmatpush2.msra.mxu0 0.0
      %3614 = vmatprep.subr.mxu0 0.0
      %3615 = vmatpush2.msra.mxu0 0.0
      %3616 = vmatprep.subr.mxu0 0.0
      %3617 = vmatpush2.msra.mxu0 0.0
      %3618 = vmatprep.subr.mxu0 0.0
      %3619 = vmatpush2.msra.mxu0 0.0
      %3620 = vmatprep.subr.mxu0 0.0
      %3621 = vmatpush2.msra.mxu0 0.0
      %3622 = vmatprep.subr.mxu0 0.0
      %3623 = vmatpush2.msra.mxu0 0.0
      %3624 = vmatprep.subr.mxu0 0.0
      %3625 = vmatpush2.msra.mxu0 0.0
      %3626 = vmatprep.subr.mxu0 0.0
      %3627 = vmatpush2.msra.mxu0 0.0
      %3628 = vmatprep.subr.mxu0 0.0
      %3629 = vmatpush2.msra.mxu0 0.0
      %3630 = vmatprep.mubr.f32.mxu0 0.0
      %3631 = vmatmul.mubr.f32.gmra.mxu0 %v3465
      %v3632 = vpop.f32.mrf.mxu0
      %v3633 = vadd.f32 %v3564, %v3632
      %v3634 = vpop.f32.mrf.mxu0
      %3635 = vmatprep.mubr.f32.mxu0 0.0
      %3636 = vmatmul.mubr.f32.gmra.mxu0 %v3468
      %v3637 = vpop.f32.mrf.mxu0
      %v3638 = vadd.f32 %v3564, %v3637
      %v3639 = vpop.f32.mrf.mxu0
      %3640 = vmatprep.mubr.f32.mxu0 0.0
      %3641 = vmatmul.mubr.f32.gmra.mxu0 %v3471
      %v3642 = vpop.f32.mrf.mxu0
      %v3643 = vadd.f32 %v3564, %v3642
      %v3644 = vpop.f32.mrf.mxu0
      %3645 = vdwg.mxu0
      %s3646 = scalar_lea.vmem %s7, 128
      %v3647 = vld [vmem:[%s3646] sm:$0xff]
      %v3648 = vld [vmem:[%s3646 + $0x8] sm:$0xff]
      %v3649 = vld [vmem:[%s3646 + $0x10] sm:$0xff]
      %v3650 = vld [vmem:[%s3646 + $0x18] sm:$0xff]
      %s3651 = scalar_lea.vmem %s8, 4
      %v3652 = vld [vmem:[%s3651] sm:$0x1]
      %v3654 = vlaneseq
      %v3655 = vshrl.u32 %v3654, 7
      %v3656 = vsub.s32 0, %v3655
      %v3657 = vrot.slane %v3652, %v3656
      %3659 = vmatprep.subr.mxu0 0.0
      %3660 = vmatpush1.msra.mxu0 0.0
      %3661 = vmatprep.subr.mxu0 0.0
      %3662 = vmatpush1.msra.mxu0 0.0
      %3663 = vmatprep.subr.mxu0 0.0
      %3664 = vmatpush1.msra.mxu0 0.0
      %3665 = vmatprep.subr.mxu0 0.0
      %3666 = vmatpush1.msra.mxu0 0.0
      %3667 = vmatprep.subr.mxu0 0.0
      %3668 = vmatpush1.msra.mxu0 0.0
      %3669 = vmatprep.subr.mxu0 0.0
      %3670 = vmatpush1.msra.mxu0 0.0
      %3671 = vmatprep.subr.mxu0 0.0
      %3672 = vmatpush1.msra.mxu0 0.0
      %3673 = vmatprep.subr.mxu0 0.0
      %3674 = vmatpush1.msra.mxu0 0.0
      %3675 = vmatprep.subr.mxu0 0.0
      %3676 = vmatpush1.msra.mxu0 0.0
      %3677 = vmatprep.subr.mxu0 0.0
      %3678 = vmatpush1.msra.mxu0 0.0
      %3679 = vmatprep.subr.mxu0 0.0
      %3680 = vmatpush1.msra.mxu0 0.0
      %3681 = vmatprep.subr.mxu0 0.0
      %3682 = vmatpush1.msra.mxu0 0.0
      %3683 = vmatprep.subr.mxu0 0.0
      %3684 = vmatpush1.msra.mxu0 %v3650
      %3685 = vmatprep.subr.mxu0 0.0
      %3686 = vmatpush1.msra.mxu0 %v3649
      %3687 = vmatprep.subr.mxu0 0.0
      %3688 = vmatpush1.msra.mxu0 %v3648
      %3689 = vmatprep.subr.mxu0 0.0
      %3690 = vmatpush1.msra.mxu0 %v3647
      %3691 = vmatprep.subr.mxu0 0.0
      %3692 = vmatpush2.msra.mxu0 0.0
      %3693 = vmatprep.subr.mxu0 0.0
      %3694 = vmatpush2.msra.mxu0 0.0
      %3695 = vmatprep.subr.mxu0 0.0
      %3696 = vmatpush2.msra.mxu0 0.0
      %3697 = vmatprep.subr.mxu0 0.0
      %3698 = vmatpush2.msra.mxu0 0.0
      %3699 = vmatprep.subr.mxu0 0.0
      %3700 = vmatpush2.msra.mxu0 0.0
      %3701 = vmatprep.subr.mxu0 0.0
      %3702 = vmatpush2.msra.mxu0 0.0
      %3703 = vmatprep.subr.mxu0 0.0
      %3704 = vmatpush2.msra.mxu0 0.0
      %3705 = vmatprep.subr.mxu0 0.0
      %3706 = vmatpush2.msra.mxu0 0.0
      %3707 = vmatprep.subr.mxu0 0.0
      %3708 = vmatpush2.msra.mxu0 0.0
      %3709 = vmatprep.subr.mxu0 0.0
      %3710 = vmatpush2.msra.mxu0 0.0
      %3711 = vmatprep.subr.mxu0 0.0
      %3712 = vmatpush2.msra.mxu0 0.0
      %3713 = vmatprep.subr.mxu0 0.0
      %3714 = vmatpush2.msra.mxu0 0.0
      %3715 = vmatprep.subr.mxu0 0.0
      %3716 = vmatpush2.msra.mxu0 0.0
      %3717 = vmatprep.subr.mxu0 0.0
      %3718 = vmatpush2.msra.mxu0 0.0
      %3719 = vmatprep.subr.mxu0 0.0
      %3720 = vmatpush2.msra.mxu0 0.0
      %3721 = vmatprep.subr.mxu0 0.0
      %3722 = vmatpush2.msra.mxu0 0.0
      %3723 = vmatprep.mubr.f32.mxu0 0.0
      %3724 = vmatmul.mubr.f32.gmra.mxu0 %v3465
      %v3725 = vpop.f32.mrf.mxu0
      %v3726 = vadd.f32 %v3657, %v3725
      %v3727 = vpop.f32.mrf.mxu0
      %3728 = vmatprep.mubr.f32.mxu0 0.0
      %3729 = vmatmul.mubr.f32.gmra.mxu0 %v3468
      %v3730 = vpop.f32.mrf.mxu0
      %v3731 = vadd.f32 %v3657, %v3730
      %v3732 = vpop.f32.mrf.mxu0
      %3733 = vmatprep.mubr.f32.mxu0 0.0
      %3734 = vmatmul.mubr.f32.gmra.mxu0 %v3471
      %v3735 = vpop.f32.mrf.mxu0
      %v3736 = vadd.f32 %v3657, %v3735
      %v3737 = vpop.f32.mrf.mxu0
      %3738 = vdwg.mxu0
      %v3740 = vsel %vm1002, %v3540, 0
      %v3743 = vsel %vm1002, %v3545, 0
      %v3746 = vsel %vm1002, %v3550, 0
      %v3749 = vsel %vm1002, %v3633, 0
      %v3752 = vsel %vm1002, %v3638, 0
      %v3755 = vsel %vm1002, %v3643, 0
      %3757 = vmatprep.subr.mxu0 0.0
      %3758 = vmatpush1.xpose.msra.mxu0 0.0
      %3759 = vmatprep.subr.mxu0 0.0
      %3760 = vmatpush1.xpose.msra.mxu0 0.0
      %3761 = vmatprep.subr.mxu0 0.0
      %3762 = vmatpush1.xpose.msra.mxu0 0.0
      %3763 = vmatprep.subr.mxu0 0.0
      %3764 = vmatpush1.xpose.msra.mxu0 0.0
      %3765 = vmatprep.subr.mxu0 0.0
      %3766 = vmatpush1.xpose.msra.mxu0 0.0
      %3767 = vmatprep.subr.mxu0 0.0
      %3768 = vmatpush1.xpose.msra.mxu0 0.0
      %3769 = vmatprep.subr.mxu0 0.0
      %3770 = vmatpush1.xpose.msra.mxu0 0.0
      %3771 = vmatprep.subr.mxu0 0.0
      %3772 = vmatpush1.xpose.msra.mxu0 0.0
      %3773 = vmatprep.subr.mxu0 0.0
      %3774 = vmatpush1.xpose.msra.mxu0 0.0
      %3775 = vmatprep.subr.mxu0 0.0
      %3776 = vmatpush1.xpose.msra.mxu0 0.0
      %3777 = vmatprep.subr.mxu0 0.0
      %3778 = vmatpush1.xpose.msra.mxu0 0.0
      %3779 = vmatprep.subr.mxu0 0.0
      %3780 = vmatpush1.xpose.msra.mxu0 0.0
      %3781 = vmatprep.subr.mxu0 0.0
      %3782 = vmatpush1.xpose.msra.mxu0 0.0
      %3783 = vmatprep.subr.mxu0 0.0
      %3784 = vmatpush1.xpose.msra.mxu0 %v3755
      %3785 = vmatprep.subr.mxu0 0.0
      %3786 = vmatpush1.xpose.msra.mxu0 %v3752
      %3787 = vmatprep.subr.mxu0 0.0
      %3788 = vmatpush1.xpose.msra.mxu0 %v3749
      %3789 = vmatprep.subr.mxu0 0.0
      %3790 = vmatpush2.xpose.msra.mxu0 0.0
      %3791 = vmatprep.subr.mxu0 0.0
      %3792 = vmatpush2.xpose.msra.mxu0 0.0
      %3793 = vmatprep.subr.mxu0 0.0
      %3794 = vmatpush2.xpose.msra.mxu0 0.0
      %3795 = vmatprep.subr.mxu0 0.0
      %3796 = vmatpush2.xpose.msra.mxu0 0.0
      %3797 = vmatprep.subr.mxu0 0.0
      %3798 = vmatpush2.xpose.msra.mxu0 0.0
      %3799 = vmatprep.subr.mxu0 0.0
      %3800 = vmatpush2.xpose.msra.mxu0 0.0
      %3801 = vmatprep.subr.mxu0 0.0
      %3802 = vmatpush2.xpose.msra.mxu0 0.0
      %3803 = vmatprep.subr.mxu0 0.0
      %3804 = vmatpush2.xpose.msra.mxu0 0.0
      %3805 = vmatprep.subr.mxu0 0.0
      %3806 = vmatpush2.xpose.msra.mxu0 0.0
      %3807 = vmatprep.subr.mxu0 0.0
      %3808 = vmatpush2.xpose.msra.mxu0 0.0
      %3809 = vmatprep.subr.mxu0 0.0
      %3810 = vmatpush2.xpose.msra.mxu0 0.0
      %3811 = vmatprep.subr.mxu0 0.0
      %3812 = vmatpush2.xpose.msra.mxu0 0.0
      %3813 = vmatprep.subr.mxu0 0.0
      %3814 = vmatpush2.xpose.msra.mxu0 0.0
      %3815 = vmatprep.subr.mxu0 0.0
      %3816 = vmatpush2.xpose.msra.mxu0 0.0
      %3817 = vmatprep.subr.mxu0 0.0
      %3818 = vmatpush2.xpose.msra.mxu0 0.0
      %3819 = vmatprep.subr.mxu0 0.0
      %3820 = vmatpush2.xpose.msra.mxu0 0.0
      %3821 = vmatprep.mubr.f32.mxu0 0.0
      %3822 = vmatmul.mubr.f32.gmra.mxu0 %v3740
      %v3823 = vpop.f32.mrf.mxu0
      %v3824 = vadd.f32 0.0, %v3823
      %v3825 = vpop.f32.mrf.mxu0
      %3826 = vmatprep.mubr.f32.mxu0 0.0
      %3827 = vmatmul.mubr.f32.gmra.mxu0 %v3743
      %v3828 = vpop.f32.mrf.mxu0
      %v3829 = vadd.f32 0.0, %v3828
      %v3830 = vpop.f32.mrf.mxu0
      %3831 = vmatprep.mubr.f32.mxu0 0.0
      %3832 = vmatmul.mubr.f32.gmra.mxu0 %v3746
      %v3833 = vpop.f32.mrf.mxu0
      %v3834 = vadd.f32 0.0, %v3833
      %v3835 = vpop.f32.mrf.mxu0
      %3836 = vdwg.mxu0
      %v3837 = vsel %vm1101, %v3824, -inf
      %3838 = vmax.xlane.f32.xlu0 %v3837
      %v3839 = vpop.xlane.xlu0 %3838
      %v3840 = vsel %vm1101, %v3829, -inf
      %3841 = vmax.xlane.f32.xlu0 %v3840
      %v3842 = vpop.xlane.xlu0 %3841
      %v3843 = vsel %vm1108, %v3834, -inf
      %3844 = vmax.xlane.f32.xlu0 %v3843
      %v3845 = vpop.xlane.xlu0 %3844
      %v3846 = vsub.f32 %v3824, %v3839
      %v3847 = vsub.f32 %v3829, %v3842
      %v3848 = vsub.f32 %v3834, %v3845
      %v3849 = vmul.f32 %v3846, 1.442695
      %v3850 = vpow.pop %v3849
      %v3851 = vmul.f32 %v3847, 1.442695
      %v3852 = vpow.pop %v3851
      %v3853 = vmul.f32 %v3848, 1.442695
      %v3854 = vpow.pop %v3853
      %v3855 = vsel %vm1101, %v3850, 0.0
      %3856 = vadd.xlane.f32.xlu0 %v3855
      %v3857 = vpop.xlane.xlu0 %3856
      %v3858 = vsel %vm1101, %v3852, 0.0
      %3859 = vadd.xlane.f32.xlu0 %v3858
      %v3860 = vpop.xlane.xlu0 %3859
      %v3861 = vsel %vm1108, %v3854, 0.0
      %3862 = vadd.xlane.f32.xlu0 %v3861
      %v3863 = vpop.xlane.xlu0 %3862
      %v3864 = vrcp.pop %v3857
      %v3865 = vrcp.pop %v3860
      %v3866 = vrcp.pop %v3863
      %v3867 = vmul.f32 %v3850, %v3864
      %v3868 = vmul.f32 %v3852, %v3865
      %v3869 = vmul.f32 %v3854, %v3866
      %v3871 = vsel %vm1101, %v3867, 0
      %v3874 = vsel %vm1101, %v3868, 0
      %v3877 = vsel %vm1101, %v3869, 0
      %v3880 = vsel %vm1145, %v3736, 0
      %3882 = vmatprep.subr.mxu0 0.0
      %3883 = vmatpush1.msra.mxu0 0.0
      %3884 = vmatprep.subr.mxu0 0.0
      %3885 = vmatpush1.msra.mxu0 0.0
      %3886 = vmatprep.subr.mxu0 0.0
      %3887 = vmatpush1.msra.mxu0 0.0
      %3888 = vmatprep.subr.mxu0 0.0
      %3889 = vmatpush1.msra.mxu0 0.0
      %3890 = vmatprep.subr.mxu0 0.0
      %3891 = vmatpush1.msra.mxu0 0.0
      %3892 = vmatprep.subr.mxu0 0.0
      %3893 = vmatpush1.msra.mxu0 0.0
      %3894 = vmatprep.subr.mxu0 0.0
      %3895 = vmatpush1.msra.mxu0 0.0
      %3896 = vmatprep.subr.mxu0 0.0
      %3897 = vmatpush1.msra.mxu0 0.0
      %3898 = vmatprep.subr.mxu0 0.0
      %3899 = vmatpush1.msra.mxu0 0.0
      %3900 = vmatprep.subr.mxu0 0.0
      %3901 = vmatpush1.msra.mxu0 0.0
      %3902 = vmatprep.subr.mxu0 0.0
      %3903 = vmatpush1.msra.mxu0 0.0
      %3904 = vmatprep.subr.mxu0 0.0
      %3905 = vmatpush1.msra.mxu0 0.0
      %3906 = vmatprep.subr.mxu0 0.0
      %3907 = vmatpush1.msra.mxu0 0.0
      %3908 = vmatprep.subr.mxu0 0.0
      %3909 = vmatpush1.msra.mxu0 %v3880
      %3910 = vmatprep.subr.mxu0 0.0
      %3911 = vmatpush1.msra.mxu0 %v3731
      %3912 = vmatprep.subr.mxu0 0.0
      %3913 = vmatpush1.msra.mxu0 %v3726
      %3914 = vmatprep.subr.mxu0 0.0
      %3915 = vmatpush2.msra.mxu0 0.0
      %3916 = vmatprep.subr.mxu0 0.0
      %3917 = vmatpush2.msra.mxu0 0.0
      %3918 = vmatprep.subr.mxu0 0.0
      %3919 = vmatpush2.msra.mxu0 0.0
      %3920 = vmatprep.subr.mxu0 0.0
      %3921 = vmatpush2.msra.mxu0 0.0
      %3922 = vmatprep.subr.mxu0 0.0
      %3923 = vmatpush2.msra.mxu0 0.0
      %3924 = vmatprep.subr.mxu0 0.0
      %3925 = vmatpush2.msra.mxu0 0.0
      %3926 = vmatprep.subr.mxu0 0.0
      %3927 = vmatpush2.msra.mxu0 0.0
      %3928 = vmatprep.subr.mxu0 0.0
      %3929 = vmatpush2.msra.mxu0 0.0
      %3930 = vmatprep.subr.mxu0 0.0
      %3931 = vmatpush2.msra.mxu0 0.0
      %3932 = vmatprep.subr.mxu0 0.0
      %3933 = vmatpush2.msra.mxu0 0.0
      %3934 = vmatprep.subr.mxu0 0.0
      %3935 = vmatpush2.msra.mxu0 0.0
      %3936 = vmatprep.subr.mxu0 0.0
      %3937 = vmatpush2.msra.mxu0 0.0
      %3938 = vmatprep.subr.mxu0 0.0
      %3939 = vmatpush2.msra.mxu0 0.0
      %3940 = vmatprep.subr.mxu0 0.0
      %3941 = vmatpush2.msra.mxu0 0.0
      %3942 = vmatprep.subr.mxu0 0.0
      %3943 = vmatpush2.msra.mxu0 0.0
      %3944 = vmatprep.subr.mxu0 0.0
      %3945 = vmatpush2.msra.mxu0 0.0
      %3946 = vmatprep.mubr.f32.mxu0 0.0
      %3947 = vmatmul.mubr.f32.gmra.mxu0 %v3871
      %v3948 = vpop.f32.mrf.mxu0
      %v3949 = vadd.f32 0.0, %v3948
      %v3950 = vpop.f32.mrf.mxu0
      %3951 = vmatprep.mubr.f32.mxu0 0.0
      %3952 = vmatmul.mubr.f32.gmra.mxu0 %v3874
      %v3953 = vpop.f32.mrf.mxu0
      %v3954 = vadd.f32 0.0, %v3953
      %v3955 = vpop.f32.mrf.mxu0
      %3956 = vmatprep.mubr.f32.mxu0 0.0
      %3957 = vmatmul.mubr.f32.gmra.mxu0 %v3877
      %v3958 = vpop.f32.mrf.mxu0
      %v3959 = vadd.f32 0.0, %v3958
      %v3960 = vpop.f32.mrf.mxu0
      %3961 = vdwg.mxu0
      %s3962 = scalar_lea.vmem %s9, 32
      %v3963 = vld [vmem:[%s3962] sm:$0xff]
      %s3964 = scalar_lea.vmem %s3, 160
      %v3965 = vld [vmem:[%s3964] sm:$0xff]
      %v3966 = vld [vmem:[%s3964 + $0x8] sm:$0xff]
      %v3967 = vld [vmem:[%s3964 + $0x10] sm:$0xff]
      %v3968 = vld [vmem:[%s3964 + $0x18] sm:$0xff]
      %s3969 = scalar_lea.vmem %s4, 5
      %v3970 = vld [vmem:[%s3969] sm:$0x1]
      %v3972 = vlaneseq
      %v3973 = vshrl.u32 %v3972, 7
      %v3974 = vsub.s32 0, %v3973
      %v3975 = vrot.slane %v3970, %v3974
      %3977 = vmatprep.subr.mxu0 0.0
      %3978 = vmatpush1.msra.mxu0 0.0
      %3979 = vmatprep.subr.mxu0 0.0
      %3980 = vmatpush1.msra.mxu0 0.0
      %3981 = vmatprep.subr.mxu0 0.0
      %3982 = vmatpush1.msra.mxu0 0.0
      %3983 = vmatprep.subr.mxu0 0.0
      %3984 = vmatpush1.msra.mxu0 0.0
      %3985 = vmatprep.subr.mxu0 0.0
      %3986 = vmatpush1.msra.mxu0 0.0
      %3987 = vmatprep.subr.mxu0 0.0
      %3988 = vmatpush1.msra.mxu0 0.0
      %3989 = vmatprep.subr.mxu0 0.0
      %3990 = vmatpush1.msra.mxu0 0.0
      %3991 = vmatprep.subr.mxu0 0.0
      %3992 = vmatpush1.msra.mxu0 0.0
      %3993 = vmatprep.subr.mxu0 0.0
      %3994 = vmatpush1.msra.mxu0 0.0
      %3995 = vmatprep.subr.mxu0 0.0
      %3996 = vmatpush1.msra.mxu0 0.0
      %3997 = vmatprep.subr.mxu0 0.0
      %3998 = vmatpush1.msra.mxu0 0.0
      %3999 = vmatprep.subr.mxu0 0.0
      %4000 = vmatpush1.msra.mxu0 0.0
      %4001 = vmatprep.subr.mxu0 0.0
      %4002 = vmatpush1.msra.mxu0 %v3968
      %4003 = vmatprep.subr.mxu0 0.0
      %4004 = vmatpush1.msra.mxu0 %v3967
      %4005 = vmatprep.subr.mxu0 0.0
      %4006 = vmatpush1.msra.mxu0 %v3966
      %4007 = vmatprep.subr.mxu0 0.0
      %4008 = vmatpush1.msra.mxu0 %v3965
      %4009 = vmatprep.subr.mxu0 0.0
      %4010 = vmatpush2.msra.mxu0 0.0
      %4011 = vmatprep.subr.mxu0 0.0
      %4012 = vmatpush2.msra.mxu0 0.0
      %4013 = vmatprep.subr.mxu0 0.0
      %4014 = vmatpush2.msra.mxu0 0.0
      %4015 = vmatprep.subr.mxu0 0.0
      %4016 = vmatpush2.msra.mxu0 0.0
      %4017 = vmatprep.subr.mxu0 0.0
      %4018 = vmatpush2.msra.mxu0 0.0
      %4019 = vmatprep.subr.mxu0 0.0
      %4020 = vmatpush2.msra.mxu0 0.0
      %4021 = vmatprep.subr.mxu0 0.0
      %4022 = vmatpush2.msra.mxu0 0.0
      %4023 = vmatprep.subr.mxu0 0.0
      %4024 = vmatpush2.msra.mxu0 0.0
      %4025 = vmatprep.subr.mxu0 0.0
      %4026 = vmatpush2.msra.mxu0 0.0
      %4027 = vmatprep.subr.mxu0 0.0
      %4028 = vmatpush2.msra.mxu0 0.0
      %4029 = vmatprep.subr.mxu0 0.0
      %4030 = vmatpush2.msra.mxu0 0.0
      %4031 = vmatprep.subr.mxu0 0.0
      %4032 = vmatpush2.msra.mxu0 0.0
      %4033 = vmatprep.subr.mxu0 0.0
      %4034 = vmatpush2.msra.mxu0 0.0
      %4035 = vmatprep.subr.mxu0 0.0
      %4036 = vmatpush2.msra.mxu0 0.0
      %4037 = vmatprep.subr.mxu0 0.0
      %4038 = vmatpush2.msra.mxu0 0.0
      %4039 = vmatprep.subr.mxu0 0.0
      %4040 = vmatpush2.msra.mxu0 0.0
      %4041 = vmatprep.mubr.f32.mxu0 0.0
      %4042 = vmatmul.mubr.f32.gmra.mxu0 %v3465
      %v4043 = vpop.f32.mrf.mxu0
      %v4044 = vadd.f32 %v3975, %v4043
      %v4045 = vpop.f32.mrf.mxu0
      %4046 = vmatprep.mubr.f32.mxu0 0.0
      %4047 = vmatmul.mubr.f32.gmra.mxu0 %v3468
      %v4048 = vpop.f32.mrf.mxu0
      %v4049 = vadd.f32 %v3975, %v4048
      %v4050 = vpop.f32.mrf.mxu0
      %4051 = vmatprep.mubr.f32.mxu0 0.0
      %4052 = vmatmul.mubr.f32.gmra.mxu0 %v3471
      %v4053 = vpop.f32.mrf.mxu0
      %v4054 = vadd.f32 %v3975, %v4053
      %v4055 = vpop.f32.mrf.mxu0
      %4056 = vdwg.mxu0
      %s4057 = scalar_lea.vmem %s5, 160
      %v4058 = vld [vmem:[%s4057] sm:$0xff]
      %v4059 = vld [vmem:[%s4057 + $0x8] sm:$0xff]
      %v4060 = vld [vmem:[%s4057 + $0x10] sm:$0xff]
      %v4061 = vld [vmem:[%s4057 + $0x18] sm:$0xff]
      %s4062 = scalar_lea.vmem %s6, 5
      %v4063 = vld [vmem:[%s4062] sm:$0x1]
      %v4065 = vlaneseq
      %v4066 = vshrl.u32 %v4065, 7
      %v4067 = vsub.s32 0, %v4066
      %v4068 = vrot.slane %v4063, %v4067
      %4070 = vmatprep.subr.mxu0 0.0
      %4071 = vmatpush1.msra.mxu0 0.0
      %4072 = vmatprep.subr.mxu0 0.0
      %4073 = vmatpush1.msra.mxu0 0.0
      %4074 = vmatprep.subr.mxu0 0.0
      %4075 = vmatpush1.msra.mxu0 0.0
      %4076 = vmatprep.subr.mxu0 0.0
      %4077 = vmatpush1.msra.mxu0 0.0
      %4078 = vmatprep.subr.mxu0 0.0
      %4079 = vmatpush1.msra.mxu0 0.0
      %4080 = vmatprep.subr.mxu0 0.0
      %4081 = vmatpush1.msra.mxu0 0.0
      %4082 = vmatprep.subr.mxu0 0.0
      %4083 = vmatpush1.msra.mxu0 0.0
      %4084 = vmatprep.subr.mxu0 0.0
      %4085 = vmatpush1.msra.mxu0 0.0
      %4086 = vmatprep.subr.mxu0 0.0
      %4087 = vmatpush1.msra.mxu0 0.0
      %4088 = vmatprep.subr.mxu0 0.0
      %4089 = vmatpush1.msra.mxu0 0.0
      %4090 = vmatprep.subr.mxu0 0.0
      %4091 = vmatpush1.msra.mxu0 0.0
      %4092 = vmatprep.subr.mxu0 0.0
      %4093 = vmatpush1.msra.mxu0 0.0
      %4094 = vmatprep.subr.mxu0 0.0
      %4095 = vmatpush1.msra.mxu0 %v4061
      %4096 = vmatprep.subr.mxu0 0.0
      %4097 = vmatpush1.msra.mxu0 %v4060
      %4098 = vmatprep.subr.mxu0 0.0
      %4099 = vmatpush1.msra.mxu0 %v4059
      %4100 = vmatprep.subr.mxu0 0.0
      %4101 = vmatpush1.msra.mxu0 %v4058
      %4102 = vmatprep.subr.mxu0 0.0
      %4103 = vmatpush2.msra.mxu0 0.0
      %4104 = vmatprep.subr.mxu0 0.0
      %4105 = vmatpush2.msra.mxu0 0.0
      %4106 = vmatprep.subr.mxu0 0.0
      %4107 = vmatpush2.msra.mxu0 0.0
      %4108 = vmatprep.subr.mxu0 0.0
      %4109 = vmatpush2.msra.mxu0 0.0
      %4110 = vmatprep.subr.mxu0 0.0
      %4111 = vmatpush2.msra.mxu0 0.0
      %4112 = vmatprep.subr.mxu0 0.0
      %4113 = vmatpush2.msra.mxu0 0.0
      %4114 = vmatprep.subr.mxu0 0.0
      %4115 = vmatpush2.msra.mxu0 0.0
      %4116 = vmatprep.subr.mxu0 0.0
      %4117 = vmatpush2.msra.mxu0 0.0
      %4118 = vmatprep.subr.mxu0 0.0
      %4119 = vmatpush2.msra.mxu0 0.0
      %4120 = vmatprep.subr.mxu0 0.0
      %4121 = vmatpush2.msra.mxu0 0.0
      %4122 = vmatprep.subr.mxu0 0.0
      %4123 = vmatpush2.msra.mxu0 0.0
      %4124 = vmatprep.subr.mxu0 0.0
      %4125 = vmatpush2.msra.mxu0 0.0
      %4126 = vmatprep.subr.mxu0 0.0
      %4127 = vmatpush2.msra.mxu0 0.0
      %4128 = vmatprep.subr.mxu0 0.0
      %4129 = vmatpush2.msra.mxu0 0.0
      %4130 = vmatprep.subr.mxu0 0.0
      %4131 = vmatpush2.msra.mxu0 0.0
      %4132 = vmatprep.subr.mxu0 0.0
      %4133 = vmatpush2.msra.mxu0 0.0
      %4134 = vmatprep.mubr.f32.mxu0 0.0
      %4135 = vmatmul.mubr.f32.gmra.mxu0 %v3465
      %v4136 = vpop.f32.mrf.mxu0
      %v4137 = vadd.f32 %v4068, %v4136
      %v4138 = vpop.f32.mrf.mxu0
      %4139 = vmatprep.mubr.f32.mxu0 0.0
      %4140 = vmatmul.mubr.f32.gmra.mxu0 %v3468
      %v4141 = vpop.f32.mrf.mxu0
      %v4142 = vadd.f32 %v4068, %v4141
      %v4143 = vpop.f32.mrf.mxu0
      %4144 = vmatprep.mubr.f32.mxu0 0.0
      %4145 = vmatmul.mubr.f32.gmra.mxu0 %v3471
      %v4146 = vpop.f32.mrf.mxu0
      %v4147 = vadd.f32 %v4068, %v4146
      %v4148 = vpop.f32.mrf.mxu0
      %4149 = vdwg.mxu0
      %s4150 = scalar_lea.vmem %s7, 160
      %v4151 = vld [vmem:[%s4150] sm:$0xff]
      %v4152 = vld [vmem:[%s4150 + $0x8] sm:$0xff]
      %v4153 = vld [vmem:[%s4150 + $0x10] sm:$0xff]
      %v4154 = vld [vmem:[%s4150 + $0x18] sm:$0xff]
      %s4155 = scalar_lea.vmem %s8, 5
      %v4156 = vld [vmem:[%s4155] sm:$0x1]
      %v4158 = vlaneseq
      %v4159 = vshrl.u32 %v4158, 7
      %v4160 = vsub.s32 0, %v4159
      %v4161 = vrot.slane %v4156, %v4160
      %4163 = vmatprep.subr.mxu0 0.0
      %4164 = vmatpush1.msra.mxu0 0.0
      %4165 = vmatprep.subr.mxu0 0.0
      %4166 = vmatpush1.msra.mxu0 0.0
      %4167 = vmatprep.subr.mxu0 0.0
      %4168 = vmatpush1.msra.mxu0 0.0
      %4169 = vmatprep.subr.mxu0 0.0
      %4170 = vmatpush1.msra.mxu0 0.0
      %4171 = vmatprep.subr.mxu0 0.0
      %4172 = vmatpush1.msra.mxu0 0.0
      %4173 = vmatprep.subr.mxu0 0.0
      %4174 = vmatpush1.msra.mxu0 0.0
      %4175 = vmatprep.subr.mxu0 0.0
      %4176 = vmatpush1.msra.mxu0 0.0
      %4177 = vmatprep.subr.mxu0 0.0
      %4178 = vmatpush1.msra.mxu0 0.0
      %4179 = vmatprep.subr.mxu0 0.0
      %4180 = vmatpush1.msra.mxu0 0.0
      %4181 = vmatprep.subr.mxu0 0.0
      %4182 = vmatpush1.msra.mxu0 0.0
      %4183 = vmatprep.subr.mxu0 0.0
      %4184 = vmatpush1.msra.mxu0 0.0
      %4185 = vmatprep.subr.mxu0 0.0
      %4186 = vmatpush1.msra.mxu0 0.0
      %4187 = vmatprep.subr.mxu0 0.0
      %4188 = vmatpush1.msra.mxu0 %v4154
      %4189 = vmatprep.subr.mxu0 0.0
      %4190 = vmatpush1.msra.mxu0 %v4153
      %4191 = vmatprep.subr.mxu0 0.0
      %4192 = vmatpush1.msra.mxu0 %v4152
      %4193 = vmatprep.subr.mxu0 0.0
      %4194 = vmatpush1.msra.mxu0 %v4151
      %4195 = vmatprep.subr.mxu0 0.0
      %4196 = vmatpush2.msra.mxu0 0.0
      %4197 = vmatprep.subr.mxu0 0.0
      %4198 = vmatpush2.msra.mxu0 0.0
      %4199 = vmatprep.subr.mxu0 0.0
      %4200 = vmatpush2.msra.mxu0 0.0
      %4201 = vmatprep.subr.mxu0 0.0
      %4202 = vmatpush2.msra.mxu0 0.0
      %4203 = vmatprep.subr.mxu0 0.0
      %4204 = vmatpush2.msra.mxu0 0.0
      %4205 = vmatprep.subr.mxu0 0.0
      %4206 = vmatpush2.msra.mxu0 0.0
      %4207 = vmatprep.subr.mxu0 0.0
      %4208 = vmatpush2.msra.mxu0 0.0
      %4209 = vmatprep.subr.mxu0 0.0
      %4210 = vmatpush2.msra.mxu0 0.0
      %4211 = vmatprep.subr.mxu0 0.0
      %4212 = vmatpush2.msra.mxu0 0.0
      %4213 = vmatprep.subr.mxu0 0.0
      %4214 = vmatpush2.msra.mxu0 0.0
      %4215 = vmatprep.subr.mxu0 0.0
      %4216 = vmatpush2.msra.mxu0 0.0
      %4217 = vmatprep.subr.mxu0 0.0
      %4218 = vmatpush2.msra.mxu0 0.0
      %4219 = vmatprep.subr.mxu0 0.0
      %4220 = vmatpush2.msra.mxu0 0.0
      %4221 = vmatprep.subr.mxu0 0.0
      %4222 = vmatpush2.msra.mxu0 0.0
      %4223 = vmatprep.subr.mxu0 0.0
      %4224 = vmatpush2.msra.mxu0 0.0
      %4225 = vmatprep.subr.mxu0 0.0
      %4226 = vmatpush2.msra.mxu0 0.0
      %4227 = vmatprep.mubr.f32.mxu0 0.0
      %4228 = vmatmul.mubr.f32.gmra.mxu0 %v3465
      %v4229 = vpop.f32.mrf.mxu0
      %v4230 = vadd.f32 %v4161, %v4229
      %v4231 = vpop.f32.mrf.mxu0
      %4232 = vmatprep.mubr.f32.mxu0 0.0
      %4233 = vmatmul.mubr.f32.gmra.mxu0 %v3468
      %v4234 = vpop.f32.mrf.mxu0
      %v4235 = vadd.f32 %v4161, %v4234
      %v4236 = vpop.f32.mrf.mxu0
      %4237 = vmatprep.mubr.f32.mxu0 0.0
      %4238 = vmatmul.mubr.f32.gmra.mxu0 %v3471
      %v4239 = vpop.f32.mrf.mxu0
      %v4240 = vadd.f32 %v4161, %v4239
      %v4241 = vpop.f32.mrf.mxu0
      %4242 = vdwg.mxu0
      %v4244 = vsel %vm1002, %v4044, 0
      %v4247 = vsel %vm1002, %v4049, 0
      %v4250 = vsel %vm1002, %v4054, 0
      %v4253 = vsel %vm1002, %v4137, 0
      %v4256 = vsel %vm1002, %v4142, 0
      %v4259 = vsel %vm1002, %v4147, 0
      %4261 = vmatprep.subr.mxu0 0.0
      %4262 = vmatpush1.xpose.msra.mxu0 0.0
      %4263 = vmatprep.subr.mxu0 0.0
      %4264 = vmatpush1.xpose.msra.mxu0 0.0
      %4265 = vmatprep.subr.mxu0 0.0
      %4266 = vmatpush1.xpose.msra.mxu0 0.0
      %4267 = vmatprep.subr.mxu0 0.0
      %4268 = vmatpush1.xpose.msra.mxu0 0.0
      %4269 = vmatprep.subr.mxu0 0.0
      %4270 = vmatpush1.xpose.msra.mxu0 0.0
      %4271 = vmatprep.subr.mxu0 0.0
      %4272 = vmatpush1.xpose.msra.mxu0 0.0
      %4273 = vmatprep.subr.mxu0 0.0
      %4274 = vmatpush1.xpose.msra.mxu0 0.0
      %4275 = vmatprep.subr.mxu0 0.0
      %4276 = vmatpush1.xpose.msra.mxu0 0.0
      %4277 = vmatprep.subr.mxu0 0.0
      %4278 = vmatpush1.xpose.msra.mxu0 0.0
      %4279 = vmatprep.subr.mxu0 0.0
      %4280 = vmatpush1.xpose.msra.mxu0 0.0
      %4281 = vmatprep.subr.mxu0 0.0
      %4282 = vmatpush1.xpose.msra.mxu0 0.0
      %4283 = vmatprep.subr.mxu0 0.0
      %4284 = vmatpush1.xpose.msra.mxu0 0.0
      %4285 = vmatprep.subr.mxu0 0.0
      %4286 = vmatpush1.xpose.msra.mxu0 0.0
      %4287 = vmatprep.subr.mxu0 0.0
      %4288 = vmatpush1.xpose.msra.mxu0 %v4259
      %4289 = vmatprep.subr.mxu0 0.0
      %4290 = vmatpush1.xpose.msra.mxu0 %v4256
      %4291 = vmatprep.subr.mxu0 0.0
      %4292 = vmatpush1.xpose.msra.mxu0 %v4253
      %4293 = vmatprep.subr.mxu0 0.0
      %4294 = vmatpush2.xpose.msra.mxu0 0.0
      %4295 = vmatprep.subr.mxu0 0.0
      %4296 = vmatpush2.xpose.msra.mxu0 0.0
      %4297 = vmatprep.subr.mxu0 0.0
      %4298 = vmatpush2.xpose.msra.mxu0 0.0
      %4299 = vmatprep.subr.mxu0 0.0
      %4300 = vmatpush2.xpose.msra.mxu0 0.0
      %4301 = vmatprep.subr.mxu0 0.0
      %4302 = vmatpush2.xpose.msra.mxu0 0.0
      %4303 = vmatprep.subr.mxu0 0.0
      %4304 = vmatpush2.xpose.msra.mxu0 0.0
      %4305 = vmatprep.subr.mxu0 0.0
      %4306 = vmatpush2.xpose.msra.mxu0 0.0
      %4307 = vmatprep.subr.mxu0 0.0
      %4308 = vmatpush2.xpose.msra.mxu0 0.0
      %4309 = vmatprep.subr.mxu0 0.0
      %4310 = vmatpush2.xpose.msra.mxu0 0.0
      %4311 = vmatprep.subr.mxu0 0.0
      %4312 = vmatpush2.xpose.msra.mxu0 0.0
      %4313 = vmatprep.subr.mxu0 0.0
      %4314 = vmatpush2.xpose.msra.mxu0 0.0
      %4315 = vmatprep.subr.mxu0 0.0
      %4316 = vmatpush2.xpose.msra.mxu0 0.0
      %4317 = vmatprep.subr.mxu0 0.0
      %4318 = vmatpush2.xpose.msra.mxu0 0.0
      %4319 = vmatprep.subr.mxu0 0.0
      %4320 = vmatpush2.xpose.msra.mxu0 0.0
      %4321 = vmatprep.subr.mxu0 0.0
      %4322 = vmatpush2.xpose.msra.mxu0 0.0
      %4323 = vmatprep.subr.mxu0 0.0
      %4324 = vmatpush2.xpose.msra.mxu0 0.0
      %4325 = vmatprep.mubr.f32.mxu0 0.0
      %4326 = vmatmul.mubr.f32.gmra.mxu0 %v4244
      %v4327 = vpop.f32.mrf.mxu0
      %v4328 = vadd.f32 0.0, %v4327
      %v4329 = vpop.f32.mrf.mxu0
      %4330 = vmatprep.mubr.f32.mxu0 0.0
      %4331 = vmatmul.mubr.f32.gmra.mxu0 %v4247
      %v4332 = vpop.f32.mrf.mxu0
      %v4333 = vadd.f32 0.0, %v4332
      %v4334 = vpop.f32.mrf.mxu0
      %4335 = vmatprep.mubr.f32.mxu0 0.0
      %4336 = vmatmul.mubr.f32.gmra.mxu0 %v4250
      %v4337 = vpop.f32.mrf.mxu0
      %v4338 = vadd.f32 0.0, %v4337
      %v4339 = vpop.f32.mrf.mxu0
      %4340 = vdwg.mxu0
      %v4341 = vsel %vm1101, %v4328, -inf
      %4342 = vmax.xlane.f32.xlu0 %v4341
      %v4343 = vpop.xlane.xlu0 %4342
      %v4344 = vsel %vm1101, %v4333, -inf
      %4345 = vmax.xlane.f32.xlu0 %v4344
      %v4346 = vpop.xlane.xlu0 %4345
      %v4347 = vsel %vm1108, %v4338, -inf
      %4348 = vmax.xlane.f32.xlu0 %v4347
      %v4349 = vpop.xlane.xlu0 %4348
      %v4350 = vsub.f32 %v4328, %v4343
      %v4351 = vsub.f32 %v4333, %v4346
      %v4352 = vsub.f32 %v4338, %v4349
      %v4353 = vmul.f32 %v4350, 1.442695
      %v4354 = vpow.pop %v4353
      %v4355 = vmul.f32 %v4351, 1.442695
      %v4356 = vpow.pop %v4355
      %v4357 = vmul.f32 %v4352, 1.442695
      %v4358 = vpow.pop %v4357
      %v4359 = vsel %vm1101, %v4354, 0.0
      %4360 = vadd.xlane.f32.xlu0 %v4359
      %v4361 = vpop.xlane.xlu0 %4360
      %v4362 = vsel %vm1101, %v4356, 0.0
      %4363 = vadd.xlane.f32.xlu0 %v4362
      %v4364 = vpop.xlane.xlu0 %4363
      %v4365 = vsel %vm1108, %v4358, 0.0
      %4366 = vadd.xlane.f32.xlu0 %v4365
      %v4367 = vpop.xlane.xlu0 %4366
      %v4368 = vrcp.pop %v4361
      %v4369 = vrcp.pop %v4364
      %v4370 = vrcp.pop %v4367
      %v4371 = vmul.f32 %v4354, %v4368
      %v4372 = vmul.f32 %v4356, %v4369
      %v4373 = vmul.f32 %v4358, %v4370
      %v4375 = vsel %vm1101, %v4371, 0
      %v4378 = vsel %vm1101, %v4372, 0
      %v4381 = vsel %vm1101, %v4373, 0
      %v4384 = vsel %vm1145, %v4240, 0
      %4386 = vmatprep.subr.mxu0 0.0
      %4387 = vmatpush1.msra.mxu0 0.0
      %4388 = vmatprep.subr.mxu0 0.0
      %4389 = vmatpush1.msra.mxu0 0.0
      %4390 = vmatprep.subr.mxu0 0.0
      %4391 = vmatpush1.msra.mxu0 0.0
      %4392 = vmatprep.subr.mxu0 0.0
      %4393 = vmatpush1.msra.mxu0 0.0
      %4394 = vmatprep.subr.mxu0 0.0
      %4395 = vmatpush1.msra.mxu0 0.0
      %4396 = vmatprep.subr.mxu0 0.0
      %4397 = vmatpush1.msra.mxu0 0.0
      %4398 = vmatprep.subr.mxu0 0.0
      %4399 = vmatpush1.msra.mxu0 0.0
      %4400 = vmatprep.subr.mxu0 0.0
      %4401 = vmatpush1.msra.mxu0 0.0
      %4402 = vmatprep.subr.mxu0 0.0
      %4403 = vmatpush1.msra.mxu0 0.0
      %4404 = vmatprep.subr.mxu0 0.0
      %4405 = vmatpush1.msra.mxu0 0.0
      %4406 = vmatprep.subr.mxu0 0.0
      %4407 = vmatpush1.msra.mxu0 0.0
      %4408 = vmatprep.subr.mxu0 0.0
      %4409 = vmatpush1.msra.mxu0 0.0
      %4410 = vmatprep.subr.mxu0 0.0
      %4411 = vmatpush1.msra.mxu0 0.0
      %4412 = vmatprep.subr.mxu0 0.0
      %4413 = vmatpush1.msra.mxu0 %v4384
      %4414 = vmatprep.subr.mxu0 0.0
      %4415 = vmatpush1.msra.mxu0 %v4235
      %4416 = vmatprep.subr.mxu0 0.0
      %4417 = vmatpush1.msra.mxu0 %v4230
      %4418 = vmatprep.subr.mxu0 0.0
      %4419 = vmatpush2.msra.mxu0 0.0
      %4420 = vmatprep.subr.mxu0 0.0
      %4421 = vmatpush2.msra.mxu0 0.0
      %4422 = vmatprep.subr.mxu0 0.0
      %4423 = vmatpush2.msra.mxu0 0.0
      %4424 = vmatprep.subr.mxu0 0.0
      %4425 = vmatpush2.msra.mxu0 0.0
      %4426 = vmatprep.subr.mxu0 0.0
      %4427 = vmatpush2.msra.mxu0 0.0
      %4428 = vmatprep.subr.mxu0 0.0
      %4429 = vmatpush2.msra.mxu0 0.0
      %4430 = vmatprep.subr.mxu0 0.0
      %4431 = vmatpush2.msra.mxu0 0.0
      %4432 = vmatprep.subr.mxu0 0.0
      %4433 = vmatpush2.msra.mxu0 0.0
      %4434 = vmatprep.subr.mxu0 0.0
      %4435 = vmatpush2.msra.mxu0 0.0
      %4436 = vmatprep.subr.mxu0 0.0
      %4437 = vmatpush2.msra.mxu0 0.0
      %4438 = vmatprep.subr.mxu0 0.0
      %4439 = vmatpush2.msra.mxu0 0.0
      %4440 = vmatprep.subr.mxu0 0.0
      %4441 = vmatpush2.msra.mxu0 0.0
      %4442 = vmatprep.subr.mxu0 0.0
      %4443 = vmatpush2.msra.mxu0 0.0
      %4444 = vmatprep.subr.mxu0 0.0
      %4445 = vmatpush2.msra.mxu0 0.0
      %4446 = vmatprep.subr.mxu0 0.0
      %4447 = vmatpush2.msra.mxu0 0.0
      %4448 = vmatprep.subr.mxu0 0.0
      %4449 = vmatpush2.msra.mxu0 0.0
      %4450 = vmatprep.mubr.f32.mxu0 0.0
      %4451 = vmatmul.mubr.f32.gmra.mxu0 %v4375
      %v4452 = vpop.f32.mrf.mxu0
      %v4453 = vadd.f32 0.0, %v4452
      %v4454 = vpop.f32.mrf.mxu0
      %4455 = vmatprep.mubr.f32.mxu0 0.0
      %4456 = vmatmul.mubr.f32.gmra.mxu0 %v4378
      %v4457 = vpop.f32.mrf.mxu0
      %v4458 = vadd.f32 0.0, %v4457
      %v4459 = vpop.f32.mrf.mxu0
      %4460 = vmatprep.mubr.f32.mxu0 0.0
      %4461 = vmatmul.mubr.f32.gmra.mxu0 %v4381
      %v4462 = vpop.f32.mrf.mxu0
      %v4463 = vadd.f32 0.0, %v4462
      %v4464 = vpop.f32.mrf.mxu0
      %4465 = vdwg.mxu0
      %s4466 = scalar_lea.vmem %s9, 40
      %v4467 = vld [vmem:[%s4466] sm:$0xff]
      %v4469 = vsel %vm1002, %v4453, 0
      %v4472 = vsel %vm1002, %v4458, 0
      %v4475 = vsel %vm1002, %v4463, 0
      %4477 = vmatprep.subr.mxu0 0.0
      %4478 = vmatpush1.msra.mxu0 0.0
      %4479 = vmatprep.subr.mxu0 0.0
      %4480 = vmatpush1.msra.mxu0 0.0
      %4481 = vmatprep.subr.mxu0 0.0
      %4482 = vmatpush1.msra.mxu0 0.0
      %4483 = vmatprep.subr.mxu0 0.0
      %4484 = vmatpush1.msra.mxu0 0.0
      %4485 = vmatprep.subr.mxu0 0.0
      %4486 = vmatpush1.msra.mxu0 0.0
      %4487 = vmatprep.subr.mxu0 0.0
      %4488 = vmatpush1.msra.mxu0 0.0
      %4489 = vmatprep.subr.mxu0 0.0
      %4490 = vmatpush1.msra.mxu0 0.0
      %4491 = vmatprep.subr.mxu0 0.0
      %4492 = vmatpush1.msra.mxu0 0.0
      %4493 = vmatprep.subr.mxu0 0.0
      %4494 = vmatpush1.msra.mxu0 0.0
      %4495 = vmatprep.subr.mxu0 0.0
      %4496 = vmatpush1.msra.mxu0 0.0
      %4497 = vmatprep.subr.mxu0 0.0
      %4498 = vmatpush1.msra.mxu0 0.0
      %4499 = vmatprep.subr.mxu0 0.0
      %4500 = vmatpush1.msra.mxu0 0.0
      %4501 = vmatprep.subr.mxu0 0.0
      %4502 = vmatpush1.msra.mxu0 0.0
      %4503 = vmatprep.subr.mxu0 0.0
      %4504 = vmatpush1.msra.mxu0 0.0
      %4505 = vmatprep.subr.mxu0 0.0
      %4506 = vmatpush1.msra.mxu0 0.0
      %4507 = vmatprep.subr.mxu0 0.0
      %4508 = vmatpush1.msra.mxu0 %v4467
      %4509 = vmatprep.subr.mxu0 0.0
      %4510 = vmatpush2.msra.mxu0 0.0
      %4511 = vmatprep.subr.mxu0 0.0
      %4512 = vmatpush2.msra.mxu0 0.0
      %4513 = vmatprep.subr.mxu0 0.0
      %4514 = vmatpush2.msra.mxu0 0.0
      %4515 = vmatprep.subr.mxu0 0.0
      %4516 = vmatpush2.msra.mxu0 0.0
      %4517 = vmatprep.subr.mxu0 0.0
      %4518 = vmatpush2.msra.mxu0 0.0
      %4519 = vmatprep.subr.mxu0 0.0
      %4520 = vmatpush2.msra.mxu0 0.0
      %4521 = vmatprep.subr.mxu0 0.0
      %4522 = vmatpush2.msra.mxu0 0.0
      %4523 = vmatprep.subr.mxu0 0.0
      %4524 = vmatpush2.msra.mxu0 0.0
      %4525 = vmatprep.subr.mxu0 0.0
      %4526 = vmatpush2.msra.mxu0 0.0
      %4527 = vmatprep.subr.mxu0 0.0
      %4528 = vmatpush2.msra.mxu0 0.0
      %4529 = vmatprep.subr.mxu0 0.0
      %4530 = vmatpush2.msra.mxu0 0.0
      %4531 = vmatprep.subr.mxu0 0.0
      %4532 = vmatpush2.msra.mxu0 0.0
      %4533 = vmatprep.subr.mxu0 0.0
      %4534 = vmatpush2.msra.mxu0 0.0
      %4535 = vmatprep.subr.mxu0 0.0
      %4536 = vmatpush2.msra.mxu0 0.0
      %4537 = vmatprep.subr.mxu0 0.0
      %4538 = vmatpush2.msra.mxu0 0.0
      %4539 = vmatprep.subr.mxu0 0.0
      %4540 = vmatpush2.msra.mxu0 0.0
      %4541 = vmatprep.mubr.f32.mxu0 0.0
      %4542 = vmatmul.mubr.f32.gmra.mxu0 %v4469
      %v4543 = vpop.f32.mrf.mxu0
      %v4544 = vadd.f32 0.0, %v4543
      %v4545 = vpop.f32.mrf.mxu0
      %4546 = vmatprep.mubr.f32.mxu0 0.0
      %4547 = vmatmul.mubr.f32.gmra.mxu0 %v4472
      %v4548 = vpop.f32.mrf.mxu0
      %v4549 = vadd.f32 0.0, %v4548
      %v4550 = vpop.f32.mrf.mxu0
      %4551 = vmatprep.mubr.f32.mxu0 0.0
      %4552 = vmatmul.mubr.f32.gmra.mxu0 %v4475
      %v4553 = vpop.f32.mrf.mxu0
      %v4554 = vadd.f32 0.0, %v4553
      %v4555 = vpop.f32.mrf.mxu0
      %4556 = vdwg.mxu0
      %v4558 = vsel %vm1002, %v3949, 0
      %v4561 = vsel %vm1002, %v3954, 0
      %v4564 = vsel %vm1002, %v3959, 0
      %4566 = vmatprep.subr.mxu0 0.0
      %4567 = vmatpush1.msra.mxu0 0.0
      %4568 = vmatprep.subr.mxu0 0.0
      %4569 = vmatpush1.msra.mxu0 0.0
      %4570 = vmatprep.subr.mxu0 0.0
      %4571 = vmatpush1.msra.mxu0 0.0
      %4572 = vmatprep.subr.mxu0 0.0
      %4573 = vmatpush1.msra.mxu0 0.0
      %4574 = vmatprep.subr.mxu0 0.0
      %4575 = vmatpush1.msra.mxu0 0.0
      %4576 = vmatprep.subr.mxu0 0.0
      %4577 = vmatpush1.msra.mxu0 0.0
      %4578 = vmatprep.subr.mxu0 0.0
      %4579 = vmatpush1.msra.mxu0 0.0
      %4580 = vmatprep.subr.mxu0 0.0
      %4581 = vmatpush1.msra.mxu0 0.0
      %4582 = vmatprep.subr.mxu0 0.0
      %4583 = vmatpush1.msra.mxu0 0.0
      %4584 = vmatprep.subr.mxu0 0.0
      %4585 = vmatpush1.msra.mxu0 0.0
      %4586 = vmatprep.subr.mxu0 0.0
      %4587 = vmatpush1.msra.mxu0 0.0
      %4588 = vmatprep.subr.mxu0 0.0
      %4589 = vmatpush1.msra.mxu0 0.0
      %4590 = vmatprep.subr.mxu0 0.0
      %4591 = vmatpush1.msra.mxu0 0.0
      %4592 = vmatprep.subr.mxu0 0.0
      %4593 = vmatpush1.msra.mxu0 0.0
      %4594 = vmatprep.subr.mxu0 0.0
      %4595 = vmatpush1.msra.mxu0 0.0
      %4596 = vmatprep.subr.mxu0 0.0
      %4597 = vmatpush1.msra.mxu0 %v3963
      %4598 = vmatprep.subr.mxu0 0.0
      %4599 = vmatpush2.msra.mxu0 0.0
      %4600 = vmatprep.subr.mxu0 0.0
      %4601 = vmatpush2.msra.mxu0 0.0
      %4602 = vmatprep.subr.mxu0 0.0
      %4603 = vmatpush2.msra.mxu0 0.0
      %4604 = vmatprep.subr.mxu0 0.0
      %4605 = vmatpush2.msra.mxu0 0.0
      %4606 = vmatprep.subr.mxu0 0.0
      %4607 = vmatpush2.msra.mxu0 0.0
      %4608 = vmatprep.subr.mxu0 0.0
      %4609 = vmatpush2.msra.mxu0 0.0
      %4610 = vmatprep.subr.mxu0 0.0
      %4611 = vmatpush2.msra.mxu0 0.0
      %4612 = vmatprep.subr.mxu0 0.0
      %4613 = vmatpush2.msra.mxu0 0.0
      %4614 = vmatprep.subr.mxu0 0.0
      %4615 = vmatpush2.msra.mxu0 0.0
      %4616 = vmatprep.subr.mxu0 0.0
      %4617 = vmatpush2.msra.mxu0 0.0
      %4618 = vmatprep.subr.mxu0 0.0
      %4619 = vmatpush2.msra.mxu0 0.0
      %4620 = vmatprep.subr.mxu0 0.0
      %4621 = vmatpush2.msra.mxu0 0.0
      %4622 = vmatprep.subr.mxu0 0.0
      %4623 = vmatpush2.msra.mxu0 0.0
      %4624 = vmatprep.subr.mxu0 0.0
      %4625 = vmatpush2.msra.mxu0 0.0
      %4626 = vmatprep.subr.mxu0 0.0
      %4627 = vmatpush2.msra.mxu0 0.0
      %4628 = vmatprep.subr.mxu0 0.0
      %4629 = vmatpush2.msra.mxu0 0.0
      %4630 = vmatprep.mubr.f32.mxu0 0.0
      %4631 = vmatmul.mubr.f32.gmra.mxu0 %v4558
      %v4632 = vpop.f32.mrf.mxu0
      %v4633 = vadd.f32 %v4544, %v4632
      %v4634 = vpop.f32.mrf.mxu0
      %4635 = vmatprep.mubr.f32.mxu0 0.0
      %4636 = vmatmul.mubr.f32.gmra.mxu0 %v4561
      %v4637 = vpop.f32.mrf.mxu0
      %v4638 = vadd.f32 %v4549, %v4637
      %v4639 = vpop.f32.mrf.mxu0
      %4640 = vmatprep.mubr.f32.mxu0 0.0
      %4641 = vmatmul.mubr.f32.gmra.mxu0 %v4564
      %v4642 = vpop.f32.mrf.mxu0
      %v4643 = vadd.f32 %v4554, %v4642
      %v4644 = vpop.f32.mrf.mxu0
      %4645 = vdwg.mxu0
      %s4646 = scalar_lea.vmem %s3, 192
      %v4647 = vld [vmem:[%s4646] sm:$0xff]
      %v4648 = vld [vmem:[%s4646 + $0x8] sm:$0xff]
      %v4649 = vld [vmem:[%s4646 + $0x10] sm:$0xff]
      %v4650 = vld [vmem:[%s4646 + $0x18] sm:$0xff]
      %s4651 = scalar_lea.vmem %s4, 6
      %v4652 = vld [vmem:[%s4651] sm:$0x1]
      %v4654 = vlaneseq
      %v4655 = vshrl.u32 %v4654, 7
      %v4656 = vsub.s32 0, %v4655
      %v4657 = vrot.slane %v4652, %v4656
      %4659 = vmatprep.subr.mxu0 0.0
      %4660 = vmatpush1.msra.mxu0 0.0
      %4661 = vmatprep.subr.mxu0 0.0
      %4662 = vmatpush1.msra.mxu0 0.0
      %4663 = vmatprep.subr.mxu0 0.0
      %4664 = vmatpush1.msra.mxu0 0.0
      %4665 = vmatprep.subr.mxu0 0.0
      %4666 = vmatpush1.msra.mxu0 0.0
      %4667 = vmatprep.subr.mxu0 0.0
      %4668 = vmatpush1.msra.mxu0 0.0
      %4669 = vmatprep.subr.mxu0 0.0
      %4670 = vmatpush1.msra.mxu0 0.0
      %4671 = vmatprep.subr.mxu0 0.0
      %4672 = vmatpush1.msra.mxu0 0.0
      %4673 = vmatprep.subr.mxu0 0.0
      %4674 = vmatpush1.msra.mxu0 0.0
      %4675 = vmatprep.subr.mxu0 0.0
      %4676 = vmatpush1.msra.mxu0 0.0
      %4677 = vmatprep.subr.mxu0 0.0
      %4678 = vmatpush1.msra.mxu0 0.0
      %4679 = vmatprep.subr.mxu0 0.0
      %4680 = vmatpush1.msra.mxu0 0.0
      %4681 = vmatprep.subr.mxu0 0.0
      %4682 = vmatpush1.msra.mxu0 0.0
      %4683 = vmatprep.subr.mxu0 0.0
      %4684 = vmatpush1.msra.mxu0 %v4650
      %4685 = vmatprep.subr.mxu0 0.0
      %4686 = vmatpush1.msra.mxu0 %v4649
      %4687 = vmatprep.subr.mxu0 0.0
      %4688 = vmatpush1.msra.mxu0 %v4648
      %4689 = vmatprep.subr.mxu0 0.0
      %4690 = vmatpush1.msra.mxu0 %v4647
      %4691 = vmatprep.subr.mxu0 0.0
      %4692 = vmatpush2.msra.mxu0 0.0
      %4693 = vmatprep.subr.mxu0 0.0
      %4694 = vmatpush2.msra.mxu0 0.0
      %4695 = vmatprep.subr.mxu0 0.0
      %4696 = vmatpush2.msra.mxu0 0.0
      %4697 = vmatprep.subr.mxu0 0.0
      %4698 = vmatpush2.msra.mxu0 0.0
      %4699 = vmatprep.subr.mxu0 0.0
      %4700 = vmatpush2.msra.mxu0 0.0
      %4701 = vmatprep.subr.mxu0 0.0
      %4702 = vmatpush2.msra.mxu0 0.0
      %4703 = vmatprep.subr.mxu0 0.0
      %4704 = vmatpush2.msra.mxu0 0.0
      %4705 = vmatprep.subr.mxu0 0.0
      %4706 = vmatpush2.msra.mxu0 0.0
      %4707 = vmatprep.subr.mxu0 0.0
      %4708 = vmatpush2.msra.mxu0 0.0
      %4709 = vmatprep.subr.mxu0 0.0
      %4710 = vmatpush2.msra.mxu0 0.0
      %4711 = vmatprep.subr.mxu0 0.0
      %4712 = vmatpush2.msra.mxu0 0.0
      %4713 = vmatprep.subr.mxu0 0.0
      %4714 = vmatpush2.msra.mxu0 0.0
      %4715 = vmatprep.subr.mxu0 0.0
      %4716 = vmatpush2.msra.mxu0 0.0
      %4717 = vmatprep.subr.mxu0 0.0
      %4718 = vmatpush2.msra.mxu0 0.0
      %4719 = vmatprep.subr.mxu0 0.0
      %4720 = vmatpush2.msra.mxu0 0.0
      %4721 = vmatprep.subr.mxu0 0.0
      %4722 = vmatpush2.msra.mxu0 0.0
      %4723 = vmatprep.mubr.f32.mxu0 0.0
      %4724 = vmatmul.mubr.f32.gmra.mxu0 %v3465
      %v4725 = vpop.f32.mrf.mxu0
      %v4726 = vadd.f32 %v4657, %v4725
      %v4727 = vpop.f32.mrf.mxu0
      %4728 = vmatprep.mubr.f32.mxu0 0.0
      %4729 = vmatmul.mubr.f32.gmra.mxu0 %v3468
      %v4730 = vpop.f32.mrf.mxu0
      %v4731 = vadd.f32 %v4657, %v4730
      %v4732 = vpop.f32.mrf.mxu0
      %4733 = vmatprep.mubr.f32.mxu0 0.0
      %4734 = vmatmul.mubr.f32.gmra.mxu0 %v3471
      %v4735 = vpop.f32.mrf.mxu0
      %v4736 = vadd.f32 %v4657, %v4735
      %v4737 = vpop.f32.mrf.mxu0
      %4738 = vdwg.mxu0
      %s4739 = scalar_lea.vmem %s5, 192
      %v4740 = vld [vmem:[%s4739] sm:$0xff]
      %v4741 = vld [vmem:[%s4739 + $0x8] sm:$0xff]
      %v4742 = vld [vmem:[%s4739 + $0x10] sm:$0xff]
      %v4743 = vld [vmem:[%s4739 + $0x18] sm:$0xff]
      %s4744 = scalar_lea.vmem %s6, 6
      %v4745 = vld [vmem:[%s4744] sm:$0x1]
      %v4747 = vlaneseq
      %v4748 = vshrl.u32 %v4747, 7
      %v4749 = vsub.s32 0, %v4748
      %v4750 = vrot.slane %v4745, %v4749
      %4752 = vmatprep.subr.mxu0 0.0
      %4753 = vmatpush1.msra.mxu0 0.0
      %4754 = vmatprep.subr.mxu0 0.0
      %4755 = vmatpush1.msra.mxu0 0.0
      %4756 = vmatprep.subr.mxu0 0.0
      %4757 = vmatpush1.msra.mxu0 0.0
      %4758 = vmatprep.subr.mxu0 0.0
      %4759 = vmatpush1.msra.mxu0 0.0
      %4760 = vmatprep.subr.mxu0 0.0
      %4761 = vmatpush1.msra.mxu0 0.0
      %4762 = vmatprep.subr.mxu0 0.0
      %4763 = vmatpush1.msra.mxu0 0.0
      %4764 = vmatprep.subr.mxu0 0.0
      %4765 = vmatpush1.msra.mxu0 0.0
      %4766 = vmatprep.subr.mxu0 0.0
      %4767 = vmatpush1.msra.mxu0 0.0
      %4768 = vmatprep.subr.mxu0 0.0
      %4769 = vmatpush1.msra.mxu0 0.0
      %4770 = vmatprep.subr.mxu0 0.0
      %4771 = vmatpush1.msra.mxu0 0.0
      %4772 = vmatprep.subr.mxu0 0.0
      %4773 = vmatpush1.msra.mxu0 0.0
      %4774 = vmatprep.subr.mxu0 0.0
      %4775 = vmatpush1.msra.mxu0 0.0
      %4776 = vmatprep.subr.mxu0 0.0
      %4777 = vmatpush1.msra.mxu0 %v4743
      %4778 = vmatprep.subr.mxu0 0.0
      %4779 = vmatpush1.msra.mxu0 %v4742
      %4780 = vmatprep.subr.mxu0 0.0
      %4781 = vmatpush1.msra.mxu0 %v4741
      %4782 = vmatprep.subr.mxu0 0.0
      %4783 = vmatpush1.msra.mxu0 %v4740
      %4784 = vmatprep.subr.mxu0 0.0
      %4785 = vmatpush2.msra.mxu0 0.0
      %4786 = vmatprep.subr.mxu0 0.0
      %4787 = vmatpush2.msra.mxu0 0.0
      %4788 = vmatprep.subr.mxu0 0.0
      %4789 = vmatpush2.msra.mxu0 0.0
      %4790 = vmatprep.subr.mxu0 0.0
      %4791 = vmatpush2.msra.mxu0 0.0
      %4792 = vmatprep.subr.mxu0 0.0
      %4793 = vmatpush2.msra.mxu0 0.0
      %4794 = vmatprep.subr.mxu0 0.0
      %4795 = vmatpush2.msra.mxu0 0.0
      %4796 = vmatprep.subr.mxu0 0.0
      %4797 = vmatpush2.msra.mxu0 0.0
      %4798 = vmatprep.subr.mxu0 0.0
      %4799 = vmatpush2.msra.mxu0 0.0
      %4800 = vmatprep.subr.mxu0 0.0
      %4801 = vmatpush2.msra.mxu0 0.0
      %4802 = vmatprep.subr.mxu0 0.0
      %4803 = vmatpush2.msra.mxu0 0.0
      %4804 = vmatprep.subr.mxu0 0.0
      %4805 = vmatpush2.msra.mxu0 0.0
      %4806 = vmatprep.subr.mxu0 0.0
      %4807 = vmatpush2.msra.mxu0 0.0
      %4808 = vmatprep.subr.mxu0 0.0
      %4809 = vmatpush2.msra.mxu0 0.0
      %4810 = vmatprep.subr.mxu0 0.0
      %4811 = vmatpush2.msra.mxu0 0.0
      %4812 = vmatprep.subr.mxu0 0.0
      %4813 = vmatpush2.msra.mxu0 0.0
      %4814 = vmatprep.subr.mxu0 0.0
      %4815 = vmatpush2.msra.mxu0 0.0
      %4816 = vmatprep.mubr.f32.mxu0 0.0
      %4817 = vmatmul.mubr.f32.gmra.mxu0 %v3465
      %v4818 = vpop.f32.mrf.mxu0
      %v4819 = vadd.f32 %v4750, %v4818
      %v4820 = vpop.f32.mrf.mxu0
      %4821 = vmatprep.mubr.f32.mxu0 0.0
      %4822 = vmatmul.mubr.f32.gmra.mxu0 %v3468
      %v4823 = vpop.f32.mrf.mxu0
      %v4824 = vadd.f32 %v4750, %v4823
      %v4825 = vpop.f32.mrf.mxu0
      %4826 = vmatprep.mubr.f32.mxu0 0.0
      %4827 = vmatmul.mubr.f32.gmra.mxu0 %v3471
      %v4828 = vpop.f32.mrf.mxu0
      %v4829 = vadd.f32 %v4750, %v4828
      %v4830 = vpop.f32.mrf.mxu0
      %4831 = vdwg.mxu0
      %s4832 = scalar_lea.vmem %s7, 192
      %v4833 = vld [vmem:[%s4832] sm:$0xff]
      %v4834 = vld [vmem:[%s4832 + $0x8] sm:$0xff]
      %v4835 = vld [vmem:[%s4832 + $0x10] sm:$0xff]
      %v4836 = vld [vmem:[%s4832 + $0x18] sm:$0xff]
      %s4837 = scalar_lea.vmem %s8, 6
      %v4838 = vld [vmem:[%s4837] sm:$0x1]
      %v4840 = vlaneseq
      %v4841 = vshrl.u32 %v4840, 7
      %v4842 = vsub.s32 0, %v4841
      %v4843 = vrot.slane %v4838, %v4842
      %4845 = vmatprep.subr.mxu0 0.0
      %4846 = vmatpush1.msra.mxu0 0.0
      %4847 = vmatprep.subr.mxu0 0.0
      %4848 = vmatpush1.msra.mxu0 0.0
      %4849 = vmatprep.subr.mxu0 0.0
      %4850 = vmatpush1.msra.mxu0 0.0
      %4851 = vmatprep.subr.mxu0 0.0
      %4852 = vmatpush1.msra.mxu0 0.0
      %4853 = vmatprep.subr.mxu0 0.0
      %4854 = vmatpush1.msra.mxu0 0.0
      %4855 = vmatprep.subr.mxu0 0.0
      %4856 = vmatpush1.msra.mxu0 0.0
      %4857 = vmatprep.subr.mxu0 0.0
      %4858 = vmatpush1.msra.mxu0 0.0
      %4859 = vmatprep.subr.mxu0 0.0
      %4860 = vmatpush1.msra.mxu0 0.0
      %4861 = vmatprep.subr.mxu0 0.0
      %4862 = vmatpush1.msra.mxu0 0.0
      %4863 = vmatprep.subr.mxu0 0.0
      %4864 = vmatpush1.msra.mxu0 0.0
      %4865 = vmatprep.subr.mxu0 0.0
      %4866 = vmatpush1.msra.mxu0 0.0
      %4867 = vmatprep.subr.mxu0 0.0
      %4868 = vmatpush1.msra.mxu0 0.0
      %4869 = vmatprep.subr.mxu0 0.0
      %4870 = vmatpush1.msra.mxu0 %v4836
      %4871 = vmatprep.subr.mxu0 0.0
      %4872 = vmatpush1.msra.mxu0 %v4835
      %4873 = vmatprep.subr.mxu0 0.0
      %4874 = vmatpush1.msra.mxu0 %v4834
      %4875 = vmatprep.subr.mxu0 0.0
      %4876 = vmatpush1.msra.mxu0 %v4833
      %4877 = vmatprep.subr.mxu0 0.0
      %4878 = vmatpush2.msra.mxu0 0.0
      %4879 = vmatprep.subr.mxu0 0.0
      %4880 = vmatpush2.msra.mxu0 0.0
      %4881 = vmatprep.subr.mxu0 0.0
      %4882 = vmatpush2.msra.mxu0 0.0
      %4883 = vmatprep.subr.mxu0 0.0
      %4884 = vmatpush2.msra.mxu0 0.0
      %4885 = vmatprep.subr.mxu0 0.0
      %4886 = vmatpush2.msra.mxu0 0.0
      %4887 = vmatprep.subr.mxu0 0.0
      %4888 = vmatpush2.msra.mxu0 0.0
      %4889 = vmatprep.subr.mxu0 0.0
      %4890 = vmatpush2.msra.mxu0 0.0
      %4891 = vmatprep.subr.mxu0 0.0
      %4892 = vmatpush2.msra.mxu0 0.0
      %4893 = vmatprep.subr.mxu0 0.0
      %4894 = vmatpush2.msra.mxu0 0.0
      %4895 = vmatprep.subr.mxu0 0.0
      %4896 = vmatpush2.msra.mxu0 0.0
      %4897 = vmatprep.subr.mxu0 0.0
      %4898 = vmatpush2.msra.mxu0 0.0
      %4899 = vmatprep.subr.mxu0 0.0
      %4900 = vmatpush2.msra.mxu0 0.0
      %4901 = vmatprep.subr.mxu0 0.0
      %4902 = vmatpush2.msra.mxu0 0.0
      %4903 = vmatprep.subr.mxu0 0.0
      %4904 = vmatpush2.msra.mxu0 0.0
      %4905 = vmatprep.subr.mxu0 0.0
      %4906 = vmatpush2.msra.mxu0 0.0
      %4907 = vmatprep.subr.mxu0 0.0
      %4908 = vmatpush2.msra.mxu0 0.0
      %4909 = vmatprep.mubr.f32.mxu0 0.0
      %4910 = vmatmul.mubr.f32.gmra.mxu0 %v3465
      %v4911 = vpop.f32.mrf.mxu0
      %v4912 = vadd.f32 %v4843, %v4911
      %v4913 = vpop.f32.mrf.mxu0
      %4914 = vmatprep.mubr.f32.mxu0 0.0
      %4915 = vmatmul.mubr.f32.gmra.mxu0 %v3468
      %v4916 = vpop.f32.mrf.mxu0
      %v4917 = vadd.f32 %v4843, %v4916
      %v4918 = vpop.f32.mrf.mxu0
      %4919 = vmatprep.mubr.f32.mxu0 0.0
      %4920 = vmatmul.mubr.f32.gmra.mxu0 %v3471
      %v4921 = vpop.f32.mrf.mxu0
      %v4922 = vadd.f32 %v4843, %v4921
      %v4923 = vpop.f32.mrf.mxu0
      %4924 = vdwg.mxu0
      %v4926 = vsel %vm1002, %v4726, 0
      %v4929 = vsel %vm1002, %v4731, 0
      %v4932 = vsel %vm1002, %v4736, 0
      %v4935 = vsel %vm1002, %v4819, 0
      %v4938 = vsel %vm1002, %v4824, 0
      %v4941 = vsel %vm1002, %v4829, 0
      %4943 = vmatprep.subr.mxu0 0.0
      %4944 = vmatpush1.xpose.msra.mxu0 0.0
      %4945 = vmatprep.subr.mxu0 0.0
      %4946 = vmatpush1.xpose.msra.mxu0 0.0
      %4947 = vmatprep.subr.mxu0 0.0
      %4948 = vmatpush1.xpose.msra.mxu0 0.0
      %4949 = vmatprep.subr.mxu0 0.0
      %4950 = vmatpush1.xpose.msra.mxu0 0.0
      %4951 = vmatprep.subr.mxu0 0.0
      %4952 = vmatpush1.xpose.msra.mxu0 0.0
      %4953 = vmatprep.subr.mxu0 0.0
      %4954 = vmatpush1.xpose.msra.mxu0 0.0
      %4955 = vmatprep.subr.mxu0 0.0
      %4956 = vmatpush1.xpose.msra.mxu0 0.0
      %4957 = vmatprep.subr.mxu0 0.0
      %4958 = vmatpush1.xpose.msra.mxu0 0.0
      %4959 = vmatprep.subr.mxu0 0.0
      %4960 = vmatpush1.xpose.msra.mxu0 0.0
      %4961 = vmatprep.subr.mxu0 0.0
      %4962 = vmatpush1.xpose.msra.mxu0 0.0
      %4963 = vmatprep.subr.mxu0 0.0
      %4964 = vmatpush1.xpose.msra.mxu0 0.0
      %4965 = vmatprep.subr.mxu0 0.0
      %4966 = vmatpush1.xpose.msra.mxu0 0.0
      %4967 = vmatprep.subr.mxu0 0.0
      %4968 = vmatpush1.xpose.msra.mxu0 0.0
      %4969 = vmatprep.subr.mxu0 0.0
      %4970 = vmatpush1.xpose.msra.mxu0 %v4941
      %4971 = vmatprep.subr.mxu0 0.0
      %4972 = vmatpush1.xpose.msra.mxu0 %v4938
      %4973 = vmatprep.subr.mxu0 0.0
      %4974 = vmatpush1.xpose.msra.mxu0 %v4935
      %4975 = vmatprep.subr.mxu0 0.0
      %4976 = vmatpush2.xpose.msra.mxu0 0.0
      %4977 = vmatprep.subr.mxu0 0.0
      %4978 = vmatpush2.xpose.msra.mxu0 0.0
      %4979 = vmatprep.subr.mxu0 0.0
      %4980 = vmatpush2.xpose.msra.mxu0 0.0
      %4981 = vmatprep.subr.mxu0 0.0
      %4982 = vmatpush2.xpose.msra.mxu0 0.0
      %4983 = vmatprep.subr.mxu0 0.0
      %4984 = vmatpush2.xpose.msra.mxu0 0.0
      %4985 = vmatprep.subr.mxu0 0.0
      %4986 = vmatpush2.xpose.msra.mxu0 0.0
      %4987 = vmatprep.subr.mxu0 0.0
      %4988 = vmatpush2.xpose.msra.mxu0 0.0
      %4989 = vmatprep.subr.mxu0 0.0
      %4990 = vmatpush2.xpose.msra.mxu0 0.0
      %4991 = vmatprep.subr.mxu0 0.0
      %4992 = vmatpush2.xpose.msra.mxu0 0.0
      %4993 = vmatprep.subr.mxu0 0.0
      %4994 = vmatpush2.xpose.msra.mxu0 0.0
      %4995 = vmatprep.subr.mxu0 0.0
      %4996 = vmatpush2.xpose.msra.mxu0 0.0
      %4997 = vmatprep.subr.mxu0 0.0
      %4998 = vmatpush2.xpose.msra.mxu0 0.0
      %4999 = vmatprep.subr.mxu0 0.0
      %5000 = vmatpush2.xpose.msra.mxu0 0.0
      %5001 = vmatprep.subr.mxu0 0.0
      %5002 = vmatpush2.xpose.msra.mxu0 0.0
      %5003 = vmatprep.subr.mxu0 0.0
      %5004 = vmatpush2.xpose.msra.mxu0 0.0
      %5005 = vmatprep.subr.mxu0 0.0
      %5006 = vmatpush2.xpose.msra.mxu0 0.0
      %5007 = vmatprep.mubr.f32.mxu0 0.0
      %5008 = vmatmul.mubr.f32.gmra.mxu0 %v4926
      %v5009 = vpop.f32.mrf.mxu0
      %v5010 = vadd.f32 0.0, %v5009
      %v5011 = vpop.f32.mrf.mxu0
      %5012 = vmatprep.mubr.f32.mxu0 0.0
      %5013 = vmatmul.mubr.f32.gmra.mxu0 %v4929
      %v5014 = vpop.f32.mrf.mxu0
      %v5015 = vadd.f32 0.0, %v5014
      %v5016 = vpop.f32.mrf.mxu0
      %5017 = vmatprep.mubr.f32.mxu0 0.0
      %5018 = vmatmul.mubr.f32.gmra.mxu0 %v4932
      %v5019 = vpop.f32.mrf.mxu0
      %v5020 = vadd.f32 0.0, %v5019
      %v5021 = vpop.f32.mrf.mxu0
      %5022 = vdwg.mxu0
      %v5023 = vsel %vm1101, %v5010, -inf
      %5024 = vmax.xlane.f32.xlu0 %v5023
      %v5025 = vpop.xlane.xlu0 %5024
      %v5026 = vsel %vm1101, %v5015, -inf
      %5027 = vmax.xlane.f32.xlu0 %v5026
      %v5028 = vpop.xlane.xlu0 %5027
      %v5029 = vsel %vm1108, %v5020, -inf
      %5030 = vmax.xlane.f32.xlu0 %v5029
      %v5031 = vpop.xlane.xlu0 %5030
      %v5032 = vsub.f32 %v5010, %v5025
      %v5033 = vsub.f32 %v5015, %v5028
      %v5034 = vsub.f32 %v5020, %v5031
      %v5035 = vmul.f32 %v5032, 1.442695
      %v5036 = vpow.pop %v5035
      %v5037 = vmul.f32 %v5033, 1.442695
      %v5038 = vpow.pop %v5037
      %v5039 = vmul.f32 %v5034, 1.442695
      %v5040 = vpow.pop %v5039
      %v5041 = vsel %vm1101, %v5036, 0.0
      %5042 = vadd.xlane.f32.xlu0 %v5041
      %v5043 = vpop.xlane.xlu0 %5042
      %v5044 = vsel %vm1101, %v5038, 0.0
      %5045 = vadd.xlane.f32.xlu0 %v5044
      %v5046 = vpop.xlane.xlu0 %5045
      %v5047 = vsel %vm1108, %v5040, 0.0
      %5048 = vadd.xlane.f32.xlu0 %v5047
      %v5049 = vpop.xlane.xlu0 %5048
      %v5050 = vrcp.pop %v5043
      %v5051 = vrcp.pop %v5046
      %v5052 = vrcp.pop %v5049
      %v5053 = vmul.f32 %v5036, %v5050
      %v5054 = vmul.f32 %v5038, %v5051
      %v5055 = vmul.f32 %v5040, %v5052
      %v5057 = vsel %vm1101, %v5053, 0
      %v5060 = vsel %vm1101, %v5054, 0
      %v5063 = vsel %vm1101, %v5055, 0
      %v5066 = vsel %vm1145, %v4922, 0
      %5068 = vmatprep.subr.mxu0 0.0
      %5069 = vmatpush1.msra.mxu0 0.0
      %5070 = vmatprep.subr.mxu0 0.0
      %5071 = vmatpush1.msra.mxu0 0.0
      %5072 = vmatprep.subr.mxu0 0.0
      %5073 = vmatpush1.msra.mxu0 0.0
      %5074 = vmatprep.subr.mxu0 0.0
      %5075 = vmatpush1.msra.mxu0 0.0
      %5076 = vmatprep.subr.mxu0 0.0
      %5077 = vmatpush1.msra.mxu0 0.0
      %5078 = vmatprep.subr.mxu0 0.0
      %5079 = vmatpush1.msra.mxu0 0.0
      %5080 = vmatprep.subr.mxu0 0.0
      %5081 = vmatpush1.msra.mxu0 0.0
      %5082 = vmatprep.subr.mxu0 0.0
      %5083 = vmatpush1.msra.mxu0 0.0
      %5084 = vmatprep.subr.mxu0 0.0
      %5085 = vmatpush1.msra.mxu0 0.0
      %5086 = vmatprep.subr.mxu0 0.0
      %5087 = vmatpush1.msra.mxu0 0.0
      %5088 = vmatprep.subr.mxu0 0.0
      %5089 = vmatpush1.msra.mxu0 0.0
      %5090 = vmatprep.subr.mxu0 0.0
      %5091 = vmatpush1.msra.mxu0 0.0
      %5092 = vmatprep.subr.mxu0 0.0
      %5093 = vmatpush1.msra.mxu0 0.0
      %5094 = vmatprep.subr.mxu0 0.0
      %5095 = vmatpush1.msra.mxu0 %v5066
      %5096 = vmatprep.subr.mxu0 0.0
      %5097 = vmatpush1.msra.mxu0 %v4917
      %5098 = vmatprep.subr.mxu0 0.0
      %5099 = vmatpush1.msra.mxu0 %v4912
      %5100 = vmatprep.subr.mxu0 0.0
      %5101 = vmatpush2.msra.mxu0 0.0
      %5102 = vmatprep.subr.mxu0 0.0
      %5103 = vmatpush2.msra.mxu0 0.0
      %5104 = vmatprep.subr.mxu0 0.0
      %5105 = vmatpush2.msra.mxu0 0.0
      %5106 = vmatprep.subr.mxu0 0.0
      %5107 = vmatpush2.msra.mxu0 0.0
      %5108 = vmatprep.subr.mxu0 0.0
      %5109 = vmatpush2.msra.mxu0 0.0
      %5110 = vmatprep.subr.mxu0 0.0
      %5111 = vmatpush2.msra.mxu0 0.0
      %5112 = vmatprep.subr.mxu0 0.0
      %5113 = vmatpush2.msra.mxu0 0.0
      %5114 = vmatprep.subr.mxu0 0.0
      %5115 = vmatpush2.msra.mxu0 0.0
      %5116 = vmatprep.subr.mxu0 0.0
      %5117 = vmatpush2.msra.mxu0 0.0
      %5118 = vmatprep.subr.mxu0 0.0
      %5119 = vmatpush2.msra.mxu0 0.0
      %5120 = vmatprep.subr.mxu0 0.0
      %5121 = vmatpush2.msra.mxu0 0.0
      %5122 = vmatprep.subr.mxu0 0.0
      %5123 = vmatpush2.msra.mxu0 0.0
      %5124 = vmatprep.subr.mxu0 0.0
      %5125 = vmatpush2.msra.mxu0 0.0
      %5126 = vmatprep.subr.mxu0 0.0
      %5127 = vmatpush2.msra.mxu0 0.0
      %5128 = vmatprep.subr.mxu0 0.0
      %5129 = vmatpush2.msra.mxu0 0.0
      %5130 = vmatprep.subr.mxu0 0.0
      %5131 = vmatpush2.msra.mxu0 0.0
      %5132 = vmatprep.mubr.f32.mxu0 0.0
      %5133 = vmatmul.mubr.f32.gmra.mxu0 %v5057
      %v5134 = vpop.f32.mrf.mxu0
      %v5135 = vadd.f32 0.0, %v5134
      %v5136 = vpop.f32.mrf.mxu0
      %5137 = vmatprep.mubr.f32.mxu0 0.0
      %5138 = vmatmul.mubr.f32.gmra.mxu0 %v5060
      %v5139 = vpop.f32.mrf.mxu0
      %v5140 = vadd.f32 0.0, %v5139
      %v5141 = vpop.f32.mrf.mxu0
      %5142 = vmatprep.mubr.f32.mxu0 0.0
      %5143 = vmatmul.mubr.f32.gmra.mxu0 %v5063
      %v5144 = vpop.f32.mrf.mxu0
      %v5145 = vadd.f32 0.0, %v5144
      %v5146 = vpop.f32.mrf.mxu0
      %5147 = vdwg.mxu0
      %s5148 = scalar_lea.vmem %s9, 48
      %v5149 = vld [vmem:[%s5148] sm:$0xff]
      %v5151 = vsel %vm1002, %v5135, 0
      %v5154 = vsel %vm1002, %v5140, 0
      %v5157 = vsel %vm1002, %v5145, 0
      %5159 = vmatprep.subr.mxu0 0.0
      %5160 = vmatpush1.msra.mxu0 0.0
      %5161 = vmatprep.subr.mxu0 0.0
      %5162 = vmatpush1.msra.mxu0 0.0
      %5163 = vmatprep.subr.mxu0 0.0
      %5164 = vmatpush1.msra.mxu0 0.0
      %5165 = vmatprep.subr.mxu0 0.0
      %5166 = vmatpush1.msra.mxu0 0.0
      %5167 = vmatprep.subr.mxu0 0.0
      %5168 = vmatpush1.msra.mxu0 0.0
      %5169 = vmatprep.subr.mxu0 0.0
      %5170 = vmatpush1.msra.mxu0 0.0
      %5171 = vmatprep.subr.mxu0 0.0
      %5172 = vmatpush1.msra.mxu0 0.0
      %5173 = vmatprep.subr.mxu0 0.0
      %5174 = vmatpush1.msra.mxu0 0.0
      %5175 = vmatprep.subr.mxu0 0.0
      %5176 = vmatpush1.msra.mxu0 0.0
      %5177 = vmatprep.subr.mxu0 0.0
      %5178 = vmatpush1.msra.mxu0 0.0
      %5179 = vmatprep.subr.mxu0 0.0
      %5180 = vmatpush1.msra.mxu0 0.0
      %5181 = vmatprep.subr.mxu0 0.0
      %5182 = vmatpush1.msra.mxu0 0.0
      %5183 = vmatprep.subr.mxu0 0.0
      %5184 = vmatpush1.msra.mxu0 0.0
      %5185 = vmatprep.subr.mxu0 0.0
      %5186 = vmatpush1.msra.mxu0 0.0
      %5187 = vmatprep.subr.mxu0 0.0
      %5188 = vmatpush1.msra.mxu0 0.0
      %5189 = vmatprep.subr.mxu0 0.0
      %5190 = vmatpush1.msra.mxu0 %v5149
      %5191 = vmatprep.subr.mxu0 0.0
      %5192 = vmatpush2.msra.mxu0 0.0
      %5193 = vmatprep.subr.mxu0 0.0
      %5194 = vmatpush2.msra.mxu0 0.0
      %5195 = vmatprep.subr.mxu0 0.0
      %5196 = vmatpush2.msra.mxu0 0.0
      %5197 = vmatprep.subr.mxu0 0.0
      %5198 = vmatpush2.msra.mxu0 0.0
      %5199 = vmatprep.subr.mxu0 0.0
      %5200 = vmatpush2.msra.mxu0 0.0
      %5201 = vmatprep.subr.mxu0 0.0
      %5202 = vmatpush2.msra.mxu0 0.0
      %5203 = vmatprep.subr.mxu0 0.0
      %5204 = vmatpush2.msra.mxu0 0.0
      %5205 = vmatprep.subr.mxu0 0.0
      %5206 = vmatpush2.msra.mxu0 0.0
      %5207 = vmatprep.subr.mxu0 0.0
      %5208 = vmatpush2.msra.mxu0 0.0
      %5209 = vmatprep.subr.mxu0 0.0
      %5210 = vmatpush2.msra.mxu0 0.0
      %5211 = vmatprep.subr.mxu0 0.0
      %5212 = vmatpush2.msra.mxu0 0.0
      %5213 = vmatprep.subr.mxu0 0.0
      %5214 = vmatpush2.msra.mxu0 0.0
      %5215 = vmatprep.subr.mxu0 0.0
      %5216 = vmatpush2.msra.mxu0 0.0
      %5217 = vmatprep.subr.mxu0 0.0
      %5218 = vmatpush2.msra.mxu0 0.0
      %5219 = vmatprep.subr.mxu0 0.0
      %5220 = vmatpush2.msra.mxu0 0.0
      %5221 = vmatprep.subr.mxu0 0.0
      %5222 = vmatpush2.msra.mxu0 0.0
      %5223 = vmatprep.mubr.f32.mxu0 0.0
      %5224 = vmatmul.mubr.f32.gmra.mxu0 %v5151
      %v5225 = vpop.f32.mrf.mxu0
      %v5226 = vadd.f32 0.0, %v5225
      %v5227 = vpop.f32.mrf.mxu0
      %5228 = vmatprep.mubr.f32.mxu0 0.0
      %5229 = vmatmul.mubr.f32.gmra.mxu0 %v5154
      %v5230 = vpop.f32.mrf.mxu0
      %v5231 = vadd.f32 0.0, %v5230
      %v5232 = vpop.f32.mrf.mxu0
      %5233 = vmatprep.mubr.f32.mxu0 0.0
      %5234 = vmatmul.mubr.f32.gmra.mxu0 %v5157
      %v5235 = vpop.f32.mrf.mxu0
      %v5236 = vadd.f32 0.0, %v5235
      %v5237 = vpop.f32.mrf.mxu0
      %5238 = vdwg.mxu0
      %v5239 = vadd.f32 %v4633, %v5226
      %v5240 = vadd.f32 %v4638, %v5231
      %v5241 = vadd.f32 %v4643, %v5236
      %s5242 = scalar_lea.vmem %s3, 224
      %v5243 = vld [vmem:[%s5242] sm:$0xff]
      %v5244 = vld [vmem:[%s5242 + $0x8] sm:$0xff]
      %v5245 = vld [vmem:[%s5242 + $0x10] sm:$0xff]
      %v5246 = vld [vmem:[%s5242 + $0x18] sm:$0xff]
      %s5247 = scalar_lea.vmem %s4, 7
      %v5248 = vld [vmem:[%s5247] sm:$0x1]
      %v5250 = vlaneseq
      %v5251 = vshrl.u32 %v5250, 7
      %v5252 = vsub.s32 0, %v5251
      %v5253 = vrot.slane %v5248, %v5252
      %5255 = vmatprep.subr.mxu0 0.0
      %5256 = vmatpush1.msra.mxu0 0.0
      %5257 = vmatprep.subr.mxu0 0.0
      %5258 = vmatpush1.msra.mxu0 0.0
      %5259 = vmatprep.subr.mxu0 0.0
      %5260 = vmatpush1.msra.mxu0 0.0
      %5261 = vmatprep.subr.mxu0 0.0
      %5262 = vmatpush1.msra.mxu0 0.0
      %5263 = vmatprep.subr.mxu0 0.0
      %5264 = vmatpush1.msra.mxu0 0.0
      %5265 = vmatprep.subr.mxu0 0.0
      %5266 = vmatpush1.msra.mxu0 0.0
      %5267 = vmatprep.subr.mxu0 0.0
      %5268 = vmatpush1.msra.mxu0 0.0
      %5269 = vmatprep.subr.mxu0 0.0
      %5270 = vmatpush1.msra.mxu0 0.0
      %5271 = vmatprep.subr.mxu0 0.0
      %5272 = vmatpush1.msra.mxu0 0.0
      %5273 = vmatprep.subr.mxu0 0.0
      %5274 = vmatpush1.msra.mxu0 0.0
      %5275 = vmatprep.subr.mxu0 0.0
      %5276 = vmatpush1.msra.mxu0 0.0
      %5277 = vmatprep.subr.mxu0 0.0
      %5278 = vmatpush1.msra.mxu0 0.0
      %5279 = vmatprep.subr.mxu0 0.0
      %5280 = vmatpush1.msra.mxu0 %v5246
      %5281 = vmatprep.subr.mxu0 0.0
      %5282 = vmatpush1.msra.mxu0 %v5245
      %5283 = vmatprep.subr.mxu0 0.0
      %5284 = vmatpush1.msra.mxu0 %v5244
      %5285 = vmatprep.subr.mxu0 0.0
      %5286 = vmatpush1.msra.mxu0 %v5243
      %5287 = vmatprep.subr.mxu0 0.0
      %5288 = vmatpush2.msra.mxu0 0.0
      %5289 = vmatprep.subr.mxu0 0.0
      %5290 = vmatpush2.msra.mxu0 0.0
      %5291 = vmatprep.subr.mxu0 0.0
      %5292 = vmatpush2.msra.mxu0 0.0
      %5293 = vmatprep.subr.mxu0 0.0
      %5294 = vmatpush2.msra.mxu0 0.0
      %5295 = vmatprep.subr.mxu0 0.0
      %5296 = vmatpush2.msra.mxu0 0.0
      %5297 = vmatprep.subr.mxu0 0.0
      %5298 = vmatpush2.msra.mxu0 0.0
      %5299 = vmatprep.subr.mxu0 0.0
      %5300 = vmatpush2.msra.mxu0 0.0
      %5301 = vmatprep.subr.mxu0 0.0
      %5302 = vmatpush2.msra.mxu0 0.0
      %5303 = vmatprep.subr.mxu0 0.0
      %5304 = vmatpush2.msra.mxu0 0.0
      %5305 = vmatprep.subr.mxu0 0.0
      %5306 = vmatpush2.msra.mxu0 0.0
      %5307 = vmatprep.subr.mxu0 0.0
      %5308 = vmatpush2.msra.mxu0 0.0
      %5309 = vmatprep.subr.mxu0 0.0
      %5310 = vmatpush2.msra.mxu0 0.0
      %5311 = vmatprep.subr.mxu0 0.0
      %5312 = vmatpush2.msra.mxu0 0.0
      %5313 = vmatprep.subr.mxu0 0.0
      %5314 = vmatpush2.msra.mxu0 0.0
      %5315 = vmatprep.subr.mxu0 0.0
      %5316 = vmatpush2.msra.mxu0 0.0
      %5317 = vmatprep.subr.mxu0 0.0
      %5318 = vmatpush2.msra.mxu0 0.0
      %5319 = vmatprep.mubr.f32.mxu0 0.0
      %5320 = vmatmul.mubr.f32.gmra.mxu0 %v3465
      %v5321 = vpop.f32.mrf.mxu0
      %v5322 = vadd.f32 %v5253, %v5321
      %v5323 = vpop.f32.mrf.mxu0
      %5324 = vmatprep.mubr.f32.mxu0 0.0
      %5325 = vmatmul.mubr.f32.gmra.mxu0 %v3468
      %v5326 = vpop.f32.mrf.mxu0
      %v5327 = vadd.f32 %v5253, %v5326
      %v5328 = vpop.f32.mrf.mxu0
      %5329 = vmatprep.mubr.f32.mxu0 0.0
      %5330 = vmatmul.mubr.f32.gmra.mxu0 %v3471
      %v5331 = vpop.f32.mrf.mxu0
      %v5332 = vadd.f32 %v5253, %v5331
      %v5333 = vpop.f32.mrf.mxu0
      %5334 = vdwg.mxu0
      %s5335 = scalar_lea.vmem %s5, 224
      %v5336 = vld [vmem:[%s5335] sm:$0xff]
      %v5337 = vld [vmem:[%s5335 + $0x8] sm:$0xff]
      %v5338 = vld [vmem:[%s5335 + $0x10] sm:$0xff]
      %v5339 = vld [vmem:[%s5335 + $0x18] sm:$0xff]
      %s5340 = scalar_lea.vmem %s6, 7
      %v5341 = vld [vmem:[%s5340] sm:$0x1]
      %v5343 = vlaneseq
      %v5344 = vshrl.u32 %v5343, 7
      %v5345 = vsub.s32 0, %v5344
      %v5346 = vrot.slane %v5341, %v5345
      %5348 = vmatprep.subr.mxu0 0.0
      %5349 = vmatpush1.msra.mxu0 0.0
      %5350 = vmatprep.subr.mxu0 0.0
      %5351 = vmatpush1.msra.mxu0 0.0
      %5352 = vmatprep.subr.mxu0 0.0
      %5353 = vmatpush1.msra.mxu0 0.0
      %5354 = vmatprep.subr.mxu0 0.0
      %5355 = vmatpush1.msra.mxu0 0.0
      %5356 = vmatprep.subr.mxu0 0.0
      %5357 = vmatpush1.msra.mxu0 0.0
      %5358 = vmatprep.subr.mxu0 0.0
      %5359 = vmatpush1.msra.mxu0 0.0
      %5360 = vmatprep.subr.mxu0 0.0
      %5361 = vmatpush1.msra.mxu0 0.0
      %5362 = vmatprep.subr.mxu0 0.0
      %5363 = vmatpush1.msra.mxu0 0.0
      %5364 = vmatprep.subr.mxu0 0.0
      %5365 = vmatpush1.msra.mxu0 0.0
      %5366 = vmatprep.subr.mxu0 0.0
      %5367 = vmatpush1.msra.mxu0 0.0
      %5368 = vmatprep.subr.mxu0 0.0
      %5369 = vmatpush1.msra.mxu0 0.0
      %5370 = vmatprep.subr.mxu0 0.0
      %5371 = vmatpush1.msra.mxu0 0.0
      %5372 = vmatprep.subr.mxu0 0.0
      %5373 = vmatpush1.msra.mxu0 %v5339
      %5374 = vmatprep.subr.mxu0 0.0
      %5375 = vmatpush1.msra.mxu0 %v5338
      %5376 = vmatprep.subr.mxu0 0.0
      %5377 = vmatpush1.msra.mxu0 %v5337
      %5378 = vmatprep.subr.mxu0 0.0
      %5379 = vmatpush1.msra.mxu0 %v5336
      %5380 = vmatprep.subr.mxu0 0.0
      %5381 = vmatpush2.msra.mxu0 0.0
      %5382 = vmatprep.subr.mxu0 0.0
      %5383 = vmatpush2.msra.mxu0 0.0
      %5384 = vmatprep.subr.mxu0 0.0
      %5385 = vmatpush2.msra.mxu0 0.0
      %5386 = vmatprep.subr.mxu0 0.0
      %5387 = vmatpush2.msra.mxu0 0.0
      %5388 = vmatprep.subr.mxu0 0.0
      %5389 = vmatpush2.msra.mxu0 0.0
      %5390 = vmatprep.subr.mxu0 0.0
      %5391 = vmatpush2.msra.mxu0 0.0
      %5392 = vmatprep.subr.mxu0 0.0
      %5393 = vmatpush2.msra.mxu0 0.0
      %5394 = vmatprep.subr.mxu0 0.0
      %5395 = vmatpush2.msra.mxu0 0.0
      %5396 = vmatprep.subr.mxu0 0.0
      %5397 = vmatpush2.msra.mxu0 0.0
      %5398 = vmatprep.subr.mxu0 0.0
      %5399 = vmatpush2.msra.mxu0 0.0
      %5400 = vmatprep.subr.mxu0 0.0
      %5401 = vmatpush2.msra.mxu0 0.0
      %5402 = vmatprep.subr.mxu0 0.0
      %5403 = vmatpush2.msra.mxu0 0.0
      %5404 = vmatprep.subr.mxu0 0.0
      %5405 = vmatpush2.msra.mxu0 0.0
      %5406 = vmatprep.subr.mxu0 0.0
      %5407 = vmatpush2.msra.mxu0 0.0
      %5408 = vmatprep.subr.mxu0 0.0
      %5409 = vmatpush2.msra.mxu0 0.0
      %5410 = vmatprep.subr.mxu0 0.0
      %5411 = vmatpush2.msra.mxu0 0.0
      %5412 = vmatprep.mubr.f32.mxu0 0.0
      %5413 = vmatmul.mubr.f32.gmra.mxu0 %v3465
      %v5414 = vpop.f32.mrf.mxu0
      %v5415 = vadd.f32 %v5346, %v5414
      %v5416 = vpop.f32.mrf.mxu0
      %5417 = vmatprep.mubr.f32.mxu0 0.0
      %5418 = vmatmul.mubr.f32.gmra.mxu0 %v3468
      %v5419 = vpop.f32.mrf.mxu0
      %v5420 = vadd.f32 %v5346, %v5419
      %v5421 = vpop.f32.mrf.mxu0
      %5422 = vmatprep.mubr.f32.mxu0 0.0
      %5423 = vmatmul.mubr.f32.gmra.mxu0 %v3471
      %v5424 = vpop.f32.mrf.mxu0
      %v5425 = vadd.f32 %v5346, %v5424
      %v5426 = vpop.f32.mrf.mxu0
      %5427 = vdwg.mxu0
      %s5428 = scalar_lea.vmem %s7, 224
      %v5429 = vld [vmem:[%s5428] sm:$0xff]
      %v5430 = vld [vmem:[%s5428 + $0x8] sm:$0xff]
      %v5431 = vld [vmem:[%s5428 + $0x10] sm:$0xff]
      %v5432 = vld [vmem:[%s5428 + $0x18] sm:$0xff]
      %s5433 = scalar_lea.vmem %s8, 7
      %v5434 = vld [vmem:[%s5433] sm:$0x1]
      %v5436 = vlaneseq
      %v5437 = vshrl.u32 %v5436, 7
      %v5438 = vsub.s32 0, %v5437
      %v5439 = vrot.slane %v5434, %v5438
      %5441 = vmatprep.subr.mxu0 0.0
      %5442 = vmatpush1.msra.mxu0 0.0
      %5443 = vmatprep.subr.mxu0 0.0
      %5444 = vmatpush1.msra.mxu0 0.0
      %5445 = vmatprep.subr.mxu0 0.0
      %5446 = vmatpush1.msra.mxu0 0.0
      %5447 = vmatprep.subr.mxu0 0.0
      %5448 = vmatpush1.msra.mxu0 0.0
      %5449 = vmatprep.subr.mxu0 0.0
      %5450 = vmatpush1.msra.mxu0 0.0
      %5451 = vmatprep.subr.mxu0 0.0
      %5452 = vmatpush1.msra.mxu0 0.0
      %5453 = vmatprep.subr.mxu0 0.0
      %5454 = vmatpush1.msra.mxu0 0.0
      %5455 = vmatprep.subr.mxu0 0.0
      %5456 = vmatpush1.msra.mxu0 0.0
      %5457 = vmatprep.subr.mxu0 0.0
      %5458 = vmatpush1.msra.mxu0 0.0
      %5459 = vmatprep.subr.mxu0 0.0
      %5460 = vmatpush1.msra.mxu0 0.0
      %5461 = vmatprep.subr.mxu0 0.0
      %5462 = vmatpush1.msra.mxu0 0.0
      %5463 = vmatprep.subr.mxu0 0.0
      %5464 = vmatpush1.msra.mxu0 0.0
      %5465 = vmatprep.subr.mxu0 0.0
      %5466 = vmatpush1.msra.mxu0 %v5432
      %5467 = vmatprep.subr.mxu0 0.0
      %5468 = vmatpush1.msra.mxu0 %v5431
      %5469 = vmatprep.subr.mxu0 0.0
      %5470 = vmatpush1.msra.mxu0 %v5430
      %5471 = vmatprep.subr.mxu0 0.0
      %5472 = vmatpush1.msra.mxu0 %v5429
      %5473 = vmatprep.subr.mxu0 0.0
      %5474 = vmatpush2.msra.mxu0 0.0
      %5475 = vmatprep.subr.mxu0 0.0
      %5476 = vmatpush2.msra.mxu0 0.0
      %5477 = vmatprep.subr.mxu0 0.0
      %5478 = vmatpush2.msra.mxu0 0.0
      %5479 = vmatprep.subr.mxu0 0.0
      %5480 = vmatpush2.msra.mxu0 0.0
      %5481 = vmatprep.subr.mxu0 0.0
      %5482 = vmatpush2.msra.mxu0 0.0
      %5483 = vmatprep.subr.mxu0 0.0
      %5484 = vmatpush2.msra.mxu0 0.0
      %5485 = vmatprep.subr.mxu0 0.0
      %5486 = vmatpush2.msra.mxu0 0.0
      %5487 = vmatprep.subr.mxu0 0.0
      %5488 = vmatpush2.msra.mxu0 0.0
      %5489 = vmatprep.subr.mxu0 0.0
      %5490 = vmatpush2.msra.mxu0 0.0
      %5491 = vmatprep.subr.mxu0 0.0
      %5492 = vmatpush2.msra.mxu0 0.0
      %5493 = vmatprep.subr.mxu0 0.0
      %5494 = vmatpush2.msra.mxu0 0.0
      %5495 = vmatprep.subr.mxu0 0.0
      %5496 = vmatpush2.msra.mxu0 0.0
      %5497 = vmatprep.subr.mxu0 0.0
      %5498 = vmatpush2.msra.mxu0 0.0
      %5499 = vmatprep.subr.mxu0 0.0
      %5500 = vmatpush2.msra.mxu0 0.0
      %5501 = vmatprep.subr.mxu0 0.0
      %5502 = vmatpush2.msra.mxu0 0.0
      %5503 = vmatprep.subr.mxu0 0.0
      %5504 = vmatpush2.msra.mxu0 0.0
      %5505 = vmatprep.mubr.f32.mxu0 0.0
      %5506 = vmatmul.mubr.f32.gmra.mxu0 %v3465
      %v5507 = vpop.f32.mrf.mxu0
      %v5508 = vadd.f32 %v5439, %v5507
      %v5509 = vpop.f32.mrf.mxu0
      %5510 = vmatprep.mubr.f32.mxu0 0.0
      %5511 = vmatmul.mubr.f32.gmra.mxu0 %v3468
      %v5512 = vpop.f32.mrf.mxu0
      %v5513 = vadd.f32 %v5439, %v5512
      %v5514 = vpop.f32.mrf.mxu0
      %5515 = vmatprep.mubr.f32.mxu0 0.0
      %5516 = vmatmul.mubr.f32.gmra.mxu0 %v3471
      %v5517 = vpop.f32.mrf.mxu0
      %v5518 = vadd.f32 %v5439, %v5517
      %v5519 = vpop.f32.mrf.mxu0
      %5520 = vdwg.mxu0
      %v5522 = vsel %vm1002, %v5322, 0
      %v5525 = vsel %vm1002, %v5327, 0
      %v5528 = vsel %vm1002, %v5332, 0
      %v5531 = vsel %vm1002, %v5415, 0
      %v5534 = vsel %vm1002, %v5420, 0
      %v5537 = vsel %vm1002, %v5425, 0
      %5539 = vmatprep.subr.mxu0 0.0
      %5540 = vmatpush1.xpose.msra.mxu0 0.0
      %5541 = vmatprep.subr.mxu0 0.0
      %5542 = vmatpush1.xpose.msra.mxu0 0.0
      %5543 = vmatprep.subr.mxu0 0.0
      %5544 = vmatpush1.xpose.msra.mxu0 0.0
      %5545 = vmatprep.subr.mxu0 0.0
      %5546 = vmatpush1.xpose.msra.mxu0 0.0
      %5547 = vmatprep.subr.mxu0 0.0
      %5548 = vmatpush1.xpose.msra.mxu0 0.0
      %5549 = vmatprep.subr.mxu0 0.0
      %5550 = vmatpush1.xpose.msra.mxu0 0.0
      %5551 = vmatprep.subr.mxu0 0.0
      %5552 = vmatpush1.xpose.msra.mxu0 0.0
      %5553 = vmatprep.subr.mxu0 0.0
      %5554 = vmatpush1.xpose.msra.mxu0 0.0
      %5555 = vmatprep.subr.mxu0 0.0
      %5556 = vmatpush1.xpose.msra.mxu0 0.0
      %5557 = vmatprep.subr.mxu0 0.0
      %5558 = vmatpush1.xpose.msra.mxu0 0.0
      %5559 = vmatprep.subr.mxu0 0.0
      %5560 = vmatpush1.xpose.msra.mxu0 0.0
      %5561 = vmatprep.subr.mxu0 0.0
      %5562 = vmatpush1.xpose.msra.mxu0 0.0
      %5563 = vmatprep.subr.mxu0 0.0
      %5564 = vmatpush1.xpose.msra.mxu0 0.0
      %5565 = vmatprep.subr.mxu0 0.0
      %5566 = vmatpush1.xpose.msra.mxu0 %v5537
      %5567 = vmatprep.subr.mxu0 0.0
      %5568 = vmatpush1.xpose.msra.mxu0 %v5534
      %5569 = vmatprep.subr.mxu0 0.0
      %5570 = vmatpush1.xpose.msra.mxu0 %v5531
      %5571 = vmatprep.subr.mxu0 0.0
      %5572 = vmatpush2.xpose.msra.mxu0 0.0
      %5573 = vmatprep.subr.mxu0 0.0
      %5574 = vmatpush2.xpose.msra.mxu0 0.0
      %5575 = vmatprep.subr.mxu0 0.0
      %5576 = vmatpush2.xpose.msra.mxu0 0.0
      %5577 = vmatprep.subr.mxu0 0.0
      %5578 = vmatpush2.xpose.msra.mxu0 0.0
      %5579 = vmatprep.subr.mxu0 0.0
      %5580 = vmatpush2.xpose.msra.mxu0 0.0
      %5581 = vmatprep.subr.mxu0 0.0
      %5582 = vmatpush2.xpose.msra.mxu0 0.0
      %5583 = vmatprep.subr.mxu0 0.0
      %5584 = vmatpush2.xpose.msra.mxu0 0.0
      %5585 = vmatprep.subr.mxu0 0.0
      %5586 = vmatpush2.xpose.msra.mxu0 0.0
      %5587 = vmatprep.subr.mxu0 0.0
      %5588 = vmatpush2.xpose.msra.mxu0 0.0
      %5589 = vmatprep.subr.mxu0 0.0
      %5590 = vmatpush2.xpose.msra.mxu0 0.0
      %5591 = vmatprep.subr.mxu0 0.0
      %5592 = vmatpush2.xpose.msra.mxu0 0.0
      %5593 = vmatprep.subr.mxu0 0.0
      %5594 = vmatpush2.xpose.msra.mxu0 0.0
      %5595 = vmatprep.subr.mxu0 0.0
      %5596 = vmatpush2.xpose.msra.mxu0 0.0
      %5597 = vmatprep.subr.mxu0 0.0
      %5598 = vmatpush2.xpose.msra.mxu0 0.0
      %5599 = vmatprep.subr.mxu0 0.0
      %5600 = vmatpush2.xpose.msra.mxu0 0.0
      %5601 = vmatprep.subr.mxu0 0.0
      %5602 = vmatpush2.xpose.msra.mxu0 0.0
      %5603 = vmatprep.mubr.f32.mxu0 0.0
      %5604 = vmatmul.mubr.f32.gmra.mxu0 %v5522
      %v5605 = vpop.f32.mrf.mxu0
      %v5606 = vadd.f32 0.0, %v5605
      %v5607 = vpop.f32.mrf.mxu0
      %5608 = vmatprep.mubr.f32.mxu0 0.0
      %5609 = vmatmul.mubr.f32.gmra.mxu0 %v5525
      %v5610 = vpop.f32.mrf.mxu0
      %v5611 = vadd.f32 0.0, %v5610
      %v5612 = vpop.f32.mrf.mxu0
      %5613 = vmatprep.mubr.f32.mxu0 0.0
      %5614 = vmatmul.mubr.f32.gmra.mxu0 %v5528
      %v5615 = vpop.f32.mrf.mxu0
      %v5616 = vadd.f32 0.0, %v5615
      %v5617 = vpop.f32.mrf.mxu0
      %5618 = vdwg.mxu0
      %v5619 = vsel %vm1101, %v5606, -inf
      %5620 = vmax.xlane.f32.xlu0 %v5619
      %v5621 = vpop.xlane.xlu0 %5620
      %v5622 = vsel %vm1101, %v5611, -inf
      %5623 = vmax.xlane.f32.xlu0 %v5622
      %v5624 = vpop.xlane.xlu0 %5623
      %v5625 = vsel %vm1108, %v5616, -inf
      %5626 = vmax.xlane.f32.xlu0 %v5625
      %v5627 = vpop.xlane.xlu0 %5626
      %v5628 = vsub.f32 %v5606, %v5621
      %v5629 = vsub.f32 %v5611, %v5624
      %v5630 = vsub.f32 %v5616, %v5627
      %v5631 = vmul.f32 %v5628, 1.442695
      %v5632 = vpow.pop %v5631
      %v5633 = vmul.f32 %v5629, 1.442695
      %v5634 = vpow.pop %v5633
      %v5635 = vmul.f32 %v5630, 1.442695
      %v5636 = vpow.pop %v5635
      %v5637 = vsel %vm1101, %v5632, 0.0
      %5638 = vadd.xlane.f32.xlu0 %v5637
      %v5639 = vpop.xlane.xlu0 %5638
      %v5640 = vsel %vm1101, %v5634, 0.0
      %5641 = vadd.xlane.f32.xlu0 %v5640
      %v5642 = vpop.xlane.xlu0 %5641
      %v5643 = vsel %vm1108, %v5636, 0.0
      %5644 = vadd.xlane.f32.xlu0 %v5643
      %v5645 = vpop.xlane.xlu0 %5644
      %v5646 = vrcp.pop %v5639
      %v5647 = vrcp.pop %v5642
      %v5648 = vrcp.pop %v5645
      %v5649 = vmul.f32 %v5632, %v5646
      %v5650 = vmul.f32 %v5634, %v5647
      %v5651 = vmul.f32 %v5636, %v5648
      %v5653 = vsel %vm1101, %v5649, 0
      %v5656 = vsel %vm1101, %v5650, 0
      %v5659 = vsel %vm1101, %v5651, 0
      %v5662 = vsel %vm1145, %v5518, 0
      %5664 = vmatprep.subr.mxu0 0.0
      %5665 = vmatpush1.msra.mxu0 0.0
      %5666 = vmatprep.subr.mxu0 0.0
      %5667 = vmatpush1.msra.mxu0 0.0
      %5668 = vmatprep.subr.mxu0 0.0
      %5669 = vmatpush1.msra.mxu0 0.0
      %5670 = vmatprep.subr.mxu0 0.0
      %5671 = vmatpush1.msra.mxu0 0.0
      %5672 = vmatprep.subr.mxu0 0.0
      %5673 = vmatpush1.msra.mxu0 0.0
      %5674 = vmatprep.subr.mxu0 0.0
      %5675 = vmatpush1.msra.mxu0 0.0
      %5676 = vmatprep.subr.mxu0 0.0
      %5677 = vmatpush1.msra.mxu0 0.0
      %5678 = vmatprep.subr.mxu0 0.0
      %5679 = vmatpush1.msra.mxu0 0.0
      %5680 = vmatprep.subr.mxu0 0.0
      %5681 = vmatpush1.msra.mxu0 0.0
      %5682 = vmatprep.subr.mxu0 0.0
      %5683 = vmatpush1.msra.mxu0 0.0
      %5684 = vmatprep.subr.mxu0 0.0
      %5685 = vmatpush1.msra.mxu0 0.0
      %5686 = vmatprep.subr.mxu0 0.0
      %5687 = vmatpush1.msra.mxu0 0.0
      %5688 = vmatprep.subr.mxu0 0.0
      %5689 = vmatpush1.msra.mxu0 0.0
      %5690 = vmatprep.subr.mxu0 0.0
      %5691 = vmatpush1.msra.mxu0 %v5662
      %5692 = vmatprep.subr.mxu0 0.0
      %5693 = vmatpush1.msra.mxu0 %v5513
      %5694 = vmatprep.subr.mxu0 0.0
      %5695 = vmatpush1.msra.mxu0 %v5508
      %5696 = vmatprep.subr.mxu0 0.0
      %5697 = vmatpush2.msra.mxu0 0.0
      %5698 = vmatprep.subr.mxu0 0.0
      %5699 = vmatpush2.msra.mxu0 0.0
      %5700 = vmatprep.subr.mxu0 0.0
      %5701 = vmatpush2.msra.mxu0 0.0
      %5702 = vmatprep.subr.mxu0 0.0
      %5703 = vmatpush2.msra.mxu0 0.0
      %5704 = vmatprep.subr.mxu0 0.0
      %5705 = vmatpush2.msra.mxu0 0.0
      %5706 = vmatprep.subr.mxu0 0.0
      %5707 = vmatpush2.msra.mxu0 0.0
      %5708 = vmatprep.subr.mxu0 0.0
      %5709 = vmatpush2.msra.mxu0 0.0
      %5710 = vmatprep.subr.mxu0 0.0
      %5711 = vmatpush2.msra.mxu0 0.0
      %5712 = vmatprep.subr.mxu0 0.0
      %5713 = vmatpush2.msra.mxu0 0.0
      %5714 = vmatprep.subr.mxu0 0.0
      %5715 = vmatpush2.msra.mxu0 0.0
      %5716 = vmatprep.subr.mxu0 0.0
      %5717 = vmatpush2.msra.mxu0 0.0
      %5718 = vmatprep.subr.mxu0 0.0
      %5719 = vmatpush2.msra.mxu0 0.0
      %5720 = vmatprep.subr.mxu0 0.0
      %5721 = vmatpush2.msra.mxu0 0.0
      %5722 = vmatprep.subr.mxu0 0.0
      %5723 = vmatpush2.msra.mxu0 0.0
      %5724 = vmatprep.subr.mxu0 0.0
      %5725 = vmatpush2.msra.mxu0 0.0
      %5726 = vmatprep.subr.mxu0 0.0
      %5727 = vmatpush2.msra.mxu0 0.0
      %5728 = vmatprep.mubr.f32.mxu0 0.0
      %5729 = vmatmul.mubr.f32.gmra.mxu0 %v5653
      %v5730 = vpop.f32.mrf.mxu0
      %v5731 = vadd.f32 0.0, %v5730
      %v5732 = vpop.f32.mrf.mxu0
      %5733 = vmatprep.mubr.f32.mxu0 0.0
      %5734 = vmatmul.mubr.f32.gmra.mxu0 %v5656
      %v5735 = vpop.f32.mrf.mxu0
      %v5736 = vadd.f32 0.0, %v5735
      %v5737 = vpop.f32.mrf.mxu0
      %5738 = vmatprep.mubr.f32.mxu0 0.0
      %5739 = vmatmul.mubr.f32.gmra.mxu0 %v5659
      %v5740 = vpop.f32.mrf.mxu0
      %v5741 = vadd.f32 0.0, %v5740
      %v5742 = vpop.f32.mrf.mxu0
      %5743 = vdwg.mxu0
      %s5744 = scalar_lea.vmem %s9, 56
      %v5745 = vld [vmem:[%s5744] sm:$0xff]
      %v5747 = vsel %vm1002, %v5731, 0
      %v5750 = vsel %vm1002, %v5736, 0
      %v5753 = vsel %vm1002, %v5741, 0
      %5755 = vmatprep.subr.mxu0 0.0
      %5756 = vmatpush1.msra.mxu0 0.0
      %5757 = vmatprep.subr.mxu0 0.0
      %5758 = vmatpush1.msra.mxu0 0.0
      %5759 = vmatprep.subr.mxu0 0.0
      %5760 = vmatpush1.msra.mxu0 0.0
      %5761 = vmatprep.subr.mxu0 0.0
      %5762 = vmatpush1.msra.mxu0 0.0
      %5763 = vmatprep.subr.mxu0 0.0
      %5764 = vmatpush1.msra.mxu0 0.0
      %5765 = vmatprep.subr.mxu0 0.0
      %5766 = vmatpush1.msra.mxu0 0.0
      %5767 = vmatprep.subr.mxu0 0.0
      %5768 = vmatpush1.msra.mxu0 0.0
      %5769 = vmatprep.subr.mxu0 0.0
      %5770 = vmatpush1.msra.mxu0 0.0
      %5771 = vmatprep.subr.mxu0 0.0
      %5772 = vmatpush1.msra.mxu0 0.0
      %5773 = vmatprep.subr.mxu0 0.0
      %5774 = vmatpush1.msra.mxu0 0.0
      %5775 = vmatprep.subr.mxu0 0.0
      %5776 = vmatpush1.msra.mxu0 0.0
      %5777 = vmatprep.subr.mxu0 0.0
      %5778 = vmatpush1.msra.mxu0 0.0
      %5779 = vmatprep.subr.mxu0 0.0
      %5780 = vmatpush1.msra.mxu0 0.0
      %5781 = vmatprep.subr.mxu0 0.0
      %5782 = vmatpush1.msra.mxu0 0.0
      %5783 = vmatprep.subr.mxu0 0.0
      %5784 = vmatpush1.msra.mxu0 0.0
      %5785 = vmatprep.subr.mxu0 0.0
      %5786 = vmatpush1.msra.mxu0 %v5745
      %5787 = vmatprep.subr.mxu0 0.0
      %5788 = vmatpush2.msra.mxu0 0.0
      %5789 = vmatprep.subr.mxu0 0.0
      %5790 = vmatpush2.msra.mxu0 0.0
      %5791 = vmatprep.subr.mxu0 0.0
      %5792 = vmatpush2.msra.mxu0 0.0
      %5793 = vmatprep.subr.mxu0 0.0
      %5794 = vmatpush2.msra.mxu0 0.0
      %5795 = vmatprep.subr.mxu0 0.0
      %5796 = vmatpush2.msra.mxu0 0.0
      %5797 = vmatprep.subr.mxu0 0.0
      %5798 = vmatpush2.msra.mxu0 0.0
      %5799 = vmatprep.subr.mxu0 0.0
      %5800 = vmatpush2.msra.mxu0 0.0
      %5801 = vmatprep.subr.mxu0 0.0
      %5802 = vmatpush2.msra.mxu0 0.0
      %5803 = vmatprep.subr.mxu0 0.0
      %5804 = vmatpush2.msra.mxu0 0.0
      %5805 = vmatprep.subr.mxu0 0.0
      %5806 = vmatpush2.msra.mxu0 0.0
      %5807 = vmatprep.subr.mxu0 0.0
      %5808 = vmatpush2.msra.mxu0 0.0
      %5809 = vmatprep.subr.mxu0 0.0
      %5810 = vmatpush2.msra.mxu0 0.0
      %5811 = vmatprep.subr.mxu0 0.0
      %5812 = vmatpush2.msra.mxu0 0.0
      %5813 = vmatprep.subr.mxu0 0.0
      %5814 = vmatpush2.msra.mxu0 0.0
      %5815 = vmatprep.subr.mxu0 0.0
      %5816 = vmatpush2.msra.mxu0 0.0
      %5817 = vmatprep.subr.mxu0 0.0
      %5818 = vmatpush2.msra.mxu0 0.0
      %5819 = vmatprep.mubr.f32.mxu0 0.0
      %5820 = vmatmul.mubr.f32.gmra.mxu0 %v5747
      %v5821 = vpop.f32.mrf.mxu0
      %v5822 = vadd.f32 0.0, %v5821
      %v5823 = vpop.f32.mrf.mxu0
      %5824 = vmatprep.mubr.f32.mxu0 0.0
      %5825 = vmatmul.mubr.f32.gmra.mxu0 %v5750
      %v5826 = vpop.f32.mrf.mxu0
      %v5827 = vadd.f32 0.0, %v5826
      %v5828 = vpop.f32.mrf.mxu0
      %5829 = vmatprep.mubr.f32.mxu0 0.0
      %5830 = vmatmul.mubr.f32.gmra.mxu0 %v5753
      %v5831 = vpop.f32.mrf.mxu0
      %v5832 = vadd.f32 0.0, %v5831
      %v5833 = vpop.f32.mrf.mxu0
      %5834 = vdwg.mxu0
      %v5835 = vadd.f32 %v5239, %v5822
      %v5836 = vadd.f32 %v5240, %v5827
      %v5837 = vadd.f32 %v5241, %v5832
      %v5838 = vadd.f32 %v3387, %v5835
      %v5839 = vadd.f32 %v3388, %v5836
      %v5840 = vadd.f32 %v3389, %v5837
      %s5841 = scalar_lea.vmem %s10, 1
      %v5842 = vld [vmem:[%s5841] sm:$0x1]
      %v5844 = vlaneseq
      %v5845 = vshrl.u32 %v5844, 7
      %v5846 = vsub.s32 0, %v5845
      %v5847 = vrot.slane %v5842, %v5846
      %v5849 = vadd.f32 %v5838, %v5847
      %v5850 = vadd.f32 %v5839, %v5847
      %v5851 = vadd.f32 %v5840, %v5847
      %s5852 = scalar_lea.vmem %s11, 1
      %v5853 = vld [vmem:[%s5852] sm:$0x1]
      %s5854 = scalar_lea.vmem %s12, 1
      %v5855 = vld [vmem:[%s5854] sm:$0x1]
      %v5856 = vsel %vm660, %v5849, 0.0
      %5857 = vadd.xlane.f32.xlu0 %v5856
      %v5858 = vpop.xlane.xlu0 %5857
      %v5859 = vsel %vm660, %v5850, 0.0
      %5860 = vadd.xlane.f32.xlu0 %v5859
      %v5861 = vpop.xlane.xlu0 %5860
      %v5862 = vsel %vm667, %v5851, 0.0
      %5863 = vadd.xlane.f32.xlu0 %v5862
      %v5864 = vpop.xlane.xlu0 %5863
      %v5865 = vmul.f32 %v5858, %v671
      %v5866 = vmul.f32 %v5861, %v671
      %v5867 = vmul.f32 %v5864, %v671
      %v5868 = vsub.f32 %v5849, %v5865
      %v5869 = vsub.f32 %v5850, %v5866
      %v5870 = vsub.f32 %v5851, %v5867
      %v5871 = vmul.f32 %v5868, %v5868
      %v5872 = vmul.f32 %v5869, %v5869
      %v5873 = vmul.f32 %v5870, %v5870
      %v5874 = vsel %vm660, %v5871, 0.0
      %5875 = vadd.xlane.f32.xlu0 %v5874
      %v5876 = vpop.xlane.xlu0 %5875
      %v5877 = vsel %vm660, %v5872, 0.0
      %5878 = vadd.xlane.f32.xlu0 %v5877
      %v5879 = vpop.xlane.xlu0 %5878
      %v5880 = vsel %vm667, %v5873, 0.0
      %5881 = vadd.xlane.f32.xlu0 %v5880
      %v5882 = vpop.xlane.xlu0 %5881
      %v5883 = vmul.f32 %v5876, %v671
      %v5884 = vmul.f32 %v5879, %v671
      %v5885 = vmul.f32 %v5882, %v671
      %v5886 = vadd.f32 %v5883, 1e-05
      %v5887 = vadd.f32 %v5884, 1e-05
      %v5888 = vadd.f32 %v5885, 1e-05
      %v5889 = vrsqrt.pop %v5886
      %v5890 = vrsqrt.pop %v5887
      %v5891 = vrsqrt.pop %v5888
      %v5892 = vmul.f32 %v5868, %v5889
      %v5893 = vmul.f32 %v5869, %v5890
      %v5894 = vmul.f32 %v5870, %v5891
      %v5896 = vlaneseq
      %v5897 = vshrl.u32 %v5896, 7
      %v5898 = vsub.s32 0, %v5897
      %v5899 = vrot.slane %v5853, %v5898
      %v5901 = vmul.f32 %v5892, %v5899
      %v5902 = vmul.f32 %v5893, %v5899
      %v5903 = vmul.f32 %v5894, %v5899
      %v5905 = vlaneseq
      %v5906 = vshrl.u32 %v5905, 7
      %v5907 = vsub.s32 0, %v5906
      %v5908 = vrot.slane %v5855, %v5907
      %v5910 = vadd.f32 %v5901, %v5908
      %v5911 = vadd.f32 %v5902, %v5908
      %v5912 = vadd.f32 %v5903, %v5908
      %s5913 = scalar_lea.vmem %s13, 32
      %v5914 = vld [vmem:[%s5913] sm:$0xff]
      %v5915 = vld [vmem:[%s5913 + $0x8] sm:$0xff]
      %v5916 = vld [vmem:[%s5913 + $0x10] sm:$0xff]
      %v5917 = vld [vmem:[%s5913 + $0x18] sm:$0xff]
      %s5918 = scalar_lea.vmem %s14, 1
      %v5919 = vld [vmem:[%s5918] sm:$0x1]
      %v5921 = vlaneseq
      %v5922 = vshrl.u32 %v5921, 7
      %v5923 = vsub.s32 0, %v5922
      %v5924 = vrot.slane %v5919, %v5923
      %v5927 = vsel %vm660, %v5910, 0
      %v5930 = vsel %vm660, %v5911, 0
      %v5933 = vsel %vm660, %v5912, 0
      %5935 = vmatprep.subr.mxu0 0.0
      %5936 = vmatpush1.msra.mxu0 0.0
      %5937 = vmatprep.subr.mxu0 0.0
      %5938 = vmatpush1.msra.mxu0 0.0
      %5939 = vmatprep.subr.mxu0 0.0
      %5940 = vmatpush1.msra.mxu0 0.0
      %5941 = vmatprep.subr.mxu0 0.0
      %5942 = vmatpush1.msra.mxu0 0.0
      %5943 = vmatprep.subr.mxu0 0.0
      %5944 = vmatpush1.msra.mxu0 0.0
      %5945 = vmatprep.subr.mxu0 0.0
      %5946 = vmatpush1.msra.mxu0 0.0
      %5947 = vmatprep.subr.mxu0 0.0
      %5948 = vmatpush1.msra.mxu0 0.0
      %5949 = vmatprep.subr.mxu0 0.0
      %5950 = vmatpush1.msra.mxu0 0.0
      %5951 = vmatprep.subr.mxu0 0.0
      %5952 = vmatpush1.msra.mxu0 0.0
      %5953 = vmatprep.subr.mxu0 0.0
      %5954 = vmatpush1.msra.mxu0 0.0
      %5955 = vmatprep.subr.mxu0 0.0
      %5956 = vmatpush1.msra.mxu0 0.0
      %5957 = vmatprep.subr.mxu0 0.0
      %5958 = vmatpush1.msra.mxu0 0.0
      %5959 = vmatprep.subr.mxu0 0.0
      %5960 = vmatpush1.msra.mxu0 %v5917
      %5961 = vmatprep.subr.mxu0 0.0
      %5962 = vmatpush1.msra.mxu0 %v5916
      %5963 = vmatprep.subr.mxu0 0.0
      %5964 = vmatpush1.msra.mxu0 %v5915
      %5965 = vmatprep.subr.mxu0 0.0
      %5966 = vmatpush1.msra.mxu0 %v5914
      %5967 = vmatprep.subr.mxu0 0.0
      %5968 = vmatpush2.msra.mxu0 0.0
      %5969 = vmatprep.subr.mxu0 0.0
      %5970 = vmatpush2.msra.mxu0 0.0
      %5971 = vmatprep.subr.mxu0 0.0
      %5972 = vmatpush2.msra.mxu0 0.0
      %5973 = vmatprep.subr.mxu0 0.0
      %5974 = vmatpush2.msra.mxu0 0.0
      %5975 = vmatprep.subr.mxu0 0.0
      %5976 = vmatpush2.msra.mxu0 0.0
      %5977 = vmatprep.subr.mxu0 0.0
      %5978 = vmatpush2.msra.mxu0 0.0
      %5979 = vmatprep.subr.mxu0 0.0
      %5980 = vmatpush2.msra.mxu0 0.0
      %5981 = vmatprep.subr.mxu0 0.0
      %5982 = vmatpush2.msra.mxu0 0.0
      %5983 = vmatprep.subr.mxu0 0.0
      %5984 = vmatpush2.msra.mxu0 0.0
      %5985 = vmatprep.subr.mxu0 0.0
      %5986 = vmatpush2.msra.mxu0 0.0
      %5987 = vmatprep.subr.mxu0 0.0
      %5988 = vmatpush2.msra.mxu0 0.0
      %5989 = vmatprep.subr.mxu0 0.0
      %5990 = vmatpush2.msra.mxu0 0.0
      %5991 = vmatprep.subr.mxu0 0.0
      %5992 = vmatpush2.msra.mxu0 0.0
      %5993 = vmatprep.subr.mxu0 0.0
      %5994 = vmatpush2.msra.mxu0 0.0
      %5995 = vmatprep.subr.mxu0 0.0
      %5996 = vmatpush2.msra.mxu0 0.0
      %5997 = vmatprep.subr.mxu0 0.0
      %5998 = vmatpush2.msra.mxu0 0.0
      %5999 = vmatprep.mubr.f32.mxu0 0.0
      %6000 = vmatmul.mubr.f32.gmra.mxu0 %v5927
      %v6001 = vpop.f32.mrf.mxu0
      %v6002 = vadd.f32 %v5924, %v6001
      %v6003 = vpop.f32.mrf.mxu0
      %6004 = vmatprep.mubr.f32.mxu0 0.0
      %6005 = vmatmul.mubr.f32.gmra.mxu0 %v5930
      %v6006 = vpop.f32.mrf.mxu0
      %v6007 = vadd.f32 %v5924, %v6006
      %v6008 = vpop.f32.mrf.mxu0
      %6009 = vmatprep.mubr.f32.mxu0 0.0
      %6010 = vmatmul.mubr.f32.gmra.mxu0 %v5933
      %v6011 = vpop.f32.mrf.mxu0
      %v6012 = vadd.f32 %v5924, %v6011
      %v6013 = vpop.f32.mrf.mxu0
      %6014 = vdwg.mxu0
      %v6015 = vmax.f32 %v6002, 0.0
      %v6016 = vmax.f32 %v6007, 0.0
      %v6017 = vmax.f32 %v6012, 0.0
      %s6018 = scalar_lea.vmem %s15, 64
      %v6019 = vld [vmem:[%s6018] sm:$0xff]
      %v6020 = vld [vmem:[%s6018 + $0x8] sm:$0xff]
      %v6021 = vld [vmem:[%s6018 + $0x10] sm:$0xff]
      %v6022 = vld [vmem:[%s6018 + $0x18] sm:$0xff]
      %v6023 = vld [vmem:[%s6018 + $0x20] sm:$0xff]
      %v6024 = vld [vmem:[%s6018 + $0x28] sm:$0xff]
      %v6025 = vld [vmem:[%s6018 + $0x30] sm:$0xff]
      %v6026 = vld [vmem:[%s6018 + $0x38] sm:$0xff]
      %v6028 = vsel %vm3287, %v6015, 0
      %v6031 = vsel %vm3287, %v6016, 0
      %v6034 = vsel %vm3287, %v6017, 0
      %6036 = vmatprep.subr.mxu0 0.0
      %6037 = vmatpush1.msra.mxu0 0.0
      %6038 = vmatprep.subr.mxu0 0.0
      %6039 = vmatpush1.msra.mxu0 0.0
      %6040 = vmatprep.subr.mxu0 0.0
      %6041 = vmatpush1.msra.mxu0 0.0
      %6042 = vmatprep.subr.mxu0 0.0
      %6043 = vmatpush1.msra.mxu0 0.0
      %6044 = vmatprep.subr.mxu0 0.0
      %6045 = vmatpush1.msra.mxu0 0.0
      %6046 = vmatprep.subr.mxu0 0.0
      %6047 = vmatpush1.msra.mxu0 0.0
      %6048 = vmatprep.subr.mxu0 0.0
      %6049 = vmatpush1.msra.mxu0 0.0
      %6050 = vmatprep.subr.mxu0 0.0
      %6051 = vmatpush1.msra.mxu0 0.0
      %6052 = vmatprep.subr.mxu0 0.0
      %6053 = vmatpush1.msra.mxu0 %v6026
      %6054 = vmatprep.subr.mxu0 0.0
      %6055 = vmatpush1.msra.mxu0 %v6025
      %6056 = vmatprep.subr.mxu0 0.0
      %6057 = vmatpush1.msra.mxu0 %v6024
      %6058 = vmatprep.subr.mxu0 0.0
      %6059 = vmatpush1.msra.mxu0 %v6023
      %6060 = vmatprep.subr.mxu0 0.0
      %6061 = vmatpush1.msra.mxu0 %v6022
      %6062 = vmatprep.subr.mxu0 0.0
      %6063 = vmatpush1.msra.mxu0 %v6021
      %6064 = vmatprep.subr.mxu0 0.0
      %6065 = vmatpush1.msra.mxu0 %v6020
      %6066 = vmatprep.subr.mxu0 0.0
      %6067 = vmatpush1.msra.mxu0 %v6019
      %6068 = vmatprep.subr.mxu0 0.0
      %6069 = vmatpush2.msra.mxu0 0.0
      %6070 = vmatprep.subr.mxu0 0.0
      %6071 = vmatpush2.msra.mxu0 0.0
      %6072 = vmatprep.subr.mxu0 0.0
      %6073 = vmatpush2.msra.mxu0 0.0
      %6074 = vmatprep.subr.mxu0 0.0
      %6075 = vmatpush2.msra.mxu0 0.0
      %6076 = vmatprep.subr.mxu0 0.0
      %6077 = vmatpush2.msra.mxu0 0.0
      %6078 = vmatprep.subr.mxu0 0.0
      %6079 = vmatpush2.msra.mxu0 0.0
      %6080 = vmatprep.subr.mxu0 0.0
      %6081 = vmatpush2.msra.mxu0 0.0
      %6082 = vmatprep.subr.mxu0 0.0
      %6083 = vmatpush2.msra.mxu0 0.0
      %6084 = vmatprep.subr.mxu0 0.0
      %6085 = vmatpush2.msra.mxu0 0.0
      %6086 = vmatprep.subr.mxu0 0.0
      %6087 = vmatpush2.msra.mxu0 0.0
      %6088 = vmatprep.subr.mxu0 0.0
      %6089 = vmatpush2.msra.mxu0 0.0
      %6090 = vmatprep.subr.mxu0 0.0
      %6091 = vmatpush2.msra.mxu0 0.0
      %6092 = vmatprep.subr.mxu0 0.0
      %6093 = vmatpush2.msra.mxu0 0.0
      %6094 = vmatprep.subr.mxu0 0.0
      %6095 = vmatpush2.msra.mxu0 0.0
      %6096 = vmatprep.subr.mxu0 0.0
      %6097 = vmatpush2.msra.mxu0 0.0
      %6098 = vmatprep.subr.mxu0 0.0
      %6099 = vmatpush2.msra.mxu0 0.0
      %6100 = vmatprep.mubr.f32.mxu0 0.0
      %6101 = vmatmul.mubr.f32.gmra.mxu0 %v6028
      %v6102 = vpop.f32.mrf.mxu0
      %v6103 = vadd.f32 0.0, %v6102
      %v6104 = vpop.f32.mrf.mxu0
      %6105 = vmatprep.mubr.f32.mxu0 0.0
      %6106 = vmatmul.mubr.f32.gmra.mxu0 %v6031
      %v6107 = vpop.f32.mrf.mxu0
      %v6108 = vadd.f32 0.0, %v6107
      %v6109 = vpop.f32.mrf.mxu0
      %6110 = vmatprep.mubr.f32.mxu0 0.0
      %6111 = vmatmul.mubr.f32.gmra.mxu0 %v6034
      %v6112 = vpop.f32.mrf.mxu0
      %v6113 = vadd.f32 0.0, %v6112
      %v6114 = vpop.f32.mrf.mxu0
      %6115 = vdwg.mxu0
      %v6116 = vadd.f32 %v5849, %v6103
      %v6117 = vadd.f32 %v5850, %v6108
      %v6118 = vadd.f32 %v5851, %v6113
      %s6119 = scalar_lea.vmem %s16, 1
      %v6120 = vld [vmem:[%s6119] sm:$0x1]
      %v6122 = vlaneseq
      %v6123 = vshrl.u32 %v6122, 7
      %v6124 = vsub.s32 0, %v6123
      %v6125 = vrot.slane %v6120, %v6124
      %v6127 = vadd.f32 %v6116, %v6125
      %v6128 = vadd.f32 %v6117, %v6125
      %v6129 = vadd.f32 %v6118, %v6125
      %v6130 = vld [vmem:[%s17] sm:$0x1]
      %v6131 = vld [vmem:[%s18] sm:$0x1]
      %v6132 = vsel %vm660, %v6127, 0.0
      %6133 = vadd.xlane.f32.xlu0 %v6132
      %v6134 = vpop.xlane.xlu0 %6133
      %v6135 = vsel %vm660, %v6128, 0.0
      %6136 = vadd.xlane.f32.xlu0 %v6135
      %v6137 = vpop.xlane.xlu0 %6136
      %v6138 = vsel %vm667, %v6129, 0.0
      %6139 = vadd.xlane.f32.xlu0 %v6138
      %v6140 = vpop.xlane.xlu0 %6139
      %v6141 = vmul.f32 %v6134, %v671
      %v6142 = vmul.f32 %v6137, %v671
      %v6143 = vmul.f32 %v6140, %v671
      %v6144 = vsub.f32 %v6127, %v6141
      %v6145 = vsub.f32 %v6128, %v6142
      %v6146 = vsub.f32 %v6129, %v6143
      %v6147 = vmul.f32 %v6144, %v6144
      %v6148 = vmul.f32 %v6145, %v6145
      %v6149 = vmul.f32 %v6146, %v6146
      %v6150 = vsel %vm660, %v6147, 0.0
      %6151 = vadd.xlane.f32.xlu0 %v6150
      %v6152 = vpop.xlane.xlu0 %6151
      %v6153 = vsel %vm660, %v6148, 0.0
      %6154 = vadd.xlane.f32.xlu0 %v6153
      %v6155 = vpop.xlane.xlu0 %6154
      %v6156 = vsel %vm667, %v6149, 0.0
      %6157 = vadd.xlane.f32.xlu0 %v6156
      %v6158 = vpop.xlane.xlu0 %6157
      %v6159 = vmul.f32 %v6152, %v671
      %v6160 = vmul.f32 %v6155, %v671
      %v6161 = vmul.f32 %v6158, %v671
      %v6162 = vadd.f32 %v6159, 1e-05
      %v6163 = vadd.f32 %v6160, 1e-05
      %v6164 = vadd.f32 %v6161, 1e-05
      %v6165 = vrsqrt.pop %v6162
      %v6166 = vrsqrt.pop %v6163
      %v6167 = vrsqrt.pop %v6164
      %v6168 = vmul.f32 %v6144, %v6165
      %v6169 = vmul.f32 %v6145, %v6166
      %v6170 = vmul.f32 %v6146, %v6167
      %v6172 = vlaneseq
      %v6173 = vshrl.u32 %v6172, 7
      %v6174 = vsub.s32 0, %v6173
      %v6175 = vrot.slane %v6130, %v6174
      %v6177 = vmul.f32 %v6168, %v6175
      %v6178 = vmul.f32 %v6169, %v6175
      %v6179 = vmul.f32 %v6170, %v6175
      %v6181 = vlaneseq
      %v6182 = vshrl.u32 %v6181, 7
      %v6183 = vsub.s32 0, %v6182
      %v6184 = vrot.slane %v6131, %v6183
      %v6186 = vadd.f32 %v6177, %v6184
      %v6187 = vadd.f32 %v6178, %v6184
      %v6188 = vadd.f32 %v6179, %v6184
      %v6189 = vld [vmem:[%s19] sm:$0xff]
      %v6190 = vld [vmem:[%s19 + $0x8] sm:$0xff]
      %v6191 = vld [vmem:[%s19 + $0x10] sm:$0x7f]
      %v6192 = vmul.f32 %v6186, %v6189
      %v6193 = vmul.f32 %v6187, %v6190
      %v6194 = vmul.f32 %v6188, %v6191
      %v6195 = vsel %vm660, %v6192, 0.0
      %6196 = vadd.xlane.f32.xlu0 %v6195
      %v6197 = vpop.xlane.xlu0 %6196
      %v6198 = vsel %vm660, %v6193, 0.0
      %6199 = vadd.xlane.f32.xlu0 %v6198
      %v6200 = vpop.xlane.xlu0 %6199
      %v6201 = vsel %vm667, %v6194, 0.0
      %6202 = vadd.xlane.f32.xlu0 %v6201
      %v6203 = vpop.xlane.xlu0 %6202
      %v6204 = vadd.f32 %v6197, %v6200
      %v6205 = vsel %vm1145, %v6203, 0.0
      %v6206 = vadd.f32 %v6204, %v6205
      %v6207 = vrot.slane %v6206, 4
      %v6208 = vadd.f32 %v6206, %v6207
      %v6209 = vrot.slane %v6208, 2
      %v6210 = vadd.f32 %v6208, %v6209
      %v6211 = vrot.slane %v6210, 1
      %v6212 = vadd.f32 %v6210, %v6211
      %v6213 = vld [vmem:[#allocation2] sm:$0x1]
      %v6214 = vadd.f32 %v6212, %v6213
      %vm6215 = vcmask 0
      %6216 = vst.msk [vmem:[%s654] sm:$0x1] %vm6215, %v6214
      %p6217 = scmp.lt.s32.totalorder %s34, 1
      %s6218 = scalar_select %p6217, %s34, 1
      %s6219 = scalar_lea.vmem %s21, %s6218
      // Predicated region
      $region105: #{tpu_custom_call.1} parent=103 // pred_check
        %p6220 = pneg %p498
      $region106: #{tpu_custom_call.1} parent=103 // pred_check_branch
        %6222 = sbr.rel (%p6220) target = $region108
      $region107: #{tpu_custom_call.1} parent=103 // pred_region
        _
      $region108: #{tpu_custom_call.1} parent=103 // pred_fallthru
        _
    $region104: #{tpu_custom_call.1} parent=5 // pred_fallthru
      _
    %p6223 = scmp.le.s32.totalorder 2, %s29
    // Predicated region
    $region109: #{tpu_custom_call.1} parent=5 // pred_check
      %p6224 = pneg %p6223
    $region110: #{tpu_custom_call.1} parent=5 // pred_check_branch
      %6226 = sbr.rel (%p6224) target = $region112
    $region111: #{tpu_custom_call.1} parent=5 // pred_region
      %s6227 = ssub.s32 %s29, 2
      // Predicated region
      $region113: #{tpu_custom_call.1} parent=111 // pred_check
        %p6228 = pneg %p504
      $region114: #{tpu_custom_call.1} parent=111 // pred_check_branch
        %6230 = sbr.rel (%p6228) target = $region116
      $region115: #{tpu_custom_call.1} parent=111 // pred_region
        %p6231 = scmp.lt.s32.totalorder %s35, 1
        %s6232 = scalar_select %p6231, %s35, 1
        %s6233 = scalar_lea.vmem %s21, %s6232
      $region116: #{tpu_custom_call.1} parent=111 // pred_fallthru
        _
    $region112: #{tpu_custom_call.1} parent=5 // pred_fallthru
      _
  $region6: #{tpu_custom_call.1} parent=0 // loop_footer
    %s33 = sadd.s32 1, %s29
  $region7: #{tpu_custom_call.1} parent=0 // loop_footer_branch
    %28 = sbr.rel target = $region3
  $region8: #{tpu_custom_call.1} parent=0 // loop_exit
    _

</llo_original>
